<compile_context>
chip_gen: v7x
topology: tpu7x:2x2x1
jax: 0.10.0
libtpu: 0.0.40
codegen_flags: <defaults>
</compile_context>

<pallas_src>
import functools
import math

import jax
import jax.numpy as jnp
from jax.experimental import pallas as pl
from jax.experimental.pallas import tpu as pltpu

D_MODEL = 32
N_HEADS = 4
D_HEAD = D_MODEL // N_HEADS
D_FF = 64
EPS = 1e-5          # nn.LayerNorm default
NEG_INF = -1e9


# ---------------------------------------------------------------------------
# Fused decoder-layer kernel (single invocation, everything in VMEM)
# ---------------------------------------------------------------------------
def _decoder_layer_kernel(
    x_ref, mem_ref, mt_ref, ms_ref, mm_ref,
    t_wqkv_ref, t_bqkv_ref, t_wo_ref, t_bo_ref,
    s_wqkv_ref, s_bqkv_ref, s_wo_ref, s_bo_ref,
    c_wq_ref, c_bq_ref, c_wkv_ref, c_bkv_ref, c_wo_ref, c_bo_ref,
    f_w1_ref, f_b1_ref, f_w2_ref, f_b2_ref,
    ln_g_ref, ln_b_ref,
    o_ref,
    *, n_heads, d_head, d_model):

    f32 = jnp.float32

    def mm_nn(a, b):      # a @ b
        return jax.lax.dot_general(a, b, (((1,), (0,)), ((), ())),
                                   preferred_element_type=f32)

    def mm_nt(a, b):      # a @ b.T  (no explicit transpose)
        return jax.lax.dot_general(a, b, (((1,), (1,)), ((), ())),
                                   preferred_element_type=f32)

    def layer_norm(y, idx):
        g = ln_g_ref[idx:idx + 1, :]          # (1, D)
        b = ln_b_ref[idx:idx + 1, :]
        mu = jnp.mean(y, axis=-1, keepdims=True)
        var = jnp.mean((y - mu) ** 2, axis=-1, keepdims=True)
        return (y - mu) * jax.lax.rsqrt(var + EPS) * g + b

    def attend(q2d, k2d, v2d, mask_add, wo, bo):
        # q2d: (Rq, D) already projected (with 1/sqrt(dk) folded into Wq);
        # k2d/v2d: (Rk, D); mask_add: (Rq, Rk) additive mask (0 / -1e9).
        out = jnp.zeros((q2d.shape[0], d_model), f32)
        for h in range(n_heads):
            sl = slice(h * d_head, (h + 1) * d_head)
            s = mm_nt(q2d[:, sl], k2d[:, sl]) + mask_add          # (Rq, Rk)
            s = s - jnp.max(s, axis=-1, keepdims=True)
            p = jnp.exp(s)
            p = p * pl.reciprocal(jnp.sum(p, axis=-1, keepdims=True), approx=True)
            oh = mm_nn(p, v2d[:, sl])                             # (Rq, dk)
            out = out + mm_nn(oh, wo[sl, :])                      # concat folded into Wo
        return out + bo

    x = x_ref[...].astype(f32)        # (N*S*T, D)
    mem = mem_ref[...].astype(f32)    # (N*S*Tm, D)
    d = d_model

    # ---- sublayer 0: divided space-time self-attention ----
    qkv_t = mm_nn(x, t_wqkv_ref[...]) + t_bqkv_ref[...]           # fused QKV (R, 3D)
    m = attend(qkv_t[:, 0:d], qkv_t[:, d:2 * d], qkv_t[:, 2 * d:3 * d],
               mt_ref[...], t_wo_ref[...], t_bo_ref[...])          # TimeAttention MHA
    qkv_s = mm_nn(m, s_wqkv_ref[...]) + s_bqkv_ref[...]
    a0 = attend(qkv_s[:, 0:d], qkv_s[:, d:2 * d], qkv_s[:, 2 * d:3 * d],
                ms_ref[...], s_wo_ref[...], s_bo_ref[...])         # SpaceAttention MHA
    x1 = layer_norm(x + a0, 0)

    # ---- sublayer 1: cross attention over encoder memory ----
    qc = mm_nn(x1, c_wq_ref[...]) + c_bq_ref[...]
    kv_m = mm_nn(mem, c_wkv_ref[...]) + c_bkv_ref[...]             # fused K|V of memory
    a1 = attend(qc, kv_m[:, 0:d], kv_m[:, d:2 * d],
                mm_ref[...], c_wo_ref[...], c_bo_ref[...])
    x2 = layer_norm(x1 + a1, 1)

    # ---- sublayer 2: position-wise feed-forward ----
    hdn = jnp.maximum(mm_nn(x2, f_w1_ref[...]) + f_b1_ref[...], 0.0)
    ff = mm_nn(hdn, f_w2_ref[...]) + f_b2_ref[...]
    o_ref[...] = layer_norm(x2 + ff, 2).astype(o_ref.dtype)


# ---------------------------------------------------------------------------
# Host-side wrapper: pack weights, build joint additive masks, one pallas_call
# ---------------------------------------------------------------------------
def _joint_masks(N, S, T, Tm, tgt_mask, memory_mask):
    """Additive masks over the flattened (n, s, t) query/key axes.

    TimeAttention  : keys must share (batch, space) and satisfy ~tgt_mask[t_q, t_k]
    SpaceAttention : keys must share (batch, time)
    Cross (memory) : keys must share (batch, space) and satisfy ~memory_mask[t_q, t_k]
    Masked-out entries get -1e9 => exp underflows to exactly 0, so the joint softmax
    equals the per-group softmax of the reference.
    """
    neg = jnp.float32(NEG_INF)
    iq = jnp.arange(N * S * T)
    nq, sq, tq = iq // (S * T), (iq // T) % S, iq % T
    ik = jnp.arange(N * S * Tm)
    nk, sk, tk = ik // (S * Tm), (ik // Tm) % S, ik % Tm

    same_b_self = nq[:, None] == nq[None, :]
    same_s_self = sq[:, None] == sq[None, :]
    same_t_self = tq[:, None] == tq[None, :]
    tgt_blocked = tgt_mask[tq[:, None], tq[None, :]]          # True = masked out
    mt = jnp.where(same_b_self & same_s_self & ~tgt_blocked, 0.0, neg)
    ms = jnp.where(same_b_self & same_t_self, 0.0, neg)

    same_b_x = nq[:, None] == nk[None, :]
    same_s_x = sq[:, None] == sk[None, :]
    mem_blocked = memory_mask[tq[:, None], tk[None, :]]
    mm = jnp.where(same_b_x & same_s_x & ~mem_blocked, 0.0, neg)
    return mt.astype(jnp.float32), ms.astype(jnp.float32), mm.astype(jnp.float32)


@jax.jit
def decoder_layer(x, memory, tgt_mask, memory_mask, params):
    N, S, T, D = x.shape
    Tm = memory.shape[2]
    scale = 1.0 / math.sqrt(D // N_HEADS)

    def pack_self(p):   # fused QKV with 1/sqrt(dk) folded into Wq
        wqkv = jnp.concatenate([p["wq"] * scale, p["wk"], p["wv"]], axis=1)
        bqkv = jnp.concatenate([p["bq"] * scale, p["bk"], p["bv"]])[None, :]
        return wqkv, bqkv, p["wo"], p["bo"][None, :]

    t_wqkv, t_bqkv, t_wo, t_bo = pack_self(params["time_attn"])
    s_wqkv, s_bqkv, s_wo, s_bo = pack_self(params["space_attn"])
    pc = params["encoder_attn"]
    c_wq, c_bq = pc["wq"] * scale, (pc["bq"] * scale)[None, :]
    c_wkv = jnp.concatenate([pc["wk"], pc["wv"]], axis=1)
    c_bkv = jnp.concatenate([pc["bk"], pc["bv"]])[None, :]
    c_wo, c_bo = pc["wo"], pc["bo"][None, :]

    f_w1, f_b1 = params["ffn_w1"], params["ffn_b1"][None, :]
    f_w2, f_b2 = params["ffn_w2"], params["ffn_b2"][None, :]
    ln_g = jnp.stack([params["ln1_g"], params["ln2_g"], params["ln3_g"]])
    ln_b = jnp.stack([params["ln1_b"], params["ln2_b"], params["ln3_b"]])

    mt, ms, mm = _joint_masks(N, S, T, Tm, tgt_mask, memory_mask)

    args = (x.reshape(N * S * T, D), memory.reshape(N * S * Tm, D),
            mt, ms, mm,
            t_wqkv, t_bqkv, t_wo, t_bo,
            s_wqkv, s_bqkv, s_wo, s_bo,
            c_wq, c_bq, c_wkv, c_bkv, c_wo, c_bo,
            f_w1, f_b1, f_w2, f_b2,
            ln_g, ln_b)

    out = pl.pallas_call(
        functools.partial(_decoder_layer_kernel,
                          n_heads=N_HEADS, d_head=D // N_HEADS, d_model=D),
        out_shape=jax.ShapeDtypeStruct((N * S * T, D), x.dtype),
        in_specs=[pl.BlockSpec(memory_space=pltpu.MemorySpace.VMEM)] * len(args),
        out_specs=pl.BlockSpec(memory_space=pltpu.MemorySpace.VMEM),
    )(*args)
    return out.reshape(N, S, T, D)


# ---------------------------------------------------------------------------
# Deterministic parameter init (nn.Linear-style uniform) + pure-JAX reference
# ---------------------------------------------------------------------------
def _init_linear(key, d_in, d_out):
    kw, kb = jax.random.split(key)
    bound = 1.0 / math.sqrt(d_in)
    w = jax.random.uniform(kw, (d_in, d_out), jnp.float32, -bound, bound)
    b = jax.random.uniform(kb, (d_out,), jnp.float32, -bound, bound)
    return w, b


def init_params(key):
    ka, kb_, kc, kf1, kf2 = jax.random.split(key, 5)

    def mha(k):
        ks = jax.random.split(k, 4)
        wq, bq = _init_linear(ks[0], D_MODEL, D_MODEL)
        wk, bk = _init_linear(ks[1], D_MODEL, D_MODEL)
        wv, bv = _init_linear(ks[2], D_MODEL, D_MODEL)
        wo, bo = _init_linear(ks[3], D_MODEL, D_MODEL)
        return dict(wq=wq, bq=bq, wk=wk, bk=bk, wv=wv, bv=bv, wo=wo, bo=bo)

    w1, b1 = _init_linear(kf1, D_MODEL, D_FF)
    w2, b2 = _init_linear(kf2, D_FF, D_MODEL)
    ones, zeros = jnp.ones((D_MODEL,), jnp.float32), jnp.zeros((D_MODEL,), jnp.float32)
    return dict(time_attn=mha(ka), space_attn=mha(kb_), encoder_attn=mha(kc),
                ffn_w1=w1, ffn_b1=b1, ffn_w2=w2, ffn_b2=b2,
                ln1_g=ones, ln1_b=zeros, ln2_g=ones, ln2_b=zeros,
                ln3_g=ones, ln3_b=zeros)


def _reference_decoder_layer(x, memory, tgt_mask, memory_mask, params):
    """Pure-jnp transcription of the PyTorch module (eval mode) for validation."""
    dk = D_MODEL // N_HEADS

    def mha(q_in, k_in, v_in, p, kind, mask):
        N, S, Tq, D = q_in.shape

        def proj(z, w, b):
            y = z @ w + b
            return y.reshape(z.shape[0], z.shape[1], z.shape[2], N_HEADS, dk
                             ).transpose(0, 3, 1, 2, 4)           # (N,h,S,T,dk)

        q, k, v = proj(q_in, p["wq"], p["bq"]), proj(k_in, p["wk"], p["bk"]), proj(v_in, p["wv"], p["bv"])
        if kind == "time":
            s = jnp.einsum('nhstd,nhsud->nhstu', q, k) / math.sqrt(dk)
            if mask is not None:
                s = jnp.where(mask[None, None, None], -jnp.inf, s)
            out = jnp.einsum('nhstu,nhsud->nhstd', jax.nn.softmax(s, axis=-1), v)
        else:  # space attention (mask ignored)
            qs, ks, vs = (z.transpose(0, 1, 3, 2, 4) for z in (q, k, v))
            s = jnp.einsum('nhtsd,nhtud->nhtsu', qs, ks) / math.sqrt(dk)
            out = jnp.einsum('nhtsu,nhtud->nhtsd', jax.nn.softmax(s, axis=-1), vs
                             ).transpose(0, 1, 3, 2, 4)
        out = out.transpose(0, 2, 3, 1, 4).reshape(N, S, Tq, D)
        return out @ p["wo"] + p["bo"]

    def ln(y, g, b):
        mu = y.mean(-1, keepdims=True)
        var = ((y - mu) ** 2).mean(-1, keepdims=True)
        return (y - mu) / jnp.sqrt(var + EPS) * g + b

    m = mha(x, x, x, params["time_attn"], "time", tgt_mask)
    m = mha(m, m, m, params["space_attn"], "space", None)
    x1 = ln(x + m, params["ln1_g"], params["ln1_b"])
    c = mha(x1, memory, memory, params["encoder_attn"], "time", memory_mask)
    x2 = ln(x1 + c, params["ln2_g"], params["ln2_b"])
    ff = jnp.maximum(x2 @ params["ffn_w1"] + params["ffn_b1"], 0.0) @ params["ffn_w2"] + params["ffn_b2"]
    return ln(x2 + ff, params["ln3_g"], params["ln3_b"])


if __name__ == "__main__":
    N, S, T = 2, 4, 8        # batch, space, time; d_model = 32, heads = 4, ffn = 64
    key = jax.random.PRNGKey(0)
    kx, km, kp = jax.random.split(key, 3)

    x = jax.random.normal(kx, (N, S, T, D_MODEL), jnp.float32)
    memory = jax.random.normal(km, (N, S, T, D_MODEL), jnp.float32)
    # bool masks, True = masked out (matches masked_fill semantics in TimeAttention)
    tgt_mask = jnp.triu(jnp.ones((T, T), dtype=jnp.bool_), k=1)     # causal over time
    memory_mask = jnp.zeros((T, T), dtype=jnp.bool_)                # full visibility

    params = init_params(kp)

    out = decoder_layer(x, memory, tgt_mask, memory_mask, params)
    jax.block_until_ready(out)
    assert out.shape == (N, S, T, D_MODEL)

    ref = _reference_decoder_layer(x, memory, tgt_mask, memory_mask, params)
    assert bool(jnp.all(jnp.isfinite(out)))
    assert bool(jnp.allclose(out, ref, rtol=2e-2, atol=2e-2)), "mismatch vs reference"

    print("KERNEL_OK")
</pallas_src>

<mosaic_0001>
module attributes {stable_mosaic.version = 11 : i64} {
  func.func @_decoder_layer_kernel(%arg0: memref<64x32xf32, #tpu.memory_space<vmem>>, %arg1: memref<64x32xf32, #tpu.memory_space<vmem>>, %arg2: memref<64x64xf32, #tpu.memory_space<vmem>>, %arg3: memref<64x64xf32, #tpu.memory_space<vmem>>, %arg4: memref<64x64xf32, #tpu.memory_space<vmem>>, %arg5: memref<32x96xf32, #tpu.memory_space<vmem>>, %arg6: memref<1x96xf32, #tpu.memory_space<vmem>>, %arg7: memref<32x32xf32, #tpu.memory_space<vmem>>, %arg8: memref<1x32xf32, #tpu.memory_space<vmem>>, %arg9: memref<32x96xf32, #tpu.memory_space<vmem>>, %arg10: memref<1x96xf32, #tpu.memory_space<vmem>>, %arg11: memref<32x32xf32, #tpu.memory_space<vmem>>, %arg12: memref<1x32xf32, #tpu.memory_space<vmem>>, %arg13: memref<32x32xf32, #tpu.memory_space<vmem>>, %arg14: memref<1x32xf32, #tpu.memory_space<vmem>>, %arg15: memref<32x64xf32, #tpu.memory_space<vmem>>, %arg16: memref<1x64xf32, #tpu.memory_space<vmem>>, %arg17: memref<32x32xf32, #tpu.memory_space<vmem>>, %arg18: memref<1x32xf32, #tpu.memory_space<vmem>>, %arg19: memref<32x64xf32, #tpu.memory_space<vmem>>, %arg20: memref<1x64xf32, #tpu.memory_space<vmem>>, %arg21: memref<64x32xf32, #tpu.memory_space<vmem>>, %arg22: memref<1x32xf32, #tpu.memory_space<vmem>>, %arg23: memref<3x32xf32, #tpu.memory_space<vmem>>, %arg24: memref<3x32xf32, #tpu.memory_space<vmem>>, %arg25: memref<64x32xf32, #tpu.memory_space<vmem>>) attributes {dimension_semantics = [], scalar_prefetch = 0 : i64, scratch_operands = 0 : i64, tpu.core_type = #tpu.core_type<tc>} {
    %c0 = arith.constant 0 : index
    %c0_0 = arith.constant 0 : index
    %0 = vector.load %arg0[%c0, %c0_0] : memref<64x32xf32, #tpu.memory_space<vmem>>, vector<64x32xf32>
    %c0_1 = arith.constant 0 : index
    %c0_2 = arith.constant 0 : index
    %1 = vector.load %arg1[%c0_1, %c0_2] : memref<64x32xf32, #tpu.memory_space<vmem>>, vector<64x32xf32>
    %c0_3 = arith.constant 0 : index
    %c0_4 = arith.constant 0 : index
    %2 = vector.load %arg5[%c0_3, %c0_4] : memref<32x96xf32, #tpu.memory_space<vmem>>, vector<32x96xf32>
    %cst = arith.constant dense<0.000000e+00> : vector<64x96xf32>
    %3 = tpu.matmul %0, %2, %cst {dimension_numbers = #tpu.dot_dimension_numbers<[1], [0], [0], [1], [0, 0, 1, 1], [], []>} : vector<64x32xf32>, vector<32x96xf32>, vector<64x96xf32> -> vector<64x96xf32>
    %c0_5 = arith.constant 0 : index
    %c0_6 = arith.constant 0 : index
    %4 = vector.load %arg6[%c0_5, %c0_6] : memref<1x96xf32, #tpu.memory_space<vmem>>, vector<1x96xf32>
    %5 = vector.broadcast %4 : vector<1x96xf32> to vector<64x96xf32>
    %6 = arith.addf %3, %5 : vector<64x96xf32>
    %7 = vector.extract_strided_slice %6 {offsets = [0, 0], sizes = [64, 32], strides = [1, 1]} : vector<64x96xf32> to vector<64x32xf32>
    %8 = vector.extract_strided_slice %6 {offsets = [0, 32], sizes = [64, 32], strides = [1, 1]} : vector<64x96xf32> to vector<64x32xf32>
    %9 = vector.extract_strided_slice %6 {offsets = [0, 64], sizes = [64, 32], strides = [1, 1]} : vector<64x96xf32> to vector<64x32xf32>
    %c0_7 = arith.constant 0 : index
    %c0_8 = arith.constant 0 : index
    %10 = vector.load %arg2[%c0_7, %c0_8] : memref<64x64xf32, #tpu.memory_space<vmem>>, vector<64x64xf32>
    %c0_9 = arith.constant 0 : index
    %c0_10 = arith.constant 0 : index
    %11 = vector.load %arg7[%c0_9, %c0_10] : memref<32x32xf32, #tpu.memory_space<vmem>>, vector<32x32xf32>
    %c0_11 = arith.constant 0 : index
    %c0_12 = arith.constant 0 : index
    %12 = vector.load %arg8[%c0_11, %c0_12] : memref<1x32xf32, #tpu.memory_space<vmem>>, vector<1x32xf32>
    %cst_13 = arith.constant 0.000000e+00 : f32
    %13 = vector.broadcast %cst_13 : f32 to vector<64x32xf32>
    %14 = vector.extract_strided_slice %7 {offsets = [0, 0], sizes = [64, 8], strides = [1, 1]} : vector<64x32xf32> to vector<64x8xf32>
    %15 = vector.extract_strided_slice %8 {offsets = [0, 0], sizes = [64, 8], strides = [1, 1]} : vector<64x32xf32> to vector<64x8xf32>
    %cst_14 = arith.constant dense<0.000000e+00> : vector<64x64xf32>
    %16 = tpu.matmul %14, %15, %cst_14 {dimension_numbers = #tpu.dot_dimension_numbers<[1], [1], [0], [0], [0, 0, 1, 0], [], []>} : vector<64x8xf32>, vector<64x8xf32>, vector<64x64xf32> -> vector<64x64xf32>
    %17 = arith.addf %16, %10 : vector<64x64xf32>
    %cst_15 = arith.constant dense<0xFF800000> : vector<64xf32>
    %18 = vector.multi_reduction <maximumf>, %17, %cst_15 [1] : vector<64x64xf32> to vector<64xf32>
    %19 = vector.shape_cast %18 : vector<64xf32> to vector<64x1xf32>
    %20 = vector.broadcast %19 : vector<64x1xf32> to vector<64x64xf32>
    %21 = arith.subf %17, %20 : vector<64x64xf32>
    %22 = math.exp %21 : vector<64x64xf32>
    %cst_16 = arith.constant dense<0.000000e+00> : vector<64xf32>
    %23 = vector.multi_reduction <add>, %22, %cst_16 [1] : vector<64x64xf32> to vector<64xf32>
    %24 = vector.shape_cast %23 : vector<64xf32> to vector<64x1xf32>
    %25 = tpu.reciprocal %24 {approx = true} : vector<64x1xf32> -> vector<64x1xf32>
    %26 = vector.broadcast %25 : vector<64x1xf32> to vector<64x64xf32>
    %27 = arith.mulf %22, %26 : vector<64x64xf32>
    %28 = vector.extract_strided_slice %9 {offsets = [0, 0], sizes = [64, 8], strides = [1, 1]} : vector<64x32xf32> to vector<64x8xf32>
    %cst_17 = arith.constant dense<0.000000e+00> : vector<64x8xf32>
    %29 = tpu.matmul %27, %28, %cst_17 {dimension_numbers = #tpu.dot_dimension_numbers<[1], [0], [0], [1], [0, 0, 1, 1], [], []>} : vector<64x64xf32>, vector<64x8xf32>, vector<64x8xf32> -> vector<64x8xf32>
    %30 = vector.extract_strided_slice %11 {offsets = [0, 0], sizes = [8, 32], strides = [1, 1]} : vector<32x32xf32> to vector<8x32xf32>
    %cst_18 = arith.constant dense<0.000000e+00> : vector<64x32xf32>
    %31 = tpu.matmul %29, %30, %cst_18 {dimension_numbers = #tpu.dot_dimension_numbers<[1], [0], [0], [1], [0, 0, 1, 1], [], []>} : vector<64x8xf32>, vector<8x32xf32>, vector<64x32xf32> -> vector<64x32xf32>
    %32 = arith.addf %13, %31 : vector<64x32xf32>
    %33 = vector.extract_strided_slice %7 {offsets = [0, 8], sizes = [64, 8], strides = [1, 1]} : vector<64x32xf32> to vector<64x8xf32>
    %34 = vector.extract_strided_slice %8 {offsets = [0, 8], sizes = [64, 8], strides = [1, 1]} : vector<64x32xf32> to vector<64x8xf32>
    %cst_19 = arith.constant dense<0.000000e+00> : vector<64x64xf32>
    %35 = tpu.matmul %33, %34, %cst_19 {dimension_numbers = #tpu.dot_dimension_numbers<[1], [1], [0], [0], [0, 0, 1, 0], [], []>} : vector<64x8xf32>, vector<64x8xf32>, vector<64x64xf32> -> vector<64x64xf32>
    %36 = arith.addf %35, %10 : vector<64x64xf32>
    %cst_20 = arith.constant dense<0xFF800000> : vector<64xf32>
    %37 = vector.multi_reduction <maximumf>, %36, %cst_20 [1] : vector<64x64xf32> to vector<64xf32>
    %38 = vector.shape_cast %37 : vector<64xf32> to vector<64x1xf32>
    %39 = vector.broadcast %38 : vector<64x1xf32> to vector<64x64xf32>
    %40 = arith.subf %36, %39 : vector<64x64xf32>
    %41 = math.exp %40 : vector<64x64xf32>
    %cst_21 = arith.constant dense<0.000000e+00> : vector<64xf32>
    %42 = vector.multi_reduction <add>, %41, %cst_21 [1] : vector<64x64xf32> to vector<64xf32>
    %43 = vector.shape_cast %42 : vector<64xf32> to vector<64x1xf32>
    %44 = tpu.reciprocal %43 {approx = true} : vector<64x1xf32> -> vector<64x1xf32>
    %45 = vector.broadcast %44 : vector<64x1xf32> to vector<64x64xf32>
    %46 = arith.mulf %41, %45 : vector<64x64xf32>
    %47 = vector.extract_strided_slice %9 {offsets = [0, 8], sizes = [64, 8], strides = [1, 1]} : vector<64x32xf32> to vector<64x8xf32>
    %cst_22 = arith.constant dense<0.000000e+00> : vector<64x8xf32>
    %48 = tpu.matmul %46, %47, %cst_22 {dimension_numbers = #tpu.dot_dimension_numbers<[1], [0], [0], [1], [0, 0, 1, 1], [], []>} : vector<64x64xf32>, vector<64x8xf32>, vector<64x8xf32> -> vector<64x8xf32>
    %49 = vector.extract_strided_slice %11 {offsets = [8, 0], sizes = [8, 32], strides = [1, 1]} : vector<32x32xf32> to vector<8x32xf32>
    %cst_23 = arith.constant dense<0.000000e+00> : vector<64x32xf32>
    %50 = tpu.matmul %48, %49, %cst_23 {dimension_numbers = #tpu.dot_dimension_numbers<[1], [0], [0], [1], [0, 0, 1, 1], [], []>} : vector<64x8xf32>, vector<8x32xf32>, vector<64x32xf32> -> vector<64x32xf32>
    %51 = arith.addf %32, %50 : vector<64x32xf32>
    %52 = vector.extract_strided_slice %7 {offsets = [0, 16], sizes = [64, 8], strides = [1, 1]} : vector<64x32xf32> to vector<64x8xf32>
    %53 = vector.extract_strided_slice %8 {offsets = [0, 16], sizes = [64, 8], strides = [1, 1]} : vector<64x32xf32> to vector<64x8xf32>
    %cst_24 = arith.constant dense<0.000000e+00> : vector<64x64xf32>
    %54 = tpu.matmul %52, %53, %cst_24 {dimension_numbers = #tpu.dot_dimension_numbers<[1], [1], [0], [0], [0, 0, 1, 0], [], []>} : vector<64x8xf32>, vector<64x8xf32>, vector<64x64xf32> -> vector<64x64xf32>
    %55 = arith.addf %54, %10 : vector<64x64xf32>
    %cst_25 = arith.constant dense<0xFF800000> : vector<64xf32>
    %56 = vector.multi_reduction <maximumf>, %55, %cst_25 [1] : vector<64x64xf32> to vector<64xf32>
    %57 = vector.shape_cast %56 : vector<64xf32> to vector<64x1xf32>
    %58 = vector.broadcast %57 : vector<64x1xf32> to vector<64x64xf32>
    %59 = arith.subf %55, %58 : vector<64x64xf32>
    %60 = math.exp %59 : vector<64x64xf32>
    %cst_26 = arith.constant dense<0.000000e+00> : vector<64xf32>
    %61 = vector.multi_reduction <add>, %60, %cst_26 [1] : vector<64x64xf32> to vector<64xf32>
    %62 = vector.shape_cast %61 : vector<64xf32> to vector<64x1xf32>
    %63 = tpu.reciprocal %62 {approx = true} : vector<64x1xf32> -> vector<64x1xf32>
    %64 = vector.broadcast %63 : vector<64x1xf32> to vector<64x64xf32>
    %65 = arith.mulf %60, %64 : vector<64x64xf32>
    %66 = vector.extract_strided_slice %9 {offsets = [0, 16], sizes = [64, 8], strides = [1, 1]} : vector<64x32xf32> to vector<64x8xf32>
    %cst_27 = arith.constant dense<0.000000e+00> : vector<64x8xf32>
    %67 = tpu.matmul %65, %66, %cst_27 {dimension_numbers = #tpu.dot_dimension_numbers<[1], [0], [0], [1], [0, 0, 1, 1], [], []>} : vector<64x64xf32>, vector<64x8xf32>, vector<64x8xf32> -> vector<64x8xf32>
    %68 = vector.extract_strided_slice %11 {offsets = [16, 0], sizes = [8, 32], strides = [1, 1]} : vector<32x32xf32> to vector<8x32xf32>
    %cst_28 = arith.constant dense<0.000000e+00> : vector<64x32xf32>
    %69 = tpu.matmul %67, %68, %cst_28 {dimension_numbers = #tpu.dot_dimension_numbers<[1], [0], [0], [1], [0, 0, 1, 1], [], []>} : vector<64x8xf32>, vector<8x32xf32>, vector<64x32xf32> -> vector<64x32xf32>
    %70 = arith.addf %51, %69 : vector<64x32xf32>
    %71 = vector.extract_strided_slice %7 {offsets = [0, 24], sizes = [64, 8], strides = [1, 1]} : vector<64x32xf32> to vector<64x8xf32>
    %72 = vector.extract_strided_slice %8 {offsets = [0, 24], sizes = [64, 8], strides = [1, 1]} : vector<64x32xf32> to vector<64x8xf32>
    %cst_29 = arith.constant dense<0.000000e+00> : vector<64x64xf32>
    %73 = tpu.matmul %71, %72, %cst_29 {dimension_numbers = #tpu.dot_dimension_numbers<[1], [1], [0], [0], [0, 0, 1, 0], [], []>} : vector<64x8xf32>, vector<64x8xf32>, vector<64x64xf32> -> vector<64x64xf32>
    %74 = arith.addf %73, %10 : vector<64x64xf32>
    %cst_30 = arith.constant dense<0xFF800000> : vector<64xf32>
    %75 = vector.multi_reduction <maximumf>, %74, %cst_30 [1] : vector<64x64xf32> to vector<64xf32>
    %76 = vector.shape_cast %75 : vector<64xf32> to vector<64x1xf32>
    %77 = vector.broadcast %76 : vector<64x1xf32> to vector<64x64xf32>
    %78 = arith.subf %74, %77 : vector<64x64xf32>
    %79 = math.exp %78 : vector<64x64xf32>
    %cst_31 = arith.constant dense<0.000000e+00> : vector<64xf32>
    %80 = vector.multi_reduction <add>, %79, %cst_31 [1] : vector<64x64xf32> to vector<64xf32>
    %81 = vector.shape_cast %80 : vector<64xf32> to vector<64x1xf32>
    %82 = tpu.reciprocal %81 {approx = true} : vector<64x1xf32> -> vector<64x1xf32>
    %83 = vector.broadcast %82 : vector<64x1xf32> to vector<64x64xf32>
    %84 = arith.mulf %79, %83 : vector<64x64xf32>
    %85 = vector.extract_strided_slice %9 {offsets = [0, 24], sizes = [64, 8], strides = [1, 1]} : vector<64x32xf32> to vector<64x8xf32>
    %cst_32 = arith.constant dense<0.000000e+00> : vector<64x8xf32>
    %86 = tpu.matmul %84, %85, %cst_32 {dimension_numbers = #tpu.dot_dimension_numbers<[1], [0], [0], [1], [0, 0, 1, 1], [], []>} : vector<64x64xf32>, vector<64x8xf32>, vector<64x8xf32> -> vector<64x8xf32>
    %87 = vector.extract_strided_slice %11 {offsets = [24, 0], sizes = [8, 32], strides = [1, 1]} : vector<32x32xf32> to vector<8x32xf32>
    %cst_33 = arith.constant dense<0.000000e+00> : vector<64x32xf32>
    %88 = tpu.matmul %86, %87, %cst_33 {dimension_numbers = #tpu.dot_dimension_numbers<[1], [0], [0], [1], [0, 0, 1, 1], [], []>} : vector<64x8xf32>, vector<8x32xf32>, vector<64x32xf32> -> vector<64x32xf32>
    %89 = arith.addf %70, %88 : vector<64x32xf32>
    %90 = vector.broadcast %12 : vector<1x32xf32> to vector<64x32xf32>
    %91 = arith.addf %89, %90 : vector<64x32xf32>
    %c0_34 = arith.constant 0 : index
    %c0_35 = arith.constant 0 : index
    %92 = vector.load %arg9[%c0_34, %c0_35] : memref<32x96xf32, #tpu.memory_space<vmem>>, vector<32x96xf32>
    %cst_36 = arith.constant dense<0.000000e+00> : vector<64x96xf32>
    %93 = tpu.matmul %91, %92, %cst_36 {dimension_numbers = #tpu.dot_dimension_numbers<[1], [0], [0], [1], [0, 0, 1, 1], [], []>} : vector<64x32xf32>, vector<32x96xf32>, vector<64x96xf32> -> vector<64x96xf32>
    %c0_37 = arith.constant 0 : index
    %c0_38 = arith.constant 0 : index
    %94 = vector.load %arg10[%c0_37, %c0_38] : memref<1x96xf32, #tpu.memory_space<vmem>>, vector<1x96xf32>
    %95 = vector.broadcast %94 : vector<1x96xf32> to vector<64x96xf32>
    %96 = arith.addf %93, %95 : vector<64x96xf32>
    %97 = vector.extract_strided_slice %96 {offsets = [0, 0], sizes = [64, 32], strides = [1, 1]} : vector<64x96xf32> to vector<64x32xf32>
    %98 = vector.extract_strided_slice %96 {offsets = [0, 32], sizes = [64, 32], strides = [1, 1]} : vector<64x96xf32> to vector<64x32xf32>
    %99 = vector.extract_strided_slice %96 {offsets = [0, 64], sizes = [64, 32], strides = [1, 1]} : vector<64x96xf32> to vector<64x32xf32>
    %c0_39 = arith.constant 0 : index
    %c0_40 = arith.constant 0 : index
    %100 = vector.load %arg3[%c0_39, %c0_40] : memref<64x64xf32, #tpu.memory_space<vmem>>, vector<64x64xf32>
    %c0_41 = arith.constant 0 : index
    %c0_42 = arith.constant 0 : index
    %101 = vector.load %arg11[%c0_41, %c0_42] : memref<32x32xf32, #tpu.memory_space<vmem>>, vector<32x32xf32>
    %c0_43 = arith.constant 0 : index
    %c0_44 = arith.constant 0 : index
    %102 = vector.load %arg12[%c0_43, %c0_44] : memref<1x32xf32, #tpu.memory_space<vmem>>, vector<1x32xf32>
    %cst_45 = arith.constant 0.000000e+00 : f32
    %103 = vector.broadcast %cst_45 : f32 to vector<64x32xf32>
    %104 = vector.extract_strided_slice %97 {offsets = [0, 0], sizes = [64, 8], strides = [1, 1]} : vector<64x32xf32> to vector<64x8xf32>
    %105 = vector.extract_strided_slice %98 {offsets = [0, 0], sizes = [64, 8], strides = [1, 1]} : vector<64x32xf32> to vector<64x8xf32>
    %cst_46 = arith.constant dense<0.000000e+00> : vector<64x64xf32>
    %106 = tpu.matmul %104, %105, %cst_46 {dimension_numbers = #tpu.dot_dimension_numbers<[1], [1], [0], [0], [0, 0, 1, 0], [], []>} : vector<64x8xf32>, vector<64x8xf32>, vector<64x64xf32> -> vector<64x64xf32>
    %107 = arith.addf %106, %100 : vector<64x64xf32>
    %cst_47 = arith.constant dense<0xFF800000> : vector<64xf32>
    %108 = vector.multi_reduction <maximumf>, %107, %cst_47 [1] : vector<64x64xf32> to vector<64xf32>
    %109 = vector.shape_cast %108 : vector<64xf32> to vector<64x1xf32>
    %110 = vector.broadcast %109 : vector<64x1xf32> to vector<64x64xf32>
    %111 = arith.subf %107, %110 : vector<64x64xf32>
    %112 = math.exp %111 : vector<64x64xf32>
    %cst_48 = arith.constant dense<0.000000e+00> : vector<64xf32>
    %113 = vector.multi_reduction <add>, %112, %cst_48 [1] : vector<64x64xf32> to vector<64xf32>
    %114 = vector.shape_cast %113 : vector<64xf32> to vector<64x1xf32>
    %115 = tpu.reciprocal %114 {approx = true} : vector<64x1xf32> -> vector<64x1xf32>
    %116 = vector.broadcast %115 : vector<64x1xf32> to vector<64x64xf32>
    %117 = arith.mulf %112, %116 : vector<64x64xf32>
    %118 = vector.extract_strided_slice %99 {offsets = [0, 0], sizes = [64, 8], strides = [1, 1]} : vector<64x32xf32> to vector<64x8xf32>
    %cst_49 = arith.constant dense<0.000000e+00> : vector<64x8xf32>
    %119 = tpu.matmul %117, %118, %cst_49 {dimension_numbers = #tpu.dot_dimension_numbers<[1], [0], [0], [1], [0, 0, 1, 1], [], []>} : vector<64x64xf32>, vector<64x8xf32>, vector<64x8xf32> -> vector<64x8xf32>
    %120 = vector.extract_strided_slice %101 {offsets = [0, 0], sizes = [8, 32], strides = [1, 1]} : vector<32x32xf32> to vector<8x32xf32>
    %cst_50 = arith.constant dense<0.000000e+00> : vector<64x32xf32>
    %121 = tpu.matmul %119, %120, %cst_50 {dimension_numbers = #tpu.dot_dimension_numbers<[1], [0], [0], [1], [0, 0, 1, 1], [], []>} : vector<64x8xf32>, vector<8x32xf32>, vector<64x32xf32> -> vector<64x32xf32>
    %122 = arith.addf %103, %121 : vector<64x32xf32>
    %123 = vector.extract_strided_slice %97 {offsets = [0, 8], sizes = [64, 8], strides = [1, 1]} : vector<64x32xf32> to vector<64x8xf32>
    %124 = vector.extract_strided_slice %98 {offsets = [0, 8], sizes = [64, 8], strides = [1, 1]} : vector<64x32xf32> to vector<64x8xf32>
    %cst_51 = arith.constant dense<0.000000e+00> : vector<64x64xf32>
    %125 = tpu.matmul %123, %124, %cst_51 {dimension_numbers = #tpu.dot_dimension_numbers<[1], [1], [0], [0], [0, 0, 1, 0], [], []>} : vector<64x8xf32>, vector<64x8xf32>, vector<64x64xf32> -> vector<64x64xf32>
    %126 = arith.addf %125, %100 : vector<64x64xf32>
    %cst_52 = arith.constant dense<0xFF800000> : vector<64xf32>
    %127 = vector.multi_reduction <maximumf>, %126, %cst_52 [1] : vector<64x64xf32> to vector<64xf32>
    %128 = vector.shape_cast %127 : vector<64xf32> to vector<64x1xf32>
    %129 = vector.broadcast %128 : vector<64x1xf32> to vector<64x64xf32>
    %130 = arith.subf %126, %129 : vector<64x64xf32>
    %131 = math.exp %130 : vector<64x64xf32>
    %cst_53 = arith.constant dense<0.000000e+00> : vector<64xf32>
    %132 = vector.multi_reduction <add>, %131, %cst_53 [1] : vector<64x64xf32> to vector<64xf32>
    %133 = vector.shape_cast %132 : vector<64xf32> to vector<64x1xf32>
    %134 = tpu.reciprocal %133 {approx = true} : vector<64x1xf32> -> vector<64x1xf32>
    %135 = vector.broadcast %134 : vector<64x1xf32> to vector<64x64xf32>
    %136 = arith.mulf %131, %135 : vector<64x64xf32>
    %137 = vector.extract_strided_slice %99 {offsets = [0, 8], sizes = [64, 8], strides = [1, 1]} : vector<64x32xf32> to vector<64x8xf32>
    %cst_54 = arith.constant dense<0.000000e+00> : vector<64x8xf32>
    %138 = tpu.matmul %136, %137, %cst_54 {dimension_numbers = #tpu.dot_dimension_numbers<[1], [0], [0], [1], [0, 0, 1, 1], [], []>} : vector<64x64xf32>, vector<64x8xf32>, vector<64x8xf32> -> vector<64x8xf32>
    %139 = vector.extract_strided_slice %101 {offsets = [8, 0], sizes = [8, 32], strides = [1, 1]} : vector<32x32xf32> to vector<8x32xf32>
    %cst_55 = arith.constant dense<0.000000e+00> : vector<64x32xf32>
    %140 = tpu.matmul %138, %139, %cst_55 {dimension_numbers = #tpu.dot_dimension_numbers<[1], [0], [0], [1], [0, 0, 1, 1], [], []>} : vector<64x8xf32>, vector<8x32xf32>, vector<64x32xf32> -> vector<64x32xf32>
    %141 = arith.addf %122, %140 : vector<64x32xf32>
    %142 = vector.extract_strided_slice %97 {offsets = [0, 16], sizes = [64, 8], strides = [1, 1]} : vector<64x32xf32> to vector<64x8xf32>
    %143 = vector.extract_strided_slice %98 {offsets = [0, 16], sizes = [64, 8], strides = [1, 1]} : vector<64x32xf32> to vector<64x8xf32>
    %cst_56 = arith.constant dense<0.000000e+00> : vector<64x64xf32>
    %144 = tpu.matmul %142, %143, %cst_56 {dimension_numbers = #tpu.dot_dimension_numbers<[1], [1], [0], [0], [0, 0, 1, 0], [], []>} : vector<64x8xf32>, vector<64x8xf32>, vector<64x64xf32> -> vector<64x64xf32>
    %145 = arith.addf %144, %100 : vector<64x64xf32>
    %cst_57 = arith.constant dense<0xFF800000> : vector<64xf32>
    %146 = vector.multi_reduction <maximumf>, %145, %cst_57 [1] : vector<64x64xf32> to vector<64xf32>
    %147 = vector.shape_cast %146 : vector<64xf32> to vector<64x1xf32>
    %148 = vector.broadcast %147 : vector<64x1xf32> to vector<64x64xf32>
    %149 = arith.subf %145, %148 : vector<64x64xf32>
    %150 = math.exp %149 : vector<64x64xf32>
    %cst_58 = arith.constant dense<0.000000e+00> : vector<64xf32>
    %151 = vector.multi_reduction <add>, %150, %cst_58 [1] : vector<64x64xf32> to vector<64xf32>
    %152 = vector.shape_cast %151 : vector<64xf32> to vector<64x1xf32>
    %153 = tpu.reciprocal %152 {approx = true} : vector<64x1xf32> -> vector<64x1xf32>
    %154 = vector.broadcast %153 : vector<64x1xf32> to vector<64x64xf32>
    %155 = arith.mulf %150, %154 : vector<64x64xf32>
    %156 = vector.extract_strided_slice %99 {offsets = [0, 16], sizes = [64, 8], strides = [1, 1]} : vector<64x32xf32> to vector<64x8xf32>
    %cst_59 = arith.constant dense<0.000000e+00> : vector<64x8xf32>
    %157 = tpu.matmul %155, %156, %cst_59 {dimension_numbers = #tpu.dot_dimension_numbers<[1], [0], [0], [1], [0, 0, 1, 1], [], []>} : vector<64x64xf32>, vector<64x8xf32>, vector<64x8xf32> -> vector<64x8xf32>
    %158 = vector.extract_strided_slice %101 {offsets = [16, 0], sizes = [8, 32], strides = [1, 1]} : vector<32x32xf32> to vector<8x32xf32>
    %cst_60 = arith.constant dense<0.000000e+00> : vector<64x32xf32>
    %159 = tpu.matmul %157, %158, %cst_60 {dimension_numbers = #tpu.dot_dimension_numbers<[1], [0], [0], [1], [0, 0, 1, 1], [], []>} : vector<64x8xf32>, vector<8x32xf32>, vector<64x32xf32> -> vector<64x32xf32>
    %160 = arith.addf %141, %159 : vector<64x32xf32>
    %161 = vector.extract_strided_slice %97 {offsets = [0, 24], sizes = [64, 8], strides = [1, 1]} : vector<64x32xf32> to vector<64x8xf32>
    %162 = vector.extract_strided_slice %98 {offsets = [0, 24], sizes = [64, 8], strides = [1, 1]} : vector<64x32xf32> to vector<64x8xf32>
    %cst_61 = arith.constant dense<0.000000e+00> : vector<64x64xf32>
    %163 = tpu.matmul %161, %162, %cst_61 {dimension_numbers = #tpu.dot_dimension_numbers<[1], [1], [0], [0], [0, 0, 1, 0], [], []>} : vector<64x8xf32>, vector<64x8xf32>, vector<64x64xf32> -> vector<64x64xf32>
    %164 = arith.addf %163, %100 : vector<64x64xf32>
    %cst_62 = arith.constant dense<0xFF800000> : vector<64xf32>
    %165 = vector.multi_reduction <maximumf>, %164, %cst_62 [1] : vector<64x64xf32> to vector<64xf32>
    %166 = vector.shape_cast %165 : vector<64xf32> to vector<64x1xf32>
    %167 = vector.broadcast %166 : vector<64x1xf32> to vector<64x64xf32>
    %168 = arith.subf %164, %167 : vector<64x64xf32>
    %169 = math.exp %168 : vector<64x64xf32>
    %cst_63 = arith.constant dense<0.000000e+00> : vector<64xf32>
    %170 = vector.multi_reduction <add>, %169, %cst_63 [1] : vector<64x64xf32> to vector<64xf32>
    %171 = vector.shape_cast %170 : vector<64xf32> to vector<64x1xf32>
    %172 = tpu.reciprocal %171 {approx = true} : vector<64x1xf32> -> vector<64x1xf32>
    %173 = vector.broadcast %172 : vector<64x1xf32> to vector<64x64xf32>
    %174 = arith.mulf %169, %173 : vector<64x64xf32>
    %175 = vector.extract_strided_slice %99 {offsets = [0, 24], sizes = [64, 8], strides = [1, 1]} : vector<64x32xf32> to vector<64x8xf32>
    %cst_64 = arith.constant dense<0.000000e+00> : vector<64x8xf32>
    %176 = tpu.matmul %174, %175, %cst_64 {dimension_numbers = #tpu.dot_dimension_numbers<[1], [0], [0], [1], [0, 0, 1, 1], [], []>} : vector<64x64xf32>, vector<64x8xf32>, vector<64x8xf32> -> vector<64x8xf32>
    %177 = vector.extract_strided_slice %101 {offsets = [24, 0], sizes = [8, 32], strides = [1, 1]} : vector<32x32xf32> to vector<8x32xf32>
    %cst_65 = arith.constant dense<0.000000e+00> : vector<64x32xf32>
    %178 = tpu.matmul %176, %177, %cst_65 {dimension_numbers = #tpu.dot_dimension_numbers<[1], [0], [0], [1], [0, 0, 1, 1], [], []>} : vector<64x8xf32>, vector<8x32xf32>, vector<64x32xf32> -> vector<64x32xf32>
    %179 = arith.addf %160, %178 : vector<64x32xf32>
    %180 = vector.broadcast %102 : vector<1x32xf32> to vector<64x32xf32>
    %181 = arith.addf %179, %180 : vector<64x32xf32>
    %182 = arith.addf %0, %181 : vector<64x32xf32>
    %c0_66 = arith.constant 0 : index
    %c0_67 = arith.constant 0 : index
    %183 = vector.load %arg23[%c0_66, %c0_67] : memref<3x32xf32, #tpu.memory_space<vmem>>, vector<1x32xf32>
    %c0_68 = arith.constant 0 : index
    %c0_69 = arith.constant 0 : index
    %184 = vector.load %arg24[%c0_68, %c0_69] : memref<3x32xf32, #tpu.memory_space<vmem>>, vector<1x32xf32>
    %cst_70 = arith.constant dense<0.000000e+00> : vector<64xf32>
    %185 = vector.multi_reduction <add>, %182, %cst_70 [1] : vector<64x32xf32> to vector<64xf32>
    %186 = vector.shape_cast %185 : vector<64xf32> to vector<64x1xf32>
    %cst_71 = arith.constant 3.200000e+01 : f32
    %187 = vector.broadcast %cst_71 : f32 to vector<64x1xf32>
    %188 = arith.divf %186, %187 : vector<64x1xf32>
    %189 = vector.broadcast %188 : vector<64x1xf32> to vector<64x32xf32>
    %190 = arith.subf %182, %189 : vector<64x32xf32>
    %191 = arith.mulf %190, %190 : vector<64x32xf32>
    %cst_72 = arith.constant dense<0.000000e+00> : vector<64xf32>
    %192 = vector.multi_reduction <add>, %191, %cst_72 [1] : vector<64x32xf32> to vector<64xf32>
    %193 = vector.shape_cast %192 : vector<64xf32> to vector<64x1xf32>
    %cst_73 = arith.constant 3.200000e+01 : f32
    %194 = vector.broadcast %cst_73 : f32 to vector<64x1xf32>
    %195 = arith.divf %193, %194 : vector<64x1xf32>
    %196 = vector.broadcast %188 : vector<64x1xf32> to vector<64x32xf32>
    %197 = arith.subf %182, %196 : vector<64x32xf32>
    %cst_74 = arith.constant 9.99999974E-6 : f32
    %198 = vector.broadcast %cst_74 : f32 to vector<64x1xf32>
    %199 = arith.addf %195, %198 : vector<64x1xf32>
    %200 = math.rsqrt %199 : vector<64x1xf32>
    %201 = vector.broadcast %200 : vector<64x1xf32> to vector<64x32xf32>
    %202 = arith.mulf %197, %201 : vector<64x32xf32>
    %203 = vector.broadcast %183 : vector<1x32xf32> to vector<64x32xf32>
    %204 = arith.mulf %202, %203 : vector<64x32xf32>
    %205 = vector.broadcast %184 : vector<1x32xf32> to vector<64x32xf32>
    %206 = arith.addf %204, %205 : vector<64x32xf32>
    %c0_75 = arith.constant 0 : index
    %c0_76 = arith.constant 0 : index
    %207 = vector.load %arg13[%c0_75, %c0_76] : memref<32x32xf32, #tpu.memory_space<vmem>>, vector<32x32xf32>
    %cst_77 = arith.constant dense<0.000000e+00> : vector<64x32xf32>
    %208 = tpu.matmul %206, %207, %cst_77 {dimension_numbers = #tpu.dot_dimension_numbers<[1], [0], [0], [1], [0, 0, 1, 1], [], []>} : vector<64x32xf32>, vector<32x32xf32>, vector<64x32xf32> -> vector<64x32xf32>
    %c0_78 = arith.constant 0 : index
    %c0_79 = arith.constant 0 : index
    %209 = vector.load %arg14[%c0_78, %c0_79] : memref<1x32xf32, #tpu.memory_space<vmem>>, vector<1x32xf32>
    %210 = vector.broadcast %209 : vector<1x32xf32> to vector<64x32xf32>
    %211 = arith.addf %208, %210 : vector<64x32xf32>
    %c0_80 = arith.constant 0 : index
    %c0_81 = arith.constant 0 : index
    %212 = vector.load %arg15[%c0_80, %c0_81] : memref<32x64xf32, #tpu.memory_space<vmem>>, vector<32x64xf32>
    %cst_82 = arith.constant dense<0.000000e+00> : vector<64x64xf32>
    %213 = tpu.matmul %1, %212, %cst_82 {dimension_numbers = #tpu.dot_dimension_numbers<[1], [0], [0], [1], [0, 0, 1, 1], [], []>} : vector<64x32xf32>, vector<32x64xf32>, vector<64x64xf32> -> vector<64x64xf32>
    %c0_83 = arith.constant 0 : index
    %c0_84 = arith.constant 0 : index
    %214 = vector.load %arg16[%c0_83, %c0_84] : memref<1x64xf32, #tpu.memory_space<vmem>>, vector<1x64xf32>
    %215 = vector.broadcast %214 : vector<1x64xf32> to vector<64x64xf32>
    %216 = arith.addf %213, %215 : vector<64x64xf32>
    %217 = vector.extract_strided_slice %216 {offsets = [0, 0], sizes = [64, 32], strides = [1, 1]} : vector<64x64xf32> to vector<64x32xf32>
    %218 = vector.extract_strided_slice %216 {offsets = [0, 32], sizes = [64, 32], strides = [1, 1]} : vector<64x64xf32> to vector<64x32xf32>
    %c0_85 = arith.constant 0 : index
    %c0_86 = arith.constant 0 : index
    %219 = vector.load %arg4[%c0_85, %c0_86] : memref<64x64xf32, #tpu.memory_space<vmem>>, vector<64x64xf32>
    %c0_87 = arith.constant 0 : index
    %c0_88 = arith.constant 0 : index
    %220 = vector.load %arg17[%c0_87, %c0_88] : memref<32x32xf32, #tpu.memory_space<vmem>>, vector<32x32xf32>
    %c0_89 = arith.constant 0 : index
    %c0_90 = arith.constant 0 : index
    %221 = vector.load %arg18[%c0_89, %c0_90] : memref<1x32xf32, #tpu.memory_space<vmem>>, vector<1x32xf32>
    %cst_91 = arith.constant 0.000000e+00 : f32
    %222 = vector.broadcast %cst_91 : f32 to vector<64x32xf32>
    %223 = vector.extract_strided_slice %211 {offsets = [0, 0], sizes = [64, 8], strides = [1, 1]} : vector<64x32xf32> to vector<64x8xf32>
    %224 = vector.extract_strided_slice %217 {offsets = [0, 0], sizes = [64, 8], strides = [1, 1]} : vector<64x32xf32> to vector<64x8xf32>
    %cst_92 = arith.constant dense<0.000000e+00> : vector<64x64xf32>
    %225 = tpu.matmul %223, %224, %cst_92 {dimension_numbers = #tpu.dot_dimension_numbers<[1], [1], [0], [0], [0, 0, 1, 0], [], []>} : vector<64x8xf32>, vector<64x8xf32>, vector<64x64xf32> -> vector<64x64xf32>
    %226 = arith.addf %225, %219 : vector<64x64xf32>
    %cst_93 = arith.constant dense<0xFF800000> : vector<64xf32>
    %227 = vector.multi_reduction <maximumf>, %226, %cst_93 [1] : vector<64x64xf32> to vector<64xf32>
    %228 = vector.shape_cast %227 : vector<64xf32> to vector<64x1xf32>
    %229 = vector.broadcast %228 : vector<64x1xf32> to vector<64x64xf32>
    %230 = arith.subf %226, %229 : vector<64x64xf32>
    %231 = math.exp %230 : vector<64x64xf32>
    %cst_94 = arith.constant dense<0.000000e+00> : vector<64xf32>
    %232 = vector.multi_reduction <add>, %231, %cst_94 [1] : vector<64x64xf32> to vector<64xf32>
    %233 = vector.shape_cast %232 : vector<64xf32> to vector<64x1xf32>
    %234 = tpu.reciprocal %233 {approx = true} : vector<64x1xf32> -> vector<64x1xf32>
    %235 = vector.broadcast %234 : vector<64x1xf32> to vector<64x64xf32>
    %236 = arith.mulf %231, %235 : vector<64x64xf32>
    %237 = vector.extract_strided_slice %218 {offsets = [0, 0], sizes = [64, 8], strides = [1, 1]} : vector<64x32xf32> to vector<64x8xf32>
    %cst_95 = arith.constant dense<0.000000e+00> : vector<64x8xf32>
    %238 = tpu.matmul %236, %237, %cst_95 {dimension_numbers = #tpu.dot_dimension_numbers<[1], [0], [0], [1], [0, 0, 1, 1], [], []>} : vector<64x64xf32>, vector<64x8xf32>, vector<64x8xf32> -> vector<64x8xf32>
    %239 = vector.extract_strided_slice %220 {offsets = [0, 0], sizes = [8, 32], strides = [1, 1]} : vector<32x32xf32> to vector<8x32xf32>
    %cst_96 = arith.constant dense<0.000000e+00> : vector<64x32xf32>
    %240 = tpu.matmul %238, %239, %cst_96 {dimension_numbers = #tpu.dot_dimension_numbers<[1], [0], [0], [1], [0, 0, 1, 1], [], []>} : vector<64x8xf32>, vector<8x32xf32>, vector<64x32xf32> -> vector<64x32xf32>
    %241 = arith.addf %222, %240 : vector<64x32xf32>
    %242 = vector.extract_strided_slice %211 {offsets = [0, 8], sizes = [64, 8], strides = [1, 1]} : vector<64x32xf32> to vector<64x8xf32>
    %243 = vector.extract_strided_slice %217 {offsets = [0, 8], sizes = [64, 8], strides = [1, 1]} : vector<64x32xf32> to vector<64x8xf32>
    %cst_97 = arith.constant dense<0.000000e+00> : vector<64x64xf32>
    %244 = tpu.matmul %242, %243, %cst_97 {dimension_numbers = #tpu.dot_dimension_numbers<[1], [1], [0], [0], [0, 0, 1, 0], [], []>} : vector<64x8xf32>, vector<64x8xf32>, vector<64x64xf32> -> vector<64x64xf32>
    %245 = arith.addf %244, %219 : vector<64x64xf32>
    %cst_98 = arith.constant dense<0xFF800000> : vector<64xf32>
    %246 = vector.multi_reduction <maximumf>, %245, %cst_98 [1] : vector<64x64xf32> to vector<64xf32>
    %247 = vector.shape_cast %246 : vector<64xf32> to vector<64x1xf32>
    %248 = vector.broadcast %247 : vector<64x1xf32> to vector<64x64xf32>
    %249 = arith.subf %245, %248 : vector<64x64xf32>
    %250 = math.exp %249 : vector<64x64xf32>
    %cst_99 = arith.constant dense<0.000000e+00> : vector<64xf32>
    %251 = vector.multi_reduction <add>, %250, %cst_99 [1] : vector<64x64xf32> to vector<64xf32>
    %252 = vector.shape_cast %251 : vector<64xf32> to vector<64x1xf32>
    %253 = tpu.reciprocal %252 {approx = true} : vector<64x1xf32> -> vector<64x1xf32>
    %254 = vector.broadcast %253 : vector<64x1xf32> to vector<64x64xf32>
    %255 = arith.mulf %250, %254 : vector<64x64xf32>
    %256 = vector.extract_strided_slice %218 {offsets = [0, 8], sizes = [64, 8], strides = [1, 1]} : vector<64x32xf32> to vector<64x8xf32>
    %cst_100 = arith.constant dense<0.000000e+00> : vector<64x8xf32>
    %257 = tpu.matmul %255, %256, %cst_100 {dimension_numbers = #tpu.dot_dimension_numbers<[1], [0], [0], [1], [0, 0, 1, 1], [], []>} : vector<64x64xf32>, vector<64x8xf32>, vector<64x8xf32> -> vector<64x8xf32>
    %258 = vector.extract_strided_slice %220 {offsets = [8, 0], sizes = [8, 32], strides = [1, 1]} : vector<32x32xf32> to vector<8x32xf32>
    %cst_101 = arith.constant dense<0.000000e+00> : vector<64x32xf32>
    %259 = tpu.matmul %257, %258, %cst_101 {dimension_numbers = #tpu.dot_dimension_numbers<[1], [0], [0], [1], [0, 0, 1, 1], [], []>} : vector<64x8xf32>, vector<8x32xf32>, vector<64x32xf32> -> vector<64x32xf32>
    %260 = arith.addf %241, %259 : vector<64x32xf32>
    %261 = vector.extract_strided_slice %211 {offsets = [0, 16], sizes = [64, 8], strides = [1, 1]} : vector<64x32xf32> to vector<64x8xf32>
    %262 = vector.extract_strided_slice %217 {offsets = [0, 16], sizes = [64, 8], strides = [1, 1]} : vector<64x32xf32> to vector<64x8xf32>
    %cst_102 = arith.constant dense<0.000000e+00> : vector<64x64xf32>
    %263 = tpu.matmul %261, %262, %cst_102 {dimension_numbers = #tpu.dot_dimension_numbers<[1], [1], [0], [0], [0, 0, 1, 0], [], []>} : vector<64x8xf32>, vector<64x8xf32>, vector<64x64xf32> -> vector<64x64xf32>
    %264 = arith.addf %263, %219 : vector<64x64xf32>
    %cst_103 = arith.constant dense<0xFF800000> : vector<64xf32>
    %265 = vector.multi_reduction <maximumf>, %264, %cst_103 [1] : vector<64x64xf32> to vector<64xf32>
    %266 = vector.shape_cast %265 : vector<64xf32> to vector<64x1xf32>
    %267 = vector.broadcast %266 : vector<64x1xf32> to vector<64x64xf32>
    %268 = arith.subf %264, %267 : vector<64x64xf32>
    %269 = math.exp %268 : vector<64x64xf32>
    %cst_104 = arith.constant dense<0.000000e+00> : vector<64xf32>
    %270 = vector.multi_reduction <add>, %269, %cst_104 [1] : vector<64x64xf32> to vector<64xf32>
    %271 = vector.shape_cast %270 : vector<64xf32> to vector<64x1xf32>
    %272 = tpu.reciprocal %271 {approx = true} : vector<64x1xf32> -> vector<64x1xf32>
    %273 = vector.broadcast %272 : vector<64x1xf32> to vector<64x64xf32>
    %274 = arith.mulf %269, %273 : vector<64x64xf32>
    %275 = vector.extract_strided_slice %218 {offsets = [0, 16], sizes = [64, 8], strides = [1, 1]} : vector<64x32xf32> to vector<64x8xf32>
    %cst_105 = arith.constant dense<0.000000e+00> : vector<64x8xf32>
    %276 = tpu.matmul %274, %275, %cst_105 {dimension_numbers = #tpu.dot_dimension_numbers<[1], [0], [0], [1], [0, 0, 1, 1], [], []>} : vector<64x64xf32>, vector<64x8xf32>, vector<64x8xf32> -> vector<64x8xf32>
    %277 = vector.extract_strided_slice %220 {offsets = [16, 0], sizes = [8, 32], strides = [1, 1]} : vector<32x32xf32> to vector<8x32xf32>
    %cst_106 = arith.constant dense<0.000000e+00> : vector<64x32xf32>
    %278 = tpu.matmul %276, %277, %cst_106 {dimension_numbers = #tpu.dot_dimension_numbers<[1], [0], [0], [1], [0, 0, 1, 1], [], []>} : vector<64x8xf32>, vector<8x32xf32>, vector<64x32xf32> -> vector<64x32xf32>
    %279 = arith.addf %260, %278 : vector<64x32xf32>
    %280 = vector.extract_strided_slice %211 {offsets = [0, 24], sizes = [64, 8], strides = [1, 1]} : vector<64x32xf32> to vector<64x8xf32>
    %281 = vector.extract_strided_slice %217 {offsets = [0, 24], sizes = [64, 8], strides = [1, 1]} : vector<64x32xf32> to vector<64x8xf32>
    %cst_107 = arith.constant dense<0.000000e+00> : vector<64x64xf32>
    %282 = tpu.matmul %280, %281, %cst_107 {dimension_numbers = #tpu.dot_dimension_numbers<[1], [1], [0], [0], [0, 0, 1, 0], [], []>} : vector<64x8xf32>, vector<64x8xf32>, vector<64x64xf32> -> vector<64x64xf32>
    %283 = arith.addf %282, %219 : vector<64x64xf32>
    %cst_108 = arith.constant dense<0xFF800000> : vector<64xf32>
    %284 = vector.multi_reduction <maximumf>, %283, %cst_108 [1] : vector<64x64xf32> to vector<64xf32>
    %285 = vector.shape_cast %284 : vector<64xf32> to vector<64x1xf32>
    %286 = vector.broadcast %285 : vector<64x1xf32> to vector<64x64xf32>
    %287 = arith.subf %283, %286 : vector<64x64xf32>
    %288 = math.exp %287 : vector<64x64xf32>
    %cst_109 = arith.constant dense<0.000000e+00> : vector<64xf32>
    %289 = vector.multi_reduction <add>, %288, %cst_109 [1] : vector<64x64xf32> to vector<64xf32>
    %290 = vector.shape_cast %289 : vector<64xf32> to vector<64x1xf32>
    %291 = tpu.reciprocal %290 {approx = true} : vector<64x1xf32> -> vector<64x1xf32>
    %292 = vector.broadcast %291 : vector<64x1xf32> to vector<64x64xf32>
    %293 = arith.mulf %288, %292 : vector<64x64xf32>
    %294 = vector.extract_strided_slice %218 {offsets = [0, 24], sizes = [64, 8], strides = [1, 1]} : vector<64x32xf32> to vector<64x8xf32>
    %cst_110 = arith.constant dense<0.000000e+00> : vector<64x8xf32>
    %295 = tpu.matmul %293, %294, %cst_110 {dimension_numbers = #tpu.dot_dimension_numbers<[1], [0], [0], [1], [0, 0, 1, 1], [], []>} : vector<64x64xf32>, vector<64x8xf32>, vector<64x8xf32> -> vector<64x8xf32>
    %296 = vector.extract_strided_slice %220 {offsets = [24, 0], sizes = [8, 32], strides = [1, 1]} : vector<32x32xf32> to vector<8x32xf32>
    %cst_111 = arith.constant dense<0.000000e+00> : vector<64x32xf32>
    %297 = tpu.matmul %295, %296, %cst_111 {dimension_numbers = #tpu.dot_dimension_numbers<[1], [0], [0], [1], [0, 0, 1, 1], [], []>} : vector<64x8xf32>, vector<8x32xf32>, vector<64x32xf32> -> vector<64x32xf32>
    %298 = arith.addf %279, %297 : vector<64x32xf32>
    %299 = vector.broadcast %221 : vector<1x32xf32> to vector<64x32xf32>
    %300 = arith.addf %298, %299 : vector<64x32xf32>
    %301 = arith.addf %206, %300 : vector<64x32xf32>
    %c1 = arith.constant 1 : index
    %c0_112 = arith.constant 0 : index
    %302 = vector.load %arg23[%c1, %c0_112] : memref<3x32xf32, #tpu.memory_space<vmem>>, vector<1x32xf32>
    %c1_113 = arith.constant 1 : index
    %c0_114 = arith.constant 0 : index
    %303 = vector.load %arg24[%c1_113, %c0_114] : memref<3x32xf32, #tpu.memory_space<vmem>>, vector<1x32xf32>
    %cst_115 = arith.constant dense<0.000000e+00> : vector<64xf32>
    %304 = vector.multi_reduction <add>, %301, %cst_115 [1] : vector<64x32xf32> to vector<64xf32>
    %305 = vector.shape_cast %304 : vector<64xf32> to vector<64x1xf32>
    %cst_116 = arith.constant 3.200000e+01 : f32
    %306 = vector.broadcast %cst_116 : f32 to vector<64x1xf32>
    %307 = arith.divf %305, %306 : vector<64x1xf32>
    %308 = vector.broadcast %307 : vector<64x1xf32> to vector<64x32xf32>
    %309 = arith.subf %301, %308 : vector<64x32xf32>
    %310 = arith.mulf %309, %309 : vector<64x32xf32>
    %cst_117 = arith.constant dense<0.000000e+00> : vector<64xf32>
    %311 = vector.multi_reduction <add>, %310, %cst_117 [1] : vector<64x32xf32> to vector<64xf32>
    %312 = vector.shape_cast %311 : vector<64xf32> to vector<64x1xf32>
    %cst_118 = arith.constant 3.200000e+01 : f32
    %313 = vector.broadcast %cst_118 : f32 to vector<64x1xf32>
    %314 = arith.divf %312, %313 : vector<64x1xf32>
    %315 = vector.broadcast %307 : vector<64x1xf32> to vector<64x32xf32>
    %316 = arith.subf %301, %315 : vector<64x32xf32>
    %cst_119 = arith.constant 9.99999974E-6 : f32
    %317 = vector.broadcast %cst_119 : f32 to vector<64x1xf32>
    %318 = arith.addf %314, %317 : vector<64x1xf32>
    %319 = math.rsqrt %318 : vector<64x1xf32>
    %320 = vector.broadcast %319 : vector<64x1xf32> to vector<64x32xf32>
    %321 = arith.mulf %316, %320 : vector<64x32xf32>
    %322 = vector.broadcast %302 : vector<1x32xf32> to vector<64x32xf32>
    %323 = arith.mulf %321, %322 : vector<64x32xf32>
    %324 = vector.broadcast %303 : vector<1x32xf32> to vector<64x32xf32>
    %325 = arith.addf %323, %324 : vector<64x32xf32>
    %c0_120 = arith.constant 0 : index
    %c0_121 = arith.constant 0 : index
    %326 = vector.load %arg19[%c0_120, %c0_121] : memref<32x64xf32, #tpu.memory_space<vmem>>, vector<32x64xf32>
    %cst_122 = arith.constant dense<0.000000e+00> : vector<64x64xf32>
    %327 = tpu.matmul %325, %326, %cst_122 {dimension_numbers = #tpu.dot_dimension_numbers<[1], [0], [0], [1], [0, 0, 1, 1], [], []>} : vector<64x32xf32>, vector<32x64xf32>, vector<64x64xf32> -> vector<64x64xf32>
    %c0_123 = arith.constant 0 : index
    %c0_124 = arith.constant 0 : index
    %328 = vector.load %arg20[%c0_123, %c0_124] : memref<1x64xf32, #tpu.memory_space<vmem>>, vector<1x64xf32>
    %329 = vector.broadcast %328 : vector<1x64xf32> to vector<64x64xf32>
    %330 = arith.addf %327, %329 : vector<64x64xf32>
    %cst_125 = arith.constant 0.000000e+00 : f32
    %331 = vector.broadcast %cst_125 : f32 to vector<64x64xf32>
    %332 = arith.maximumf %330, %331 : vector<64x64xf32>
    %c0_126 = arith.constant 0 : index
    %c0_127 = arith.constant 0 : index
    %333 = vector.load %arg21[%c0_126, %c0_127] : memref<64x32xf32, #tpu.memory_space<vmem>>, vector<64x32xf32>
    %cst_128 = arith.constant dense<0.000000e+00> : vector<64x32xf32>
    %334 = tpu.matmul %332, %333, %cst_128 {dimension_numbers = #tpu.dot_dimension_numbers<[1], [0], [0], [1], [0, 0, 1, 1], [], []>} : vector<64x64xf32>, vector<64x32xf32>, vector<64x32xf32> -> vector<64x32xf32>
    %c0_129 = arith.constant 0 : index
    %c0_130 = arith.constant 0 : index
    %335 = vector.load %arg22[%c0_129, %c0_130] : memref<1x32xf32, #tpu.memory_space<vmem>>, vector<1x32xf32>
    %336 = vector.broadcast %335 : vector<1x32xf32> to vector<64x32xf32>
    %337 = arith.addf %334, %336 : vector<64x32xf32>
    %338 = arith.addf %325, %337 : vector<64x32xf32>
    %c2 = arith.constant 2 : index
    %c0_131 = arith.constant 0 : index
    %339 = vector.load %arg23[%c2, %c0_131] : memref<3x32xf32, #tpu.memory_space<vmem>>, vector<1x32xf32>
    %c2_132 = arith.constant 2 : index
    %c0_133 = arith.constant 0 : index
    %340 = vector.load %arg24[%c2_132, %c0_133] : memref<3x32xf32, #tpu.memory_space<vmem>>, vector<1x32xf32>
    %cst_134 = arith.constant dense<0.000000e+00> : vector<64xf32>
    %341 = vector.multi_reduction <add>, %338, %cst_134 [1] : vector<64x32xf32> to vector<64xf32>
    %342 = vector.shape_cast %341 : vector<64xf32> to vector<64x1xf32>
    %cst_135 = arith.constant 3.200000e+01 : f32
    %343 = vector.broadcast %cst_135 : f32 to vector<64x1xf32>
    %344 = arith.divf %342, %343 : vector<64x1xf32>
    %345 = vector.broadcast %344 : vector<64x1xf32> to vector<64x32xf32>
    %346 = arith.subf %338, %345 : vector<64x32xf32>
    %347 = arith.mulf %346, %346 : vector<64x32xf32>
    %cst_136 = arith.constant dense<0.000000e+00> : vector<64xf32>
    %348 = vector.multi_reduction <add>, %347, %cst_136 [1] : vector<64x32xf32> to vector<64xf32>
    %349 = vector.shape_cast %348 : vector<64xf32> to vector<64x1xf32>
    %cst_137 = arith.constant 3.200000e+01 : f32
    %350 = vector.broadcast %cst_137 : f32 to vector<64x1xf32>
    %351 = arith.divf %349, %350 : vector<64x1xf32>
    %352 = vector.broadcast %344 : vector<64x1xf32> to vector<64x32xf32>
    %353 = arith.subf %338, %352 : vector<64x32xf32>
    %cst_138 = arith.constant 9.99999974E-6 : f32
    %354 = vector.broadcast %cst_138 : f32 to vector<64x1xf32>
    %355 = arith.addf %351, %354 : vector<64x1xf32>
    %356 = math.rsqrt %355 : vector<64x1xf32>
    %357 = vector.broadcast %356 : vector<64x1xf32> to vector<64x32xf32>
    %358 = arith.mulf %353, %357 : vector<64x32xf32>
    %359 = vector.broadcast %339 : vector<1x32xf32> to vector<64x32xf32>
    %360 = arith.mulf %358, %359 : vector<64x32xf32>
    %361 = vector.broadcast %340 : vector<1x32xf32> to vector<64x32xf32>
    %362 = arith.addf %360, %361 : vector<64x32xf32>
    %c0_139 = arith.constant 0 : index
    %c0_140 = arith.constant 0 : index
    %363 = vector.load %arg25[%c0_139, %c0_140] : memref<64x32xf32, #tpu.memory_space<vmem>>, vector<64x32xf32>
    tpu.vector_store %arg25[%c0_139, %c0_140], %362 {strides = array<i32>} : memref<64x32xf32, #tpu.memory_space<vmem>>, vector<64x32xf32>,
    return
  }
}

</mosaic_0001>

<llo_original>
// kernel: decoder_layer.1
$region0: #{decoder_layer.1}
  #allocation0 [shape = 'u32[]', space=smem, size = 0x4, offset = 0x4, fixed_abs, tag = 'smem constant byte address 0x4 - core index']
  #allocation1 [shape = 'u32[144,128]{1,0:T(1,128)}', space=vmem, size = 0x12000, scoped, tag = 'internal scratch']
  %s0 = inlined_call_operand.vmem [shape: f32[64,32], index: 0, kind: input, shape index: {}]
  %s1 = inlined_call_operand.vmem [shape: f32[64,32], index: 1, kind: input, shape index: {}]
  %s2 = inlined_call_operand.vmem [shape: f32[64,64], index: 2, kind: input, shape index: {}]
  %s3 = inlined_call_operand.vmem [shape: f32[64,64], index: 3, kind: input, shape index: {}]
  %s4 = inlined_call_operand.vmem [shape: f32[64,64], index: 4, kind: input, shape index: {}]
  %s5 = inlined_call_operand.vmem [shape: f32[32,96], index: 5, kind: input, shape index: {}]
  %s6 = inlined_call_operand.vmem [shape: f32[1,96], index: 6, kind: input, shape index: {}]
  %s7 = inlined_call_operand.vmem [shape: f32[32,32], index: 7, kind: input, shape index: {}]
  %s8 = inlined_call_operand.vmem [shape: f32[1,32], index: 8, kind: input, shape index: {}]
  %s9 = inlined_call_operand.vmem [shape: f32[32,96], index: 9, kind: input, shape index: {}]
  %s10 = inlined_call_operand.vmem [shape: f32[1,96], index: 10, kind: input, shape index: {}]
  %s11 = inlined_call_operand.vmem [shape: f32[32,32], index: 11, kind: input, shape index: {}]
  %s12 = inlined_call_operand.vmem [shape: f32[1,32], index: 12, kind: input, shape index: {}]
  %s13 = inlined_call_operand.vmem [shape: f32[32,32], index: 13, kind: input, shape index: {}]
  %s14 = inlined_call_operand.vmem [shape: f32[1,32], index: 14, kind: input, shape index: {}]
  %s15 = inlined_call_operand.vmem [shape: f32[32,64], index: 15, kind: input, shape index: {}]
  %s16 = inlined_call_operand.vmem [shape: f32[1,64], index: 16, kind: input, shape index: {}]
  %s17 = inlined_call_operand.vmem [shape: f32[32,32], index: 17, kind: input, shape index: {}]
  %s18 = inlined_call_operand.vmem [shape: f32[1,32], index: 18, kind: input, shape index: {}]
  %s19 = inlined_call_operand.vmem [shape: f32[32,64], index: 19, kind: input, shape index: {}]
  %s20 = inlined_call_operand.vmem [shape: f32[1,64], index: 20, kind: input, shape index: {}]
  %s21 = inlined_call_operand.vmem [shape: f32[64,32], index: 21, kind: input, shape index: {}]
  %s22 = inlined_call_operand.vmem [shape: f32[1,32], index: 22, kind: input, shape index: {}]
  %s23 = inlined_call_operand.vmem [shape: f32[3,32], index: 23, kind: input, shape index: {}]
  %s24 = inlined_call_operand.vmem [shape: f32[3,32], index: 24, kind: input, shape index: {}]
  %s25 = inlined_call_operand.hbm [shape: f32[64,32], index: 25, kind: output, shape index: {}]
  %s26 = sld [smem:[#allocation0]]
  $region110: #{decoder_layer.1} parent=0
    _
  %s28 = ssub.s32 1, %s26
  %s29 = scalar_select 0, %s28, %s26
  $region1: #{decoder_layer.1} parent=0
    #allocation2 [shape = 'u8[32768]{0}', space=vmem, size = 0x8000, scoped, tag = 'output window, operand 0, single buffered']
    #allocation3 [shape = 's32[1]{0}', space=sflag, size = 0x4, scoped, tag = 'scoped memory for decoder_layer.1']
    %30 = vsyncpa [#allocation3], 0
    // Predicated region
    $region2: #{decoder_layer.1} parent=1 // pred_check
      _
    $region3: #{decoder_layer.1} parent=1 // pred_check_branch
      %32 = sbr.rel (0) target = $region5
    $region4: #{decoder_layer.1} parent=1 // pred_region
      _
    $region5: #{decoder_layer.1} parent=1 // pred_fallthru
      _
    // Predicated region
    $region6: #{decoder_layer.1} parent=1 // pred_check
      _
    $region7: #{decoder_layer.1} parent=1 // pred_check_branch
      %34 = sbr.rel (0) target = $region9
    $region8: #{decoder_layer.1} parent=1 // pred_region
      _
    $region9: #{decoder_layer.1} parent=1 // pred_fallthru
      _
    // Predicated region
    $region10: #{decoder_layer.1} parent=1 // pred_check
      _
    $region11: #{decoder_layer.1} parent=1 // pred_check_branch
      %36 = sbr.rel (0) target = $region13
    $region12: #{decoder_layer.1} parent=1 // pred_region
      _
    $region13: #{decoder_layer.1} parent=1 // pred_fallthru
      _
    // Predicated region
    $region14: #{decoder_layer.1} parent=1 // pred_check
      _
    $region15: #{decoder_layer.1} parent=1 // pred_check_branch
      %38 = sbr.rel (0) target = $region17
    $region16: #{decoder_layer.1} parent=1 // pred_region
      _
    $region17: #{decoder_layer.1} parent=1 // pred_fallthru
      _
    // Predicated region
    $region18: #{decoder_layer.1} parent=1 // pred_check
      _
    $region19: #{decoder_layer.1} parent=1 // pred_check_branch
      %40 = sbr.rel (0) target = $region21
    $region20: #{decoder_layer.1} parent=1 // pred_region
      _
    $region21: #{decoder_layer.1} parent=1 // pred_fallthru
      _
    // Predicated region
    $region22: #{decoder_layer.1} parent=1 // pred_check
      _
    $region23: #{decoder_layer.1} parent=1 // pred_check_branch
      %42 = sbr.rel (0) target = $region25
    $region24: #{decoder_layer.1} parent=1 // pred_region
      _
    $region25: #{decoder_layer.1} parent=1 // pred_fallthru
      _
    // Predicated region
    $region26: #{decoder_layer.1} parent=1 // pred_check
      _
    $region27: #{decoder_layer.1} parent=1 // pred_check_branch
      %44 = sbr.rel (0) target = $region29
    $region28: #{decoder_layer.1} parent=1 // pred_region
      _
    $region29: #{decoder_layer.1} parent=1 // pred_fallthru
      _
    // Predicated region
    $region30: #{decoder_layer.1} parent=1 // pred_check
      _
    $region31: #{decoder_layer.1} parent=1 // pred_check_branch
      %46 = sbr.rel (0) target = $region33
    $region32: #{decoder_layer.1} parent=1 // pred_region
      _
    $region33: #{decoder_layer.1} parent=1 // pred_fallthru
      _
    // Predicated region
    $region34: #{decoder_layer.1} parent=1 // pred_check
      _
    $region35: #{decoder_layer.1} parent=1 // pred_check_branch
      %48 = sbr.rel (0) target = $region37
    $region36: #{decoder_layer.1} parent=1 // pred_region
      _
    $region37: #{decoder_layer.1} parent=1 // pred_fallthru
      _
    // Predicated region
    $region38: #{decoder_layer.1} parent=1 // pred_check
      _
    $region39: #{decoder_layer.1} parent=1 // pred_check_branch
      %50 = sbr.rel (0) target = $region41
    $region40: #{decoder_layer.1} parent=1 // pred_region
      _
    $region41: #{decoder_layer.1} parent=1 // pred_fallthru
      _
    // Predicated region
    $region42: #{decoder_layer.1} parent=1 // pred_check
      _
    $region43: #{decoder_layer.1} parent=1 // pred_check_branch
      %52 = sbr.rel (0) target = $region45
    $region44: #{decoder_layer.1} parent=1 // pred_region
      _
    $region45: #{decoder_layer.1} parent=1 // pred_fallthru
      _
    // Predicated region
    $region46: #{decoder_layer.1} parent=1 // pred_check
      _
    $region47: #{decoder_layer.1} parent=1 // pred_check_branch
      %54 = sbr.rel (0) target = $region49
    $region48: #{decoder_layer.1} parent=1 // pred_region
      _
    $region49: #{decoder_layer.1} parent=1 // pred_fallthru
      _
    // Predicated region
    $region50: #{decoder_layer.1} parent=1 // pred_check
      _
    $region51: #{decoder_layer.1} parent=1 // pred_check_branch
      %56 = sbr.rel (0) target = $region53
    $region52: #{decoder_layer.1} parent=1 // pred_region
      _
    $region53: #{decoder_layer.1} parent=1 // pred_fallthru
      _
    // Predicated region
    $region54: #{decoder_layer.1} parent=1 // pred_check
      _
    $region55: #{decoder_layer.1} parent=1 // pred_check_branch
      %58 = sbr.rel (0) target = $region57
    $region56: #{decoder_layer.1} parent=1 // pred_region
      _
    $region57: #{decoder_layer.1} parent=1 // pred_fallthru
      _
    // Predicated region
    $region58: #{decoder_layer.1} parent=1 // pred_check
      _
    $region59: #{decoder_layer.1} parent=1 // pred_check_branch
      %60 = sbr.rel (0) target = $region61
    $region60: #{decoder_layer.1} parent=1 // pred_region
      _
    $region61: #{decoder_layer.1} parent=1 // pred_fallthru
      _
    // Predicated region
    $region62: #{decoder_layer.1} parent=1 // pred_check
      _
    $region63: #{decoder_layer.1} parent=1 // pred_check_branch
      %62 = sbr.rel (0) target = $region65
    $region64: #{decoder_layer.1} parent=1 // pred_region
      _
    $region65: #{decoder_layer.1} parent=1 // pred_fallthru
      _
    // Predicated region
    $region66: #{decoder_layer.1} parent=1 // pred_check
      _
    $region67: #{decoder_layer.1} parent=1 // pred_check_branch
      %64 = sbr.rel (0) target = $region69
    $region68: #{decoder_layer.1} parent=1 // pred_region
      _
    $region69: #{decoder_layer.1} parent=1 // pred_fallthru
      _
    // Predicated region
    $region70: #{decoder_layer.1} parent=1 // pred_check
      _
    $region71: #{decoder_layer.1} parent=1 // pred_check_branch
      %66 = sbr.rel (0) target = $region73
    $region72: #{decoder_layer.1} parent=1 // pred_region
      _
    $region73: #{decoder_layer.1} parent=1 // pred_fallthru
      _
    // Predicated region
    $region74: #{decoder_layer.1} parent=1 // pred_check
      _
    $region75: #{decoder_layer.1} parent=1 // pred_check_branch
      %68 = sbr.rel (0) target = $region77
    $region76: #{decoder_layer.1} parent=1 // pred_region
      _
    $region77: #{decoder_layer.1} parent=1 // pred_fallthru
      _
    // Predicated region
    $region78: #{decoder_layer.1} parent=1 // pred_check
      _
    $region79: #{decoder_layer.1} parent=1 // pred_check_branch
      %70 = sbr.rel (0) target = $region81
    $region80: #{decoder_layer.1} parent=1 // pred_region
      _
    $region81: #{decoder_layer.1} parent=1 // pred_fallthru
      _
    // Predicated region
    $region82: #{decoder_layer.1} parent=1 // pred_check
      _
    $region83: #{decoder_layer.1} parent=1 // pred_check_branch
      %72 = sbr.rel (0) target = $region85
    $region84: #{decoder_layer.1} parent=1 // pred_region
      _
    $region85: #{decoder_layer.1} parent=1 // pred_fallthru
      _
    // Predicated region
    $region86: #{decoder_layer.1} parent=1 // pred_check
      _
    $region87: #{decoder_layer.1} parent=1 // pred_check_branch
      %74 = sbr.rel (0) target = $region89
    $region88: #{decoder_layer.1} parent=1 // pred_region
      _
    $region89: #{decoder_layer.1} parent=1 // pred_fallthru
      _
    // Predicated region
    $region90: #{decoder_layer.1} parent=1 // pred_check
      _
    $region91: #{decoder_layer.1} parent=1 // pred_check_branch
      %76 = sbr.rel (0) target = $region93
    $region92: #{decoder_layer.1} parent=1 // pred_region
      _
    $region93: #{decoder_layer.1} parent=1 // pred_fallthru
      _
    // Predicated region
    $region94: #{decoder_layer.1} parent=1 // pred_check
      _
    $region95: #{decoder_layer.1} parent=1 // pred_check_branch
      %78 = sbr.rel (0) target = $region97
    $region96: #{decoder_layer.1} parent=1 // pred_region
      _
    $region97: #{decoder_layer.1} parent=1 // pred_fallthru
      _
    // Predicated region
    $region98: #{decoder_layer.1} parent=1 // pred_check
      _
    $region99: #{decoder_layer.1} parent=1 // pred_check_branch
      %80 = sbr.rel (0) target = $region101
    $region100: #{decoder_layer.1} parent=1 // pred_region
      _
    $region101: #{decoder_layer.1} parent=1 // pred_fallthru
      _
    %v81 = vld [vmem:[%s0] sm:$0xff]
    %v82 = vld [vmem:[%s0 + $0x8] sm:$0xff]
    %v83 = vld [vmem:[%s0 + $0x10] sm:$0xff]
    %v84 = vld [vmem:[%s0 + $0x18] sm:$0xff]
    %v85 = vld [vmem:[%s0 + $0x20] sm:$0xff]
    %v86 = vld [vmem:[%s0 + $0x28] sm:$0xff]
    %v87 = vld [vmem:[%s0 + $0x30] sm:$0xff]
    %v88 = vld [vmem:[%s0 + $0x38] sm:$0xff]
    %v89 = vld [vmem:[%s1] sm:$0xff]
    %v90 = vld [vmem:[%s1 + $0x8] sm:$0xff]
    %v91 = vld [vmem:[%s1 + $0x10] sm:$0xff]
    %v92 = vld [vmem:[%s1 + $0x18] sm:$0xff]
    %v93 = vld [vmem:[%s1 + $0x20] sm:$0xff]
    %v94 = vld [vmem:[%s1 + $0x28] sm:$0xff]
    %v95 = vld [vmem:[%s1 + $0x30] sm:$0xff]
    %v96 = vld [vmem:[%s1 + $0x38] sm:$0xff]
    %v97 = vld [vmem:[%s5] sm:$0xff]
    %v98 = vld [vmem:[%s5 + $0x8] sm:$0xff]
    %v99 = vld [vmem:[%s5 + $0x10] sm:$0xff]
    %v100 = vld [vmem:[%s5 + $0x18] sm:$0xff]
    %v101 = vld [vmem:[%s6] sm:$0x1]
    %v103 = vlaneseq
    %v104 = vshrl.u32 %v103, 7
    %v105 = vsub.s32 0, %v104
    %v106 = vrot.slane %v101, %v105
    %vm108 = vcmask 261120
    %v110 = vsel %vm108, %v81, 0
    %v113 = vsel %vm108, %v82, 0
    %v116 = vsel %vm108, %v83, 0
    %v119 = vsel %vm108, %v84, 0
    %v122 = vsel %vm108, %v85, 0
    %v125 = vsel %vm108, %v86, 0
    %v128 = vsel %vm108, %v87, 0
    %v131 = vsel %vm108, %v88, 0
    %133 = vmatprep.subr.mxu0 0.0
    %134 = vmatpush1.msra.mxu0 %v97
    %135 = vmatprep.subr.mxu0 0.0
    %136 = vmatpush1.msra.mxu0 %v98
    %137 = vmatprep.subr.mxu0 0.0
    %138 = vmatpush1.msra.mxu0 %v99
    %139 = vmatprep.subr.mxu0 0.0
    %140 = vmatpush1.msra.mxu0 %v100
    %141 = vmatprep.subr.mxu0 0.0
    %142 = vmatpush1.msra.mxu0 0.0
    %143 = vmatprep.subr.mxu0 0.0
    %144 = vmatpush1.msra.mxu0 0.0
    %145 = vmatprep.subr.mxu0 0.0
    %146 = vmatpush1.msra.mxu0 0.0
    %147 = vmatprep.subr.mxu0 0.0
    %148 = vmatpush1.msra.mxu0 0.0
    %149 = vmatprep.subr.mxu0 0.0
    %150 = vmatpush1.msra.mxu0 0.0
    %151 = vmatprep.subr.mxu0 0.0
    %152 = vmatpush1.msra.mxu0 0.0
    %153 = vmatprep.subr.mxu0 0.0
    %154 = vmatpush1.msra.mxu0 0.0
    %155 = vmatprep.subr.mxu0 0.0
    %156 = vmatpush1.msra.mxu0 0.0
    %157 = vmatprep.subr.mxu0 0.0
    %158 = vmatpush1.msra.mxu0 0.0
    %159 = vmatprep.subr.mxu0 0.0
    %160 = vmatpush1.msra.mxu0 0.0
    %161 = vmatprep.subr.mxu0 0.0
    %162 = vmatpush1.msra.mxu0 0.0
    %163 = vmatprep.subr.mxu0 0.0
    %164 = vmatpush1.msra.mxu0 0.0
    %165 = vmatprep.subr.mxu0 0.0
    %166 = vmatpush1.msra.mxu0 0.0
    %167 = vmatprep.subr.mxu0 0.0
    %168 = vmatpush1.msra.mxu0 0.0
    %169 = vmatprep.subr.mxu0 0.0
    %170 = vmatpush1.msra.mxu0 0.0
    %171 = vmatprep.subr.mxu0 0.0
    %172 = vmatpush1.msra.mxu0 0.0
    %173 = vmatprep.subr.mxu0 0.0
    %174 = vmatpush1.msra.mxu0 0.0
    %175 = vmatprep.subr.mxu0 0.0
    %176 = vmatpush1.msra.mxu0 0.0
    %177 = vmatprep.subr.mxu0 0.0
    %178 = vmatpush1.msra.mxu0 0.0
    %179 = vmatprep.subr.mxu0 0.0
    %180 = vmatpush1.msra.mxu0 0.0
    %181 = vmatprep.subr.mxu0 0.0
    %182 = vmatpush1.msra.mxu0 0.0
    %183 = vmatprep.subr.mxu0 0.0
    %184 = vmatpush1.msra.mxu0 0.0
    %185 = vmatprep.subr.mxu0 0.0
    %186 = vmatpush1.msra.mxu0 0.0
    %187 = vmatprep.subr.mxu0 0.0
    %188 = vmatpush1.msra.mxu0 0.0
    %189 = vmatprep.subr.mxu0 0.0
    %190 = vmatpush1.msra.mxu0 0.0
    %191 = vmatprep.subr.mxu0 0.0
    %192 = vmatpush1.msra.mxu0 0.0
    %193 = vmatprep.subr.mxu0 0.0
    %194 = vmatpush1.msra.mxu0 0.0
    %195 = vmatprep.subr.mxu0 0.0
    %196 = vmatpush1.msra.mxu0 0.0
    %197 = vmatprep.mubr.f32.mxu0 0.0
    %198 = vmatmul.mubr.f32.gmra.mrb[0].mxu0 %v110
    %v199 = vpop.f32.mrb[0].mxu0
    %v200 = vadd.f32 %v106, %v199
    %v201 = vpop.f32.mrb[0].mxu0
    %202 = vmatprep.mubr.f32.mxu0 0.0
    %203 = vmatmul.mubr.f32.gmra.mrb[0].mxu0 %v113
    %v204 = vpop.f32.mrb[0].mxu0
    %v205 = vadd.f32 %v106, %v204
    %v206 = vpop.f32.mrb[0].mxu0
    %207 = vmatprep.mubr.f32.mxu0 0.0
    %208 = vmatmul.mubr.f32.gmra.mrb[0].mxu0 %v116
    %v209 = vpop.f32.mrb[0].mxu0
    %v210 = vadd.f32 %v106, %v209
    %v211 = vpop.f32.mrb[0].mxu0
    %212 = vmatprep.mubr.f32.mxu0 0.0
    %213 = vmatmul.mubr.f32.gmra.mrb[0].mxu0 %v119
    %v214 = vpop.f32.mrb[0].mxu0
    %v215 = vadd.f32 %v106, %v214
    %v216 = vpop.f32.mrb[0].mxu0
    %217 = vmatprep.mubr.f32.mxu0 0.0
    %218 = vmatmul.mubr.f32.gmra.mrb[0].mxu0 %v122
    %v219 = vpop.f32.mrb[0].mxu0
    %v220 = vadd.f32 %v106, %v219
    %v221 = vpop.f32.mrb[0].mxu0
    %222 = vmatprep.mubr.f32.mxu0 0.0
    %223 = vmatmul.mubr.f32.gmra.mrb[0].mxu0 %v125
    %v224 = vpop.f32.mrb[0].mxu0
    %v225 = vadd.f32 %v106, %v224
    %v226 = vpop.f32.mrb[0].mxu0
    %227 = vmatprep.mubr.f32.mxu0 0.0
    %228 = vmatmul.mubr.f32.gmra.mrb[0].mxu0 %v128
    %v229 = vpop.f32.mrb[0].mxu0
    %v230 = vadd.f32 %v106, %v229
    %v231 = vpop.f32.mrb[0].mxu0
    %232 = vmatprep.mubr.f32.mxu0 0.0
    %233 = vmatmul.mubr.f32.gmra.mrb[0].mxu0 %v131
    %v234 = vpop.f32.mrb[0].mxu0
    %v235 = vadd.f32 %v106, %v234
    %v236 = vpop.f32.mrb[0].mxu0
    %237 = vdwg.mxu0
    %v238 = vld [vmem:[%s2] sm:$0xff]
    %v239 = vld [vmem:[%s2 + $0x8] sm:$0xff]
    %v240 = vld [vmem:[%s2 + $0x10] sm:$0xff]
    %v241 = vld [vmem:[%s2 + $0x18] sm:$0xff]
    %v242 = vld [vmem:[%s2 + $0x20] sm:$0xff]
    %v243 = vld [vmem:[%s2 + $0x28] sm:$0xff]
    %v244 = vld [vmem:[%s2 + $0x30] sm:$0xff]
    %v245 = vld [vmem:[%s2 + $0x38] sm:$0xff]
    %v246 = vld [vmem:[%s7] sm:$0xff]
    %v247 = vld [vmem:[%s7 + $0x8] sm:$0xff]
    %v248 = vld [vmem:[%s7 + $0x10] sm:$0xff]
    %v249 = vld [vmem:[%s7 + $0x18] sm:$0xff]
    %v250 = vld [vmem:[%s8] sm:$0x1]
    %259 = vrot.lane.b32.xlu0 %v200, 96
    %v260 = vpop.permute.xlu0 %259
    %261 = vrot.lane.b32.xlu0 %v205, 96
    %v262 = vpop.permute.xlu0 %261
    %263 = vrot.lane.b32.xlu0 %v210, 96
    %v264 = vpop.permute.xlu0 %263
    %265 = vrot.lane.b32.xlu0 %v215, 96
    %v266 = vpop.permute.xlu0 %265
    %267 = vrot.lane.b32.xlu0 %v220, 96
    %v268 = vpop.permute.xlu0 %267
    %269 = vrot.lane.b32.xlu0 %v225, 96
    %v270 = vpop.permute.xlu0 %269
    %271 = vrot.lane.b32.xlu0 %v230, 96
    %v272 = vpop.permute.xlu0 %271
    %273 = vrot.lane.b32.xlu0 %v235, 96
    %v274 = vpop.permute.xlu0 %273
    %vm275 = vcmask 64512
    %v276 = vsel %vm275, %v200, 0
    %v278 = vsel %vm275, %v205, 0
    %v280 = vsel %vm275, %v210, 0
    %v282 = vsel %vm275, %v215, 0
    %v284 = vsel %vm275, %v220, 0
    %v286 = vsel %vm275, %v225, 0
    %v288 = vsel %vm275, %v230, 0
    %v290 = vsel %vm275, %v235, 0
    %v292 = vsel %vm275, %v260, 0
    %v294 = vsel %vm275, %v262, 0
    %v296 = vsel %vm275, %v264, 0
    %v298 = vsel %vm275, %v266, 0
    %v300 = vsel %vm275, %v268, 0
    %v302 = vsel %vm275, %v270, 0
    %v304 = vsel %vm275, %v272, 0
    %v306 = vsel %vm275, %v274, 0
    %308 = vmatprep.subr.mxu0 0.0
    %309 = vmatpush1.xpose.msra.mxu0 %v292
    %310 = vmatprep.subr.mxu0 0.0
    %311 = vmatpush1.xpose.msra.mxu0 %v294
    %312 = vmatprep.subr.mxu0 0.0
    %313 = vmatpush1.xpose.msra.mxu0 %v296
    %314 = vmatprep.subr.mxu0 0.0
    %315 = vmatpush1.xpose.msra.mxu0 %v298
    %316 = vmatprep.subr.mxu0 0.0
    %317 = vmatpush1.xpose.msra.mxu0 %v300
    %318 = vmatprep.subr.mxu0 0.0
    %319 = vmatpush1.xpose.msra.mxu0 %v302
    %320 = vmatprep.subr.mxu0 0.0
    %321 = vmatpush1.xpose.msra.mxu0 %v304
    %322 = vmatprep.subr.mxu0 0.0
    %323 = vmatpush1.xpose.msra.mxu0 %v306
    %324 = vmatprep.subr.mxu0 0.0
    %325 = vmatpush1.xpose.msra.mxu0 0.0
    %326 = vmatprep.subr.mxu0 0.0
    %327 = vmatpush1.xpose.msra.mxu0 0.0
    %328 = vmatprep.subr.mxu0 0.0
    %329 = vmatpush1.xpose.msra.mxu0 0.0
    %330 = vmatprep.subr.mxu0 0.0
    %331 = vmatpush1.xpose.msra.mxu0 0.0
    %332 = vmatprep.subr.mxu0 0.0
    %333 = vmatpush1.xpose.msra.mxu0 0.0
    %334 = vmatprep.subr.mxu0 0.0
    %335 = vmatpush1.xpose.msra.mxu0 0.0
    %336 = vmatprep.subr.mxu0 0.0
    %337 = vmatpush1.xpose.msra.mxu0 0.0
    %338 = vmatprep.subr.mxu0 0.0
    %339 = vmatpush1.xpose.msra.mxu0 0.0
    %340 = vmatprep.subr.mxu0 0.0
    %341 = vmatpush1.xpose.msra.mxu0 0.0
    %342 = vmatprep.subr.mxu0 0.0
    %343 = vmatpush1.xpose.msra.mxu0 0.0
    %344 = vmatprep.subr.mxu0 0.0
    %345 = vmatpush1.xpose.msra.mxu0 0.0
    %346 = vmatprep.subr.mxu0 0.0
    %347 = vmatpush1.xpose.msra.mxu0 0.0
    %348 = vmatprep.subr.mxu0 0.0
    %349 = vmatpush1.xpose.msra.mxu0 0.0
    %350 = vmatprep.subr.mxu0 0.0
    %351 = vmatpush1.xpose.msra.mxu0 0.0
    %352 = vmatprep.subr.mxu0 0.0
    %353 = vmatpush1.xpose.msra.mxu0 0.0
    %354 = vmatprep.subr.mxu0 0.0
    %355 = vmatpush1.xpose.msra.mxu0 0.0
    %356 = vmatprep.subr.mxu0 0.0
    %357 = vmatpush1.xpose.msra.mxu0 0.0
    %358 = vmatprep.subr.mxu0 0.0
    %359 = vmatpush1.xpose.msra.mxu0 0.0
    %360 = vmatprep.subr.mxu0 0.0
    %361 = vmatpush1.xpose.msra.mxu0 0.0
    %362 = vmatprep.subr.mxu0 0.0
    %363 = vmatpush1.xpose.msra.mxu0 0.0
    %364 = vmatprep.subr.mxu0 0.0
    %365 = vmatpush1.xpose.msra.mxu0 0.0
    %366 = vmatprep.subr.mxu0 0.0
    %367 = vmatpush1.xpose.msra.mxu0 0.0
    %368 = vmatprep.subr.mxu0 0.0
    %369 = vmatpush1.xpose.msra.mxu0 0.0
    %370 = vmatprep.subr.mxu0 0.0
    %371 = vmatpush1.xpose.msra.mxu0 0.0
    %372 = vmatprep.mubr.f32.mxu0 0.0
    %373 = vmatmul.mubr.f32.gmra.mrb[0].mxu0 %v276
    %v374 = vpop.f32.mrb[0].mxu0
    %v375 = vadd.f32 %v238, %v374
    %v376 = vpop.f32.mrb[0].mxu0
    %377 = vmatprep.mubr.f32.mxu0 0.0
    %378 = vmatmul.mubr.f32.gmra.mrb[0].mxu0 %v278
    %v379 = vpop.f32.mrb[0].mxu0
    %v380 = vadd.f32 %v239, %v379
    %v381 = vpop.f32.mrb[0].mxu0
    %382 = vmatprep.mubr.f32.mxu0 0.0
    %383 = vmatmul.mubr.f32.gmra.mrb[0].mxu0 %v280
    %v384 = vpop.f32.mrb[0].mxu0
    %v385 = vadd.f32 %v240, %v384
    %v386 = vpop.f32.mrb[0].mxu0
    %387 = vmatprep.mubr.f32.mxu0 0.0
    %388 = vmatmul.mubr.f32.gmra.mrb[0].mxu0 %v282
    %v389 = vpop.f32.mrb[0].mxu0
    %v390 = vadd.f32 %v241, %v389
    %v391 = vpop.f32.mrb[0].mxu0
    %392 = vmatprep.mubr.f32.mxu0 0.0
    %393 = vmatmul.mubr.f32.gmra.mrb[0].mxu0 %v284
    %v394 = vpop.f32.mrb[0].mxu0
    %v395 = vadd.f32 %v242, %v394
    %v396 = vpop.f32.mrb[0].mxu0
    %397 = vmatprep.mubr.f32.mxu0 0.0
    %398 = vmatmul.mubr.f32.gmra.mrb[0].mxu0 %v286
    %v399 = vpop.f32.mrb[0].mxu0
    %v400 = vadd.f32 %v243, %v399
    %v401 = vpop.f32.mrb[0].mxu0
    %402 = vmatprep.mubr.f32.mxu0 0.0
    %403 = vmatmul.mubr.f32.gmra.mrb[0].mxu0 %v288
    %v404 = vpop.f32.mrb[0].mxu0
    %v405 = vadd.f32 %v244, %v404
    %v406 = vpop.f32.mrb[0].mxu0
    %407 = vmatprep.mubr.f32.mxu0 0.0
    %408 = vmatmul.mubr.f32.gmra.mrb[0].mxu0 %v290
    %v409 = vpop.f32.mrb[0].mxu0
    %v410 = vadd.f32 %v245, %v409
    %v411 = vpop.f32.mrb[0].mxu0
    %412 = vdwg.mxu0
    %vm413 = vcmask 523264
    %v414 = vsel %vm413, %v375, -inf
    %415 = vmax.xlane.f32.xlu0 %v414
    %v416 = vpop.xlane.xlu0 %415
    %v417 = vsel %vm413, %v380, -inf
    %418 = vmax.xlane.f32.xlu0 %v417
    %v419 = vpop.xlane.xlu0 %418
    %v420 = vsel %vm413, %v385, -inf
    %421 = vmax.xlane.f32.xlu0 %v420
    %v422 = vpop.xlane.xlu0 %421
    %v423 = vsel %vm413, %v390, -inf
    %424 = vmax.xlane.f32.xlu0 %v423
    %v425 = vpop.xlane.xlu0 %424
    %v426 = vsel %vm413, %v395, -inf
    %427 = vmax.xlane.f32.xlu0 %v426
    %v428 = vpop.xlane.xlu0 %427
    %v429 = vsel %vm413, %v400, -inf
    %430 = vmax.xlane.f32.xlu0 %v429
    %v431 = vpop.xlane.xlu0 %430
    %v432 = vsel %vm413, %v405, -inf
    %433 = vmax.xlane.f32.xlu0 %v432
    %v434 = vpop.xlane.xlu0 %433
    %v435 = vsel %vm413, %v410, -inf
    %436 = vmax.xlane.f32.xlu0 %v435
    %v437 = vpop.xlane.xlu0 %436
    %v438 = vsub.f32 %v375, %v416
    %v439 = vsub.f32 %v380, %v419
    %v440 = vsub.f32 %v385, %v422
    %v441 = vsub.f32 %v390, %v425
    %v442 = vsub.f32 %v395, %v428
    %v443 = vsub.f32 %v400, %v431
    %v444 = vsub.f32 %v405, %v434
    %v445 = vsub.f32 %v410, %v437
    %v446 = vmul.f32 %v438, 1.442695
    %v447 = vpow.pop %v446
    %v448 = vmul.f32 %v439, 1.442695
    %v449 = vpow.pop %v448
    %v450 = vmul.f32 %v440, 1.442695
    %v451 = vpow.pop %v450
    %v452 = vmul.f32 %v441, 1.442695
    %v453 = vpow.pop %v452
    %v454 = vmul.f32 %v442, 1.442695
    %v455 = vpow.pop %v454
    %v456 = vmul.f32 %v443, 1.442695
    %v457 = vpow.pop %v456
    %v458 = vmul.f32 %v444, 1.442695
    %v459 = vpow.pop %v458
    %v460 = vmul.f32 %v445, 1.442695
    %v461 = vpow.pop %v460
    %v462 = vsel %vm413, %v447, 0.0
    %463 = vadd.xlane.f32.xlu0 %v462
    %v464 = vpop.xlane.xlu0 %463
    %v465 = vsel %vm413, %v449, 0.0
    %466 = vadd.xlane.f32.xlu0 %v465
    %v467 = vpop.xlane.xlu0 %466
    %v468 = vsel %vm413, %v451, 0.0
    %469 = vadd.xlane.f32.xlu0 %v468
    %v470 = vpop.xlane.xlu0 %469
    %v471 = vsel %vm413, %v453, 0.0
    %472 = vadd.xlane.f32.xlu0 %v471
    %v473 = vpop.xlane.xlu0 %472
    %v474 = vsel %vm413, %v455, 0.0
    %475 = vadd.xlane.f32.xlu0 %v474
    %v476 = vpop.xlane.xlu0 %475
    %v477 = vsel %vm413, %v457, 0.0
    %478 = vadd.xlane.f32.xlu0 %v477
    %v479 = vpop.xlane.xlu0 %478
    %v480 = vsel %vm413, %v459, 0.0
    %481 = vadd.xlane.f32.xlu0 %v480
    %v482 = vpop.xlane.xlu0 %481
    %v483 = vsel %vm413, %v461, 0.0
    %484 = vadd.xlane.f32.xlu0 %v483
    %v485 = vpop.xlane.xlu0 %484
    %v486 = vrcp.pop %v464
    %v487 = vrcp.pop %v467
    %v488 = vrcp.pop %v470
    %v489 = vrcp.pop %v473
    %v490 = vrcp.pop %v476
    %v491 = vrcp.pop %v479
    %v492 = vrcp.pop %v482
    %v493 = vrcp.pop %v485
    %v494 = vmul.f32 %v447, %v486
    %v495 = vmul.f32 %v449, %v487
    %v496 = vmul.f32 %v451, %v488
    %v497 = vmul.f32 %v453, %v489
    %v498 = vmul.f32 %v455, %v490
    %v499 = vmul.f32 %v457, %v491
    %v500 = vmul.f32 %v459, %v492
    %v501 = vmul.f32 %v461, %v493
    %502 = vrot.lane.b32.xlu0 %v200, 64
    %v503 = vpop.permute.xlu0 %502
    %504 = vrot.lane.b32.xlu0 %v205, 64
    %v505 = vpop.permute.xlu0 %504
    %506 = vrot.lane.b32.xlu0 %v210, 64
    %v507 = vpop.permute.xlu0 %506
    %508 = vrot.lane.b32.xlu0 %v215, 64
    %v509 = vpop.permute.xlu0 %508
    %510 = vrot.lane.b32.xlu0 %v220, 64
    %v511 = vpop.permute.xlu0 %510
    %512 = vrot.lane.b32.xlu0 %v225, 64
    %v513 = vpop.permute.xlu0 %512
    %514 = vrot.lane.b32.xlu0 %v230, 64
    %v515 = vpop.permute.xlu0 %514
    %516 = vrot.lane.b32.xlu0 %v235, 64
    %v517 = vpop.permute.xlu0 %516
    %v527 = vsel %vm413, %v494, 0
    %v530 = vsel %vm413, %v495, 0
    %v533 = vsel %vm413, %v496, 0
    %v536 = vsel %vm413, %v497, 0
    %v539 = vsel %vm413, %v498, 0
    %v542 = vsel %vm413, %v499, 0
    %v545 = vsel %vm413, %v500, 0
    %v548 = vsel %vm413, %v501, 0
    %550 = vmatprep.subr.mxu0 0.0
    %551 = vmatpush1.msra.mxu0 %v503
    %552 = vmatprep.subr.mxu0 0.0
    %553 = vmatpush1.msra.mxu0 %v505
    %554 = vmatprep.subr.mxu0 0.0
    %555 = vmatpush1.msra.mxu0 %v507
    %556 = vmatprep.subr.mxu0 0.0
    %557 = vmatpush1.msra.mxu0 %v509
    %558 = vmatprep.subr.mxu0 0.0
    %559 = vmatpush1.msra.mxu0 %v511
    %560 = vmatprep.subr.mxu0 0.0
    %561 = vmatpush1.msra.mxu0 %v513
    %562 = vmatprep.subr.mxu0 0.0
    %563 = vmatpush1.msra.mxu0 %v515
    %564 = vmatprep.subr.mxu0 0.0
    %565 = vmatpush1.msra.mxu0 %v517
    %566 = vmatprep.subr.mxu0 0.0
    %567 = vmatpush1.msra.mxu0 0.0
    %568 = vmatprep.subr.mxu0 0.0
    %569 = vmatpush1.msra.mxu0 0.0
    %570 = vmatprep.subr.mxu0 0.0
    %571 = vmatpush1.msra.mxu0 0.0
    %572 = vmatprep.subr.mxu0 0.0
    %573 = vmatpush1.msra.mxu0 0.0
    %574 = vmatprep.subr.mxu0 0.0
    %575 = vmatpush1.msra.mxu0 0.0
    %576 = vmatprep.subr.mxu0 0.0
    %577 = vmatpush1.msra.mxu0 0.0
    %578 = vmatprep.subr.mxu0 0.0
    %579 = vmatpush1.msra.mxu0 0.0
    %580 = vmatprep.subr.mxu0 0.0
    %581 = vmatpush1.msra.mxu0 0.0
    %582 = vmatprep.subr.mxu0 0.0
    %583 = vmatpush1.msra.mxu0 0.0
    %584 = vmatprep.subr.mxu0 0.0
    %585 = vmatpush1.msra.mxu0 0.0
    %586 = vmatprep.subr.mxu0 0.0
    %587 = vmatpush1.msra.mxu0 0.0
    %588 = vmatprep.subr.mxu0 0.0
    %589 = vmatpush1.msra.mxu0 0.0
    %590 = vmatprep.subr.mxu0 0.0
    %591 = vmatpush1.msra.mxu0 0.0
    %592 = vmatprep.subr.mxu0 0.0
    %593 = vmatpush1.msra.mxu0 0.0
    %594 = vmatprep.subr.mxu0 0.0
    %595 = vmatpush1.msra.mxu0 0.0
    %596 = vmatprep.subr.mxu0 0.0
    %597 = vmatpush1.msra.mxu0 0.0
    %598 = vmatprep.subr.mxu0 0.0
    %599 = vmatpush1.msra.mxu0 0.0
    %600 = vmatprep.subr.mxu0 0.0
    %601 = vmatpush1.msra.mxu0 0.0
    %602 = vmatprep.subr.mxu0 0.0
    %603 = vmatpush1.msra.mxu0 0.0
    %604 = vmatprep.subr.mxu0 0.0
    %605 = vmatpush1.msra.mxu0 0.0
    %606 = vmatprep.subr.mxu0 0.0
    %607 = vmatpush1.msra.mxu0 0.0
    %608 = vmatprep.subr.mxu0 0.0
    %609 = vmatpush1.msra.mxu0 0.0
    %610 = vmatprep.subr.mxu0 0.0
    %611 = vmatpush1.msra.mxu0 0.0
    %612 = vmatprep.subr.mxu0 0.0
    %613 = vmatpush1.msra.mxu0 0.0
    %614 = vmatprep.mubr.f32.mxu0 0.0
    %615 = vmatmul.mubr.f32.gmra.mrb[0].mxu0 %v527
    %v616 = vpop.f32.mrb[0].mxu0
    %v617 = vadd.f32 0.0, %v616
    %v618 = vpop.f32.mrb[0].mxu0
    %619 = vmatprep.mubr.f32.mxu0 0.0
    %620 = vmatmul.mubr.f32.gmra.mrb[0].mxu0 %v530
    %v621 = vpop.f32.mrb[0].mxu0
    %v622 = vadd.f32 0.0, %v621
    %v623 = vpop.f32.mrb[0].mxu0
    %624 = vmatprep.mubr.f32.mxu0 0.0
    %625 = vmatmul.mubr.f32.gmra.mrb[0].mxu0 %v533
    %v626 = vpop.f32.mrb[0].mxu0
    %v627 = vadd.f32 0.0, %v626
    %v628 = vpop.f32.mrb[0].mxu0
    %629 = vmatprep.mubr.f32.mxu0 0.0
    %630 = vmatmul.mubr.f32.gmra.mrb[0].mxu0 %v536
    %v631 = vpop.f32.mrb[0].mxu0
    %v632 = vadd.f32 0.0, %v631
    %v633 = vpop.f32.mrb[0].mxu0
    %634 = vmatprep.mubr.f32.mxu0 0.0
    %635 = vmatmul.mubr.f32.gmra.mrb[0].mxu0 %v539
    %v636 = vpop.f32.mrb[0].mxu0
    %v637 = vadd.f32 0.0, %v636
    %v638 = vpop.f32.mrb[0].mxu0
    %639 = vmatprep.mubr.f32.mxu0 0.0
    %640 = vmatmul.mubr.f32.gmra.mrb[0].mxu0 %v542
    %v641 = vpop.f32.mrb[0].mxu0
    %v642 = vadd.f32 0.0, %v641
    %v643 = vpop.f32.mrb[0].mxu0
    %644 = vmatprep.mubr.f32.mxu0 0.0
    %645 = vmatmul.mubr.f32.gmra.mrb[0].mxu0 %v545
    %v646 = vpop.f32.mrb[0].mxu0
    %v647 = vadd.f32 0.0, %v646
    %v648 = vpop.f32.mrb[0].mxu0
    %649 = vmatprep.mubr.f32.mxu0 0.0
    %650 = vmatmul.mubr.f32.gmra.mrb[0].mxu0 %v548
    %v651 = vpop.f32.mrb[0].mxu0
    %v652 = vadd.f32 0.0, %v651
    %v653 = vpop.f32.mrb[0].mxu0
    %654 = vdwg.mxu0
    %655 = vrot.lane.b32.xlu0 %v200, 120
    %v656 = vpop.permute.xlu0 %655
    %657 = vrot.lane.b32.xlu0 %v205, 120
    %v658 = vpop.permute.xlu0 %657
    %659 = vrot.lane.b32.xlu0 %v210, 120
    %v660 = vpop.permute.xlu0 %659
    %661 = vrot.lane.b32.xlu0 %v215, 120
    %v662 = vpop.permute.xlu0 %661
    %663 = vrot.lane.b32.xlu0 %v220, 120
    %v664 = vpop.permute.xlu0 %663
    %665 = vrot.lane.b32.xlu0 %v225, 120
    %v666 = vpop.permute.xlu0 %665
    %667 = vrot.lane.b32.xlu0 %v230, 120
    %v668 = vpop.permute.xlu0 %667
    %669 = vrot.lane.b32.xlu0 %v235, 120
    %v670 = vpop.permute.xlu0 %669
    %671 = vrot.lane.b32.xlu0 %v200, 88
    %v672 = vpop.permute.xlu0 %671
    %673 = vrot.lane.b32.xlu0 %v205, 88
    %v674 = vpop.permute.xlu0 %673
    %675 = vrot.lane.b32.xlu0 %v210, 88
    %v676 = vpop.permute.xlu0 %675
    %677 = vrot.lane.b32.xlu0 %v215, 88
    %v678 = vpop.permute.xlu0 %677
    %679 = vrot.lane.b32.xlu0 %v220, 88
    %v680 = vpop.permute.xlu0 %679
    %681 = vrot.lane.b32.xlu0 %v225, 88
    %v682 = vpop.permute.xlu0 %681
    %683 = vrot.lane.b32.xlu0 %v230, 88
    %v684 = vpop.permute.xlu0 %683
    %685 = vrot.lane.b32.xlu0 %v235, 88
    %v686 = vpop.permute.xlu0 %685
    %v687 = vsel %vm275, %v656, 0
    %v689 = vsel %vm275, %v658, 0
    %v691 = vsel %vm275, %v660, 0
    %v693 = vsel %vm275, %v662, 0
    %v695 = vsel %vm275, %v664, 0
    %v697 = vsel %vm275, %v666, 0
    %v699 = vsel %vm275, %v668, 0
    %v701 = vsel %vm275, %v670, 0
    %v703 = vsel %vm275, %v672, 0
    %v705 = vsel %vm275, %v674, 0
    %v707 = vsel %vm275, %v676, 0
    %v709 = vsel %vm275, %v678, 0
    %v711 = vsel %vm275, %v680, 0
    %v713 = vsel %vm275, %v682, 0
    %v715 = vsel %vm275, %v684, 0
    %v717 = vsel %vm275, %v686, 0
    %719 = vmatprep.subr.mxu0 0.0
    %720 = vmatpush1.xpose.msra.mxu0 %v703
    %721 = vmatprep.subr.mxu0 0.0
    %722 = vmatpush1.xpose.msra.mxu0 %v705
    %723 = vmatprep.subr.mxu0 0.0
    %724 = vmatpush1.xpose.msra.mxu0 %v707
    %725 = vmatprep.subr.mxu0 0.0
    %726 = vmatpush1.xpose.msra.mxu0 %v709
    %727 = vmatprep.subr.mxu0 0.0
    %728 = vmatpush1.xpose.msra.mxu0 %v711
    %729 = vmatprep.subr.mxu0 0.0
    %730 = vmatpush1.xpose.msra.mxu0 %v713
    %731 = vmatprep.subr.mxu0 0.0
    %732 = vmatpush1.xpose.msra.mxu0 %v715
    %733 = vmatprep.subr.mxu0 0.0
    %734 = vmatpush1.xpose.msra.mxu0 %v717
    %735 = vmatprep.subr.mxu0 0.0
    %736 = vmatpush1.xpose.msra.mxu0 0.0
    %737 = vmatprep.subr.mxu0 0.0
    %738 = vmatpush1.xpose.msra.mxu0 0.0
    %739 = vmatprep.subr.mxu0 0.0
    %740 = vmatpush1.xpose.msra.mxu0 0.0
    %741 = vmatprep.subr.mxu0 0.0
    %742 = vmatpush1.xpose.msra.mxu0 0.0
    %743 = vmatprep.subr.mxu0 0.0
    %744 = vmatpush1.xpose.msra.mxu0 0.0
    %745 = vmatprep.subr.mxu0 0.0
    %746 = vmatpush1.xpose.msra.mxu0 0.0
    %747 = vmatprep.subr.mxu0 0.0
    %748 = vmatpush1.xpose.msra.mxu0 0.0
    %749 = vmatprep.subr.mxu0 0.0
    %750 = vmatpush1.xpose.msra.mxu0 0.0
    %751 = vmatprep.subr.mxu0 0.0
    %752 = vmatpush1.xpose.msra.mxu0 0.0
    %753 = vmatprep.subr.mxu0 0.0
    %754 = vmatpush1.xpose.msra.mxu0 0.0
    %755 = vmatprep.subr.mxu0 0.0
    %756 = vmatpush1.xpose.msra.mxu0 0.0
    %757 = vmatprep.subr.mxu0 0.0
    %758 = vmatpush1.xpose.msra.mxu0 0.0
    %759 = vmatprep.subr.mxu0 0.0
    %760 = vmatpush1.xpose.msra.mxu0 0.0
    %761 = vmatprep.subr.mxu0 0.0
    %762 = vmatpush1.xpose.msra.mxu0 0.0
    %763 = vmatprep.subr.mxu0 0.0
    %764 = vmatpush1.xpose.msra.mxu0 0.0
    %765 = vmatprep.subr.mxu0 0.0
    %766 = vmatpush1.xpose.msra.mxu0 0.0
    %767 = vmatprep.subr.mxu0 0.0
    %768 = vmatpush1.xpose.msra.mxu0 0.0
    %769 = vmatprep.subr.mxu0 0.0
    %770 = vmatpush1.xpose.msra.mxu0 0.0
    %771 = vmatprep.subr.mxu0 0.0
    %772 = vmatpush1.xpose.msra.mxu0 0.0
    %773 = vmatprep.subr.mxu0 0.0
    %774 = vmatpush1.xpose.msra.mxu0 0.0
    %775 = vmatprep.subr.mxu0 0.0
    %776 = vmatpush1.xpose.msra.mxu0 0.0
    %777 = vmatprep.subr.mxu0 0.0
    %778 = vmatpush1.xpose.msra.mxu0 0.0
    %779 = vmatprep.subr.mxu0 0.0
    %780 = vmatpush1.xpose.msra.mxu0 0.0
    %781 = vmatprep.subr.mxu0 0.0
    %782 = vmatpush1.xpose.msra.mxu0 0.0
    %783 = vmatprep.mubr.f32.mxu0 0.0
    %784 = vmatmul.mubr.f32.gmra.mrb[0].mxu0 %v687
    %v785 = vpop.f32.mrb[0].mxu0
    %v786 = vadd.f32 %v238, %v785
    %v787 = vpop.f32.mrb[0].mxu0
    %788 = vmatprep.mubr.f32.mxu0 0.0
    %789 = vmatmul.mubr.f32.gmra.mrb[0].mxu0 %v689
    %v790 = vpop.f32.mrb[0].mxu0
    %v791 = vadd.f32 %v239, %v790
    %v792 = vpop.f32.mrb[0].mxu0
    %793 = vmatprep.mubr.f32.mxu0 0.0
    %794 = vmatmul.mubr.f32.gmra.mrb[0].mxu0 %v691
    %v795 = vpop.f32.mrb[0].mxu0
    %v796 = vadd.f32 %v240, %v795
    %v797 = vpop.f32.mrb[0].mxu0
    %798 = vmatprep.mubr.f32.mxu0 0.0
    %799 = vmatmul.mubr.f32.gmra.mrb[0].mxu0 %v693
    %v800 = vpop.f32.mrb[0].mxu0
    %v801 = vadd.f32 %v241, %v800
    %v802 = vpop.f32.mrb[0].mxu0
    %803 = vmatprep.mubr.f32.mxu0 0.0
    %804 = vmatmul.mubr.f32.gmra.mrb[0].mxu0 %v695
    %v805 = vpop.f32.mrb[0].mxu0
    %v806 = vadd.f32 %v242, %v805
    %v807 = vpop.f32.mrb[0].mxu0
    %808 = vmatprep.mubr.f32.mxu0 0.0
    %809 = vmatmul.mubr.f32.gmra.mrb[0].mxu0 %v697
    %v810 = vpop.f32.mrb[0].mxu0
    %v811 = vadd.f32 %v243, %v810
    %v812 = vpop.f32.mrb[0].mxu0
    %813 = vmatprep.mubr.f32.mxu0 0.0
    %814 = vmatmul.mubr.f32.gmra.mrb[0].mxu0 %v699
    %v815 = vpop.f32.mrb[0].mxu0
    %v816 = vadd.f32 %v244, %v815
    %v817 = vpop.f32.mrb[0].mxu0
    %818 = vmatprep.mubr.f32.mxu0 0.0
    %819 = vmatmul.mubr.f32.gmra.mrb[0].mxu0 %v701
    %v820 = vpop.f32.mrb[0].mxu0
    %v821 = vadd.f32 %v245, %v820
    %v822 = vpop.f32.mrb[0].mxu0
    %823 = vdwg.mxu0
    %v824 = vsel %vm413, %v786, -inf
    %825 = vmax.xlane.f32.xlu0 %v824
    %v826 = vpop.xlane.xlu0 %825
    %v827 = vsel %vm413, %v791, -inf
    %828 = vmax.xlane.f32.xlu0 %v827
    %v829 = vpop.xlane.xlu0 %828
    %v830 = vsel %vm413, %v796, -inf
    %831 = vmax.xlane.f32.xlu0 %v830
    %v832 = vpop.xlane.xlu0 %831
    %v833 = vsel %vm413, %v801, -inf
    %834 = vmax.xlane.f32.xlu0 %v833
    %v835 = vpop.xlane.xlu0 %834
    %v836 = vsel %vm413, %v806, -inf
    %837 = vmax.xlane.f32.xlu0 %v836
    %v838 = vpop.xlane.xlu0 %837
    %v839 = vsel %vm413, %v811, -inf
    %840 = vmax.xlane.f32.xlu0 %v839
    %v841 = vpop.xlane.xlu0 %840
    %v842 = vsel %vm413, %v816, -inf
    %843 = vmax.xlane.f32.xlu0 %v842
    %v844 = vpop.xlane.xlu0 %843
    %v845 = vsel %vm413, %v821, -inf
    %846 = vmax.xlane.f32.xlu0 %v845
    %v847 = vpop.xlane.xlu0 %846
    %v848 = vsub.f32 %v786, %v826
    %v849 = vsub.f32 %v791, %v829
    %v850 = vsub.f32 %v796, %v832
    %v851 = vsub.f32 %v801, %v835
    %v852 = vsub.f32 %v806, %v838
    %v853 = vsub.f32 %v811, %v841
    %v854 = vsub.f32 %v816, %v844
    %v855 = vsub.f32 %v821, %v847
    %v856 = vmul.f32 %v848, 1.442695
    %v857 = vpow.pop %v856
    %v858 = vmul.f32 %v849, 1.442695
    %v859 = vpow.pop %v858
    %v860 = vmul.f32 %v850, 1.442695
    %v861 = vpow.pop %v860
    %v862 = vmul.f32 %v851, 1.442695
    %v863 = vpow.pop %v862
    %v864 = vmul.f32 %v852, 1.442695
    %v865 = vpow.pop %v864
    %v866 = vmul.f32 %v853, 1.442695
    %v867 = vpow.pop %v866
    %v868 = vmul.f32 %v854, 1.442695
    %v869 = vpow.pop %v868
    %v870 = vmul.f32 %v855, 1.442695
    %v871 = vpow.pop %v870
    %v872 = vsel %vm413, %v857, 0.0
    %873 = vadd.xlane.f32.xlu0 %v872
    %v874 = vpop.xlane.xlu0 %873
    %v875 = vsel %vm413, %v859, 0.0
    %876 = vadd.xlane.f32.xlu0 %v875
    %v877 = vpop.xlane.xlu0 %876
    %v878 = vsel %vm413, %v861, 0.0
    %879 = vadd.xlane.f32.xlu0 %v878
    %v880 = vpop.xlane.xlu0 %879
    %v881 = vsel %vm413, %v863, 0.0
    %882 = vadd.xlane.f32.xlu0 %v881
    %v883 = vpop.xlane.xlu0 %882
    %v884 = vsel %vm413, %v865, 0.0
    %885 = vadd.xlane.f32.xlu0 %v884
    %v886 = vpop.xlane.xlu0 %885
    %v887 = vsel %vm413, %v867, 0.0
    %888 = vadd.xlane.f32.xlu0 %v887
    %v889 = vpop.xlane.xlu0 %888
    %v890 = vsel %vm413, %v869, 0.0
    %891 = vadd.xlane.f32.xlu0 %v890
    %v892 = vpop.xlane.xlu0 %891
    %v893 = vsel %vm413, %v871, 0.0
    %894 = vadd.xlane.f32.xlu0 %v893
    %v895 = vpop.xlane.xlu0 %894
    %v896 = vrcp.pop %v874
    %v897 = vrcp.pop %v877
    %v898 = vrcp.pop %v880
    %v899 = vrcp.pop %v883
    %v900 = vrcp.pop %v886
    %v901 = vrcp.pop %v889
    %v902 = vrcp.pop %v892
    %v903 = vrcp.pop %v895
    %v904 = vmul.f32 %v857, %v896
    %v905 = vmul.f32 %v859, %v897
    %v906 = vmul.f32 %v861, %v898
    %v907 = vmul.f32 %v863, %v899
    %v908 = vmul.f32 %v865, %v900
    %v909 = vmul.f32 %v867, %v901
    %v910 = vmul.f32 %v869, %v902
    %v911 = vmul.f32 %v871, %v903
    %912 = vrot.lane.b32.xlu0 %v200, 56
    %v913 = vpop.permute.xlu0 %912
    %914 = vrot.lane.b32.xlu0 %v205, 56
    %v915 = vpop.permute.xlu0 %914
    %916 = vrot.lane.b32.xlu0 %v210, 56
    %v917 = vpop.permute.xlu0 %916
    %918 = vrot.lane.b32.xlu0 %v215, 56
    %v919 = vpop.permute.xlu0 %918
    %920 = vrot.lane.b32.xlu0 %v220, 56
    %v921 = vpop.permute.xlu0 %920
    %922 = vrot.lane.b32.xlu0 %v225, 56
    %v923 = vpop.permute.xlu0 %922
    %924 = vrot.lane.b32.xlu0 %v230, 56
    %v925 = vpop.permute.xlu0 %924
    %926 = vrot.lane.b32.xlu0 %v235, 56
    %v927 = vpop.permute.xlu0 %926
    %v937 = vsel %vm413, %v904, 0
    %v940 = vsel %vm413, %v905, 0
    %v943 = vsel %vm413, %v906, 0
    %v946 = vsel %vm413, %v907, 0
    %v949 = vsel %vm413, %v908, 0
    %v952 = vsel %vm413, %v909, 0
    %v955 = vsel %vm413, %v910, 0
    %v958 = vsel %vm413, %v911, 0
    %960 = vmatprep.subr.mxu0 0.0
    %961 = vmatpush1.msra.mxu0 %v913
    %962 = vmatprep.subr.mxu0 0.0
    %963 = vmatpush1.msra.mxu0 %v915
    %964 = vmatprep.subr.mxu0 0.0
    %965 = vmatpush1.msra.mxu0 %v917
    %966 = vmatprep.subr.mxu0 0.0
    %967 = vmatpush1.msra.mxu0 %v919
    %968 = vmatprep.subr.mxu0 0.0
    %969 = vmatpush1.msra.mxu0 %v921
    %970 = vmatprep.subr.mxu0 0.0
    %971 = vmatpush1.msra.mxu0 %v923
    %972 = vmatprep.subr.mxu0 0.0
    %973 = vmatpush1.msra.mxu0 %v925
    %974 = vmatprep.subr.mxu0 0.0
    %975 = vmatpush1.msra.mxu0 %v927
    %976 = vmatprep.subr.mxu0 0.0
    %977 = vmatpush1.msra.mxu0 0.0
    %978 = vmatprep.subr.mxu0 0.0
    %979 = vmatpush1.msra.mxu0 0.0
    %980 = vmatprep.subr.mxu0 0.0
    %981 = vmatpush1.msra.mxu0 0.0
    %982 = vmatprep.subr.mxu0 0.0
    %983 = vmatpush1.msra.mxu0 0.0
    %984 = vmatprep.subr.mxu0 0.0
    %985 = vmatpush1.msra.mxu0 0.0
    %986 = vmatprep.subr.mxu0 0.0
    %987 = vmatpush1.msra.mxu0 0.0
    %988 = vmatprep.subr.mxu0 0.0
    %989 = vmatpush1.msra.mxu0 0.0
    %990 = vmatprep.subr.mxu0 0.0
    %991 = vmatpush1.msra.mxu0 0.0
    %992 = vmatprep.subr.mxu0 0.0
    %993 = vmatpush1.msra.mxu0 0.0
    %994 = vmatprep.subr.mxu0 0.0
    %995 = vmatpush1.msra.mxu0 0.0
    %996 = vmatprep.subr.mxu0 0.0
    %997 = vmatpush1.msra.mxu0 0.0
    %998 = vmatprep.subr.mxu0 0.0
    %999 = vmatpush1.msra.mxu0 0.0
    %1000 = vmatprep.subr.mxu0 0.0
    %1001 = vmatpush1.msra.mxu0 0.0
    %1002 = vmatprep.subr.mxu0 0.0
    %1003 = vmatpush1.msra.mxu0 0.0
    %1004 = vmatprep.subr.mxu0 0.0
    %1005 = vmatpush1.msra.mxu0 0.0
    %1006 = vmatprep.subr.mxu0 0.0
    %1007 = vmatpush1.msra.mxu0 0.0
    %1008 = vmatprep.subr.mxu0 0.0
    %1009 = vmatpush1.msra.mxu0 0.0
    %1010 = vmatprep.subr.mxu0 0.0
    %1011 = vmatpush1.msra.mxu0 0.0
    %1012 = vmatprep.subr.mxu0 0.0
    %1013 = vmatpush1.msra.mxu0 0.0
    %1014 = vmatprep.subr.mxu0 0.0
    %1015 = vmatpush1.msra.mxu0 0.0
    %1016 = vmatprep.subr.mxu0 0.0
    %1017 = vmatpush1.msra.mxu0 0.0
    %1018 = vmatprep.subr.mxu0 0.0
    %1019 = vmatpush1.msra.mxu0 0.0
    %1020 = vmatprep.subr.mxu0 0.0
    %1021 = vmatpush1.msra.mxu0 0.0
    %1022 = vmatprep.subr.mxu0 0.0
    %1023 = vmatpush1.msra.mxu0 0.0
    %1024 = vmatprep.mubr.f32.mxu0 0.0
    %1025 = vmatmul.mubr.f32.gmra.mrb[0].mxu0 %v937
    %v1026 = vpop.f32.mrb[0].mxu0
    %v1027 = vadd.f32 0.0, %v1026
    %v1028 = vpop.f32.mrb[0].mxu0
    %1029 = vmatprep.mubr.f32.mxu0 0.0
    %1030 = vmatmul.mubr.f32.gmra.mrb[0].mxu0 %v940
    %v1031 = vpop.f32.mrb[0].mxu0
    %v1032 = vadd.f32 0.0, %v1031
    %v1033 = vpop.f32.mrb[0].mxu0
    %1034 = vmatprep.mubr.f32.mxu0 0.0
    %1035 = vmatmul.mubr.f32.gmra.mrb[0].mxu0 %v943
    %v1036 = vpop.f32.mrb[0].mxu0
    %v1037 = vadd.f32 0.0, %v1036
    %v1038 = vpop.f32.mrb[0].mxu0
    %1039 = vmatprep.mubr.f32.mxu0 0.0
    %1040 = vmatmul.mubr.f32.gmra.mrb[0].mxu0 %v946
    %v1041 = vpop.f32.mrb[0].mxu0
    %v1042 = vadd.f32 0.0, %v1041
    %v1043 = vpop.f32.mrb[0].mxu0
    %1044 = vmatprep.mubr.f32.mxu0 0.0
    %1045 = vmatmul.mubr.f32.gmra.mrb[0].mxu0 %v949
    %v1046 = vpop.f32.mrb[0].mxu0
    %v1047 = vadd.f32 0.0, %v1046
    %v1048 = vpop.f32.mrb[0].mxu0
    %1049 = vmatprep.mubr.f32.mxu0 0.0
    %1050 = vmatmul.mubr.f32.gmra.mrb[0].mxu0 %v952
    %v1051 = vpop.f32.mrb[0].mxu0
    %v1052 = vadd.f32 0.0, %v1051
    %v1053 = vpop.f32.mrb[0].mxu0
    %1054 = vmatprep.mubr.f32.mxu0 0.0
    %1055 = vmatmul.mubr.f32.gmra.mrb[0].mxu0 %v955
    %v1056 = vpop.f32.mrb[0].mxu0
    %v1057 = vadd.f32 0.0, %v1056
    %v1058 = vpop.f32.mrb[0].mxu0
    %1059 = vmatprep.mubr.f32.mxu0 0.0
    %1060 = vmatmul.mubr.f32.gmra.mrb[0].mxu0 %v958
    %v1061 = vpop.f32.mrb[0].mxu0
    %v1062 = vadd.f32 0.0, %v1061
    %v1063 = vpop.f32.mrb[0].mxu0
    %1064 = vdwg.mxu0
    %v1066 = vsel %vm275, %v1027, 0
    %v1069 = vsel %vm275, %v1032, 0
    %v1072 = vsel %vm275, %v1037, 0
    %v1075 = vsel %vm275, %v1042, 0
    %v1078 = vsel %vm275, %v1047, 0
    %v1081 = vsel %vm275, %v1052, 0
    %v1084 = vsel %vm275, %v1057, 0
    %v1087 = vsel %vm275, %v1062, 0
    %1089 = vmatprep.subr.mxu0 0.0
    %1090 = vmatpush1.msra.mxu0 %v247
    %1091 = vmatprep.subr.mxu0 0.0
    %1092 = vmatpush1.msra.mxu0 0.0
    %1093 = vmatprep.subr.mxu0 0.0
    %1094 = vmatpush1.msra.mxu0 0.0
    %1095 = vmatprep.subr.mxu0 0.0
    %1096 = vmatpush1.msra.mxu0 0.0
    %1097 = vmatprep.subr.mxu0 0.0
    %1098 = vmatpush1.msra.mxu0 0.0
    %1099 = vmatprep.subr.mxu0 0.0
    %1100 = vmatpush1.msra.mxu0 0.0
    %1101 = vmatprep.subr.mxu0 0.0
    %1102 = vmatpush1.msra.mxu0 0.0
    %1103 = vmatprep.subr.mxu0 0.0
    %1104 = vmatpush1.msra.mxu0 0.0
    %1105 = vmatprep.subr.mxu0 0.0
    %1106 = vmatpush1.msra.mxu0 0.0
    %1107 = vmatprep.subr.mxu0 0.0
    %1108 = vmatpush1.msra.mxu0 0.0
    %1109 = vmatprep.subr.mxu0 0.0
    %1110 = vmatpush1.msra.mxu0 0.0
    %1111 = vmatprep.subr.mxu0 0.0
    %1112 = vmatpush1.msra.mxu0 0.0
    %1113 = vmatprep.subr.mxu0 0.0
    %1114 = vmatpush1.msra.mxu0 0.0
    %1115 = vmatprep.subr.mxu0 0.0
    %1116 = vmatpush1.msra.mxu0 0.0
    %1117 = vmatprep.subr.mxu0 0.0
    %1118 = vmatpush1.msra.mxu0 0.0
    %1119 = vmatprep.subr.mxu0 0.0
    %1120 = vmatpush1.msra.mxu0 0.0
    %1121 = vmatprep.subr.mxu0 0.0
    %1122 = vmatpush1.msra.mxu0 0.0
    %1123 = vmatprep.subr.mxu0 0.0
    %1124 = vmatpush1.msra.mxu0 0.0
    %1125 = vmatprep.subr.mxu0 0.0
    %1126 = vmatpush1.msra.mxu0 0.0
    %1127 = vmatprep.subr.mxu0 0.0
    %1128 = vmatpush1.msra.mxu0 0.0
    %1129 = vmatprep.subr.mxu0 0.0
    %1130 = vmatpush1.msra.mxu0 0.0
    %1131 = vmatprep.subr.mxu0 0.0
    %1132 = vmatpush1.msra.mxu0 0.0
    %1133 = vmatprep.subr.mxu0 0.0
    %1134 = vmatpush1.msra.mxu0 0.0
    %1135 = vmatprep.subr.mxu0 0.0
    %1136 = vmatpush1.msra.mxu0 0.0
    %1137 = vmatprep.subr.mxu0 0.0
    %1138 = vmatpush1.msra.mxu0 0.0
    %1139 = vmatprep.subr.mxu0 0.0
    %1140 = vmatpush1.msra.mxu0 0.0
    %1141 = vmatprep.subr.mxu0 0.0
    %1142 = vmatpush1.msra.mxu0 0.0
    %1143 = vmatprep.subr.mxu0 0.0
    %1144 = vmatpush1.msra.mxu0 0.0
    %1145 = vmatprep.subr.mxu0 0.0
    %1146 = vmatpush1.msra.mxu0 0.0
    %1147 = vmatprep.subr.mxu0 0.0
    %1148 = vmatpush1.msra.mxu0 0.0
    %1149 = vmatprep.subr.mxu0 0.0
    %1150 = vmatpush1.msra.mxu0 0.0
    %1151 = vmatprep.subr.mxu0 0.0
    %1152 = vmatpush1.msra.mxu0 0.0
    %1153 = vmatprep.mubr.f32.mxu0 0.0
    %1154 = vmatmul.mubr.f32.gmra.mrb[0].mxu0 %v1066
    %v1155 = vpop.f32.mrb[0].mxu0
    %v1156 = vadd.f32 0.0, %v1155
    %v1157 = vpop.f32.mrb[0].mxu0
    %1158 = vmatprep.mubr.f32.mxu0 0.0
    %1159 = vmatmul.mubr.f32.gmra.mrb[0].mxu0 %v1069
    %v1160 = vpop.f32.mrb[0].mxu0
    %v1161 = vadd.f32 0.0, %v1160
    %v1162 = vpop.f32.mrb[0].mxu0
    %1163 = vmatprep.mubr.f32.mxu0 0.0
    %1164 = vmatmul.mubr.f32.gmra.mrb[0].mxu0 %v1072
    %v1165 = vpop.f32.mrb[0].mxu0
    %v1166 = vadd.f32 0.0, %v1165
    %v1167 = vpop.f32.mrb[0].mxu0
    %1168 = vmatprep.mubr.f32.mxu0 0.0
    %1169 = vmatmul.mubr.f32.gmra.mrb[0].mxu0 %v1075
    %v1170 = vpop.f32.mrb[0].mxu0
    %v1171 = vadd.f32 0.0, %v1170
    %v1172 = vpop.f32.mrb[0].mxu0
    %1173 = vmatprep.mubr.f32.mxu0 0.0
    %1174 = vmatmul.mubr.f32.gmra.mrb[0].mxu0 %v1078
    %v1175 = vpop.f32.mrb[0].mxu0
    %v1176 = vadd.f32 0.0, %v1175
    %v1177 = vpop.f32.mrb[0].mxu0
    %1178 = vmatprep.mubr.f32.mxu0 0.0
    %1179 = vmatmul.mubr.f32.gmra.mrb[0].mxu0 %v1081
    %v1180 = vpop.f32.mrb[0].mxu0
    %v1181 = vadd.f32 0.0, %v1180
    %v1182 = vpop.f32.mrb[0].mxu0
    %1183 = vmatprep.mubr.f32.mxu0 0.0
    %1184 = vmatmul.mubr.f32.gmra.mrb[0].mxu0 %v1084
    %v1185 = vpop.f32.mrb[0].mxu0
    %v1186 = vadd.f32 0.0, %v1185
    %v1187 = vpop.f32.mrb[0].mxu0
    %1188 = vmatprep.mubr.f32.mxu0 0.0
    %1189 = vmatmul.mubr.f32.gmra.mrb[0].mxu0 %v1087
    %v1190 = vpop.f32.mrb[0].mxu0
    %v1191 = vadd.f32 0.0, %v1190
    %v1192 = vpop.f32.mrb[0].mxu0
    %1193 = vdwg.mxu0
    %v1195 = vsel %vm275, %v617, 0
    %v1198 = vsel %vm275, %v622, 0
    %v1201 = vsel %vm275, %v627, 0
    %v1204 = vsel %vm275, %v632, 0
    %v1207 = vsel %vm275, %v637, 0
    %v1210 = vsel %vm275, %v642, 0
    %v1213 = vsel %vm275, %v647, 0
    %v1216 = vsel %vm275, %v652, 0
    %1218 = vmatprep.subr.mxu0 0.0
    %1219 = vmatpush1.msra.mxu0 %v246
    %1220 = vmatprep.subr.mxu0 0.0
    %1221 = vmatpush1.msra.mxu0 0.0
    %1222 = vmatprep.subr.mxu0 0.0
    %1223 = vmatpush1.msra.mxu0 0.0
    %1224 = vmatprep.subr.mxu0 0.0
    %1225 = vmatpush1.msra.mxu0 0.0
    %1226 = vmatprep.subr.mxu0 0.0
    %1227 = vmatpush1.msra.mxu0 0.0
    %1228 = vmatprep.subr.mxu0 0.0
    %1229 = vmatpush1.msra.mxu0 0.0
    %1230 = vmatprep.subr.mxu0 0.0
    %1231 = vmatpush1.msra.mxu0 0.0
    %1232 = vmatprep.subr.mxu0 0.0
    %1233 = vmatpush1.msra.mxu0 0.0
    %1234 = vmatprep.subr.mxu0 0.0
    %1235 = vmatpush1.msra.mxu0 0.0
    %1236 = vmatprep.subr.mxu0 0.0
    %1237 = vmatpush1.msra.mxu0 0.0
    %1238 = vmatprep.subr.mxu0 0.0
    %1239 = vmatpush1.msra.mxu0 0.0
    %1240 = vmatprep.subr.mxu0 0.0
    %1241 = vmatpush1.msra.mxu0 0.0
    %1242 = vmatprep.subr.mxu0 0.0
    %1243 = vmatpush1.msra.mxu0 0.0
    %1244 = vmatprep.subr.mxu0 0.0
    %1245 = vmatpush1.msra.mxu0 0.0
    %1246 = vmatprep.subr.mxu0 0.0
    %1247 = vmatpush1.msra.mxu0 0.0
    %1248 = vmatprep.subr.mxu0 0.0
    %1249 = vmatpush1.msra.mxu0 0.0
    %1250 = vmatprep.subr.mxu0 0.0
    %1251 = vmatpush1.msra.mxu0 0.0
    %1252 = vmatprep.subr.mxu0 0.0
    %1253 = vmatpush1.msra.mxu0 0.0
    %1254 = vmatprep.subr.mxu0 0.0
    %1255 = vmatpush1.msra.mxu0 0.0
    %1256 = vmatprep.subr.mxu0 0.0
    %1257 = vmatpush1.msra.mxu0 0.0
    %1258 = vmatprep.subr.mxu0 0.0
    %1259 = vmatpush1.msra.mxu0 0.0
    %1260 = vmatprep.subr.mxu0 0.0
    %1261 = vmatpush1.msra.mxu0 0.0
    %1262 = vmatprep.subr.mxu0 0.0
    %1263 = vmatpush1.msra.mxu0 0.0
    %1264 = vmatprep.subr.mxu0 0.0
    %1265 = vmatpush1.msra.mxu0 0.0
    %1266 = vmatprep.subr.mxu0 0.0
    %1267 = vmatpush1.msra.mxu0 0.0
    %1268 = vmatprep.subr.mxu0 0.0
    %1269 = vmatpush1.msra.mxu0 0.0
    %1270 = vmatprep.subr.mxu0 0.0
    %1271 = vmatpush1.msra.mxu0 0.0
    %1272 = vmatprep.subr.mxu0 0.0
    %1273 = vmatpush1.msra.mxu0 0.0
    %1274 = vmatprep.subr.mxu0 0.0
    %1275 = vmatpush1.msra.mxu0 0.0
    %1276 = vmatprep.subr.mxu0 0.0
    %1277 = vmatpush1.msra.mxu0 0.0
    %1278 = vmatprep.subr.mxu0 0.0
    %1279 = vmatpush1.msra.mxu0 0.0
    %1280 = vmatprep.subr.mxu0 0.0
    %1281 = vmatpush1.msra.mxu0 0.0
    %1282 = vmatprep.mubr.f32.mxu0 0.0
    %1283 = vmatmul.mubr.f32.gmra.mrb[0].mxu0 %v1195
    %v1284 = vpop.f32.mrb[0].mxu0
    %v1285 = vadd.f32 %v1156, %v1284
    %v1286 = vpop.f32.mrb[0].mxu0
    %1287 = vmatprep.mubr.f32.mxu0 0.0
    %1288 = vmatmul.mubr.f32.gmra.mrb[0].mxu0 %v1198
    %v1289 = vpop.f32.mrb[0].mxu0
    %v1290 = vadd.f32 %v1161, %v1289
    %v1291 = vpop.f32.mrb[0].mxu0
    %1292 = vmatprep.mubr.f32.mxu0 0.0
    %1293 = vmatmul.mubr.f32.gmra.mrb[0].mxu0 %v1201
    %v1294 = vpop.f32.mrb[0].mxu0
    %v1295 = vadd.f32 %v1166, %v1294
    %v1296 = vpop.f32.mrb[0].mxu0
    %1297 = vmatprep.mubr.f32.mxu0 0.0
    %1298 = vmatmul.mubr.f32.gmra.mrb[0].mxu0 %v1204
    %v1299 = vpop.f32.mrb[0].mxu0
    %v1300 = vadd.f32 %v1171, %v1299
    %v1301 = vpop.f32.mrb[0].mxu0
    %1302 = vmatprep.mubr.f32.mxu0 0.0
    %1303 = vmatmul.mubr.f32.gmra.mrb[0].mxu0 %v1207
    %v1304 = vpop.f32.mrb[0].mxu0
    %v1305 = vadd.f32 %v1176, %v1304
    %v1306 = vpop.f32.mrb[0].mxu0
    %1307 = vmatprep.mubr.f32.mxu0 0.0
    %1308 = vmatmul.mubr.f32.gmra.mrb[0].mxu0 %v1210
    %v1309 = vpop.f32.mrb[0].mxu0
    %v1310 = vadd.f32 %v1181, %v1309
    %v1311 = vpop.f32.mrb[0].mxu0
    %1312 = vmatprep.mubr.f32.mxu0 0.0
    %1313 = vmatmul.mubr.f32.gmra.mrb[0].mxu0 %v1213
    %v1314 = vpop.f32.mrb[0].mxu0
    %v1315 = vadd.f32 %v1186, %v1314
    %v1316 = vpop.f32.mrb[0].mxu0
    %1317 = vmatprep.mubr.f32.mxu0 0.0
    %1318 = vmatmul.mubr.f32.gmra.mrb[0].mxu0 %v1216
    %v1319 = vpop.f32.mrb[0].mxu0
    %v1320 = vadd.f32 %v1191, %v1319
    %v1321 = vpop.f32.mrb[0].mxu0
    %1322 = vdwg.mxu0
    %1323 = vrot.lane.b32.xlu0 %v200, 112
    %v1324 = vpop.permute.xlu0 %1323
    %1325 = vrot.lane.b32.xlu0 %v205, 112
    %v1326 = vpop.permute.xlu0 %1325
    %1327 = vrot.lane.b32.xlu0 %v210, 112
    %v1328 = vpop.permute.xlu0 %1327
    %1329 = vrot.lane.b32.xlu0 %v215, 112
    %v1330 = vpop.permute.xlu0 %1329
    %1331 = vrot.lane.b32.xlu0 %v220, 112
    %v1332 = vpop.permute.xlu0 %1331
    %1333 = vrot.lane.b32.xlu0 %v225, 112
    %v1334 = vpop.permute.xlu0 %1333
    %1335 = vrot.lane.b32.xlu0 %v230, 112
    %v1336 = vpop.permute.xlu0 %1335
    %1337 = vrot.lane.b32.xlu0 %v235, 112
    %v1338 = vpop.permute.xlu0 %1337
    %1339 = vrot.lane.b32.xlu0 %v200, 80
    %v1340 = vpop.permute.xlu0 %1339
    %1341 = vrot.lane.b32.xlu0 %v205, 80
    %v1342 = vpop.permute.xlu0 %1341
    %1343 = vrot.lane.b32.xlu0 %v210, 80
    %v1344 = vpop.permute.xlu0 %1343
    %1345 = vrot.lane.b32.xlu0 %v215, 80
    %v1346 = vpop.permute.xlu0 %1345
    %1347 = vrot.lane.b32.xlu0 %v220, 80
    %v1348 = vpop.permute.xlu0 %1347
    %1349 = vrot.lane.b32.xlu0 %v225, 80
    %v1350 = vpop.permute.xlu0 %1349
    %1351 = vrot.lane.b32.xlu0 %v230, 80
    %v1352 = vpop.permute.xlu0 %1351
    %1353 = vrot.lane.b32.xlu0 %v235, 80
    %v1354 = vpop.permute.xlu0 %1353
    %v1355 = vsel %vm275, %v1324, 0
    %v1357 = vsel %vm275, %v1326, 0
    %v1359 = vsel %vm275, %v1328, 0
    %v1361 = vsel %vm275, %v1330, 0
    %v1363 = vsel %vm275, %v1332, 0
    %v1365 = vsel %vm275, %v1334, 0
    %v1367 = vsel %vm275, %v1336, 0
    %v1369 = vsel %vm275, %v1338, 0
    %v1371 = vsel %vm275, %v1340, 0
    %v1373 = vsel %vm275, %v1342, 0
    %v1375 = vsel %vm275, %v1344, 0
    %v1377 = vsel %vm275, %v1346, 0
    %v1379 = vsel %vm275, %v1348, 0
    %v1381 = vsel %vm275, %v1350, 0
    %v1383 = vsel %vm275, %v1352, 0
    %v1385 = vsel %vm275, %v1354, 0
    %1387 = vmatprep.subr.mxu0 0.0
    %1388 = vmatpush1.xpose.msra.mxu0 %v1371
    %1389 = vmatprep.subr.mxu0 0.0
    %1390 = vmatpush1.xpose.msra.mxu0 %v1373
    %1391 = vmatprep.subr.mxu0 0.0
    %1392 = vmatpush1.xpose.msra.mxu0 %v1375
    %1393 = vmatprep.subr.mxu0 0.0
    %1394 = vmatpush1.xpose.msra.mxu0 %v1377
    %1395 = vmatprep.subr.mxu0 0.0
    %1396 = vmatpush1.xpose.msra.mxu0 %v1379
    %1397 = vmatprep.subr.mxu0 0.0
    %1398 = vmatpush1.xpose.msra.mxu0 %v1381
    %1399 = vmatprep.subr.mxu0 0.0
    %1400 = vmatpush1.xpose.msra.mxu0 %v1383
    %1401 = vmatprep.subr.mxu0 0.0
    %1402 = vmatpush1.xpose.msra.mxu0 %v1385
    %1403 = vmatprep.subr.mxu0 0.0
    %1404 = vmatpush1.xpose.msra.mxu0 0.0
    %1405 = vmatprep.subr.mxu0 0.0
    %1406 = vmatpush1.xpose.msra.mxu0 0.0
    %1407 = vmatprep.subr.mxu0 0.0
    %1408 = vmatpush1.xpose.msra.mxu0 0.0
    %1409 = vmatprep.subr.mxu0 0.0
    %1410 = vmatpush1.xpose.msra.mxu0 0.0
    %1411 = vmatprep.subr.mxu0 0.0
    %1412 = vmatpush1.xpose.msra.mxu0 0.0
    %1413 = vmatprep.subr.mxu0 0.0
    %1414 = vmatpush1.xpose.msra.mxu0 0.0
    %1415 = vmatprep.subr.mxu0 0.0
    %1416 = vmatpush1.xpose.msra.mxu0 0.0
    %1417 = vmatprep.subr.mxu0 0.0
    %1418 = vmatpush1.xpose.msra.mxu0 0.0
    %1419 = vmatprep.subr.mxu0 0.0
    %1420 = vmatpush1.xpose.msra.mxu0 0.0
    %1421 = vmatprep.subr.mxu0 0.0
    %1422 = vmatpush1.xpose.msra.mxu0 0.0
    %1423 = vmatprep.subr.mxu0 0.0
    %1424 = vmatpush1.xpose.msra.mxu0 0.0
    %1425 = vmatprep.subr.mxu0 0.0
    %1426 = vmatpush1.xpose.msra.mxu0 0.0
    %1427 = vmatprep.subr.mxu0 0.0
    %1428 = vmatpush1.xpose.msra.mxu0 0.0
    %1429 = vmatprep.subr.mxu0 0.0
    %1430 = vmatpush1.xpose.msra.mxu0 0.0
    %1431 = vmatprep.subr.mxu0 0.0
    %1432 = vmatpush1.xpose.msra.mxu0 0.0
    %1433 = vmatprep.subr.mxu0 0.0
    %1434 = vmatpush1.xpose.msra.mxu0 0.0
    %1435 = vmatprep.subr.mxu0 0.0
    %1436 = vmatpush1.xpose.msra.mxu0 0.0
    %1437 = vmatprep.subr.mxu0 0.0
    %1438 = vmatpush1.xpose.msra.mxu0 0.0
    %1439 = vmatprep.subr.mxu0 0.0
    %1440 = vmatpush1.xpose.msra.mxu0 0.0
    %1441 = vmatprep.subr.mxu0 0.0
    %1442 = vmatpush1.xpose.msra.mxu0 0.0
    %1443 = vmatprep.subr.mxu0 0.0
    %1444 = vmatpush1.xpose.msra.mxu0 0.0
    %1445 = vmatprep.subr.mxu0 0.0
    %1446 = vmatpush1.xpose.msra.mxu0 0.0
    %1447 = vmatprep.subr.mxu0 0.0
    %1448 = vmatpush1.xpose.msra.mxu0 0.0
    %1449 = vmatprep.subr.mxu0 0.0
    %1450 = vmatpush1.xpose.msra.mxu0 0.0
    %1451 = vmatprep.mubr.f32.mxu0 0.0
    %1452 = vmatmul.mubr.f32.gmra.mrb[0].mxu0 %v1355
    %v1453 = vpop.f32.mrb[0].mxu0
    %v1454 = vadd.f32 %v238, %v1453
    %v1455 = vpop.f32.mrb[0].mxu0
    %1456 = vmatprep.mubr.f32.mxu0 0.0
    %1457 = vmatmul.mubr.f32.gmra.mrb[0].mxu0 %v1357
    %v1458 = vpop.f32.mrb[0].mxu0
    %v1459 = vadd.f32 %v239, %v1458
    %v1460 = vpop.f32.mrb[0].mxu0
    %1461 = vmatprep.mubr.f32.mxu0 0.0
    %1462 = vmatmul.mubr.f32.gmra.mrb[0].mxu0 %v1359
    %v1463 = vpop.f32.mrb[0].mxu0
    %v1464 = vadd.f32 %v240, %v1463
    %v1465 = vpop.f32.mrb[0].mxu0
    %1466 = vmatprep.mubr.f32.mxu0 0.0
    %1467 = vmatmul.mubr.f32.gmra.mrb[0].mxu0 %v1361
    %v1468 = vpop.f32.mrb[0].mxu0
    %v1469 = vadd.f32 %v241, %v1468
    %v1470 = vpop.f32.mrb[0].mxu0
    %1471 = vmatprep.mubr.f32.mxu0 0.0
    %1472 = vmatmul.mubr.f32.gmra.mrb[0].mxu0 %v1363
    %v1473 = vpop.f32.mrb[0].mxu0
    %v1474 = vadd.f32 %v242, %v1473
    %v1475 = vpop.f32.mrb[0].mxu0
    %1476 = vmatprep.mubr.f32.mxu0 0.0
    %1477 = vmatmul.mubr.f32.gmra.mrb[0].mxu0 %v1365
    %v1478 = vpop.f32.mrb[0].mxu0
    %v1479 = vadd.f32 %v243, %v1478
    %v1480 = vpop.f32.mrb[0].mxu0
    %1481 = vmatprep.mubr.f32.mxu0 0.0
    %1482 = vmatmul.mubr.f32.gmra.mrb[0].mxu0 %v1367
    %v1483 = vpop.f32.mrb[0].mxu0
    %v1484 = vadd.f32 %v244, %v1483
    %v1485 = vpop.f32.mrb[0].mxu0
    %1486 = vmatprep.mubr.f32.mxu0 0.0
    %1487 = vmatmul.mubr.f32.gmra.mrb[0].mxu0 %v1369
    %v1488 = vpop.f32.mrb[0].mxu0
    %v1489 = vadd.f32 %v245, %v1488
    %v1490 = vpop.f32.mrb[0].mxu0
    %1491 = vdwg.mxu0
    %v1492 = vsel %vm413, %v1454, -inf
    %1493 = vmax.xlane.f32.xlu0 %v1492
    %v1494 = vpop.xlane.xlu0 %1493
    %v1495 = vsel %vm413, %v1459, -inf
    %1496 = vmax.xlane.f32.xlu0 %v1495
    %v1497 = vpop.xlane.xlu0 %1496
    %v1498 = vsel %vm413, %v1464, -inf
    %1499 = vmax.xlane.f32.xlu0 %v1498
    %v1500 = vpop.xlane.xlu0 %1499
    %v1501 = vsel %vm413, %v1469, -inf
    %1502 = vmax.xlane.f32.xlu0 %v1501
    %v1503 = vpop.xlane.xlu0 %1502
    %v1504 = vsel %vm413, %v1474, -inf
    %1505 = vmax.xlane.f32.xlu0 %v1504
    %v1506 = vpop.xlane.xlu0 %1505
    %v1507 = vsel %vm413, %v1479, -inf
    %1508 = vmax.xlane.f32.xlu0 %v1507
    %v1509 = vpop.xlane.xlu0 %1508
    %v1510 = vsel %vm413, %v1484, -inf
    %1511 = vmax.xlane.f32.xlu0 %v1510
    %v1512 = vpop.xlane.xlu0 %1511
    %v1513 = vsel %vm413, %v1489, -inf
    %1514 = vmax.xlane.f32.xlu0 %v1513
    %v1515 = vpop.xlane.xlu0 %1514
    %v1516 = vsub.f32 %v1454, %v1494
    %v1517 = vsub.f32 %v1459, %v1497
    %v1518 = vsub.f32 %v1464, %v1500
    %v1519 = vsub.f32 %v1469, %v1503
    %v1520 = vsub.f32 %v1474, %v1506
    %v1521 = vsub.f32 %v1479, %v1509
    %v1522 = vsub.f32 %v1484, %v1512
    %v1523 = vsub.f32 %v1489, %v1515
    %v1524 = vmul.f32 %v1516, 1.442695
    %v1525 = vpow.pop %v1524
    %v1526 = vmul.f32 %v1517, 1.442695
    %v1527 = vpow.pop %v1526
    %v1528 = vmul.f32 %v1518, 1.442695
    %v1529 = vpow.pop %v1528
    %v1530 = vmul.f32 %v1519, 1.442695
    %v1531 = vpow.pop %v1530
    %v1532 = vmul.f32 %v1520, 1.442695
    %v1533 = vpow.pop %v1532
    %v1534 = vmul.f32 %v1521, 1.442695
    %v1535 = vpow.pop %v1534
    %v1536 = vmul.f32 %v1522, 1.442695
    %v1537 = vpow.pop %v1536
    %v1538 = vmul.f32 %v1523, 1.442695
    %v1539 = vpow.pop %v1538
    %v1540 = vsel %vm413, %v1525, 0.0
    %1541 = vadd.xlane.f32.xlu0 %v1540
    %v1542 = vpop.xlane.xlu0 %1541
    %v1543 = vsel %vm413, %v1527, 0.0
    %1544 = vadd.xlane.f32.xlu0 %v1543
    %v1545 = vpop.xlane.xlu0 %1544
    %v1546 = vsel %vm413, %v1529, 0.0
    %1547 = vadd.xlane.f32.xlu0 %v1546
    %v1548 = vpop.xlane.xlu0 %1547
    %v1549 = vsel %vm413, %v1531, 0.0
    %1550 = vadd.xlane.f32.xlu0 %v1549
    %v1551 = vpop.xlane.xlu0 %1550
    %v1552 = vsel %vm413, %v1533, 0.0
    %1553 = vadd.xlane.f32.xlu0 %v1552
    %v1554 = vpop.xlane.xlu0 %1553
    %v1555 = vsel %vm413, %v1535, 0.0
    %1556 = vadd.xlane.f32.xlu0 %v1555
    %v1557 = vpop.xlane.xlu0 %1556
    %v1558 = vsel %vm413, %v1537, 0.0
    %1559 = vadd.xlane.f32.xlu0 %v1558
    %v1560 = vpop.xlane.xlu0 %1559
    %v1561 = vsel %vm413, %v1539, 0.0
    %1562 = vadd.xlane.f32.xlu0 %v1561
    %v1563 = vpop.xlane.xlu0 %1562
    %v1564 = vrcp.pop %v1542
    %v1565 = vrcp.pop %v1545
    %v1566 = vrcp.pop %v1548
    %v1567 = vrcp.pop %v1551
    %v1568 = vrcp.pop %v1554
    %v1569 = vrcp.pop %v1557
    %v1570 = vrcp.pop %v1560
    %v1571 = vrcp.pop %v1563
    %v1572 = vmul.f32 %v1525, %v1564
    %v1573 = vmul.f32 %v1527, %v1565
    %v1574 = vmul.f32 %v1529, %v1566
    %v1575 = vmul.f32 %v1531, %v1567
    %v1576 = vmul.f32 %v1533, %v1568
    %v1577 = vmul.f32 %v1535, %v1569
    %v1578 = vmul.f32 %v1537, %v1570
    %v1579 = vmul.f32 %v1539, %v1571
    %1580 = vrot.lane.b32.xlu0 %v200, 48
    %v1581 = vpop.permute.xlu0 %1580
    %1582 = vrot.lane.b32.xlu0 %v205, 48
    %v1583 = vpop.permute.xlu0 %1582
    %1584 = vrot.lane.b32.xlu0 %v210, 48
    %v1585 = vpop.permute.xlu0 %1584
    %1586 = vrot.lane.b32.xlu0 %v215, 48
    %v1587 = vpop.permute.xlu0 %1586
    %1588 = vrot.lane.b32.xlu0 %v220, 48
    %v1589 = vpop.permute.xlu0 %1588
    %1590 = vrot.lane.b32.xlu0 %v225, 48
    %v1591 = vpop.permute.xlu0 %1590
    %1592 = vrot.lane.b32.xlu0 %v230, 48
    %v1593 = vpop.permute.xlu0 %1592
    %1594 = vrot.lane.b32.xlu0 %v235, 48
    %v1595 = vpop.permute.xlu0 %1594
    %v1605 = vsel %vm413, %v1572, 0
    %v1608 = vsel %vm413, %v1573, 0
    %v1611 = vsel %vm413, %v1574, 0
    %v1614 = vsel %vm413, %v1575, 0
    %v1617 = vsel %vm413, %v1576, 0
    %v1620 = vsel %vm413, %v1577, 0
    %v1623 = vsel %vm413, %v1578, 0
    %v1626 = vsel %vm413, %v1579, 0
    %1628 = vmatprep.subr.mxu0 0.0
    %1629 = vmatpush1.msra.mxu0 %v1581
    %1630 = vmatprep.subr.mxu0 0.0
    %1631 = vmatpush1.msra.mxu0 %v1583
    %1632 = vmatprep.subr.mxu0 0.0
    %1633 = vmatpush1.msra.mxu0 %v1585
    %1634 = vmatprep.subr.mxu0 0.0
    %1635 = vmatpush1.msra.mxu0 %v1587
    %1636 = vmatprep.subr.mxu0 0.0
    %1637 = vmatpush1.msra.mxu0 %v1589
    %1638 = vmatprep.subr.mxu0 0.0
    %1639 = vmatpush1.msra.mxu0 %v1591
    %1640 = vmatprep.subr.mxu0 0.0
    %1641 = vmatpush1.msra.mxu0 %v1593
    %1642 = vmatprep.subr.mxu0 0.0
    %1643 = vmatpush1.msra.mxu0 %v1595
    %1644 = vmatprep.subr.mxu0 0.0
    %1645 = vmatpush1.msra.mxu0 0.0
    %1646 = vmatprep.subr.mxu0 0.0
    %1647 = vmatpush1.msra.mxu0 0.0
    %1648 = vmatprep.subr.mxu0 0.0
    %1649 = vmatpush1.msra.mxu0 0.0
    %1650 = vmatprep.subr.mxu0 0.0
    %1651 = vmatpush1.msra.mxu0 0.0
    %1652 = vmatprep.subr.mxu0 0.0
    %1653 = vmatpush1.msra.mxu0 0.0
    %1654 = vmatprep.subr.mxu0 0.0
    %1655 = vmatpush1.msra.mxu0 0.0
    %1656 = vmatprep.subr.mxu0 0.0
    %1657 = vmatpush1.msra.mxu0 0.0
    %1658 = vmatprep.subr.mxu0 0.0
    %1659 = vmatpush1.msra.mxu0 0.0
    %1660 = vmatprep.subr.mxu0 0.0
    %1661 = vmatpush1.msra.mxu0 0.0
    %1662 = vmatprep.subr.mxu0 0.0
    %1663 = vmatpush1.msra.mxu0 0.0
    %1664 = vmatprep.subr.mxu0 0.0
    %1665 = vmatpush1.msra.mxu0 0.0
    %1666 = vmatprep.subr.mxu0 0.0
    %1667 = vmatpush1.msra.mxu0 0.0
    %1668 = vmatprep.subr.mxu0 0.0
    %1669 = vmatpush1.msra.mxu0 0.0
    %1670 = vmatprep.subr.mxu0 0.0
    %1671 = vmatpush1.msra.mxu0 0.0
    %1672 = vmatprep.subr.mxu0 0.0
    %1673 = vmatpush1.msra.mxu0 0.0
    %1674 = vmatprep.subr.mxu0 0.0
    %1675 = vmatpush1.msra.mxu0 0.0
    %1676 = vmatprep.subr.mxu0 0.0
    %1677 = vmatpush1.msra.mxu0 0.0
    %1678 = vmatprep.subr.mxu0 0.0
    %1679 = vmatpush1.msra.mxu0 0.0
    %1680 = vmatprep.subr.mxu0 0.0
    %1681 = vmatpush1.msra.mxu0 0.0
    %1682 = vmatprep.subr.mxu0 0.0
    %1683 = vmatpush1.msra.mxu0 0.0
    %1684 = vmatprep.subr.mxu0 0.0
    %1685 = vmatpush1.msra.mxu0 0.0
    %1686 = vmatprep.subr.mxu0 0.0
    %1687 = vmatpush1.msra.mxu0 0.0
    %1688 = vmatprep.subr.mxu0 0.0
    %1689 = vmatpush1.msra.mxu0 0.0
    %1690 = vmatprep.subr.mxu0 0.0
    %1691 = vmatpush1.msra.mxu0 0.0
    %1692 = vmatprep.mubr.f32.mxu0 0.0
    %1693 = vmatmul.mubr.f32.gmra.mrb[0].mxu0 %v1605
    %v1694 = vpop.f32.mrb[0].mxu0
    %v1695 = vadd.f32 0.0, %v1694
    %v1696 = vpop.f32.mrb[0].mxu0
    %1697 = vmatprep.mubr.f32.mxu0 0.0
    %1698 = vmatmul.mubr.f32.gmra.mrb[0].mxu0 %v1608
    %v1699 = vpop.f32.mrb[0].mxu0
    %v1700 = vadd.f32 0.0, %v1699
    %v1701 = vpop.f32.mrb[0].mxu0
    %1702 = vmatprep.mubr.f32.mxu0 0.0
    %1703 = vmatmul.mubr.f32.gmra.mrb[0].mxu0 %v1611
    %v1704 = vpop.f32.mrb[0].mxu0
    %v1705 = vadd.f32 0.0, %v1704
    %v1706 = vpop.f32.mrb[0].mxu0
    %1707 = vmatprep.mubr.f32.mxu0 0.0
    %1708 = vmatmul.mubr.f32.gmra.mrb[0].mxu0 %v1614
    %v1709 = vpop.f32.mrb[0].mxu0
    %v1710 = vadd.f32 0.0, %v1709
    %v1711 = vpop.f32.mrb[0].mxu0
    %1712 = vmatprep.mubr.f32.mxu0 0.0
    %1713 = vmatmul.mubr.f32.gmra.mrb[0].mxu0 %v1617
    %v1714 = vpop.f32.mrb[0].mxu0
    %v1715 = vadd.f32 0.0, %v1714
    %v1716 = vpop.f32.mrb[0].mxu0
    %1717 = vmatprep.mubr.f32.mxu0 0.0
    %1718 = vmatmul.mubr.f32.gmra.mrb[0].mxu0 %v1620
    %v1719 = vpop.f32.mrb[0].mxu0
    %v1720 = vadd.f32 0.0, %v1719
    %v1721 = vpop.f32.mrb[0].mxu0
    %1722 = vmatprep.mubr.f32.mxu0 0.0
    %1723 = vmatmul.mubr.f32.gmra.mrb[0].mxu0 %v1623
    %v1724 = vpop.f32.mrb[0].mxu0
    %v1725 = vadd.f32 0.0, %v1724
    %v1726 = vpop.f32.mrb[0].mxu0
    %1727 = vmatprep.mubr.f32.mxu0 0.0
    %1728 = vmatmul.mubr.f32.gmra.mrb[0].mxu0 %v1626
    %v1729 = vpop.f32.mrb[0].mxu0
    %v1730 = vadd.f32 0.0, %v1729
    %v1731 = vpop.f32.mrb[0].mxu0
    %1732 = vdwg.mxu0
    %v1734 = vsel %vm275, %v1695, 0
    %v1737 = vsel %vm275, %v1700, 0
    %v1740 = vsel %vm275, %v1705, 0
    %v1743 = vsel %vm275, %v1710, 0
    %v1746 = vsel %vm275, %v1715, 0
    %v1749 = vsel %vm275, %v1720, 0
    %v1752 = vsel %vm275, %v1725, 0
    %v1755 = vsel %vm275, %v1730, 0
    %1757 = vmatprep.subr.mxu0 0.0
    %1758 = vmatpush1.msra.mxu0 %v248
    %1759 = vmatprep.subr.mxu0 0.0
    %1760 = vmatpush1.msra.mxu0 0.0
    %1761 = vmatprep.subr.mxu0 0.0
    %1762 = vmatpush1.msra.mxu0 0.0
    %1763 = vmatprep.subr.mxu0 0.0
    %1764 = vmatpush1.msra.mxu0 0.0
    %1765 = vmatprep.subr.mxu0 0.0
    %1766 = vmatpush1.msra.mxu0 0.0
    %1767 = vmatprep.subr.mxu0 0.0
    %1768 = vmatpush1.msra.mxu0 0.0
    %1769 = vmatprep.subr.mxu0 0.0
    %1770 = vmatpush1.msra.mxu0 0.0
    %1771 = vmatprep.subr.mxu0 0.0
    %1772 = vmatpush1.msra.mxu0 0.0
    %1773 = vmatprep.subr.mxu0 0.0
    %1774 = vmatpush1.msra.mxu0 0.0
    %1775 = vmatprep.subr.mxu0 0.0
    %1776 = vmatpush1.msra.mxu0 0.0
    %1777 = vmatprep.subr.mxu0 0.0
    %1778 = vmatpush1.msra.mxu0 0.0
    %1779 = vmatprep.subr.mxu0 0.0
    %1780 = vmatpush1.msra.mxu0 0.0
    %1781 = vmatprep.subr.mxu0 0.0
    %1782 = vmatpush1.msra.mxu0 0.0
    %1783 = vmatprep.subr.mxu0 0.0
    %1784 = vmatpush1.msra.mxu0 0.0
    %1785 = vmatprep.subr.mxu0 0.0
    %1786 = vmatpush1.msra.mxu0 0.0
    %1787 = vmatprep.subr.mxu0 0.0
    %1788 = vmatpush1.msra.mxu0 0.0
    %1789 = vmatprep.subr.mxu0 0.0
    %1790 = vmatpush1.msra.mxu0 0.0
    %1791 = vmatprep.subr.mxu0 0.0
    %1792 = vmatpush1.msra.mxu0 0.0
    %1793 = vmatprep.subr.mxu0 0.0
    %1794 = vmatpush1.msra.mxu0 0.0
    %1795 = vmatprep.subr.mxu0 0.0
    %1796 = vmatpush1.msra.mxu0 0.0
    %1797 = vmatprep.subr.mxu0 0.0
    %1798 = vmatpush1.msra.mxu0 0.0
    %1799 = vmatprep.subr.mxu0 0.0
    %1800 = vmatpush1.msra.mxu0 0.0
    %1801 = vmatprep.subr.mxu0 0.0
    %1802 = vmatpush1.msra.mxu0 0.0
    %1803 = vmatprep.subr.mxu0 0.0
    %1804 = vmatpush1.msra.mxu0 0.0
    %1805 = vmatprep.subr.mxu0 0.0
    %1806 = vmatpush1.msra.mxu0 0.0
    %1807 = vmatprep.subr.mxu0 0.0
    %1808 = vmatpush1.msra.mxu0 0.0
    %1809 = vmatprep.subr.mxu0 0.0
    %1810 = vmatpush1.msra.mxu0 0.0
    %1811 = vmatprep.subr.mxu0 0.0
    %1812 = vmatpush1.msra.mxu0 0.0
    %1813 = vmatprep.subr.mxu0 0.0
    %1814 = vmatpush1.msra.mxu0 0.0
    %1815 = vmatprep.subr.mxu0 0.0
    %1816 = vmatpush1.msra.mxu0 0.0
    %1817 = vmatprep.subr.mxu0 0.0
    %1818 = vmatpush1.msra.mxu0 0.0
    %1819 = vmatprep.subr.mxu0 0.0
    %1820 = vmatpush1.msra.mxu0 0.0
    %1821 = vmatprep.mubr.f32.mxu0 0.0
    %1822 = vmatmul.mubr.f32.gmra.mrb[0].mxu0 %v1734
    %v1823 = vpop.f32.mrb[0].mxu0
    %v1824 = vadd.f32 0.0, %v1823
    %v1825 = vpop.f32.mrb[0].mxu0
    %1826 = vmatprep.mubr.f32.mxu0 0.0
    %1827 = vmatmul.mubr.f32.gmra.mrb[0].mxu0 %v1737
    %v1828 = vpop.f32.mrb[0].mxu0
    %v1829 = vadd.f32 0.0, %v1828
    %v1830 = vpop.f32.mrb[0].mxu0
    %1831 = vmatprep.mubr.f32.mxu0 0.0
    %1832 = vmatmul.mubr.f32.gmra.mrb[0].mxu0 %v1740
    %v1833 = vpop.f32.mrb[0].mxu0
    %v1834 = vadd.f32 0.0, %v1833
    %v1835 = vpop.f32.mrb[0].mxu0
    %1836 = vmatprep.mubr.f32.mxu0 0.0
    %1837 = vmatmul.mubr.f32.gmra.mrb[0].mxu0 %v1743
    %v1838 = vpop.f32.mrb[0].mxu0
    %v1839 = vadd.f32 0.0, %v1838
    %v1840 = vpop.f32.mrb[0].mxu0
    %1841 = vmatprep.mubr.f32.mxu0 0.0
    %1842 = vmatmul.mubr.f32.gmra.mrb[0].mxu0 %v1746
    %v1843 = vpop.f32.mrb[0].mxu0
    %v1844 = vadd.f32 0.0, %v1843
    %v1845 = vpop.f32.mrb[0].mxu0
    %1846 = vmatprep.mubr.f32.mxu0 0.0
    %1847 = vmatmul.mubr.f32.gmra.mrb[0].mxu0 %v1749
    %v1848 = vpop.f32.mrb[0].mxu0
    %v1849 = vadd.f32 0.0, %v1848
    %v1850 = vpop.f32.mrb[0].mxu0
    %1851 = vmatprep.mubr.f32.mxu0 0.0
    %1852 = vmatmul.mubr.f32.gmra.mrb[0].mxu0 %v1752
    %v1853 = vpop.f32.mrb[0].mxu0
    %v1854 = vadd.f32 0.0, %v1853
    %v1855 = vpop.f32.mrb[0].mxu0
    %1856 = vmatprep.mubr.f32.mxu0 0.0
    %1857 = vmatmul.mubr.f32.gmra.mrb[0].mxu0 %v1755
    %v1858 = vpop.f32.mrb[0].mxu0
    %v1859 = vadd.f32 0.0, %v1858
    %v1860 = vpop.f32.mrb[0].mxu0
    %1861 = vdwg.mxu0
    %v1862 = vadd.f32 %v1285, %v1824
    %v1863 = vadd.f32 %v1290, %v1829
    %v1864 = vadd.f32 %v1295, %v1834
    %v1865 = vadd.f32 %v1300, %v1839
    %v1866 = vadd.f32 %v1305, %v1844
    %v1867 = vadd.f32 %v1310, %v1849
    %v1868 = vadd.f32 %v1315, %v1854
    %v1869 = vadd.f32 %v1320, %v1859
    %1870 = vrot.lane.b32.xlu0 %v200, 104
    %v1871 = vpop.permute.xlu0 %1870
    %1872 = vrot.lane.b32.xlu0 %v205, 104
    %v1873 = vpop.permute.xlu0 %1872
    %1874 = vrot.lane.b32.xlu0 %v210, 104
    %v1875 = vpop.permute.xlu0 %1874
    %1876 = vrot.lane.b32.xlu0 %v215, 104
    %v1877 = vpop.permute.xlu0 %1876
    %1878 = vrot.lane.b32.xlu0 %v220, 104
    %v1879 = vpop.permute.xlu0 %1878
    %1880 = vrot.lane.b32.xlu0 %v225, 104
    %v1881 = vpop.permute.xlu0 %1880
    %1882 = vrot.lane.b32.xlu0 %v230, 104
    %v1883 = vpop.permute.xlu0 %1882
    %1884 = vrot.lane.b32.xlu0 %v235, 104
    %v1885 = vpop.permute.xlu0 %1884
    %1886 = vrot.lane.b32.xlu0 %v200, 72
    %v1887 = vpop.permute.xlu0 %1886
    %1888 = vrot.lane.b32.xlu0 %v205, 72
    %v1889 = vpop.permute.xlu0 %1888
    %1890 = vrot.lane.b32.xlu0 %v210, 72
    %v1891 = vpop.permute.xlu0 %1890
    %1892 = vrot.lane.b32.xlu0 %v215, 72
    %v1893 = vpop.permute.xlu0 %1892
    %1894 = vrot.lane.b32.xlu0 %v220, 72
    %v1895 = vpop.permute.xlu0 %1894
    %1896 = vrot.lane.b32.xlu0 %v225, 72
    %v1897 = vpop.permute.xlu0 %1896
    %1898 = vrot.lane.b32.xlu0 %v230, 72
    %v1899 = vpop.permute.xlu0 %1898
    %1900 = vrot.lane.b32.xlu0 %v235, 72
    %v1901 = vpop.permute.xlu0 %1900
    %v1902 = vsel %vm275, %v1871, 0
    %v1904 = vsel %vm275, %v1873, 0
    %v1906 = vsel %vm275, %v1875, 0
    %v1908 = vsel %vm275, %v1877, 0
    %v1910 = vsel %vm275, %v1879, 0
    %v1912 = vsel %vm275, %v1881, 0
    %v1914 = vsel %vm275, %v1883, 0
    %v1916 = vsel %vm275, %v1885, 0
    %v1918 = vsel %vm275, %v1887, 0
    %v1920 = vsel %vm275, %v1889, 0
    %v1922 = vsel %vm275, %v1891, 0
    %v1924 = vsel %vm275, %v1893, 0
    %v1926 = vsel %vm275, %v1895, 0
    %v1928 = vsel %vm275, %v1897, 0
    %v1930 = vsel %vm275, %v1899, 0
    %v1932 = vsel %vm275, %v1901, 0
    %1934 = vmatprep.subr.mxu0 0.0
    %1935 = vmatpush1.xpose.msra.mxu0 %v1918
    %1936 = vmatprep.subr.mxu0 0.0
    %1937 = vmatpush1.xpose.msra.mxu0 %v1920
    %1938 = vmatprep.subr.mxu0 0.0
    %1939 = vmatpush1.xpose.msra.mxu0 %v1922
    %1940 = vmatprep.subr.mxu0 0.0
    %1941 = vmatpush1.xpose.msra.mxu0 %v1924
    %1942 = vmatprep.subr.mxu0 0.0
    %1943 = vmatpush1.xpose.msra.mxu0 %v1926
    %1944 = vmatprep.subr.mxu0 0.0
    %1945 = vmatpush1.xpose.msra.mxu0 %v1928
    %1946 = vmatprep.subr.mxu0 0.0
    %1947 = vmatpush1.xpose.msra.mxu0 %v1930
    %1948 = vmatprep.subr.mxu0 0.0
    %1949 = vmatpush1.xpose.msra.mxu0 %v1932
    %1950 = vmatprep.subr.mxu0 0.0
    %1951 = vmatpush1.xpose.msra.mxu0 0.0
    %1952 = vmatprep.subr.mxu0 0.0
    %1953 = vmatpush1.xpose.msra.mxu0 0.0
    %1954 = vmatprep.subr.mxu0 0.0
    %1955 = vmatpush1.xpose.msra.mxu0 0.0
    %1956 = vmatprep.subr.mxu0 0.0
    %1957 = vmatpush1.xpose.msra.mxu0 0.0
    %1958 = vmatprep.subr.mxu0 0.0
    %1959 = vmatpush1.xpose.msra.mxu0 0.0
    %1960 = vmatprep.subr.mxu0 0.0
    %1961 = vmatpush1.xpose.msra.mxu0 0.0
    %1962 = vmatprep.subr.mxu0 0.0
    %1963 = vmatpush1.xpose.msra.mxu0 0.0
    %1964 = vmatprep.subr.mxu0 0.0
    %1965 = vmatpush1.xpose.msra.mxu0 0.0
    %1966 = vmatprep.subr.mxu0 0.0
    %1967 = vmatpush1.xpose.msra.mxu0 0.0
    %1968 = vmatprep.subr.mxu0 0.0
    %1969 = vmatpush1.xpose.msra.mxu0 0.0
    %1970 = vmatprep.subr.mxu0 0.0
    %1971 = vmatpush1.xpose.msra.mxu0 0.0
    %1972 = vmatprep.subr.mxu0 0.0
    %1973 = vmatpush1.xpose.msra.mxu0 0.0
    %1974 = vmatprep.subr.mxu0 0.0
    %1975 = vmatpush1.xpose.msra.mxu0 0.0
    %1976 = vmatprep.subr.mxu0 0.0
    %1977 = vmatpush1.xpose.msra.mxu0 0.0
    %1978 = vmatprep.subr.mxu0 0.0
    %1979 = vmatpush1.xpose.msra.mxu0 0.0
    %1980 = vmatprep.subr.mxu0 0.0
    %1981 = vmatpush1.xpose.msra.mxu0 0.0
    %1982 = vmatprep.subr.mxu0 0.0
    %1983 = vmatpush1.xpose.msra.mxu0 0.0
    %1984 = vmatprep.subr.mxu0 0.0
    %1985 = vmatpush1.xpose.msra.mxu0 0.0
    %1986 = vmatprep.subr.mxu0 0.0
    %1987 = vmatpush1.xpose.msra.mxu0 0.0
    %1988 = vmatprep.subr.mxu0 0.0
    %1989 = vmatpush1.xpose.msra.mxu0 0.0
    %1990 = vmatprep.subr.mxu0 0.0
    %1991 = vmatpush1.xpose.msra.mxu0 0.0
    %1992 = vmatprep.subr.mxu0 0.0
    %1993 = vmatpush1.xpose.msra.mxu0 0.0
    %1994 = vmatprep.subr.mxu0 0.0
    %1995 = vmatpush1.xpose.msra.mxu0 0.0
    %1996 = vmatprep.subr.mxu0 0.0
    %1997 = vmatpush1.xpose.msra.mxu0 0.0
    %1998 = vmatprep.mubr.f32.mxu0 0.0
    %1999 = vmatmul.mubr.f32.gmra.mrb[0].mxu0 %v1902
    %v2000 = vpop.f32.mrb[0].mxu0
    %v2001 = vadd.f32 %v238, %v2000
    %v2002 = vpop.f32.mrb[0].mxu0
    %2003 = vmatprep.mubr.f32.mxu0 0.0
    %2004 = vmatmul.mubr.f32.gmra.mrb[0].mxu0 %v1904
    %v2005 = vpop.f32.mrb[0].mxu0
    %v2006 = vadd.f32 %v239, %v2005
    %v2007 = vpop.f32.mrb[0].mxu0
    %2008 = vmatprep.mubr.f32.mxu0 0.0
    %2009 = vmatmul.mubr.f32.gmra.mrb[0].mxu0 %v1906
    %v2010 = vpop.f32.mrb[0].mxu0
    %v2011 = vadd.f32 %v240, %v2010
    %v2012 = vpop.f32.mrb[0].mxu0
    %2013 = vmatprep.mubr.f32.mxu0 0.0
    %2014 = vmatmul.mubr.f32.gmra.mrb[0].mxu0 %v1908
    %v2015 = vpop.f32.mrb[0].mxu0
    %v2016 = vadd.f32 %v241, %v2015
    %v2017 = vpop.f32.mrb[0].mxu0
    %2018 = vmatprep.mubr.f32.mxu0 0.0
    %2019 = vmatmul.mubr.f32.gmra.mrb[0].mxu0 %v1910
    %v2020 = vpop.f32.mrb[0].mxu0
    %v2021 = vadd.f32 %v242, %v2020
    %v2022 = vpop.f32.mrb[0].mxu0
    %2023 = vmatprep.mubr.f32.mxu0 0.0
    %2024 = vmatmul.mubr.f32.gmra.mrb[0].mxu0 %v1912
    %v2025 = vpop.f32.mrb[0].mxu0
    %v2026 = vadd.f32 %v243, %v2025
    %v2027 = vpop.f32.mrb[0].mxu0
    %2028 = vmatprep.mubr.f32.mxu0 0.0
    %2029 = vmatmul.mubr.f32.gmra.mrb[0].mxu0 %v1914
    %v2030 = vpop.f32.mrb[0].mxu0
    %v2031 = vadd.f32 %v244, %v2030
    %v2032 = vpop.f32.mrb[0].mxu0
    %2033 = vmatprep.mubr.f32.mxu0 0.0
    %2034 = vmatmul.mubr.f32.gmra.mrb[0].mxu0 %v1916
    %v2035 = vpop.f32.mrb[0].mxu0
    %v2036 = vadd.f32 %v245, %v2035
    %v2037 = vpop.f32.mrb[0].mxu0
    %2038 = vdwg.mxu0
    %v2039 = vsel %vm413, %v2001, -inf
    %2040 = vmax.xlane.f32.xlu0 %v2039
    %v2041 = vpop.xlane.xlu0 %2040
    %v2042 = vsel %vm413, %v2006, -inf
    %2043 = vmax.xlane.f32.xlu0 %v2042
    %v2044 = vpop.xlane.xlu0 %2043
    %v2045 = vsel %vm413, %v2011, -inf
    %2046 = vmax.xlane.f32.xlu0 %v2045
    %v2047 = vpop.xlane.xlu0 %2046
    %v2048 = vsel %vm413, %v2016, -inf
    %2049 = vmax.xlane.f32.xlu0 %v2048
    %v2050 = vpop.xlane.xlu0 %2049
    %v2051 = vsel %vm413, %v2021, -inf
    %2052 = vmax.xlane.f32.xlu0 %v2051
    %v2053 = vpop.xlane.xlu0 %2052
    %v2054 = vsel %vm413, %v2026, -inf
    %2055 = vmax.xlane.f32.xlu0 %v2054
    %v2056 = vpop.xlane.xlu0 %2055
    %v2057 = vsel %vm413, %v2031, -inf
    %2058 = vmax.xlane.f32.xlu0 %v2057
    %v2059 = vpop.xlane.xlu0 %2058
    %v2060 = vsel %vm413, %v2036, -inf
    %2061 = vmax.xlane.f32.xlu0 %v2060
    %v2062 = vpop.xlane.xlu0 %2061
    %v2063 = vsub.f32 %v2001, %v2041
    %v2064 = vsub.f32 %v2006, %v2044
    %v2065 = vsub.f32 %v2011, %v2047
    %v2066 = vsub.f32 %v2016, %v2050
    %v2067 = vsub.f32 %v2021, %v2053
    %v2068 = vsub.f32 %v2026, %v2056
    %v2069 = vsub.f32 %v2031, %v2059
    %v2070 = vsub.f32 %v2036, %v2062
    %v2071 = vmul.f32 %v2063, 1.442695
    %v2072 = vpow.pop %v2071
    %v2073 = vmul.f32 %v2064, 1.442695
    %v2074 = vpow.pop %v2073
    %v2075 = vmul.f32 %v2065, 1.442695
    %v2076 = vpow.pop %v2075
    %v2077 = vmul.f32 %v2066, 1.442695
    %v2078 = vpow.pop %v2077
    %v2079 = vmul.f32 %v2067, 1.442695
    %v2080 = vpow.pop %v2079
    %v2081 = vmul.f32 %v2068, 1.442695
    %v2082 = vpow.pop %v2081
    %v2083 = vmul.f32 %v2069, 1.442695
    %v2084 = vpow.pop %v2083
    %v2085 = vmul.f32 %v2070, 1.442695
    %v2086 = vpow.pop %v2085
    %v2087 = vsel %vm413, %v2072, 0.0
    %2088 = vadd.xlane.f32.xlu0 %v2087
    %v2089 = vpop.xlane.xlu0 %2088
    %v2090 = vsel %vm413, %v2074, 0.0
    %2091 = vadd.xlane.f32.xlu0 %v2090
    %v2092 = vpop.xlane.xlu0 %2091
    %v2093 = vsel %vm413, %v2076, 0.0
    %2094 = vadd.xlane.f32.xlu0 %v2093
    %v2095 = vpop.xlane.xlu0 %2094
    %v2096 = vsel %vm413, %v2078, 0.0
    %2097 = vadd.xlane.f32.xlu0 %v2096
    %v2098 = vpop.xlane.xlu0 %2097
    %v2099 = vsel %vm413, %v2080, 0.0
    %2100 = vadd.xlane.f32.xlu0 %v2099
    %v2101 = vpop.xlane.xlu0 %2100
    %v2102 = vsel %vm413, %v2082, 0.0
    %2103 = vadd.xlane.f32.xlu0 %v2102
    %v2104 = vpop.xlane.xlu0 %2103
    %v2105 = vsel %vm413, %v2084, 0.0
    %2106 = vadd.xlane.f32.xlu0 %v2105
    %v2107 = vpop.xlane.xlu0 %2106
    %v2108 = vsel %vm413, %v2086, 0.0
    %2109 = vadd.xlane.f32.xlu0 %v2108
    %v2110 = vpop.xlane.xlu0 %2109
    %v2111 = vrcp.pop %v2089
    %v2112 = vrcp.pop %v2092
    %v2113 = vrcp.pop %v2095
    %v2114 = vrcp.pop %v2098
    %v2115 = vrcp.pop %v2101
    %v2116 = vrcp.pop %v2104
    %v2117 = vrcp.pop %v2107
    %v2118 = vrcp.pop %v2110
    %v2119 = vmul.f32 %v2072, %v2111
    %v2120 = vmul.f32 %v2074, %v2112
    %v2121 = vmul.f32 %v2076, %v2113
    %v2122 = vmul.f32 %v2078, %v2114
    %v2123 = vmul.f32 %v2080, %v2115
    %v2124 = vmul.f32 %v2082, %v2116
    %v2125 = vmul.f32 %v2084, %v2117
    %v2126 = vmul.f32 %v2086, %v2118
    %2127 = vrot.lane.b32.xlu0 %v200, 40
    %v2128 = vpop.permute.xlu0 %2127
    %2129 = vrot.lane.b32.xlu0 %v205, 40
    %v2130 = vpop.permute.xlu0 %2129
    %2131 = vrot.lane.b32.xlu0 %v210, 40
    %v2132 = vpop.permute.xlu0 %2131
    %2133 = vrot.lane.b32.xlu0 %v215, 40
    %v2134 = vpop.permute.xlu0 %2133
    %2135 = vrot.lane.b32.xlu0 %v220, 40
    %v2136 = vpop.permute.xlu0 %2135
    %2137 = vrot.lane.b32.xlu0 %v225, 40
    %v2138 = vpop.permute.xlu0 %2137
    %2139 = vrot.lane.b32.xlu0 %v230, 40
    %v2140 = vpop.permute.xlu0 %2139
    %2141 = vrot.lane.b32.xlu0 %v235, 40
    %v2142 = vpop.permute.xlu0 %2141
    %v2152 = vsel %vm413, %v2119, 0
    %v2155 = vsel %vm413, %v2120, 0
    %v2158 = vsel %vm413, %v2121, 0
    %v2161 = vsel %vm413, %v2122, 0
    %v2164 = vsel %vm413, %v2123, 0
    %v2167 = vsel %vm413, %v2124, 0
    %v2170 = vsel %vm413, %v2125, 0
    %v2173 = vsel %vm413, %v2126, 0
    %2175 = vmatprep.subr.mxu0 0.0
    %2176 = vmatpush1.msra.mxu0 %v2128
    %2177 = vmatprep.subr.mxu0 0.0
    %2178 = vmatpush1.msra.mxu0 %v2130
    %2179 = vmatprep.subr.mxu0 0.0
    %2180 = vmatpush1.msra.mxu0 %v2132
    %2181 = vmatprep.subr.mxu0 0.0
    %2182 = vmatpush1.msra.mxu0 %v2134
    %2183 = vmatprep.subr.mxu0 0.0
    %2184 = vmatpush1.msra.mxu0 %v2136
    %2185 = vmatprep.subr.mxu0 0.0
    %2186 = vmatpush1.msra.mxu0 %v2138
    %2187 = vmatprep.subr.mxu0 0.0
    %2188 = vmatpush1.msra.mxu0 %v2140
    %2189 = vmatprep.subr.mxu0 0.0
    %2190 = vmatpush1.msra.mxu0 %v2142
    %2191 = vmatprep.subr.mxu0 0.0
    %2192 = vmatpush1.msra.mxu0 0.0
    %2193 = vmatprep.subr.mxu0 0.0
    %2194 = vmatpush1.msra.mxu0 0.0
    %2195 = vmatprep.subr.mxu0 0.0
    %2196 = vmatpush1.msra.mxu0 0.0
    %2197 = vmatprep.subr.mxu0 0.0
    %2198 = vmatpush1.msra.mxu0 0.0
    %2199 = vmatprep.subr.mxu0 0.0
    %2200 = vmatpush1.msra.mxu0 0.0
    %2201 = vmatprep.subr.mxu0 0.0
    %2202 = vmatpush1.msra.mxu0 0.0
    %2203 = vmatprep.subr.mxu0 0.0
    %2204 = vmatpush1.msra.mxu0 0.0
    %2205 = vmatprep.subr.mxu0 0.0
    %2206 = vmatpush1.msra.mxu0 0.0
    %2207 = vmatprep.subr.mxu0 0.0
    %2208 = vmatpush1.msra.mxu0 0.0
    %2209 = vmatprep.subr.mxu0 0.0
    %2210 = vmatpush1.msra.mxu0 0.0
    %2211 = vmatprep.subr.mxu0 0.0
    %2212 = vmatpush1.msra.mxu0 0.0
    %2213 = vmatprep.subr.mxu0 0.0
    %2214 = vmatpush1.msra.mxu0 0.0
    %2215 = vmatprep.subr.mxu0 0.0
    %2216 = vmatpush1.msra.mxu0 0.0
    %2217 = vmatprep.subr.mxu0 0.0
    %2218 = vmatpush1.msra.mxu0 0.0
    %2219 = vmatprep.subr.mxu0 0.0
    %2220 = vmatpush1.msra.mxu0 0.0
    %2221 = vmatprep.subr.mxu0 0.0
    %2222 = vmatpush1.msra.mxu0 0.0
    %2223 = vmatprep.subr.mxu0 0.0
    %2224 = vmatpush1.msra.mxu0 0.0
    %2225 = vmatprep.subr.mxu0 0.0
    %2226 = vmatpush1.msra.mxu0 0.0
    %2227 = vmatprep.subr.mxu0 0.0
    %2228 = vmatpush1.msra.mxu0 0.0
    %2229 = vmatprep.subr.mxu0 0.0
    %2230 = vmatpush1.msra.mxu0 0.0
    %2231 = vmatprep.subr.mxu0 0.0
    %2232 = vmatpush1.msra.mxu0 0.0
    %2233 = vmatprep.subr.mxu0 0.0
    %2234 = vmatpush1.msra.mxu0 0.0
    %2235 = vmatprep.subr.mxu0 0.0
    %2236 = vmatpush1.msra.mxu0 0.0
    %2237 = vmatprep.subr.mxu0 0.0
    %2238 = vmatpush1.msra.mxu0 0.0
    %2239 = vmatprep.mubr.f32.mxu0 0.0
    %2240 = vmatmul.mubr.f32.gmra.mrb[0].mxu0 %v2152
    %v2241 = vpop.f32.mrb[0].mxu0
    %v2242 = vadd.f32 0.0, %v2241
    %v2243 = vpop.f32.mrb[0].mxu0
    %2244 = vmatprep.mubr.f32.mxu0 0.0
    %2245 = vmatmul.mubr.f32.gmra.mrb[0].mxu0 %v2155
    %v2246 = vpop.f32.mrb[0].mxu0
    %v2247 = vadd.f32 0.0, %v2246
    %v2248 = vpop.f32.mrb[0].mxu0
    %2249 = vmatprep.mubr.f32.mxu0 0.0
    %2250 = vmatmul.mubr.f32.gmra.mrb[0].mxu0 %v2158
    %v2251 = vpop.f32.mrb[0].mxu0
    %v2252 = vadd.f32 0.0, %v2251
    %v2253 = vpop.f32.mrb[0].mxu0
    %2254 = vmatprep.mubr.f32.mxu0 0.0
    %2255 = vmatmul.mubr.f32.gmra.mrb[0].mxu0 %v2161
    %v2256 = vpop.f32.mrb[0].mxu0
    %v2257 = vadd.f32 0.0, %v2256
    %v2258 = vpop.f32.mrb[0].mxu0
    %2259 = vmatprep.mubr.f32.mxu0 0.0
    %2260 = vmatmul.mubr.f32.gmra.mrb[0].mxu0 %v2164
    %v2261 = vpop.f32.mrb[0].mxu0
    %v2262 = vadd.f32 0.0, %v2261
    %v2263 = vpop.f32.mrb[0].mxu0
    %2264 = vmatprep.mubr.f32.mxu0 0.0
    %2265 = vmatmul.mubr.f32.gmra.mrb[0].mxu0 %v2167
    %v2266 = vpop.f32.mrb[0].mxu0
    %v2267 = vadd.f32 0.0, %v2266
    %v2268 = vpop.f32.mrb[0].mxu0
    %2269 = vmatprep.mubr.f32.mxu0 0.0
    %2270 = vmatmul.mubr.f32.gmra.mrb[0].mxu0 %v2170
    %v2271 = vpop.f32.mrb[0].mxu0
    %v2272 = vadd.f32 0.0, %v2271
    %v2273 = vpop.f32.mrb[0].mxu0
    %2274 = vmatprep.mubr.f32.mxu0 0.0
    %2275 = vmatmul.mubr.f32.gmra.mrb[0].mxu0 %v2173
    %v2276 = vpop.f32.mrb[0].mxu0
    %v2277 = vadd.f32 0.0, %v2276
    %v2278 = vpop.f32.mrb[0].mxu0
    %2279 = vdwg.mxu0
    %v2281 = vsel %vm275, %v2242, 0
    %v2284 = vsel %vm275, %v2247, 0
    %v2287 = vsel %vm275, %v2252, 0
    %v2290 = vsel %vm275, %v2257, 0
    %v2293 = vsel %vm275, %v2262, 0
    %v2296 = vsel %vm275, %v2267, 0
    %v2299 = vsel %vm275, %v2272, 0
    %v2302 = vsel %vm275, %v2277, 0
    %2304 = vmatprep.subr.mxu0 0.0
    %2305 = vmatpush1.msra.mxu0 %v249
    %2306 = vmatprep.subr.mxu0 0.0
    %2307 = vmatpush1.msra.mxu0 0.0
    %2308 = vmatprep.subr.mxu0 0.0
    %2309 = vmatpush1.msra.mxu0 0.0
    %2310 = vmatprep.subr.mxu0 0.0
    %2311 = vmatpush1.msra.mxu0 0.0
    %2312 = vmatprep.subr.mxu0 0.0
    %2313 = vmatpush1.msra.mxu0 0.0
    %2314 = vmatprep.subr.mxu0 0.0
    %2315 = vmatpush1.msra.mxu0 0.0
    %2316 = vmatprep.subr.mxu0 0.0
    %2317 = vmatpush1.msra.mxu0 0.0
    %2318 = vmatprep.subr.mxu0 0.0
    %2319 = vmatpush1.msra.mxu0 0.0
    %2320 = vmatprep.subr.mxu0 0.0
    %2321 = vmatpush1.msra.mxu0 0.0
    %2322 = vmatprep.subr.mxu0 0.0
    %2323 = vmatpush1.msra.mxu0 0.0
    %2324 = vmatprep.subr.mxu0 0.0
    %2325 = vmatpush1.msra.mxu0 0.0
    %2326 = vmatprep.subr.mxu0 0.0
    %2327 = vmatpush1.msra.mxu0 0.0
    %2328 = vmatprep.subr.mxu0 0.0
    %2329 = vmatpush1.msra.mxu0 0.0
    %2330 = vmatprep.subr.mxu0 0.0
    %2331 = vmatpush1.msra.mxu0 0.0
    %2332 = vmatprep.subr.mxu0 0.0
    %2333 = vmatpush1.msra.mxu0 0.0
    %2334 = vmatprep.subr.mxu0 0.0
    %2335 = vmatpush1.msra.mxu0 0.0
    %2336 = vmatprep.subr.mxu0 0.0
    %2337 = vmatpush1.msra.mxu0 0.0
    %2338 = vmatprep.subr.mxu0 0.0
    %2339 = vmatpush1.msra.mxu0 0.0
    %2340 = vmatprep.subr.mxu0 0.0
    %2341 = vmatpush1.msra.mxu0 0.0
    %2342 = vmatprep.subr.mxu0 0.0
    %2343 = vmatpush1.msra.mxu0 0.0
    %2344 = vmatprep.subr.mxu0 0.0
    %2345 = vmatpush1.msra.mxu0 0.0
    %2346 = vmatprep.subr.mxu0 0.0
    %2347 = vmatpush1.msra.mxu0 0.0
    %2348 = vmatprep.subr.mxu0 0.0
    %2349 = vmatpush1.msra.mxu0 0.0
    %2350 = vmatprep.subr.mxu0 0.0
    %2351 = vmatpush1.msra.mxu0 0.0
    %2352 = vmatprep.subr.mxu0 0.0
    %2353 = vmatpush1.msra.mxu0 0.0
    %2354 = vmatprep.subr.mxu0 0.0
    %2355 = vmatpush1.msra.mxu0 0.0
    %2356 = vmatprep.subr.mxu0 0.0
    %2357 = vmatpush1.msra.mxu0 0.0
    %2358 = vmatprep.subr.mxu0 0.0
    %2359 = vmatpush1.msra.mxu0 0.0
    %2360 = vmatprep.subr.mxu0 0.0
    %2361 = vmatpush1.msra.mxu0 0.0
    %2362 = vmatprep.subr.mxu0 0.0
    %2363 = vmatpush1.msra.mxu0 0.0
    %2364 = vmatprep.subr.mxu0 0.0
    %2365 = vmatpush1.msra.mxu0 0.0
    %2366 = vmatprep.subr.mxu0 0.0
    %2367 = vmatpush1.msra.mxu0 0.0
    %2368 = vmatprep.mubr.f32.mxu0 0.0
    %2369 = vmatmul.mubr.f32.gmra.mrb[0].mxu0 %v2281
    %v2370 = vpop.f32.mrb[0].mxu0
    %v2371 = vadd.f32 0.0, %v2370
    %v2372 = vpop.f32.mrb[0].mxu0
    %2373 = vmatprep.mubr.f32.mxu0 0.0
    %2374 = vmatmul.mubr.f32.gmra.mrb[0].mxu0 %v2284
    %v2375 = vpop.f32.mrb[0].mxu0
    %v2376 = vadd.f32 0.0, %v2375
    %v2377 = vpop.f32.mrb[0].mxu0
    %2378 = vmatprep.mubr.f32.mxu0 0.0
    %2379 = vmatmul.mubr.f32.gmra.mrb[0].mxu0 %v2287
    %v2380 = vpop.f32.mrb[0].mxu0
    %v2381 = vadd.f32 0.0, %v2380
    %v2382 = vpop.f32.mrb[0].mxu0
    %2383 = vmatprep.mubr.f32.mxu0 0.0
    %2384 = vmatmul.mubr.f32.gmra.mrb[0].mxu0 %v2290
    %v2385 = vpop.f32.mrb[0].mxu0
    %v2386 = vadd.f32 0.0, %v2385
    %v2387 = vpop.f32.mrb[0].mxu0
    %2388 = vmatprep.mubr.f32.mxu0 0.0
    %2389 = vmatmul.mubr.f32.gmra.mrb[0].mxu0 %v2293
    %v2390 = vpop.f32.mrb[0].mxu0
    %v2391 = vadd.f32 0.0, %v2390
    %v2392 = vpop.f32.mrb[0].mxu0
    %2393 = vmatprep.mubr.f32.mxu0 0.0
    %2394 = vmatmul.mubr.f32.gmra.mrb[0].mxu0 %v2296
    %v2395 = vpop.f32.mrb[0].mxu0
    %v2396 = vadd.f32 0.0, %v2395
    %v2397 = vpop.f32.mrb[0].mxu0
    %2398 = vmatprep.mubr.f32.mxu0 0.0
    %2399 = vmatmul.mubr.f32.gmra.mrb[0].mxu0 %v2299
    %v2400 = vpop.f32.mrb[0].mxu0
    %v2401 = vadd.f32 0.0, %v2400
    %v2402 = vpop.f32.mrb[0].mxu0
    %2403 = vmatprep.mubr.f32.mxu0 0.0
    %2404 = vmatmul.mubr.f32.gmra.mrb[0].mxu0 %v2302
    %v2405 = vpop.f32.mrb[0].mxu0
    %v2406 = vadd.f32 0.0, %v2405
    %v2407 = vpop.f32.mrb[0].mxu0
    %2408 = vdwg.mxu0
    %v2409 = vadd.f32 %v1862, %v2371
    %v2410 = vadd.f32 %v1863, %v2376
    %v2411 = vadd.f32 %v1864, %v2381
    %v2412 = vadd.f32 %v1865, %v2386
    %v2413 = vadd.f32 %v1866, %v2391
    %v2414 = vadd.f32 %v1867, %v2396
    %v2415 = vadd.f32 %v1868, %v2401
    %v2416 = vadd.f32 %v1869, %v2406
    %v2418 = vlaneseq
    %v2419 = vshrl.u32 %v2418, 7
    %v2420 = vsub.s32 0, %v2419
    %v2421 = vrot.slane %v250, %v2420
    %v2423 = vadd.f32 %v2409, %v2421
    %v2424 = vadd.f32 %v2410, %v2421
    %v2425 = vadd.f32 %v2411, %v2421
    %v2426 = vadd.f32 %v2412, %v2421
    %v2427 = vadd.f32 %v2413, %v2421
    %v2428 = vadd.f32 %v2414, %v2421
    %v2429 = vadd.f32 %v2415, %v2421
    %v2430 = vadd.f32 %v2416, %v2421
    %v2431 = vld [vmem:[%s9] sm:$0xff]
    %v2432 = vld [vmem:[%s9 + $0x8] sm:$0xff]
    %v2433 = vld [vmem:[%s9 + $0x10] sm:$0xff]
    %v2434 = vld [vmem:[%s9 + $0x18] sm:$0xff]
    %v2435 = vld [vmem:[%s10] sm:$0x1]
    %v2437 = vlaneseq
    %v2438 = vshrl.u32 %v2437, 7
    %v2439 = vsub.s32 0, %v2438
    %v2440 = vrot.slane %v2435, %v2439
    %v2443 = vsel %vm108, %v2423, 0
    %v2446 = vsel %vm108, %v2424, 0
    %v2449 = vsel %vm108, %v2425, 0
    %v2452 = vsel %vm108, %v2426, 0
    %v2455 = vsel %vm108, %v2427, 0
    %v2458 = vsel %vm108, %v2428, 0
    %v2461 = vsel %vm108, %v2429, 0
    %v2464 = vsel %vm108, %v2430, 0
    %2466 = vmatprep.subr.mxu0 0.0
    %2467 = vmatpush1.msra.mxu0 %v2431
    %2468 = vmatprep.subr.mxu0 0.0
    %2469 = vmatpush1.msra.mxu0 %v2432
    %2470 = vmatprep.subr.mxu0 0.0
    %2471 = vmatpush1.msra.mxu0 %v2433
    %2472 = vmatprep.subr.mxu0 0.0
    %2473 = vmatpush1.msra.mxu0 %v2434
    %2474 = vmatprep.subr.mxu0 0.0
    %2475 = vmatpush1.msra.mxu0 0.0
    %2476 = vmatprep.subr.mxu0 0.0
    %2477 = vmatpush1.msra.mxu0 0.0
    %2478 = vmatprep.subr.mxu0 0.0
    %2479 = vmatpush1.msra.mxu0 0.0
    %2480 = vmatprep.subr.mxu0 0.0
    %2481 = vmatpush1.msra.mxu0 0.0
    %2482 = vmatprep.subr.mxu0 0.0
    %2483 = vmatpush1.msra.mxu0 0.0
    %2484 = vmatprep.subr.mxu0 0.0
    %2485 = vmatpush1.msra.mxu0 0.0
    %2486 = vmatprep.subr.mxu0 0.0
    %2487 = vmatpush1.msra.mxu0 0.0
    %2488 = vmatprep.subr.mxu0 0.0
    %2489 = vmatpush1.msra.mxu0 0.0
    %2490 = vmatprep.subr.mxu0 0.0
    %2491 = vmatpush1.msra.mxu0 0.0
    %2492 = vmatprep.subr.mxu0 0.0
    %2493 = vmatpush1.msra.mxu0 0.0
    %2494 = vmatprep.subr.mxu0 0.0
    %2495 = vmatpush1.msra.mxu0 0.0
    %2496 = vmatprep.subr.mxu0 0.0
    %2497 = vmatpush1.msra.mxu0 0.0
    %2498 = vmatprep.subr.mxu0 0.0
    %2499 = vmatpush1.msra.mxu0 0.0
    %2500 = vmatprep.subr.mxu0 0.0
    %2501 = vmatpush1.msra.mxu0 0.0
    %2502 = vmatprep.subr.mxu0 0.0
    %2503 = vmatpush1.msra.mxu0 0.0
    %2504 = vmatprep.subr.mxu0 0.0
    %2505 = vmatpush1.msra.mxu0 0.0
    %2506 = vmatprep.subr.mxu0 0.0
    %2507 = vmatpush1.msra.mxu0 0.0
    %2508 = vmatprep.subr.mxu0 0.0
    %2509 = vmatpush1.msra.mxu0 0.0
    %2510 = vmatprep.subr.mxu0 0.0
    %2511 = vmatpush1.msra.mxu0 0.0
    %2512 = vmatprep.subr.mxu0 0.0
    %2513 = vmatpush1.msra.mxu0 0.0
    %2514 = vmatprep.subr.mxu0 0.0
    %2515 = vmatpush1.msra.mxu0 0.0
    %2516 = vmatprep.subr.mxu0 0.0
    %2517 = vmatpush1.msra.mxu0 0.0
    %2518 = vmatprep.subr.mxu0 0.0
    %2519 = vmatpush1.msra.mxu0 0.0
    %2520 = vmatprep.subr.mxu0 0.0
    %2521 = vmatpush1.msra.mxu0 0.0
    %2522 = vmatprep.subr.mxu0 0.0
    %2523 = vmatpush1.msra.mxu0 0.0
    %2524 = vmatprep.subr.mxu0 0.0
    %2525 = vmatpush1.msra.mxu0 0.0
    %2526 = vmatprep.subr.mxu0 0.0
    %2527 = vmatpush1.msra.mxu0 0.0
    %2528 = vmatprep.subr.mxu0 0.0
    %2529 = vmatpush1.msra.mxu0 0.0
    %2530 = vmatprep.mubr.f32.mxu0 0.0
    %2531 = vmatmul.mubr.f32.gmra.mrb[0].mxu0 %v2443
    %v2532 = vpop.f32.mrb[0].mxu0
    %v2533 = vadd.f32 %v2440, %v2532
    %v2534 = vpop.f32.mrb[0].mxu0
    %2535 = vmatprep.mubr.f32.mxu0 0.0
    %2536 = vmatmul.mubr.f32.gmra.mrb[0].mxu0 %v2446
    %v2537 = vpop.f32.mrb[0].mxu0
    %v2538 = vadd.f32 %v2440, %v2537
    %v2539 = vpop.f32.mrb[0].mxu0
    %2540 = vmatprep.mubr.f32.mxu0 0.0
    %2541 = vmatmul.mubr.f32.gmra.mrb[0].mxu0 %v2449
    %v2542 = vpop.f32.mrb[0].mxu0
    %v2543 = vadd.f32 %v2440, %v2542
    %v2544 = vpop.f32.mrb[0].mxu0
    %2545 = vmatprep.mubr.f32.mxu0 0.0
    %2546 = vmatmul.mubr.f32.gmra.mrb[0].mxu0 %v2452
    %v2547 = vpop.f32.mrb[0].mxu0
    %v2548 = vadd.f32 %v2440, %v2547
    %v2549 = vpop.f32.mrb[0].mxu0
    %2550 = vmatprep.mubr.f32.mxu0 0.0
    %2551 = vmatmul.mubr.f32.gmra.mrb[0].mxu0 %v2455
    %v2552 = vpop.f32.mrb[0].mxu0
    %v2553 = vadd.f32 %v2440, %v2552
    %v2554 = vpop.f32.mrb[0].mxu0
    %2555 = vmatprep.mubr.f32.mxu0 0.0
    %2556 = vmatmul.mubr.f32.gmra.mrb[0].mxu0 %v2458
    %v2557 = vpop.f32.mrb[0].mxu0
    %v2558 = vadd.f32 %v2440, %v2557
    %v2559 = vpop.f32.mrb[0].mxu0
    %2560 = vmatprep.mubr.f32.mxu0 0.0
    %2561 = vmatmul.mubr.f32.gmra.mrb[0].mxu0 %v2461
    %v2562 = vpop.f32.mrb[0].mxu0
    %v2563 = vadd.f32 %v2440, %v2562
    %v2564 = vpop.f32.mrb[0].mxu0
    %2565 = vmatprep.mubr.f32.mxu0 0.0
    %2566 = vmatmul.mubr.f32.gmra.mrb[0].mxu0 %v2464
    %v2567 = vpop.f32.mrb[0].mxu0
    %v2568 = vadd.f32 %v2440, %v2567
    %v2569 = vpop.f32.mrb[0].mxu0
    %2570 = vdwg.mxu0
    %v2571 = vld [vmem:[%s3] sm:$0xff]
    %v2572 = vld [vmem:[%s3 + $0x8] sm:$0xff]
    %v2573 = vld [vmem:[%s3 + $0x10] sm:$0xff]
    %v2574 = vld [vmem:[%s3 + $0x18] sm:$0xff]
    %v2575 = vld [vmem:[%s3 + $0x20] sm:$0xff]
    %v2576 = vld [vmem:[%s3 + $0x28] sm:$0xff]
    %v2577 = vld [vmem:[%s3 + $0x30] sm:$0xff]
    %v2578 = vld [vmem:[%s3 + $0x38] sm:$0xff]
    %v2579 = vld [vmem:[%s11] sm:$0xff]
    %v2580 = vld [vmem:[%s11 + $0x8] sm:$0xff]
    %v2581 = vld [vmem:[%s11 + $0x10] sm:$0xff]
    %v2582 = vld [vmem:[%s11 + $0x18] sm:$0xff]
    %v2583 = vld [vmem:[%s12] sm:$0x1]
    %2592 = vrot.lane.b32.xlu0 %v2533, 96
    %v2593 = vpop.permute.xlu0 %2592
    %2594 = vrot.lane.b32.xlu0 %v2538, 96
    %v2595 = vpop.permute.xlu0 %2594
    %2596 = vrot.lane.b32.xlu0 %v2543, 96
    %v2597 = vpop.permute.xlu0 %2596
    %2598 = vrot.lane.b32.xlu0 %v2548, 96
    %v2599 = vpop.permute.xlu0 %2598
    %2600 = vrot.lane.b32.xlu0 %v2553, 96
    %v2601 = vpop.permute.xlu0 %2600
    %2602 = vrot.lane.b32.xlu0 %v2558, 96
    %v2603 = vpop.permute.xlu0 %2602
    %2604 = vrot.lane.b32.xlu0 %v2563, 96
    %v2605 = vpop.permute.xlu0 %2604
    %2606 = vrot.lane.b32.xlu0 %v2568, 96
    %v2607 = vpop.permute.xlu0 %2606
    %v2608 = vsel %vm275, %v2533, 0
    %v2610 = vsel %vm275, %v2538, 0
    %v2612 = vsel %vm275, %v2543, 0
    %v2614 = vsel %vm275, %v2548, 0
    %v2616 = vsel %vm275, %v2553, 0
    %v2618 = vsel %vm275, %v2558, 0
    %v2620 = vsel %vm275, %v2563, 0
    %v2622 = vsel %vm275, %v2568, 0
    %v2624 = vsel %vm275, %v2593, 0
    %v2626 = vsel %vm275, %v2595, 0
    %v2628 = vsel %vm275, %v2597, 0
    %v2630 = vsel %vm275, %v2599, 0
    %v2632 = vsel %vm275, %v2601, 0
    %v2634 = vsel %vm275, %v2603, 0
    %v2636 = vsel %vm275, %v2605, 0
    %v2638 = vsel %vm275, %v2607, 0
    %2640 = vmatprep.subr.mxu0 0.0
    %2641 = vmatpush1.xpose.msra.mxu0 %v2624
    %2642 = vmatprep.subr.mxu0 0.0
    %2643 = vmatpush1.xpose.msra.mxu0 %v2626
    %2644 = vmatprep.subr.mxu0 0.0
    %2645 = vmatpush1.xpose.msra.mxu0 %v2628
    %2646 = vmatprep.subr.mxu0 0.0
    %2647 = vmatpush1.xpose.msra.mxu0 %v2630
    %2648 = vmatprep.subr.mxu0 0.0
    %2649 = vmatpush1.xpose.msra.mxu0 %v2632
    %2650 = vmatprep.subr.mxu0 0.0
    %2651 = vmatpush1.xpose.msra.mxu0 %v2634
    %2652 = vmatprep.subr.mxu0 0.0
    %2653 = vmatpush1.xpose.msra.mxu0 %v2636
    %2654 = vmatprep.subr.mxu0 0.0
    %2655 = vmatpush1.xpose.msra.mxu0 %v2638
    %2656 = vmatprep.subr.mxu0 0.0
    %2657 = vmatpush1.xpose.msra.mxu0 0.0
    %2658 = vmatprep.subr.mxu0 0.0
    %2659 = vmatpush1.xpose.msra.mxu0 0.0
    %2660 = vmatprep.subr.mxu0 0.0
    %2661 = vmatpush1.xpose.msra.mxu0 0.0
    %2662 = vmatprep.subr.mxu0 0.0
    %2663 = vmatpush1.xpose.msra.mxu0 0.0
    %2664 = vmatprep.subr.mxu0 0.0
    %2665 = vmatpush1.xpose.msra.mxu0 0.0
    %2666 = vmatprep.subr.mxu0 0.0
    %2667 = vmatpush1.xpose.msra.mxu0 0.0
    %2668 = vmatprep.subr.mxu0 0.0
    %2669 = vmatpush1.xpose.msra.mxu0 0.0
    %2670 = vmatprep.subr.mxu0 0.0
    %2671 = vmatpush1.xpose.msra.mxu0 0.0
    %2672 = vmatprep.subr.mxu0 0.0
    %2673 = vmatpush1.xpose.msra.mxu0 0.0
    %2674 = vmatprep.subr.mxu0 0.0
    %2675 = vmatpush1.xpose.msra.mxu0 0.0
    %2676 = vmatprep.subr.mxu0 0.0
    %2677 = vmatpush1.xpose.msra.mxu0 0.0
    %2678 = vmatprep.subr.mxu0 0.0
    %2679 = vmatpush1.xpose.msra.mxu0 0.0
    %2680 = vmatprep.subr.mxu0 0.0
    %2681 = vmatpush1.xpose.msra.mxu0 0.0
    %2682 = vmatprep.subr.mxu0 0.0
    %2683 = vmatpush1.xpose.msra.mxu0 0.0
    %2684 = vmatprep.subr.mxu0 0.0
    %2685 = vmatpush1.xpose.msra.mxu0 0.0
    %2686 = vmatprep.subr.mxu0 0.0
    %2687 = vmatpush1.xpose.msra.mxu0 0.0
    %2688 = vmatprep.subr.mxu0 0.0
    %2689 = vmatpush1.xpose.msra.mxu0 0.0
    %2690 = vmatprep.subr.mxu0 0.0
    %2691 = vmatpush1.xpose.msra.mxu0 0.0
    %2692 = vmatprep.subr.mxu0 0.0
    %2693 = vmatpush1.xpose.msra.mxu0 0.0
    %2694 = vmatprep.subr.mxu0 0.0
    %2695 = vmatpush1.xpose.msra.mxu0 0.0
    %2696 = vmatprep.subr.mxu0 0.0
    %2697 = vmatpush1.xpose.msra.mxu0 0.0
    %2698 = vmatprep.subr.mxu0 0.0
    %2699 = vmatpush1.xpose.msra.mxu0 0.0
    %2700 = vmatprep.subr.mxu0 0.0
    %2701 = vmatpush1.xpose.msra.mxu0 0.0
    %2702 = vmatprep.subr.mxu0 0.0
    %2703 = vmatpush1.xpose.msra.mxu0 0.0
    %2704 = vmatprep.mubr.f32.mxu0 0.0
    %2705 = vmatmul.mubr.f32.gmra.mrb[0].mxu0 %v2608
    %v2706 = vpop.f32.mrb[0].mxu0
    %v2707 = vadd.f32 %v2571, %v2706
    %v2708 = vpop.f32.mrb[0].mxu0
    %2709 = vmatprep.mubr.f32.mxu0 0.0
    %2710 = vmatmul.mubr.f32.gmra.mrb[0].mxu0 %v2610
    %v2711 = vpop.f32.mrb[0].mxu0
    %v2712 = vadd.f32 %v2572, %v2711
    %v2713 = vpop.f32.mrb[0].mxu0
    %2714 = vmatprep.mubr.f32.mxu0 0.0
    %2715 = vmatmul.mubr.f32.gmra.mrb[0].mxu0 %v2612
    %v2716 = vpop.f32.mrb[0].mxu0
    %v2717 = vadd.f32 %v2573, %v2716
    %v2718 = vpop.f32.mrb[0].mxu0
    %2719 = vmatprep.mubr.f32.mxu0 0.0
    %2720 = vmatmul.mubr.f32.gmra.mrb[0].mxu0 %v2614
    %v2721 = vpop.f32.mrb[0].mxu0
    %v2722 = vadd.f32 %v2574, %v2721
    %v2723 = vpop.f32.mrb[0].mxu0
    %2724 = vmatprep.mubr.f32.mxu0 0.0
    %2725 = vmatmul.mubr.f32.gmra.mrb[0].mxu0 %v2616
    %v2726 = vpop.f32.mrb[0].mxu0
    %v2727 = vadd.f32 %v2575, %v2726
    %v2728 = vpop.f32.mrb[0].mxu0
    %2729 = vmatprep.mubr.f32.mxu0 0.0
    %2730 = vmatmul.mubr.f32.gmra.mrb[0].mxu0 %v2618
    %v2731 = vpop.f32.mrb[0].mxu0
    %v2732 = vadd.f32 %v2576, %v2731
    %v2733 = vpop.f32.mrb[0].mxu0
    %2734 = vmatprep.mubr.f32.mxu0 0.0
    %2735 = vmatmul.mubr.f32.gmra.mrb[0].mxu0 %v2620
    %v2736 = vpop.f32.mrb[0].mxu0
    %v2737 = vadd.f32 %v2577, %v2736
    %v2738 = vpop.f32.mrb[0].mxu0
    %2739 = vmatprep.mubr.f32.mxu0 0.0
    %2740 = vmatmul.mubr.f32.gmra.mrb[0].mxu0 %v2622
    %v2741 = vpop.f32.mrb[0].mxu0
    %v2742 = vadd.f32 %v2578, %v2741
    %v2743 = vpop.f32.mrb[0].mxu0
    %2744 = vdwg.mxu0
    %v2745 = vsel %vm413, %v2707, -inf
    %2746 = vmax.xlane.f32.xlu0 %v2745
    %v2747 = vpop.xlane.xlu0 %2746
    %v2748 = vsel %vm413, %v2712, -inf
    %2749 = vmax.xlane.f32.xlu0 %v2748
    %v2750 = vpop.xlane.xlu0 %2749
    %v2751 = vsel %vm413, %v2717, -inf
    %2752 = vmax.xlane.f32.xlu0 %v2751
    %v2753 = vpop.xlane.xlu0 %2752
    %v2754 = vsel %vm413, %v2722, -inf
    %2755 = vmax.xlane.f32.xlu0 %v2754
    %v2756 = vpop.xlane.xlu0 %2755
    %v2757 = vsel %vm413, %v2727, -inf
    %2758 = vmax.xlane.f32.xlu0 %v2757
    %v2759 = vpop.xlane.xlu0 %2758
    %v2760 = vsel %vm413, %v2732, -inf
    %2761 = vmax.xlane.f32.xlu0 %v2760
    %v2762 = vpop.xlane.xlu0 %2761
    %v2763 = vsel %vm413, %v2737, -inf
    %2764 = vmax.xlane.f32.xlu0 %v2763
    %v2765 = vpop.xlane.xlu0 %2764
    %v2766 = vsel %vm413, %v2742, -inf
    %2767 = vmax.xlane.f32.xlu0 %v2766
    %v2768 = vpop.xlane.xlu0 %2767
    %v2769 = vsub.f32 %v2707, %v2747
    %v2770 = vsub.f32 %v2712, %v2750
    %v2771 = vsub.f32 %v2717, %v2753
    %v2772 = vsub.f32 %v2722, %v2756
    %v2773 = vsub.f32 %v2727, %v2759
    %v2774 = vsub.f32 %v2732, %v2762
    %v2775 = vsub.f32 %v2737, %v2765
    %v2776 = vsub.f32 %v2742, %v2768
    %v2777 = vmul.f32 %v2769, 1.442695
    %v2778 = vpow.pop %v2777
    %v2779 = vmul.f32 %v2770, 1.442695
    %v2780 = vpow.pop %v2779
    %v2781 = vmul.f32 %v2771, 1.442695
    %v2782 = vpow.pop %v2781
    %v2783 = vmul.f32 %v2772, 1.442695
    %v2784 = vpow.pop %v2783
    %v2785 = vmul.f32 %v2773, 1.442695
    %v2786 = vpow.pop %v2785
    %v2787 = vmul.f32 %v2774, 1.442695
    %v2788 = vpow.pop %v2787
    %v2789 = vmul.f32 %v2775, 1.442695
    %v2790 = vpow.pop %v2789
    %v2791 = vmul.f32 %v2776, 1.442695
    %v2792 = vpow.pop %v2791
    %v2793 = vsel %vm413, %v2778, 0.0
    %2794 = vadd.xlane.f32.xlu0 %v2793
    %v2795 = vpop.xlane.xlu0 %2794
    %v2796 = vsel %vm413, %v2780, 0.0
    %2797 = vadd.xlane.f32.xlu0 %v2796
    %v2798 = vpop.xlane.xlu0 %2797
    %v2799 = vsel %vm413, %v2782, 0.0
    %2800 = vadd.xlane.f32.xlu0 %v2799
    %v2801 = vpop.xlane.xlu0 %2800
    %v2802 = vsel %vm413, %v2784, 0.0
    %2803 = vadd.xlane.f32.xlu0 %v2802
    %v2804 = vpop.xlane.xlu0 %2803
    %v2805 = vsel %vm413, %v2786, 0.0
    %2806 = vadd.xlane.f32.xlu0 %v2805
    %v2807 = vpop.xlane.xlu0 %2806
    %v2808 = vsel %vm413, %v2788, 0.0
    %2809 = vadd.xlane.f32.xlu0 %v2808
    %v2810 = vpop.xlane.xlu0 %2809
    %v2811 = vsel %vm413, %v2790, 0.0
    %2812 = vadd.xlane.f32.xlu0 %v2811
    %v2813 = vpop.xlane.xlu0 %2812
    %v2814 = vsel %vm413, %v2792, 0.0
    %2815 = vadd.xlane.f32.xlu0 %v2814
    %v2816 = vpop.xlane.xlu0 %2815
    %v2817 = vrcp.pop %v2795
    %v2818 = vrcp.pop %v2798
    %v2819 = vrcp.pop %v2801
    %v2820 = vrcp.pop %v2804
    %v2821 = vrcp.pop %v2807
    %v2822 = vrcp.pop %v2810
    %v2823 = vrcp.pop %v2813
    %v2824 = vrcp.pop %v2816
    %v2825 = vmul.f32 %v2778, %v2817
    %v2826 = vmul.f32 %v2780, %v2818
    %v2827 = vmul.f32 %v2782, %v2819
    %v2828 = vmul.f32 %v2784, %v2820
    %v2829 = vmul.f32 %v2786, %v2821
    %v2830 = vmul.f32 %v2788, %v2822
    %v2831 = vmul.f32 %v2790, %v2823
    %v2832 = vmul.f32 %v2792, %v2824
    %2833 = vrot.lane.b32.xlu0 %v2533, 64
    %v2834 = vpop.permute.xlu0 %2833
    %2835 = vrot.lane.b32.xlu0 %v2538, 64
    %v2836 = vpop.permute.xlu0 %2835
    %2837 = vrot.lane.b32.xlu0 %v2543, 64
    %v2838 = vpop.permute.xlu0 %2837
    %2839 = vrot.lane.b32.xlu0 %v2548, 64
    %v2840 = vpop.permute.xlu0 %2839
    %2841 = vrot.lane.b32.xlu0 %v2553, 64
    %v2842 = vpop.permute.xlu0 %2841
    %2843 = vrot.lane.b32.xlu0 %v2558, 64
    %v2844 = vpop.permute.xlu0 %2843
    %2845 = vrot.lane.b32.xlu0 %v2563, 64
    %v2846 = vpop.permute.xlu0 %2845
    %2847 = vrot.lane.b32.xlu0 %v2568, 64
    %v2848 = vpop.permute.xlu0 %2847
    %v2858 = vsel %vm413, %v2825, 0
    %v2861 = vsel %vm413, %v2826, 0
    %v2864 = vsel %vm413, %v2827, 0
    %v2867 = vsel %vm413, %v2828, 0
    %v2870 = vsel %vm413, %v2829, 0
    %v2873 = vsel %vm413, %v2830, 0
    %v2876 = vsel %vm413, %v2831, 0
    %v2879 = vsel %vm413, %v2832, 0
    %2881 = vmatprep.subr.mxu0 0.0
    %2882 = vmatpush1.msra.mxu0 %v2834
    %2883 = vmatprep.subr.mxu0 0.0
    %2884 = vmatpush1.msra.mxu0 %v2836
    %2885 = vmatprep.subr.mxu0 0.0
    %2886 = vmatpush1.msra.mxu0 %v2838
    %2887 = vmatprep.subr.mxu0 0.0
    %2888 = vmatpush1.msra.mxu0 %v2840
    %2889 = vmatprep.subr.mxu0 0.0
    %2890 = vmatpush1.msra.mxu0 %v2842
    %2891 = vmatprep.subr.mxu0 0.0
    %2892 = vmatpush1.msra.mxu0 %v2844
    %2893 = vmatprep.subr.mxu0 0.0
    %2894 = vmatpush1.msra.mxu0 %v2846
    %2895 = vmatprep.subr.mxu0 0.0
    %2896 = vmatpush1.msra.mxu0 %v2848
    %2897 = vmatprep.subr.mxu0 0.0
    %2898 = vmatpush1.msra.mxu0 0.0
    %2899 = vmatprep.subr.mxu0 0.0
    %2900 = vmatpush1.msra.mxu0 0.0
    %2901 = vmatprep.subr.mxu0 0.0
    %2902 = vmatpush1.msra.mxu0 0.0
    %2903 = vmatprep.subr.mxu0 0.0
    %2904 = vmatpush1.msra.mxu0 0.0
    %2905 = vmatprep.subr.mxu0 0.0
    %2906 = vmatpush1.msra.mxu0 0.0
    %2907 = vmatprep.subr.mxu0 0.0
    %2908 = vmatpush1.msra.mxu0 0.0
    %2909 = vmatprep.subr.mxu0 0.0
    %2910 = vmatpush1.msra.mxu0 0.0
    %2911 = vmatprep.subr.mxu0 0.0
    %2912 = vmatpush1.msra.mxu0 0.0
    %2913 = vmatprep.subr.mxu0 0.0
    %2914 = vmatpush1.msra.mxu0 0.0
    %2915 = vmatprep.subr.mxu0 0.0
    %2916 = vmatpush1.msra.mxu0 0.0
    %2917 = vmatprep.subr.mxu0 0.0
    %2918 = vmatpush1.msra.mxu0 0.0
    %2919 = vmatprep.subr.mxu0 0.0
    %2920 = vmatpush1.msra.mxu0 0.0
    %2921 = vmatprep.subr.mxu0 0.0
    %2922 = vmatpush1.msra.mxu0 0.0
    %2923 = vmatprep.subr.mxu0 0.0
    %2924 = vmatpush1.msra.mxu0 0.0
    %2925 = vmatprep.subr.mxu0 0.0
    %2926 = vmatpush1.msra.mxu0 0.0
    %2927 = vmatprep.subr.mxu0 0.0
    %2928 = vmatpush1.msra.mxu0 0.0
    %2929 = vmatprep.subr.mxu0 0.0
    %2930 = vmatpush1.msra.mxu0 0.0
    %2931 = vmatprep.subr.mxu0 0.0
    %2932 = vmatpush1.msra.mxu0 0.0
    %2933 = vmatprep.subr.mxu0 0.0
    %2934 = vmatpush1.msra.mxu0 0.0
    %2935 = vmatprep.subr.mxu0 0.0
    %2936 = vmatpush1.msra.mxu0 0.0
    %2937 = vmatprep.subr.mxu0 0.0
    %2938 = vmatpush1.msra.mxu0 0.0
    %2939 = vmatprep.subr.mxu0 0.0
    %2940 = vmatpush1.msra.mxu0 0.0
    %2941 = vmatprep.subr.mxu0 0.0
    %2942 = vmatpush1.msra.mxu0 0.0
    %2943 = vmatprep.subr.mxu0 0.0
    %2944 = vmatpush1.msra.mxu0 0.0
    %2945 = vmatprep.mubr.f32.mxu0 0.0
    %2946 = vmatmul.mubr.f32.gmra.mrb[0].mxu0 %v2858
    %v2947 = vpop.f32.mrb[0].mxu0
    %v2948 = vadd.f32 0.0, %v2947
    %v2949 = vpop.f32.mrb[0].mxu0
    %2950 = vmatprep.mubr.f32.mxu0 0.0
    %2951 = vmatmul.mubr.f32.gmra.mrb[0].mxu0 %v2861
    %v2952 = vpop.f32.mrb[0].mxu0
    %v2953 = vadd.f32 0.0, %v2952
    %v2954 = vpop.f32.mrb[0].mxu0
    %2955 = vmatprep.mubr.f32.mxu0 0.0
    %2956 = vmatmul.mubr.f32.gmra.mrb[0].mxu0 %v2864
    %v2957 = vpop.f32.mrb[0].mxu0
    %v2958 = vadd.f32 0.0, %v2957
    %v2959 = vpop.f32.mrb[0].mxu0
    %2960 = vmatprep.mubr.f32.mxu0 0.0
    %2961 = vmatmul.mubr.f32.gmra.mrb[0].mxu0 %v2867
    %v2962 = vpop.f32.mrb[0].mxu0
    %v2963 = vadd.f32 0.0, %v2962
    %v2964 = vpop.f32.mrb[0].mxu0
    %2965 = vmatprep.mubr.f32.mxu0 0.0
    %2966 = vmatmul.mubr.f32.gmra.mrb[0].mxu0 %v2870
    %v2967 = vpop.f32.mrb[0].mxu0
    %v2968 = vadd.f32 0.0, %v2967
    %v2969 = vpop.f32.mrb[0].mxu0
    %2970 = vmatprep.mubr.f32.mxu0 0.0
    %2971 = vmatmul.mubr.f32.gmra.mrb[0].mxu0 %v2873
    %v2972 = vpop.f32.mrb[0].mxu0
    %v2973 = vadd.f32 0.0, %v2972
    %v2974 = vpop.f32.mrb[0].mxu0
    %2975 = vmatprep.mubr.f32.mxu0 0.0
    %2976 = vmatmul.mubr.f32.gmra.mrb[0].mxu0 %v2876
    %v2977 = vpop.f32.mrb[0].mxu0
    %v2978 = vadd.f32 0.0, %v2977
    %v2979 = vpop.f32.mrb[0].mxu0
    %2980 = vmatprep.mubr.f32.mxu0 0.0
    %2981 = vmatmul.mubr.f32.gmra.mrb[0].mxu0 %v2879
    %v2982 = vpop.f32.mrb[0].mxu0
    %v2983 = vadd.f32 0.0, %v2982
    %v2984 = vpop.f32.mrb[0].mxu0
    %2985 = vdwg.mxu0
    %2986 = vrot.lane.b32.xlu0 %v2533, 120
    %v2987 = vpop.permute.xlu0 %2986
    %2988 = vrot.lane.b32.xlu0 %v2538, 120
    %v2989 = vpop.permute.xlu0 %2988
    %2990 = vrot.lane.b32.xlu0 %v2543, 120
    %v2991 = vpop.permute.xlu0 %2990
    %2992 = vrot.lane.b32.xlu0 %v2548, 120
    %v2993 = vpop.permute.xlu0 %2992
    %2994 = vrot.lane.b32.xlu0 %v2553, 120
    %v2995 = vpop.permute.xlu0 %2994
    %2996 = vrot.lane.b32.xlu0 %v2558, 120
    %v2997 = vpop.permute.xlu0 %2996
    %2998 = vrot.lane.b32.xlu0 %v2563, 120
    %v2999 = vpop.permute.xlu0 %2998
    %3000 = vrot.lane.b32.xlu0 %v2568, 120
    %v3001 = vpop.permute.xlu0 %3000
    %3002 = vrot.lane.b32.xlu0 %v2533, 88
    %v3003 = vpop.permute.xlu0 %3002
    %3004 = vrot.lane.b32.xlu0 %v2538, 88
    %v3005 = vpop.permute.xlu0 %3004
    %3006 = vrot.lane.b32.xlu0 %v2543, 88
    %v3007 = vpop.permute.xlu0 %3006
    %3008 = vrot.lane.b32.xlu0 %v2548, 88
    %v3009 = vpop.permute.xlu0 %3008
    %3010 = vrot.lane.b32.xlu0 %v2553, 88
    %v3011 = vpop.permute.xlu0 %3010
    %3012 = vrot.lane.b32.xlu0 %v2558, 88
    %v3013 = vpop.permute.xlu0 %3012
    %3014 = vrot.lane.b32.xlu0 %v2563, 88
    %v3015 = vpop.permute.xlu0 %3014
    %3016 = vrot.lane.b32.xlu0 %v2568, 88
    %v3017 = vpop.permute.xlu0 %3016
    %v3018 = vsel %vm275, %v2987, 0
    %v3020 = vsel %vm275, %v2989, 0
    %v3022 = vsel %vm275, %v2991, 0
    %v3024 = vsel %vm275, %v2993, 0
    %v3026 = vsel %vm275, %v2995, 0
    %v3028 = vsel %vm275, %v2997, 0
    %v3030 = vsel %vm275, %v2999, 0
    %v3032 = vsel %vm275, %v3001, 0
    %v3034 = vsel %vm275, %v3003, 0
    %v3036 = vsel %vm275, %v3005, 0
    %v3038 = vsel %vm275, %v3007, 0
    %v3040 = vsel %vm275, %v3009, 0
    %v3042 = vsel %vm275, %v3011, 0
    %v3044 = vsel %vm275, %v3013, 0
    %v3046 = vsel %vm275, %v3015, 0
    %v3048 = vsel %vm275, %v3017, 0
    %3050 = vmatprep.subr.mxu0 0.0
    %3051 = vmatpush1.xpose.msra.mxu0 %v3034
    %3052 = vmatprep.subr.mxu0 0.0
    %3053 = vmatpush1.xpose.msra.mxu0 %v3036
    %3054 = vmatprep.subr.mxu0 0.0
    %3055 = vmatpush1.xpose.msra.mxu0 %v3038
    %3056 = vmatprep.subr.mxu0 0.0
    %3057 = vmatpush1.xpose.msra.mxu0 %v3040
    %3058 = vmatprep.subr.mxu0 0.0
    %3059 = vmatpush1.xpose.msra.mxu0 %v3042
    %3060 = vmatprep.subr.mxu0 0.0
    %3061 = vmatpush1.xpose.msra.mxu0 %v3044
    %3062 = vmatprep.subr.mxu0 0.0
    %3063 = vmatpush1.xpose.msra.mxu0 %v3046
    %3064 = vmatprep.subr.mxu0 0.0
    %3065 = vmatpush1.xpose.msra.mxu0 %v3048
    %3066 = vmatprep.subr.mxu0 0.0
    %3067 = vmatpush1.xpose.msra.mxu0 0.0
    %3068 = vmatprep.subr.mxu0 0.0
    %3069 = vmatpush1.xpose.msra.mxu0 0.0
    %3070 = vmatprep.subr.mxu0 0.0
    %3071 = vmatpush1.xpose.msra.mxu0 0.0
    %3072 = vmatprep.subr.mxu0 0.0
    %3073 = vmatpush1.xpose.msra.mxu0 0.0
    %3074 = vmatprep.subr.mxu0 0.0
    %3075 = vmatpush1.xpose.msra.mxu0 0.0
    %3076 = vmatprep.subr.mxu0 0.0
    %3077 = vmatpush1.xpose.msra.mxu0 0.0
    %3078 = vmatprep.subr.mxu0 0.0
    %3079 = vmatpush1.xpose.msra.mxu0 0.0
    %3080 = vmatprep.subr.mxu0 0.0
    %3081 = vmatpush1.xpose.msra.mxu0 0.0
    %3082 = vmatprep.subr.mxu0 0.0
    %3083 = vmatpush1.xpose.msra.mxu0 0.0
    %3084 = vmatprep.subr.mxu0 0.0
    %3085 = vmatpush1.xpose.msra.mxu0 0.0
    %3086 = vmatprep.subr.mxu0 0.0
    %3087 = vmatpush1.xpose.msra.mxu0 0.0
    %3088 = vmatprep.subr.mxu0 0.0
    %3089 = vmatpush1.xpose.msra.mxu0 0.0
    %3090 = vmatprep.subr.mxu0 0.0
    %3091 = vmatpush1.xpose.msra.mxu0 0.0
    %3092 = vmatprep.subr.mxu0 0.0
    %3093 = vmatpush1.xpose.msra.mxu0 0.0
    %3094 = vmatprep.subr.mxu0 0.0
    %3095 = vmatpush1.xpose.msra.mxu0 0.0
    %3096 = vmatprep.subr.mxu0 0.0
    %3097 = vmatpush1.xpose.msra.mxu0 0.0
    %3098 = vmatprep.subr.mxu0 0.0
    %3099 = vmatpush1.xpose.msra.mxu0 0.0
    %3100 = vmatprep.subr.mxu0 0.0
    %3101 = vmatpush1.xpose.msra.mxu0 0.0
    %3102 = vmatprep.subr.mxu0 0.0
    %3103 = vmatpush1.xpose.msra.mxu0 0.0
    %3104 = vmatprep.subr.mxu0 0.0
    %3105 = vmatpush1.xpose.msra.mxu0 0.0
    %3106 = vmatprep.subr.mxu0 0.0
    %3107 = vmatpush1.xpose.msra.mxu0 0.0
    %3108 = vmatprep.subr.mxu0 0.0
    %3109 = vmatpush1.xpose.msra.mxu0 0.0
    %3110 = vmatprep.subr.mxu0 0.0
    %3111 = vmatpush1.xpose.msra.mxu0 0.0
    %3112 = vmatprep.subr.mxu0 0.0
    %3113 = vmatpush1.xpose.msra.mxu0 0.0
    %3114 = vmatprep.mubr.f32.mxu0 0.0
    %3115 = vmatmul.mubr.f32.gmra.mrb[0].mxu0 %v3018
    %v3116 = vpop.f32.mrb[0].mxu0
    %v3117 = vadd.f32 %v2571, %v3116
    %v3118 = vpop.f32.mrb[0].mxu0
    %3119 = vmatprep.mubr.f32.mxu0 0.0
    %3120 = vmatmul.mubr.f32.gmra.mrb[0].mxu0 %v3020
    %v3121 = vpop.f32.mrb[0].mxu0
    %v3122 = vadd.f32 %v2572, %v3121
    %v3123 = vpop.f32.mrb[0].mxu0
    %3124 = vmatprep.mubr.f32.mxu0 0.0
    %3125 = vmatmul.mubr.f32.gmra.mrb[0].mxu0 %v3022
    %v3126 = vpop.f32.mrb[0].mxu0
    %v3127 = vadd.f32 %v2573, %v3126
    %v3128 = vpop.f32.mrb[0].mxu0
    %3129 = vmatprep.mubr.f32.mxu0 0.0
    %3130 = vmatmul.mubr.f32.gmra.mrb[0].mxu0 %v3024
    %v3131 = vpop.f32.mrb[0].mxu0
    %v3132 = vadd.f32 %v2574, %v3131
    %v3133 = vpop.f32.mrb[0].mxu0
    %3134 = vmatprep.mubr.f32.mxu0 0.0
    %3135 = vmatmul.mubr.f32.gmra.mrb[0].mxu0 %v3026
    %v3136 = vpop.f32.mrb[0].mxu0
    %v3137 = vadd.f32 %v2575, %v3136
    %v3138 = vpop.f32.mrb[0].mxu0
    %3139 = vmatprep.mubr.f32.mxu0 0.0
    %3140 = vmatmul.mubr.f32.gmra.mrb[0].mxu0 %v3028
    %v3141 = vpop.f32.mrb[0].mxu0
    %v3142 = vadd.f32 %v2576, %v3141
    %v3143 = vpop.f32.mrb[0].mxu0
    %3144 = vmatprep.mubr.f32.mxu0 0.0
    %3145 = vmatmul.mubr.f32.gmra.mrb[0].mxu0 %v3030
    %v3146 = vpop.f32.mrb[0].mxu0
    %v3147 = vadd.f32 %v2577, %v3146
    %v3148 = vpop.f32.mrb[0].mxu0
    %3149 = vmatprep.mubr.f32.mxu0 0.0
    %3150 = vmatmul.mubr.f32.gmra.mrb[0].mxu0 %v3032
    %v3151 = vpop.f32.mrb[0].mxu0
    %v3152 = vadd.f32 %v2578, %v3151
    %v3153 = vpop.f32.mrb[0].mxu0
    %3154 = vdwg.mxu0
    %v3155 = vsel %vm413, %v3117, -inf
    %3156 = vmax.xlane.f32.xlu0 %v3155
    %v3157 = vpop.xlane.xlu0 %3156
    %v3158 = vsel %vm413, %v3122, -inf
    %3159 = vmax.xlane.f32.xlu0 %v3158
    %v3160 = vpop.xlane.xlu0 %3159
    %v3161 = vsel %vm413, %v3127, -inf
    %3162 = vmax.xlane.f32.xlu0 %v3161
    %v3163 = vpop.xlane.xlu0 %3162
    %v3164 = vsel %vm413, %v3132, -inf
    %3165 = vmax.xlane.f32.xlu0 %v3164
    %v3166 = vpop.xlane.xlu0 %3165
    %v3167 = vsel %vm413, %v3137, -inf
    %3168 = vmax.xlane.f32.xlu0 %v3167
    %v3169 = vpop.xlane.xlu0 %3168
    %v3170 = vsel %vm413, %v3142, -inf
    %3171 = vmax.xlane.f32.xlu0 %v3170
    %v3172 = vpop.xlane.xlu0 %3171
    %v3173 = vsel %vm413, %v3147, -inf
    %3174 = vmax.xlane.f32.xlu0 %v3173
    %v3175 = vpop.xlane.xlu0 %3174
    %v3176 = vsel %vm413, %v3152, -inf
    %3177 = vmax.xlane.f32.xlu0 %v3176
    %v3178 = vpop.xlane.xlu0 %3177
    %v3179 = vsub.f32 %v3117, %v3157
    %v3180 = vsub.f32 %v3122, %v3160
    %v3181 = vsub.f32 %v3127, %v3163
    %v3182 = vsub.f32 %v3132, %v3166
    %v3183 = vsub.f32 %v3137, %v3169
    %v3184 = vsub.f32 %v3142, %v3172
    %v3185 = vsub.f32 %v3147, %v3175
    %v3186 = vsub.f32 %v3152, %v3178
    %v3187 = vmul.f32 %v3179, 1.442695
    %v3188 = vpow.pop %v3187
    %v3189 = vmul.f32 %v3180, 1.442695
    %v3190 = vpow.pop %v3189
    %v3191 = vmul.f32 %v3181, 1.442695
    %v3192 = vpow.pop %v3191
    %v3193 = vmul.f32 %v3182, 1.442695
    %v3194 = vpow.pop %v3193
    %v3195 = vmul.f32 %v3183, 1.442695
    %v3196 = vpow.pop %v3195
    %v3197 = vmul.f32 %v3184, 1.442695
    %v3198 = vpow.pop %v3197
    %v3199 = vmul.f32 %v3185, 1.442695
    %v3200 = vpow.pop %v3199
    %v3201 = vmul.f32 %v3186, 1.442695
    %v3202 = vpow.pop %v3201
    %v3203 = vsel %vm413, %v3188, 0.0
    %3204 = vadd.xlane.f32.xlu0 %v3203
    %v3205 = vpop.xlane.xlu0 %3204
    %v3206 = vsel %vm413, %v3190, 0.0
    %3207 = vadd.xlane.f32.xlu0 %v3206
    %v3208 = vpop.xlane.xlu0 %3207
    %v3209 = vsel %vm413, %v3192, 0.0
    %3210 = vadd.xlane.f32.xlu0 %v3209
    %v3211 = vpop.xlane.xlu0 %3210
    %v3212 = vsel %vm413, %v3194, 0.0
    %3213 = vadd.xlane.f32.xlu0 %v3212
    %v3214 = vpop.xlane.xlu0 %3213
    %v3215 = vsel %vm413, %v3196, 0.0
    %3216 = vadd.xlane.f32.xlu0 %v3215
    %v3217 = vpop.xlane.xlu0 %3216
    %v3218 = vsel %vm413, %v3198, 0.0
    %3219 = vadd.xlane.f32.xlu0 %v3218
    %v3220 = vpop.xlane.xlu0 %3219
    %v3221 = vsel %vm413, %v3200, 0.0
    %3222 = vadd.xlane.f32.xlu0 %v3221
    %v3223 = vpop.xlane.xlu0 %3222
    %v3224 = vsel %vm413, %v3202, 0.0
    %3225 = vadd.xlane.f32.xlu0 %v3224
    %v3226 = vpop.xlane.xlu0 %3225
    %v3227 = vrcp.pop %v3205
    %v3228 = vrcp.pop %v3208
    %v3229 = vrcp.pop %v3211
    %v3230 = vrcp.pop %v3214
    %v3231 = vrcp.pop %v3217
    %v3232 = vrcp.pop %v3220
    %v3233 = vrcp.pop %v3223
    %v3234 = vrcp.pop %v3226
    %v3235 = vmul.f32 %v3188, %v3227
    %v3236 = vmul.f32 %v3190, %v3228
    %v3237 = vmul.f32 %v3192, %v3229
    %v3238 = vmul.f32 %v3194, %v3230
    %v3239 = vmul.f32 %v3196, %v3231
    %v3240 = vmul.f32 %v3198, %v3232
    %v3241 = vmul.f32 %v3200, %v3233
    %v3242 = vmul.f32 %v3202, %v3234
    %3243 = vrot.lane.b32.xlu0 %v2533, 56
    %v3244 = vpop.permute.xlu0 %3243
    %3245 = vrot.lane.b32.xlu0 %v2538, 56
    %v3246 = vpop.permute.xlu0 %3245
    %3247 = vrot.lane.b32.xlu0 %v2543, 56
    %v3248 = vpop.permute.xlu0 %3247
    %3249 = vrot.lane.b32.xlu0 %v2548, 56
    %v3250 = vpop.permute.xlu0 %3249
    %3251 = vrot.lane.b32.xlu0 %v2553, 56
    %v3252 = vpop.permute.xlu0 %3251
    %3253 = vrot.lane.b32.xlu0 %v2558, 56
    %v3254 = vpop.permute.xlu0 %3253
    %3255 = vrot.lane.b32.xlu0 %v2563, 56
    %v3256 = vpop.permute.xlu0 %3255
    %3257 = vrot.lane.b32.xlu0 %v2568, 56
    %v3258 = vpop.permute.xlu0 %3257
    %v3268 = vsel %vm413, %v3235, 0
    %v3271 = vsel %vm413, %v3236, 0
    %v3274 = vsel %vm413, %v3237, 0
    %v3277 = vsel %vm413, %v3238, 0
    %v3280 = vsel %vm413, %v3239, 0
    %v3283 = vsel %vm413, %v3240, 0
    %v3286 = vsel %vm413, %v3241, 0
    %v3289 = vsel %vm413, %v3242, 0
    %3291 = vmatprep.subr.mxu0 0.0
    %3292 = vmatpush1.msra.mxu0 %v3244
    %3293 = vmatprep.subr.mxu0 0.0
    %3294 = vmatpush1.msra.mxu0 %v3246
    %3295 = vmatprep.subr.mxu0 0.0
    %3296 = vmatpush1.msra.mxu0 %v3248
    %3297 = vmatprep.subr.mxu0 0.0
    %3298 = vmatpush1.msra.mxu0 %v3250
    %3299 = vmatprep.subr.mxu0 0.0
    %3300 = vmatpush1.msra.mxu0 %v3252
    %3301 = vmatprep.subr.mxu0 0.0
    %3302 = vmatpush1.msra.mxu0 %v3254
    %3303 = vmatprep.subr.mxu0 0.0
    %3304 = vmatpush1.msra.mxu0 %v3256
    %3305 = vmatprep.subr.mxu0 0.0
    %3306 = vmatpush1.msra.mxu0 %v3258
    %3307 = vmatprep.subr.mxu0 0.0
    %3308 = vmatpush1.msra.mxu0 0.0
    %3309 = vmatprep.subr.mxu0 0.0
    %3310 = vmatpush1.msra.mxu0 0.0
    %3311 = vmatprep.subr.mxu0 0.0
    %3312 = vmatpush1.msra.mxu0 0.0
    %3313 = vmatprep.subr.mxu0 0.0
    %3314 = vmatpush1.msra.mxu0 0.0
    %3315 = vmatprep.subr.mxu0 0.0
    %3316 = vmatpush1.msra.mxu0 0.0
    %3317 = vmatprep.subr.mxu0 0.0
    %3318 = vmatpush1.msra.mxu0 0.0
    %3319 = vmatprep.subr.mxu0 0.0
    %3320 = vmatpush1.msra.mxu0 0.0
    %3321 = vmatprep.subr.mxu0 0.0
    %3322 = vmatpush1.msra.mxu0 0.0
    %3323 = vmatprep.subr.mxu0 0.0
    %3324 = vmatpush1.msra.mxu0 0.0
    %3325 = vmatprep.subr.mxu0 0.0
    %3326 = vmatpush1.msra.mxu0 0.0
    %3327 = vmatprep.subr.mxu0 0.0
    %3328 = vmatpush1.msra.mxu0 0.0
    %3329 = vmatprep.subr.mxu0 0.0
    %3330 = vmatpush1.msra.mxu0 0.0
    %3331 = vmatprep.subr.mxu0 0.0
    %3332 = vmatpush1.msra.mxu0 0.0
    %3333 = vmatprep.subr.mxu0 0.0
    %3334 = vmatpush1.msra.mxu0 0.0
    %3335 = vmatprep.subr.mxu0 0.0
    %3336 = vmatpush1.msra.mxu0 0.0
    %3337 = vmatprep.subr.mxu0 0.0
    %3338 = vmatpush1.msra.mxu0 0.0
    %3339 = vmatprep.subr.mxu0 0.0
    %3340 = vmatpush1.msra.mxu0 0.0
    %3341 = vmatprep.subr.mxu0 0.0
    %3342 = vmatpush1.msra.mxu0 0.0
    %3343 = vmatprep.subr.mxu0 0.0
    %3344 = vmatpush1.msra.mxu0 0.0
    %3345 = vmatprep.subr.mxu0 0.0
    %3346 = vmatpush1.msra.mxu0 0.0
    %3347 = vmatprep.subr.mxu0 0.0
    %3348 = vmatpush1.msra.mxu0 0.0
    %3349 = vmatprep.subr.mxu0 0.0
    %3350 = vmatpush1.msra.mxu0 0.0
    %3351 = vmatprep.subr.mxu0 0.0
    %3352 = vmatpush1.msra.mxu0 0.0
    %3353 = vmatprep.subr.mxu0 0.0
    %3354 = vmatpush1.msra.mxu0 0.0
    %3355 = vmatprep.mubr.f32.mxu0 0.0
    %3356 = vmatmul.mubr.f32.gmra.mrb[0].mxu0 %v3268
    %v3357 = vpop.f32.mrb[0].mxu0
    %v3358 = vadd.f32 0.0, %v3357
    %v3359 = vpop.f32.mrb[0].mxu0
    %3360 = vmatprep.mubr.f32.mxu0 0.0
    %3361 = vmatmul.mubr.f32.gmra.mrb[0].mxu0 %v3271
    %v3362 = vpop.f32.mrb[0].mxu0
    %v3363 = vadd.f32 0.0, %v3362
    %v3364 = vpop.f32.mrb[0].mxu0
    %3365 = vmatprep.mubr.f32.mxu0 0.0
    %3366 = vmatmul.mubr.f32.gmra.mrb[0].mxu0 %v3274
    %v3367 = vpop.f32.mrb[0].mxu0
    %v3368 = vadd.f32 0.0, %v3367
    %v3369 = vpop.f32.mrb[0].mxu0
    %3370 = vmatprep.mubr.f32.mxu0 0.0
    %3371 = vmatmul.mubr.f32.gmra.mrb[0].mxu0 %v3277
    %v3372 = vpop.f32.mrb[0].mxu0
    %v3373 = vadd.f32 0.0, %v3372
    %v3374 = vpop.f32.mrb[0].mxu0
    %3375 = vmatprep.mubr.f32.mxu0 0.0
    %3376 = vmatmul.mubr.f32.gmra.mrb[0].mxu0 %v3280
    %v3377 = vpop.f32.mrb[0].mxu0
    %v3378 = vadd.f32 0.0, %v3377
    %v3379 = vpop.f32.mrb[0].mxu0
    %3380 = vmatprep.mubr.f32.mxu0 0.0
    %3381 = vmatmul.mubr.f32.gmra.mrb[0].mxu0 %v3283
    %v3382 = vpop.f32.mrb[0].mxu0
    %v3383 = vadd.f32 0.0, %v3382
    %v3384 = vpop.f32.mrb[0].mxu0
    %3385 = vmatprep.mubr.f32.mxu0 0.0
    %3386 = vmatmul.mubr.f32.gmra.mrb[0].mxu0 %v3286
    %v3387 = vpop.f32.mrb[0].mxu0
    %v3388 = vadd.f32 0.0, %v3387
    %v3389 = vpop.f32.mrb[0].mxu0
    %3390 = vmatprep.mubr.f32.mxu0 0.0
    %3391 = vmatmul.mubr.f32.gmra.mrb[0].mxu0 %v3289
    %v3392 = vpop.f32.mrb[0].mxu0
    %v3393 = vadd.f32 0.0, %v3392
    %v3394 = vpop.f32.mrb[0].mxu0
    %3395 = vdwg.mxu0
    %v3397 = vsel %vm275, %v3358, 0
    %v3400 = vsel %vm275, %v3363, 0
    %v3403 = vsel %vm275, %v3368, 0
    %v3406 = vsel %vm275, %v3373, 0
    %v3409 = vsel %vm275, %v3378, 0
    %v3412 = vsel %vm275, %v3383, 0
    %v3415 = vsel %vm275, %v3388, 0
    %v3418 = vsel %vm275, %v3393, 0
    %3420 = vmatprep.subr.mxu0 0.0
    %3421 = vmatpush1.msra.mxu0 %v2580
    %3422 = vmatprep.subr.mxu0 0.0
    %3423 = vmatpush1.msra.mxu0 0.0
    %3424 = vmatprep.subr.mxu0 0.0
    %3425 = vmatpush1.msra.mxu0 0.0
    %3426 = vmatprep.subr.mxu0 0.0
    %3427 = vmatpush1.msra.mxu0 0.0
    %3428 = vmatprep.subr.mxu0 0.0
    %3429 = vmatpush1.msra.mxu0 0.0
    %3430 = vmatprep.subr.mxu0 0.0
    %3431 = vmatpush1.msra.mxu0 0.0
    %3432 = vmatprep.subr.mxu0 0.0
    %3433 = vmatpush1.msra.mxu0 0.0
    %3434 = vmatprep.subr.mxu0 0.0
    %3435 = vmatpush1.msra.mxu0 0.0
    %3436 = vmatprep.subr.mxu0 0.0
    %3437 = vmatpush1.msra.mxu0 0.0
    %3438 = vmatprep.subr.mxu0 0.0
    %3439 = vmatpush1.msra.mxu0 0.0
    %3440 = vmatprep.subr.mxu0 0.0
    %3441 = vmatpush1.msra.mxu0 0.0
    %3442 = vmatprep.subr.mxu0 0.0
    %3443 = vmatpush1.msra.mxu0 0.0
    %3444 = vmatprep.subr.mxu0 0.0
    %3445 = vmatpush1.msra.mxu0 0.0
    %3446 = vmatprep.subr.mxu0 0.0
    %3447 = vmatpush1.msra.mxu0 0.0
    %3448 = vmatprep.subr.mxu0 0.0
    %3449 = vmatpush1.msra.mxu0 0.0
    %3450 = vmatprep.subr.mxu0 0.0
    %3451 = vmatpush1.msra.mxu0 0.0
    %3452 = vmatprep.subr.mxu0 0.0
    %3453 = vmatpush1.msra.mxu0 0.0
    %3454 = vmatprep.subr.mxu0 0.0
    %3455 = vmatpush1.msra.mxu0 0.0
    %3456 = vmatprep.subr.mxu0 0.0
    %3457 = vmatpush1.msra.mxu0 0.0
    %3458 = vmatprep.subr.mxu0 0.0
    %3459 = vmatpush1.msra.mxu0 0.0
    %3460 = vmatprep.subr.mxu0 0.0
    %3461 = vmatpush1.msra.mxu0 0.0
    %3462 = vmatprep.subr.mxu0 0.0
    %3463 = vmatpush1.msra.mxu0 0.0
    %3464 = vmatprep.subr.mxu0 0.0
    %3465 = vmatpush1.msra.mxu0 0.0
    %3466 = vmatprep.subr.mxu0 0.0
    %3467 = vmatpush1.msra.mxu0 0.0
    %3468 = vmatprep.subr.mxu0 0.0
    %3469 = vmatpush1.msra.mxu0 0.0
    %3470 = vmatprep.subr.mxu0 0.0
    %3471 = vmatpush1.msra.mxu0 0.0
    %3472 = vmatprep.subr.mxu0 0.0
    %3473 = vmatpush1.msra.mxu0 0.0
    %3474 = vmatprep.subr.mxu0 0.0
    %3475 = vmatpush1.msra.mxu0 0.0
    %3476 = vmatprep.subr.mxu0 0.0
    %3477 = vmatpush1.msra.mxu0 0.0
    %3478 = vmatprep.subr.mxu0 0.0
    %3479 = vmatpush1.msra.mxu0 0.0
    %3480 = vmatprep.subr.mxu0 0.0
    %3481 = vmatpush1.msra.mxu0 0.0
    %3482 = vmatprep.subr.mxu0 0.0
    %3483 = vmatpush1.msra.mxu0 0.0
    %3484 = vmatprep.mubr.f32.mxu0 0.0
    %3485 = vmatmul.mubr.f32.gmra.mrb[0].mxu0 %v3397
    %v3486 = vpop.f32.mrb[0].mxu0
    %v3487 = vadd.f32 0.0, %v3486
    %v3488 = vpop.f32.mrb[0].mxu0
    %3489 = vmatprep.mubr.f32.mxu0 0.0
    %3490 = vmatmul.mubr.f32.gmra.mrb[0].mxu0 %v3400
    %v3491 = vpop.f32.mrb[0].mxu0
    %v3492 = vadd.f32 0.0, %v3491
    %v3493 = vpop.f32.mrb[0].mxu0
    %3494 = vmatprep.mubr.f32.mxu0 0.0
    %3495 = vmatmul.mubr.f32.gmra.mrb[0].mxu0 %v3403
    %v3496 = vpop.f32.mrb[0].mxu0
    %v3497 = vadd.f32 0.0, %v3496
    %v3498 = vpop.f32.mrb[0].mxu0
    %3499 = vmatprep.mubr.f32.mxu0 0.0
    %3500 = vmatmul.mubr.f32.gmra.mrb[0].mxu0 %v3406
    %v3501 = vpop.f32.mrb[0].mxu0
    %v3502 = vadd.f32 0.0, %v3501
    %v3503 = vpop.f32.mrb[0].mxu0
    %3504 = vmatprep.mubr.f32.mxu0 0.0
    %3505 = vmatmul.mubr.f32.gmra.mrb[0].mxu0 %v3409
    %v3506 = vpop.f32.mrb[0].mxu0
    %v3507 = vadd.f32 0.0, %v3506
    %v3508 = vpop.f32.mrb[0].mxu0
    %3509 = vmatprep.mubr.f32.mxu0 0.0
    %3510 = vmatmul.mubr.f32.gmra.mrb[0].mxu0 %v3412
    %v3511 = vpop.f32.mrb[0].mxu0
    %v3512 = vadd.f32 0.0, %v3511
    %v3513 = vpop.f32.mrb[0].mxu0
    %3514 = vmatprep.mubr.f32.mxu0 0.0
    %3515 = vmatmul.mubr.f32.gmra.mrb[0].mxu0 %v3415
    %v3516 = vpop.f32.mrb[0].mxu0
    %v3517 = vadd.f32 0.0, %v3516
    %v3518 = vpop.f32.mrb[0].mxu0
    %3519 = vmatprep.mubr.f32.mxu0 0.0
    %3520 = vmatmul.mubr.f32.gmra.mrb[0].mxu0 %v3418
    %v3521 = vpop.f32.mrb[0].mxu0
    %v3522 = vadd.f32 0.0, %v3521
    %v3523 = vpop.f32.mrb[0].mxu0
    %3524 = vdwg.mxu0
    %v3526 = vsel %vm275, %v2948, 0
    %v3529 = vsel %vm275, %v2953, 0
    %v3532 = vsel %vm275, %v2958, 0
    %v3535 = vsel %vm275, %v2963, 0
    %v3538 = vsel %vm275, %v2968, 0
    %v3541 = vsel %vm275, %v2973, 0
    %v3544 = vsel %vm275, %v2978, 0
    %v3547 = vsel %vm275, %v2983, 0
    %3549 = vmatprep.subr.mxu0 0.0
    %3550 = vmatpush1.msra.mxu0 %v2579
    %3551 = vmatprep.subr.mxu0 0.0
    %3552 = vmatpush1.msra.mxu0 0.0
    %3553 = vmatprep.subr.mxu0 0.0
    %3554 = vmatpush1.msra.mxu0 0.0
    %3555 = vmatprep.subr.mxu0 0.0
    %3556 = vmatpush1.msra.mxu0 0.0
    %3557 = vmatprep.subr.mxu0 0.0
    %3558 = vmatpush1.msra.mxu0 0.0
    %3559 = vmatprep.subr.mxu0 0.0
    %3560 = vmatpush1.msra.mxu0 0.0
    %3561 = vmatprep.subr.mxu0 0.0
    %3562 = vmatpush1.msra.mxu0 0.0
    %3563 = vmatprep.subr.mxu0 0.0
    %3564 = vmatpush1.msra.mxu0 0.0
    %3565 = vmatprep.subr.mxu0 0.0
    %3566 = vmatpush1.msra.mxu0 0.0
    %3567 = vmatprep.subr.mxu0 0.0
    %3568 = vmatpush1.msra.mxu0 0.0
    %3569 = vmatprep.subr.mxu0 0.0
    %3570 = vmatpush1.msra.mxu0 0.0
    %3571 = vmatprep.subr.mxu0 0.0
    %3572 = vmatpush1.msra.mxu0 0.0
    %3573 = vmatprep.subr.mxu0 0.0
    %3574 = vmatpush1.msra.mxu0 0.0
    %3575 = vmatprep.subr.mxu0 0.0
    %3576 = vmatpush1.msra.mxu0 0.0
    %3577 = vmatprep.subr.mxu0 0.0
    %3578 = vmatpush1.msra.mxu0 0.0
    %3579 = vmatprep.subr.mxu0 0.0
    %3580 = vmatpush1.msra.mxu0 0.0
    %3581 = vmatprep.subr.mxu0 0.0
    %3582 = vmatpush1.msra.mxu0 0.0
    %3583 = vmatprep.subr.mxu0 0.0
    %3584 = vmatpush1.msra.mxu0 0.0
    %3585 = vmatprep.subr.mxu0 0.0
    %3586 = vmatpush1.msra.mxu0 0.0
    %3587 = vmatprep.subr.mxu0 0.0
    %3588 = vmatpush1.msra.mxu0 0.0
    %3589 = vmatprep.subr.mxu0 0.0
    %3590 = vmatpush1.msra.mxu0 0.0
    %3591 = vmatprep.subr.mxu0 0.0
    %3592 = vmatpush1.msra.mxu0 0.0
    %3593 = vmatprep.subr.mxu0 0.0
    %3594 = vmatpush1.msra.mxu0 0.0
    %3595 = vmatprep.subr.mxu0 0.0
    %3596 = vmatpush1.msra.mxu0 0.0
    %3597 = vmatprep.subr.mxu0 0.0
    %3598 = vmatpush1.msra.mxu0 0.0
    %3599 = vmatprep.subr.mxu0 0.0
    %3600 = vmatpush1.msra.mxu0 0.0
    %3601 = vmatprep.subr.mxu0 0.0
    %3602 = vmatpush1.msra.mxu0 0.0
    %3603 = vmatprep.subr.mxu0 0.0
    %3604 = vmatpush1.msra.mxu0 0.0
    %3605 = vmatprep.subr.mxu0 0.0
    %3606 = vmatpush1.msra.mxu0 0.0
    %3607 = vmatprep.subr.mxu0 0.0
    %3608 = vmatpush1.msra.mxu0 0.0
    %3609 = vmatprep.subr.mxu0 0.0
    %3610 = vmatpush1.msra.mxu0 0.0
    %3611 = vmatprep.subr.mxu0 0.0
    %3612 = vmatpush1.msra.mxu0 0.0
    %3613 = vmatprep.mubr.f32.mxu0 0.0
    %3614 = vmatmul.mubr.f32.gmra.mrb[0].mxu0 %v3526
    %v3615 = vpop.f32.mrb[0].mxu0
    %v3616 = vadd.f32 %v3487, %v3615
    %v3617 = vpop.f32.mrb[0].mxu0
    %3618 = vmatprep.mubr.f32.mxu0 0.0
    %3619 = vmatmul.mubr.f32.gmra.mrb[0].mxu0 %v3529
    %v3620 = vpop.f32.mrb[0].mxu0
    %v3621 = vadd.f32 %v3492, %v3620
    %v3622 = vpop.f32.mrb[0].mxu0
    %3623 = vmatprep.mubr.f32.mxu0 0.0
    %3624 = vmatmul.mubr.f32.gmra.mrb[0].mxu0 %v3532
    %v3625 = vpop.f32.mrb[0].mxu0
    %v3626 = vadd.f32 %v3497, %v3625
    %v3627 = vpop.f32.mrb[0].mxu0
    %3628 = vmatprep.mubr.f32.mxu0 0.0
    %3629 = vmatmul.mubr.f32.gmra.mrb[0].mxu0 %v3535
    %v3630 = vpop.f32.mrb[0].mxu0
    %v3631 = vadd.f32 %v3502, %v3630
    %v3632 = vpop.f32.mrb[0].mxu0
    %3633 = vmatprep.mubr.f32.mxu0 0.0
    %3634 = vmatmul.mubr.f32.gmra.mrb[0].mxu0 %v3538
    %v3635 = vpop.f32.mrb[0].mxu0
    %v3636 = vadd.f32 %v3507, %v3635
    %v3637 = vpop.f32.mrb[0].mxu0
    %3638 = vmatprep.mubr.f32.mxu0 0.0
    %3639 = vmatmul.mubr.f32.gmra.mrb[0].mxu0 %v3541
    %v3640 = vpop.f32.mrb[0].mxu0
    %v3641 = vadd.f32 %v3512, %v3640
    %v3642 = vpop.f32.mrb[0].mxu0
    %3643 = vmatprep.mubr.f32.mxu0 0.0
    %3644 = vmatmul.mubr.f32.gmra.mrb[0].mxu0 %v3544
    %v3645 = vpop.f32.mrb[0].mxu0
    %v3646 = vadd.f32 %v3517, %v3645
    %v3647 = vpop.f32.mrb[0].mxu0
    %3648 = vmatprep.mubr.f32.mxu0 0.0
    %3649 = vmatmul.mubr.f32.gmra.mrb[0].mxu0 %v3547
    %v3650 = vpop.f32.mrb[0].mxu0
    %v3651 = vadd.f32 %v3522, %v3650
    %v3652 = vpop.f32.mrb[0].mxu0
    %3653 = vdwg.mxu0
    %3654 = vrot.lane.b32.xlu0 %v2533, 112
    %v3655 = vpop.permute.xlu0 %3654
    %3656 = vrot.lane.b32.xlu0 %v2538, 112
    %v3657 = vpop.permute.xlu0 %3656
    %3658 = vrot.lane.b32.xlu0 %v2543, 112
    %v3659 = vpop.permute.xlu0 %3658
    %3660 = vrot.lane.b32.xlu0 %v2548, 112
    %v3661 = vpop.permute.xlu0 %3660
    %3662 = vrot.lane.b32.xlu0 %v2553, 112
    %v3663 = vpop.permute.xlu0 %3662
    %3664 = vrot.lane.b32.xlu0 %v2558, 112
    %v3665 = vpop.permute.xlu0 %3664
    %3666 = vrot.lane.b32.xlu0 %v2563, 112
    %v3667 = vpop.permute.xlu0 %3666
    %3668 = vrot.lane.b32.xlu0 %v2568, 112
    %v3669 = vpop.permute.xlu0 %3668
    %3670 = vrot.lane.b32.xlu0 %v2533, 80
    %v3671 = vpop.permute.xlu0 %3670
    %3672 = vrot.lane.b32.xlu0 %v2538, 80
    %v3673 = vpop.permute.xlu0 %3672
    %3674 = vrot.lane.b32.xlu0 %v2543, 80
    %v3675 = vpop.permute.xlu0 %3674
    %3676 = vrot.lane.b32.xlu0 %v2548, 80
    %v3677 = vpop.permute.xlu0 %3676
    %3678 = vrot.lane.b32.xlu0 %v2553, 80
    %v3679 = vpop.permute.xlu0 %3678
    %3680 = vrot.lane.b32.xlu0 %v2558, 80
    %v3681 = vpop.permute.xlu0 %3680
    %3682 = vrot.lane.b32.xlu0 %v2563, 80
    %v3683 = vpop.permute.xlu0 %3682
    %3684 = vrot.lane.b32.xlu0 %v2568, 80
    %v3685 = vpop.permute.xlu0 %3684
    %v3686 = vsel %vm275, %v3655, 0
    %v3688 = vsel %vm275, %v3657, 0
    %v3690 = vsel %vm275, %v3659, 0
    %v3692 = vsel %vm275, %v3661, 0
    %v3694 = vsel %vm275, %v3663, 0
    %v3696 = vsel %vm275, %v3665, 0
    %v3698 = vsel %vm275, %v3667, 0
    %v3700 = vsel %vm275, %v3669, 0
    %v3702 = vsel %vm275, %v3671, 0
    %v3704 = vsel %vm275, %v3673, 0
    %v3706 = vsel %vm275, %v3675, 0
    %v3708 = vsel %vm275, %v3677, 0
    %v3710 = vsel %vm275, %v3679, 0
    %v3712 = vsel %vm275, %v3681, 0
    %v3714 = vsel %vm275, %v3683, 0
    %v3716 = vsel %vm275, %v3685, 0
    %3718 = vmatprep.subr.mxu0 0.0
    %3719 = vmatpush1.xpose.msra.mxu0 %v3702
    %3720 = vmatprep.subr.mxu0 0.0
    %3721 = vmatpush1.xpose.msra.mxu0 %v3704
    %3722 = vmatprep.subr.mxu0 0.0
    %3723 = vmatpush1.xpose.msra.mxu0 %v3706
    %3724 = vmatprep.subr.mxu0 0.0
    %3725 = vmatpush1.xpose.msra.mxu0 %v3708
    %3726 = vmatprep.subr.mxu0 0.0
    %3727 = vmatpush1.xpose.msra.mxu0 %v3710
    %3728 = vmatprep.subr.mxu0 0.0
    %3729 = vmatpush1.xpose.msra.mxu0 %v3712
    %3730 = vmatprep.subr.mxu0 0.0
    %3731 = vmatpush1.xpose.msra.mxu0 %v3714
    %3732 = vmatprep.subr.mxu0 0.0
    %3733 = vmatpush1.xpose.msra.mxu0 %v3716
    %3734 = vmatprep.subr.mxu0 0.0
    %3735 = vmatpush1.xpose.msra.mxu0 0.0
    %3736 = vmatprep.subr.mxu0 0.0
    %3737 = vmatpush1.xpose.msra.mxu0 0.0
    %3738 = vmatprep.subr.mxu0 0.0
    %3739 = vmatpush1.xpose.msra.mxu0 0.0
    %3740 = vmatprep.subr.mxu0 0.0
    %3741 = vmatpush1.xpose.msra.mxu0 0.0
    %3742 = vmatprep.subr.mxu0 0.0
    %3743 = vmatpush1.xpose.msra.mxu0 0.0
    %3744 = vmatprep.subr.mxu0 0.0
    %3745 = vmatpush1.xpose.msra.mxu0 0.0
    %3746 = vmatprep.subr.mxu0 0.0
    %3747 = vmatpush1.xpose.msra.mxu0 0.0
    %3748 = vmatprep.subr.mxu0 0.0
    %3749 = vmatpush1.xpose.msra.mxu0 0.0
    %3750 = vmatprep.subr.mxu0 0.0
    %3751 = vmatpush1.xpose.msra.mxu0 0.0
    %3752 = vmatprep.subr.mxu0 0.0
    %3753 = vmatpush1.xpose.msra.mxu0 0.0
    %3754 = vmatprep.subr.mxu0 0.0
    %3755 = vmatpush1.xpose.msra.mxu0 0.0
    %3756 = vmatprep.subr.mxu0 0.0
    %3757 = vmatpush1.xpose.msra.mxu0 0.0
    %3758 = vmatprep.subr.mxu0 0.0
    %3759 = vmatpush1.xpose.msra.mxu0 0.0
    %3760 = vmatprep.subr.mxu0 0.0
    %3761 = vmatpush1.xpose.msra.mxu0 0.0
    %3762 = vmatprep.subr.mxu0 0.0
    %3763 = vmatpush1.xpose.msra.mxu0 0.0
    %3764 = vmatprep.subr.mxu0 0.0
    %3765 = vmatpush1.xpose.msra.mxu0 0.0
    %3766 = vmatprep.subr.mxu0 0.0
    %3767 = vmatpush1.xpose.msra.mxu0 0.0
    %3768 = vmatprep.subr.mxu0 0.0
    %3769 = vmatpush1.xpose.msra.mxu0 0.0
    %3770 = vmatprep.subr.mxu0 0.0
    %3771 = vmatpush1.xpose.msra.mxu0 0.0
    %3772 = vmatprep.subr.mxu0 0.0
    %3773 = vmatpush1.xpose.msra.mxu0 0.0
    %3774 = vmatprep.subr.mxu0 0.0
    %3775 = vmatpush1.xpose.msra.mxu0 0.0
    %3776 = vmatprep.subr.mxu0 0.0
    %3777 = vmatpush1.xpose.msra.mxu0 0.0
    %3778 = vmatprep.subr.mxu0 0.0
    %3779 = vmatpush1.xpose.msra.mxu0 0.0
    %3780 = vmatprep.subr.mxu0 0.0
    %3781 = vmatpush1.xpose.msra.mxu0 0.0
    %3782 = vmatprep.mubr.f32.mxu0 0.0
    %3783 = vmatmul.mubr.f32.gmra.mrb[0].mxu0 %v3686
    %v3784 = vpop.f32.mrb[0].mxu0
    %v3785 = vadd.f32 %v2571, %v3784
    %v3786 = vpop.f32.mrb[0].mxu0
    %3787 = vmatprep.mubr.f32.mxu0 0.0
    %3788 = vmatmul.mubr.f32.gmra.mrb[0].mxu0 %v3688
    %v3789 = vpop.f32.mrb[0].mxu0
    %v3790 = vadd.f32 %v2572, %v3789
    %v3791 = vpop.f32.mrb[0].mxu0
    %3792 = vmatprep.mubr.f32.mxu0 0.0
    %3793 = vmatmul.mubr.f32.gmra.mrb[0].mxu0 %v3690
    %v3794 = vpop.f32.mrb[0].mxu0
    %v3795 = vadd.f32 %v2573, %v3794
    %v3796 = vpop.f32.mrb[0].mxu0
    %3797 = vmatprep.mubr.f32.mxu0 0.0
    %3798 = vmatmul.mubr.f32.gmra.mrb[0].mxu0 %v3692
    %v3799 = vpop.f32.mrb[0].mxu0
    %v3800 = vadd.f32 %v2574, %v3799
    %v3801 = vpop.f32.mrb[0].mxu0
    %3802 = vmatprep.mubr.f32.mxu0 0.0
    %3803 = vmatmul.mubr.f32.gmra.mrb[0].mxu0 %v3694
    %v3804 = vpop.f32.mrb[0].mxu0
    %v3805 = vadd.f32 %v2575, %v3804
    %v3806 = vpop.f32.mrb[0].mxu0
    %3807 = vmatprep.mubr.f32.mxu0 0.0
    %3808 = vmatmul.mubr.f32.gmra.mrb[0].mxu0 %v3696
    %v3809 = vpop.f32.mrb[0].mxu0
    %v3810 = vadd.f32 %v2576, %v3809
    %v3811 = vpop.f32.mrb[0].mxu0
    %3812 = vmatprep.mubr.f32.mxu0 0.0
    %3813 = vmatmul.mubr.f32.gmra.mrb[0].mxu0 %v3698
    %v3814 = vpop.f32.mrb[0].mxu0
    %v3815 = vadd.f32 %v2577, %v3814
    %v3816 = vpop.f32.mrb[0].mxu0
    %3817 = vmatprep.mubr.f32.mxu0 0.0
    %3818 = vmatmul.mubr.f32.gmra.mrb[0].mxu0 %v3700
    %v3819 = vpop.f32.mrb[0].mxu0
    %v3820 = vadd.f32 %v2578, %v3819
    %v3821 = vpop.f32.mrb[0].mxu0
    %3822 = vdwg.mxu0
    %v3823 = vsel %vm413, %v3785, -inf
    %3824 = vmax.xlane.f32.xlu0 %v3823
    %v3825 = vpop.xlane.xlu0 %3824
    %v3826 = vsel %vm413, %v3790, -inf
    %3827 = vmax.xlane.f32.xlu0 %v3826
    %v3828 = vpop.xlane.xlu0 %3827
    %v3829 = vsel %vm413, %v3795, -inf
    %3830 = vmax.xlane.f32.xlu0 %v3829
    %v3831 = vpop.xlane.xlu0 %3830
    %v3832 = vsel %vm413, %v3800, -inf
    %3833 = vmax.xlane.f32.xlu0 %v3832
    %v3834 = vpop.xlane.xlu0 %3833
    %v3835 = vsel %vm413, %v3805, -inf
    %3836 = vmax.xlane.f32.xlu0 %v3835
    %v3837 = vpop.xlane.xlu0 %3836
    %v3838 = vsel %vm413, %v3810, -inf
    %3839 = vmax.xlane.f32.xlu0 %v3838
    %v3840 = vpop.xlane.xlu0 %3839
    %v3841 = vsel %vm413, %v3815, -inf
    %3842 = vmax.xlane.f32.xlu0 %v3841
    %v3843 = vpop.xlane.xlu0 %3842
    %v3844 = vsel %vm413, %v3820, -inf
    %3845 = vmax.xlane.f32.xlu0 %v3844
    %v3846 = vpop.xlane.xlu0 %3845
    %v3847 = vsub.f32 %v3785, %v3825
    %v3848 = vsub.f32 %v3790, %v3828
    %v3849 = vsub.f32 %v3795, %v3831
    %v3850 = vsub.f32 %v3800, %v3834
    %v3851 = vsub.f32 %v3805, %v3837
    %v3852 = vsub.f32 %v3810, %v3840
    %v3853 = vsub.f32 %v3815, %v3843
    %v3854 = vsub.f32 %v3820, %v3846
    %v3855 = vmul.f32 %v3847, 1.442695
    %v3856 = vpow.pop %v3855
    %v3857 = vmul.f32 %v3848, 1.442695
    %v3858 = vpow.pop %v3857
    %v3859 = vmul.f32 %v3849, 1.442695
    %v3860 = vpow.pop %v3859
    %v3861 = vmul.f32 %v3850, 1.442695
    %v3862 = vpow.pop %v3861
    %v3863 = vmul.f32 %v3851, 1.442695
    %v3864 = vpow.pop %v3863
    %v3865 = vmul.f32 %v3852, 1.442695
    %v3866 = vpow.pop %v3865
    %v3867 = vmul.f32 %v3853, 1.442695
    %v3868 = vpow.pop %v3867
    %v3869 = vmul.f32 %v3854, 1.442695
    %v3870 = vpow.pop %v3869
    %v3871 = vsel %vm413, %v3856, 0.0
    %3872 = vadd.xlane.f32.xlu0 %v3871
    %v3873 = vpop.xlane.xlu0 %3872
    %v3874 = vsel %vm413, %v3858, 0.0
    %3875 = vadd.xlane.f32.xlu0 %v3874
    %v3876 = vpop.xlane.xlu0 %3875
    %v3877 = vsel %vm413, %v3860, 0.0
    %3878 = vadd.xlane.f32.xlu0 %v3877
    %v3879 = vpop.xlane.xlu0 %3878
    %v3880 = vsel %vm413, %v3862, 0.0
    %3881 = vadd.xlane.f32.xlu0 %v3880
    %v3882 = vpop.xlane.xlu0 %3881
    %v3883 = vsel %vm413, %v3864, 0.0
    %3884 = vadd.xlane.f32.xlu0 %v3883
    %v3885 = vpop.xlane.xlu0 %3884
    %v3886 = vsel %vm413, %v3866, 0.0
    %3887 = vadd.xlane.f32.xlu0 %v3886
    %v3888 = vpop.xlane.xlu0 %3887
    %v3889 = vsel %vm413, %v3868, 0.0
    %3890 = vadd.xlane.f32.xlu0 %v3889
    %v3891 = vpop.xlane.xlu0 %3890
    %v3892 = vsel %vm413, %v3870, 0.0
    %3893 = vadd.xlane.f32.xlu0 %v3892
    %v3894 = vpop.xlane.xlu0 %3893
    %v3895 = vrcp.pop %v3873
    %v3896 = vrcp.pop %v3876
    %v3897 = vrcp.pop %v3879
    %v3898 = vrcp.pop %v3882
    %v3899 = vrcp.pop %v3885
    %v3900 = vrcp.pop %v3888
    %v3901 = vrcp.pop %v3891
    %v3902 = vrcp.pop %v3894
    %v3903 = vmul.f32 %v3856, %v3895
    %v3904 = vmul.f32 %v3858, %v3896
    %v3905 = vmul.f32 %v3860, %v3897
    %v3906 = vmul.f32 %v3862, %v3898
    %v3907 = vmul.f32 %v3864, %v3899
    %v3908 = vmul.f32 %v3866, %v3900
    %v3909 = vmul.f32 %v3868, %v3901
    %v3910 = vmul.f32 %v3870, %v3902
    %3911 = vrot.lane.b32.xlu0 %v2533, 48
    %v3912 = vpop.permute.xlu0 %3911
    %3913 = vrot.lane.b32.xlu0 %v2538, 48
    %v3914 = vpop.permute.xlu0 %3913
    %3915 = vrot.lane.b32.xlu0 %v2543, 48
    %v3916 = vpop.permute.xlu0 %3915
    %3917 = vrot.lane.b32.xlu0 %v2548, 48
    %v3918 = vpop.permute.xlu0 %3917
    %3919 = vrot.lane.b32.xlu0 %v2553, 48
    %v3920 = vpop.permute.xlu0 %3919
    %3921 = vrot.lane.b32.xlu0 %v2558, 48
    %v3922 = vpop.permute.xlu0 %3921
    %3923 = vrot.lane.b32.xlu0 %v2563, 48
    %v3924 = vpop.permute.xlu0 %3923
    %3925 = vrot.lane.b32.xlu0 %v2568, 48
    %v3926 = vpop.permute.xlu0 %3925
    %v3936 = vsel %vm413, %v3903, 0
    %v3939 = vsel %vm413, %v3904, 0
    %v3942 = vsel %vm413, %v3905, 0
    %v3945 = vsel %vm413, %v3906, 0
    %v3948 = vsel %vm413, %v3907, 0
    %v3951 = vsel %vm413, %v3908, 0
    %v3954 = vsel %vm413, %v3909, 0
    %v3957 = vsel %vm413, %v3910, 0
    %3959 = vmatprep.subr.mxu0 0.0
    %3960 = vmatpush1.msra.mxu0 %v3912
    %3961 = vmatprep.subr.mxu0 0.0
    %3962 = vmatpush1.msra.mxu0 %v3914
    %3963 = vmatprep.subr.mxu0 0.0
    %3964 = vmatpush1.msra.mxu0 %v3916
    %3965 = vmatprep.subr.mxu0 0.0
    %3966 = vmatpush1.msra.mxu0 %v3918
    %3967 = vmatprep.subr.mxu0 0.0
    %3968 = vmatpush1.msra.mxu0 %v3920
    %3969 = vmatprep.subr.mxu0 0.0
    %3970 = vmatpush1.msra.mxu0 %v3922
    %3971 = vmatprep.subr.mxu0 0.0
    %3972 = vmatpush1.msra.mxu0 %v3924
    %3973 = vmatprep.subr.mxu0 0.0
    %3974 = vmatpush1.msra.mxu0 %v3926
    %3975 = vmatprep.subr.mxu0 0.0
    %3976 = vmatpush1.msra.mxu0 0.0
    %3977 = vmatprep.subr.mxu0 0.0
    %3978 = vmatpush1.msra.mxu0 0.0
    %3979 = vmatprep.subr.mxu0 0.0
    %3980 = vmatpush1.msra.mxu0 0.0
    %3981 = vmatprep.subr.mxu0 0.0
    %3982 = vmatpush1.msra.mxu0 0.0
    %3983 = vmatprep.subr.mxu0 0.0
    %3984 = vmatpush1.msra.mxu0 0.0
    %3985 = vmatprep.subr.mxu0 0.0
    %3986 = vmatpush1.msra.mxu0 0.0
    %3987 = vmatprep.subr.mxu0 0.0
    %3988 = vmatpush1.msra.mxu0 0.0
    %3989 = vmatprep.subr.mxu0 0.0
    %3990 = vmatpush1.msra.mxu0 0.0
    %3991 = vmatprep.subr.mxu0 0.0
    %3992 = vmatpush1.msra.mxu0 0.0
    %3993 = vmatprep.subr.mxu0 0.0
    %3994 = vmatpush1.msra.mxu0 0.0
    %3995 = vmatprep.subr.mxu0 0.0
    %3996 = vmatpush1.msra.mxu0 0.0
    %3997 = vmatprep.subr.mxu0 0.0
    %3998 = vmatpush1.msra.mxu0 0.0
    %3999 = vmatprep.subr.mxu0 0.0
    %4000 = vmatpush1.msra.mxu0 0.0
    %4001 = vmatprep.subr.mxu0 0.0
    %4002 = vmatpush1.msra.mxu0 0.0
    %4003 = vmatprep.subr.mxu0 0.0
    %4004 = vmatpush1.msra.mxu0 0.0
    %4005 = vmatprep.subr.mxu0 0.0
    %4006 = vmatpush1.msra.mxu0 0.0
    %4007 = vmatprep.subr.mxu0 0.0
    %4008 = vmatpush1.msra.mxu0 0.0
    %4009 = vmatprep.subr.mxu0 0.0
    %4010 = vmatpush1.msra.mxu0 0.0
    %4011 = vmatprep.subr.mxu0 0.0
    %4012 = vmatpush1.msra.mxu0 0.0
    %4013 = vmatprep.subr.mxu0 0.0
    %4014 = vmatpush1.msra.mxu0 0.0
    %4015 = vmatprep.subr.mxu0 0.0
    %4016 = vmatpush1.msra.mxu0 0.0
    %4017 = vmatprep.subr.mxu0 0.0
    %4018 = vmatpush1.msra.mxu0 0.0
    %4019 = vmatprep.subr.mxu0 0.0
    %4020 = vmatpush1.msra.mxu0 0.0
    %4021 = vmatprep.subr.mxu0 0.0
    %4022 = vmatpush1.msra.mxu0 0.0
    %4023 = vmatprep.mubr.f32.mxu0 0.0
    %4024 = vmatmul.mubr.f32.gmra.mrb[0].mxu0 %v3936
    %v4025 = vpop.f32.mrb[0].mxu0
    %v4026 = vadd.f32 0.0, %v4025
    %v4027 = vpop.f32.mrb[0].mxu0
    %4028 = vmatprep.mubr.f32.mxu0 0.0
    %4029 = vmatmul.mubr.f32.gmra.mrb[0].mxu0 %v3939
    %v4030 = vpop.f32.mrb[0].mxu0
    %v4031 = vadd.f32 0.0, %v4030
    %v4032 = vpop.f32.mrb[0].mxu0
    %4033 = vmatprep.mubr.f32.mxu0 0.0
    %4034 = vmatmul.mubr.f32.gmra.mrb[0].mxu0 %v3942
    %v4035 = vpop.f32.mrb[0].mxu0
    %v4036 = vadd.f32 0.0, %v4035
    %v4037 = vpop.f32.mrb[0].mxu0
    %4038 = vmatprep.mubr.f32.mxu0 0.0
    %4039 = vmatmul.mubr.f32.gmra.mrb[0].mxu0 %v3945
    %v4040 = vpop.f32.mrb[0].mxu0
    %v4041 = vadd.f32 0.0, %v4040
    %v4042 = vpop.f32.mrb[0].mxu0
    %4043 = vmatprep.mubr.f32.mxu0 0.0
    %4044 = vmatmul.mubr.f32.gmra.mrb[0].mxu0 %v3948
    %v4045 = vpop.f32.mrb[0].mxu0
    %v4046 = vadd.f32 0.0, %v4045
    %v4047 = vpop.f32.mrb[0].mxu0
    %4048 = vmatprep.mubr.f32.mxu0 0.0
    %4049 = vmatmul.mubr.f32.gmra.mrb[0].mxu0 %v3951
    %v4050 = vpop.f32.mrb[0].mxu0
    %v4051 = vadd.f32 0.0, %v4050
    %v4052 = vpop.f32.mrb[0].mxu0
    %4053 = vmatprep.mubr.f32.mxu0 0.0
    %4054 = vmatmul.mubr.f32.gmra.mrb[0].mxu0 %v3954
    %v4055 = vpop.f32.mrb[0].mxu0
    %v4056 = vadd.f32 0.0, %v4055
    %v4057 = vpop.f32.mrb[0].mxu0
    %4058 = vmatprep.mubr.f32.mxu0 0.0
    %4059 = vmatmul.mubr.f32.gmra.mrb[0].mxu0 %v3957
    %v4060 = vpop.f32.mrb[0].mxu0
    %v4061 = vadd.f32 0.0, %v4060
    %v4062 = vpop.f32.mrb[0].mxu0
    %4063 = vdwg.mxu0
    %v4065 = vsel %vm275, %v4026, 0
    %v4068 = vsel %vm275, %v4031, 0
    %v4071 = vsel %vm275, %v4036, 0
    %v4074 = vsel %vm275, %v4041, 0
    %v4077 = vsel %vm275, %v4046, 0
    %v4080 = vsel %vm275, %v4051, 0
    %v4083 = vsel %vm275, %v4056, 0
    %v4086 = vsel %vm275, %v4061, 0
    %4088 = vmatprep.subr.mxu0 0.0
    %4089 = vmatpush1.msra.mxu0 %v2581
    %4090 = vmatprep.subr.mxu0 0.0
    %4091 = vmatpush1.msra.mxu0 0.0
    %4092 = vmatprep.subr.mxu0 0.0
    %4093 = vmatpush1.msra.mxu0 0.0
    %4094 = vmatprep.subr.mxu0 0.0
    %4095 = vmatpush1.msra.mxu0 0.0
    %4096 = vmatprep.subr.mxu0 0.0
    %4097 = vmatpush1.msra.mxu0 0.0
    %4098 = vmatprep.subr.mxu0 0.0
    %4099 = vmatpush1.msra.mxu0 0.0
    %4100 = vmatprep.subr.mxu0 0.0
    %4101 = vmatpush1.msra.mxu0 0.0
    %4102 = vmatprep.subr.mxu0 0.0
    %4103 = vmatpush1.msra.mxu0 0.0
    %4104 = vmatprep.subr.mxu0 0.0
    %4105 = vmatpush1.msra.mxu0 0.0
    %4106 = vmatprep.subr.mxu0 0.0
    %4107 = vmatpush1.msra.mxu0 0.0
    %4108 = vmatprep.subr.mxu0 0.0
    %4109 = vmatpush1.msra.mxu0 0.0
    %4110 = vmatprep.subr.mxu0 0.0
    %4111 = vmatpush1.msra.mxu0 0.0
    %4112 = vmatprep.subr.mxu0 0.0
    %4113 = vmatpush1.msra.mxu0 0.0
    %4114 = vmatprep.subr.mxu0 0.0
    %4115 = vmatpush1.msra.mxu0 0.0
    %4116 = vmatprep.subr.mxu0 0.0
    %4117 = vmatpush1.msra.mxu0 0.0
    %4118 = vmatprep.subr.mxu0 0.0
    %4119 = vmatpush1.msra.mxu0 0.0
    %4120 = vmatprep.subr.mxu0 0.0
    %4121 = vmatpush1.msra.mxu0 0.0
    %4122 = vmatprep.subr.mxu0 0.0
    %4123 = vmatpush1.msra.mxu0 0.0
    %4124 = vmatprep.subr.mxu0 0.0
    %4125 = vmatpush1.msra.mxu0 0.0
    %4126 = vmatprep.subr.mxu0 0.0
    %4127 = vmatpush1.msra.mxu0 0.0
    %4128 = vmatprep.subr.mxu0 0.0
    %4129 = vmatpush1.msra.mxu0 0.0
    %4130 = vmatprep.subr.mxu0 0.0
    %4131 = vmatpush1.msra.mxu0 0.0
    %4132 = vmatprep.subr.mxu0 0.0
    %4133 = vmatpush1.msra.mxu0 0.0
    %4134 = vmatprep.subr.mxu0 0.0
    %4135 = vmatpush1.msra.mxu0 0.0
    %4136 = vmatprep.subr.mxu0 0.0
    %4137 = vmatpush1.msra.mxu0 0.0
    %4138 = vmatprep.subr.mxu0 0.0
    %4139 = vmatpush1.msra.mxu0 0.0
    %4140 = vmatprep.subr.mxu0 0.0
    %4141 = vmatpush1.msra.mxu0 0.0
    %4142 = vmatprep.subr.mxu0 0.0
    %4143 = vmatpush1.msra.mxu0 0.0
    %4144 = vmatprep.subr.mxu0 0.0
    %4145 = vmatpush1.msra.mxu0 0.0
    %4146 = vmatprep.subr.mxu0 0.0
    %4147 = vmatpush1.msra.mxu0 0.0
    %4148 = vmatprep.subr.mxu0 0.0
    %4149 = vmatpush1.msra.mxu0 0.0
    %4150 = vmatprep.subr.mxu0 0.0
    %4151 = vmatpush1.msra.mxu0 0.0
    %4152 = vmatprep.mubr.f32.mxu0 0.0
    %4153 = vmatmul.mubr.f32.gmra.mrb[0].mxu0 %v4065
    %v4154 = vpop.f32.mrb[0].mxu0
    %v4155 = vadd.f32 0.0, %v4154
    %v4156 = vpop.f32.mrb[0].mxu0
    %4157 = vmatprep.mubr.f32.mxu0 0.0
    %4158 = vmatmul.mubr.f32.gmra.mrb[0].mxu0 %v4068
    %v4159 = vpop.f32.mrb[0].mxu0
    %v4160 = vadd.f32 0.0, %v4159
    %v4161 = vpop.f32.mrb[0].mxu0
    %4162 = vmatprep.mubr.f32.mxu0 0.0
    %4163 = vmatmul.mubr.f32.gmra.mrb[0].mxu0 %v4071
    %v4164 = vpop.f32.mrb[0].mxu0
    %v4165 = vadd.f32 0.0, %v4164
    %v4166 = vpop.f32.mrb[0].mxu0
    %4167 = vmatprep.mubr.f32.mxu0 0.0
    %4168 = vmatmul.mubr.f32.gmra.mrb[0].mxu0 %v4074
    %v4169 = vpop.f32.mrb[0].mxu0
    %v4170 = vadd.f32 0.0, %v4169
    %v4171 = vpop.f32.mrb[0].mxu0
    %4172 = vmatprep.mubr.f32.mxu0 0.0
    %4173 = vmatmul.mubr.f32.gmra.mrb[0].mxu0 %v4077
    %v4174 = vpop.f32.mrb[0].mxu0
    %v4175 = vadd.f32 0.0, %v4174
    %v4176 = vpop.f32.mrb[0].mxu0
    %4177 = vmatprep.mubr.f32.mxu0 0.0
    %4178 = vmatmul.mubr.f32.gmra.mrb[0].mxu0 %v4080
    %v4179 = vpop.f32.mrb[0].mxu0
    %v4180 = vadd.f32 0.0, %v4179
    %v4181 = vpop.f32.mrb[0].mxu0
    %4182 = vmatprep.mubr.f32.mxu0 0.0
    %4183 = vmatmul.mubr.f32.gmra.mrb[0].mxu0 %v4083
    %v4184 = vpop.f32.mrb[0].mxu0
    %v4185 = vadd.f32 0.0, %v4184
    %v4186 = vpop.f32.mrb[0].mxu0
    %4187 = vmatprep.mubr.f32.mxu0 0.0
    %4188 = vmatmul.mubr.f32.gmra.mrb[0].mxu0 %v4086
    %v4189 = vpop.f32.mrb[0].mxu0
    %v4190 = vadd.f32 0.0, %v4189
    %v4191 = vpop.f32.mrb[0].mxu0
    %4192 = vdwg.mxu0
    %v4193 = vadd.f32 %v3616, %v4155
    %v4194 = vadd.f32 %v3621, %v4160
    %v4195 = vadd.f32 %v3626, %v4165
    %v4196 = vadd.f32 %v3631, %v4170
    %v4197 = vadd.f32 %v3636, %v4175
    %v4198 = vadd.f32 %v3641, %v4180
    %v4199 = vadd.f32 %v3646, %v4185
    %v4200 = vadd.f32 %v3651, %v4190
    %4201 = vrot.lane.b32.xlu0 %v2533, 104
    %v4202 = vpop.permute.xlu0 %4201
    %4203 = vrot.lane.b32.xlu0 %v2538, 104
    %v4204 = vpop.permute.xlu0 %4203
    %4205 = vrot.lane.b32.xlu0 %v2543, 104
    %v4206 = vpop.permute.xlu0 %4205
    %4207 = vrot.lane.b32.xlu0 %v2548, 104
    %v4208 = vpop.permute.xlu0 %4207
    %4209 = vrot.lane.b32.xlu0 %v2553, 104
    %v4210 = vpop.permute.xlu0 %4209
    %4211 = vrot.lane.b32.xlu0 %v2558, 104
    %v4212 = vpop.permute.xlu0 %4211
    %4213 = vrot.lane.b32.xlu0 %v2563, 104
    %v4214 = vpop.permute.xlu0 %4213
    %4215 = vrot.lane.b32.xlu0 %v2568, 104
    %v4216 = vpop.permute.xlu0 %4215
    %4217 = vrot.lane.b32.xlu0 %v2533, 72
    %v4218 = vpop.permute.xlu0 %4217
    %4219 = vrot.lane.b32.xlu0 %v2538, 72
    %v4220 = vpop.permute.xlu0 %4219
    %4221 = vrot.lane.b32.xlu0 %v2543, 72
    %v4222 = vpop.permute.xlu0 %4221
    %4223 = vrot.lane.b32.xlu0 %v2548, 72
    %v4224 = vpop.permute.xlu0 %4223
    %4225 = vrot.lane.b32.xlu0 %v2553, 72
    %v4226 = vpop.permute.xlu0 %4225
    %4227 = vrot.lane.b32.xlu0 %v2558, 72
    %v4228 = vpop.permute.xlu0 %4227
    %4229 = vrot.lane.b32.xlu0 %v2563, 72
    %v4230 = vpop.permute.xlu0 %4229
    %4231 = vrot.lane.b32.xlu0 %v2568, 72
    %v4232 = vpop.permute.xlu0 %4231
    %v4233 = vsel %vm275, %v4202, 0
    %v4235 = vsel %vm275, %v4204, 0
    %v4237 = vsel %vm275, %v4206, 0
    %v4239 = vsel %vm275, %v4208, 0
    %v4241 = vsel %vm275, %v4210, 0
    %v4243 = vsel %vm275, %v4212, 0
    %v4245 = vsel %vm275, %v4214, 0
    %v4247 = vsel %vm275, %v4216, 0
    %v4249 = vsel %vm275, %v4218, 0
    %v4251 = vsel %vm275, %v4220, 0
    %v4253 = vsel %vm275, %v4222, 0
    %v4255 = vsel %vm275, %v4224, 0
    %v4257 = vsel %vm275, %v4226, 0
    %v4259 = vsel %vm275, %v4228, 0
    %v4261 = vsel %vm275, %v4230, 0
    %v4263 = vsel %vm275, %v4232, 0
    %4265 = vmatprep.subr.mxu0 0.0
    %4266 = vmatpush1.xpose.msra.mxu0 %v4249
    %4267 = vmatprep.subr.mxu0 0.0
    %4268 = vmatpush1.xpose.msra.mxu0 %v4251
    %4269 = vmatprep.subr.mxu0 0.0
    %4270 = vmatpush1.xpose.msra.mxu0 %v4253
    %4271 = vmatprep.subr.mxu0 0.0
    %4272 = vmatpush1.xpose.msra.mxu0 %v4255
    %4273 = vmatprep.subr.mxu0 0.0
    %4274 = vmatpush1.xpose.msra.mxu0 %v4257
    %4275 = vmatprep.subr.mxu0 0.0
    %4276 = vmatpush1.xpose.msra.mxu0 %v4259
    %4277 = vmatprep.subr.mxu0 0.0
    %4278 = vmatpush1.xpose.msra.mxu0 %v4261
    %4279 = vmatprep.subr.mxu0 0.0
    %4280 = vmatpush1.xpose.msra.mxu0 %v4263
    %4281 = vmatprep.subr.mxu0 0.0
    %4282 = vmatpush1.xpose.msra.mxu0 0.0
    %4283 = vmatprep.subr.mxu0 0.0
    %4284 = vmatpush1.xpose.msra.mxu0 0.0
    %4285 = vmatprep.subr.mxu0 0.0
    %4286 = vmatpush1.xpose.msra.mxu0 0.0
    %4287 = vmatprep.subr.mxu0 0.0
    %4288 = vmatpush1.xpose.msra.mxu0 0.0
    %4289 = vmatprep.subr.mxu0 0.0
    %4290 = vmatpush1.xpose.msra.mxu0 0.0
    %4291 = vmatprep.subr.mxu0 0.0
    %4292 = vmatpush1.xpose.msra.mxu0 0.0
    %4293 = vmatprep.subr.mxu0 0.0
    %4294 = vmatpush1.xpose.msra.mxu0 0.0
    %4295 = vmatprep.subr.mxu0 0.0
    %4296 = vmatpush1.xpose.msra.mxu0 0.0
    %4297 = vmatprep.subr.mxu0 0.0
    %4298 = vmatpush1.xpose.msra.mxu0 0.0
    %4299 = vmatprep.subr.mxu0 0.0
    %4300 = vmatpush1.xpose.msra.mxu0 0.0
    %4301 = vmatprep.subr.mxu0 0.0
    %4302 = vmatpush1.xpose.msra.mxu0 0.0
    %4303 = vmatprep.subr.mxu0 0.0
    %4304 = vmatpush1.xpose.msra.mxu0 0.0
    %4305 = vmatprep.subr.mxu0 0.0
    %4306 = vmatpush1.xpose.msra.mxu0 0.0
    %4307 = vmatprep.subr.mxu0 0.0
    %4308 = vmatpush1.xpose.msra.mxu0 0.0
    %4309 = vmatprep.subr.mxu0 0.0
    %4310 = vmatpush1.xpose.msra.mxu0 0.0
    %4311 = vmatprep.subr.mxu0 0.0
    %4312 = vmatpush1.xpose.msra.mxu0 0.0
    %4313 = vmatprep.subr.mxu0 0.0
    %4314 = vmatpush1.xpose.msra.mxu0 0.0
    %4315 = vmatprep.subr.mxu0 0.0
    %4316 = vmatpush1.xpose.msra.mxu0 0.0
    %4317 = vmatprep.subr.mxu0 0.0
    %4318 = vmatpush1.xpose.msra.mxu0 0.0
    %4319 = vmatprep.subr.mxu0 0.0
    %4320 = vmatpush1.xpose.msra.mxu0 0.0
    %4321 = vmatprep.subr.mxu0 0.0
    %4322 = vmatpush1.xpose.msra.mxu0 0.0
    %4323 = vmatprep.subr.mxu0 0.0
    %4324 = vmatpush1.xpose.msra.mxu0 0.0
    %4325 = vmatprep.subr.mxu0 0.0
    %4326 = vmatpush1.xpose.msra.mxu0 0.0
    %4327 = vmatprep.subr.mxu0 0.0
    %4328 = vmatpush1.xpose.msra.mxu0 0.0
    %4329 = vmatprep.mubr.f32.mxu0 0.0
    %4330 = vmatmul.mubr.f32.gmra.mrb[0].mxu0 %v4233
    %v4331 = vpop.f32.mrb[0].mxu0
    %v4332 = vadd.f32 %v2571, %v4331
    %v4333 = vpop.f32.mrb[0].mxu0
    %4334 = vmatprep.mubr.f32.mxu0 0.0
    %4335 = vmatmul.mubr.f32.gmra.mrb[0].mxu0 %v4235
    %v4336 = vpop.f32.mrb[0].mxu0
    %v4337 = vadd.f32 %v2572, %v4336
    %v4338 = vpop.f32.mrb[0].mxu0
    %4339 = vmatprep.mubr.f32.mxu0 0.0
    %4340 = vmatmul.mubr.f32.gmra.mrb[0].mxu0 %v4237
    %v4341 = vpop.f32.mrb[0].mxu0
    %v4342 = vadd.f32 %v2573, %v4341
    %v4343 = vpop.f32.mrb[0].mxu0
    %4344 = vmatprep.mubr.f32.mxu0 0.0
    %4345 = vmatmul.mubr.f32.gmra.mrb[0].mxu0 %v4239
    %v4346 = vpop.f32.mrb[0].mxu0
    %v4347 = vadd.f32 %v2574, %v4346
    %v4348 = vpop.f32.mrb[0].mxu0
    %4349 = vmatprep.mubr.f32.mxu0 0.0
    %4350 = vmatmul.mubr.f32.gmra.mrb[0].mxu0 %v4241
    %v4351 = vpop.f32.mrb[0].mxu0
    %v4352 = vadd.f32 %v2575, %v4351
    %v4353 = vpop.f32.mrb[0].mxu0
    %4354 = vmatprep.mubr.f32.mxu0 0.0
    %4355 = vmatmul.mubr.f32.gmra.mrb[0].mxu0 %v4243
    %v4356 = vpop.f32.mrb[0].mxu0
    %v4357 = vadd.f32 %v2576, %v4356
    %v4358 = vpop.f32.mrb[0].mxu0
    %4359 = vmatprep.mubr.f32.mxu0 0.0
    %4360 = vmatmul.mubr.f32.gmra.mrb[0].mxu0 %v4245
    %v4361 = vpop.f32.mrb[0].mxu0
    %v4362 = vadd.f32 %v2577, %v4361
    %v4363 = vpop.f32.mrb[0].mxu0
    %4364 = vmatprep.mubr.f32.mxu0 0.0
    %4365 = vmatmul.mubr.f32.gmra.mrb[0].mxu0 %v4247
    %v4366 = vpop.f32.mrb[0].mxu0
    %v4367 = vadd.f32 %v2578, %v4366
    %v4368 = vpop.f32.mrb[0].mxu0
    %4369 = vdwg.mxu0
    %v4370 = vsel %vm413, %v4332, -inf
    %4371 = vmax.xlane.f32.xlu0 %v4370
    %v4372 = vpop.xlane.xlu0 %4371
    %v4373 = vsel %vm413, %v4337, -inf
    %4374 = vmax.xlane.f32.xlu0 %v4373
    %v4375 = vpop.xlane.xlu0 %4374
    %v4376 = vsel %vm413, %v4342, -inf
    %4377 = vmax.xlane.f32.xlu0 %v4376
    %v4378 = vpop.xlane.xlu0 %4377
    %v4379 = vsel %vm413, %v4347, -inf
    %4380 = vmax.xlane.f32.xlu0 %v4379
    %v4381 = vpop.xlane.xlu0 %4380
    %v4382 = vsel %vm413, %v4352, -inf
    %4383 = vmax.xlane.f32.xlu0 %v4382
    %v4384 = vpop.xlane.xlu0 %4383
    %v4385 = vsel %vm413, %v4357, -inf
    %4386 = vmax.xlane.f32.xlu0 %v4385
    %v4387 = vpop.xlane.xlu0 %4386
    %v4388 = vsel %vm413, %v4362, -inf
    %4389 = vmax.xlane.f32.xlu0 %v4388
    %v4390 = vpop.xlane.xlu0 %4389
    %v4391 = vsel %vm413, %v4367, -inf
    %4392 = vmax.xlane.f32.xlu0 %v4391
    %v4393 = vpop.xlane.xlu0 %4392
    %v4394 = vsub.f32 %v4332, %v4372
    %v4395 = vsub.f32 %v4337, %v4375
    %v4396 = vsub.f32 %v4342, %v4378
    %v4397 = vsub.f32 %v4347, %v4381
    %v4398 = vsub.f32 %v4352, %v4384
    %v4399 = vsub.f32 %v4357, %v4387
    %v4400 = vsub.f32 %v4362, %v4390
    %v4401 = vsub.f32 %v4367, %v4393
    %v4402 = vmul.f32 %v4394, 1.442695
    %v4403 = vpow.pop %v4402
    %v4404 = vmul.f32 %v4395, 1.442695
    %v4405 = vpow.pop %v4404
    %v4406 = vmul.f32 %v4396, 1.442695
    %v4407 = vpow.pop %v4406
    %v4408 = vmul.f32 %v4397, 1.442695
    %v4409 = vpow.pop %v4408
    %v4410 = vmul.f32 %v4398, 1.442695
    %v4411 = vpow.pop %v4410
    %v4412 = vmul.f32 %v4399, 1.442695
    %v4413 = vpow.pop %v4412
    %v4414 = vmul.f32 %v4400, 1.442695
    %v4415 = vpow.pop %v4414
    %v4416 = vmul.f32 %v4401, 1.442695
    %v4417 = vpow.pop %v4416
    %v4418 = vsel %vm413, %v4403, 0.0
    %4419 = vadd.xlane.f32.xlu0 %v4418
    %v4420 = vpop.xlane.xlu0 %4419
    %v4421 = vsel %vm413, %v4405, 0.0
    %4422 = vadd.xlane.f32.xlu0 %v4421
    %v4423 = vpop.xlane.xlu0 %4422
    %v4424 = vsel %vm413, %v4407, 0.0
    %4425 = vadd.xlane.f32.xlu0 %v4424
    %v4426 = vpop.xlane.xlu0 %4425
    %v4427 = vsel %vm413, %v4409, 0.0
    %4428 = vadd.xlane.f32.xlu0 %v4427
    %v4429 = vpop.xlane.xlu0 %4428
    %v4430 = vsel %vm413, %v4411, 0.0
    %4431 = vadd.xlane.f32.xlu0 %v4430
    %v4432 = vpop.xlane.xlu0 %4431
    %v4433 = vsel %vm413, %v4413, 0.0
    %4434 = vadd.xlane.f32.xlu0 %v4433
    %v4435 = vpop.xlane.xlu0 %4434
    %v4436 = vsel %vm413, %v4415, 0.0
    %4437 = vadd.xlane.f32.xlu0 %v4436
    %v4438 = vpop.xlane.xlu0 %4437
    %v4439 = vsel %vm413, %v4417, 0.0
    %4440 = vadd.xlane.f32.xlu0 %v4439
    %v4441 = vpop.xlane.xlu0 %4440
    %v4442 = vrcp.pop %v4420
    %v4443 = vrcp.pop %v4423
    %v4444 = vrcp.pop %v4426
    %v4445 = vrcp.pop %v4429
    %v4446 = vrcp.pop %v4432
    %v4447 = vrcp.pop %v4435
    %v4448 = vrcp.pop %v4438
    %v4449 = vrcp.pop %v4441
    %v4450 = vmul.f32 %v4403, %v4442
    %v4451 = vmul.f32 %v4405, %v4443
    %v4452 = vmul.f32 %v4407, %v4444
    %v4453 = vmul.f32 %v4409, %v4445
    %v4454 = vmul.f32 %v4411, %v4446
    %v4455 = vmul.f32 %v4413, %v4447
    %v4456 = vmul.f32 %v4415, %v4448
    %v4457 = vmul.f32 %v4417, %v4449
    %4458 = vrot.lane.b32.xlu0 %v2533, 40
    %v4459 = vpop.permute.xlu0 %4458
    %4460 = vrot.lane.b32.xlu0 %v2538, 40
    %v4461 = vpop.permute.xlu0 %4460
    %4462 = vrot.lane.b32.xlu0 %v2543, 40
    %v4463 = vpop.permute.xlu0 %4462
    %4464 = vrot.lane.b32.xlu0 %v2548, 40
    %v4465 = vpop.permute.xlu0 %4464
    %4466 = vrot.lane.b32.xlu0 %v2553, 40
    %v4467 = vpop.permute.xlu0 %4466
    %4468 = vrot.lane.b32.xlu0 %v2558, 40
    %v4469 = vpop.permute.xlu0 %4468
    %4470 = vrot.lane.b32.xlu0 %v2563, 40
    %v4471 = vpop.permute.xlu0 %4470
    %4472 = vrot.lane.b32.xlu0 %v2568, 40
    %v4473 = vpop.permute.xlu0 %4472
    %v4483 = vsel %vm413, %v4450, 0
    %v4486 = vsel %vm413, %v4451, 0
    %v4489 = vsel %vm413, %v4452, 0
    %v4492 = vsel %vm413, %v4453, 0
    %v4495 = vsel %vm413, %v4454, 0
    %v4498 = vsel %vm413, %v4455, 0
    %v4501 = vsel %vm413, %v4456, 0
    %v4504 = vsel %vm413, %v4457, 0
    %4506 = vmatprep.subr.mxu0 0.0
    %4507 = vmatpush1.msra.mxu0 %v4459
    %4508 = vmatprep.subr.mxu0 0.0
    %4509 = vmatpush1.msra.mxu0 %v4461
    %4510 = vmatprep.subr.mxu0 0.0
    %4511 = vmatpush1.msra.mxu0 %v4463
    %4512 = vmatprep.subr.mxu0 0.0
    %4513 = vmatpush1.msra.mxu0 %v4465
    %4514 = vmatprep.subr.mxu0 0.0
    %4515 = vmatpush1.msra.mxu0 %v4467
    %4516 = vmatprep.subr.mxu0 0.0
    %4517 = vmatpush1.msra.mxu0 %v4469
    %4518 = vmatprep.subr.mxu0 0.0
    %4519 = vmatpush1.msra.mxu0 %v4471
    %4520 = vmatprep.subr.mxu0 0.0
    %4521 = vmatpush1.msra.mxu0 %v4473
    %4522 = vmatprep.subr.mxu0 0.0
    %4523 = vmatpush1.msra.mxu0 0.0
    %4524 = vmatprep.subr.mxu0 0.0
    %4525 = vmatpush1.msra.mxu0 0.0
    %4526 = vmatprep.subr.mxu0 0.0
    %4527 = vmatpush1.msra.mxu0 0.0
    %4528 = vmatprep.subr.mxu0 0.0
    %4529 = vmatpush1.msra.mxu0 0.0
    %4530 = vmatprep.subr.mxu0 0.0
    %4531 = vmatpush1.msra.mxu0 0.0
    %4532 = vmatprep.subr.mxu0 0.0
    %4533 = vmatpush1.msra.mxu0 0.0
    %4534 = vmatprep.subr.mxu0 0.0
    %4535 = vmatpush1.msra.mxu0 0.0
    %4536 = vmatprep.subr.mxu0 0.0
    %4537 = vmatpush1.msra.mxu0 0.0
    %4538 = vmatprep.subr.mxu0 0.0
    %4539 = vmatpush1.msra.mxu0 0.0
    %4540 = vmatprep.subr.mxu0 0.0
    %4541 = vmatpush1.msra.mxu0 0.0
    %4542 = vmatprep.subr.mxu0 0.0
    %4543 = vmatpush1.msra.mxu0 0.0
    %4544 = vmatprep.subr.mxu0 0.0
    %4545 = vmatpush1.msra.mxu0 0.0
    %4546 = vmatprep.subr.mxu0 0.0
    %4547 = vmatpush1.msra.mxu0 0.0
    %4548 = vmatprep.subr.mxu0 0.0
    %4549 = vmatpush1.msra.mxu0 0.0
    %4550 = vmatprep.subr.mxu0 0.0
    %4551 = vmatpush1.msra.mxu0 0.0
    %4552 = vmatprep.subr.mxu0 0.0
    %4553 = vmatpush1.msra.mxu0 0.0
    %4554 = vmatprep.subr.mxu0 0.0
    %4555 = vmatpush1.msra.mxu0 0.0
    %4556 = vmatprep.subr.mxu0 0.0
    %4557 = vmatpush1.msra.mxu0 0.0
    %4558 = vmatprep.subr.mxu0 0.0
    %4559 = vmatpush1.msra.mxu0 0.0
    %4560 = vmatprep.subr.mxu0 0.0
    %4561 = vmatpush1.msra.mxu0 0.0
    %4562 = vmatprep.subr.mxu0 0.0
    %4563 = vmatpush1.msra.mxu0 0.0
    %4564 = vmatprep.subr.mxu0 0.0
    %4565 = vmatpush1.msra.mxu0 0.0
    %4566 = vmatprep.subr.mxu0 0.0
    %4567 = vmatpush1.msra.mxu0 0.0
    %4568 = vmatprep.subr.mxu0 0.0
    %4569 = vmatpush1.msra.mxu0 0.0
    %4570 = vmatprep.mubr.f32.mxu0 0.0
    %4571 = vmatmul.mubr.f32.gmra.mrb[0].mxu0 %v4483
    %v4572 = vpop.f32.mrb[0].mxu0
    %v4573 = vadd.f32 0.0, %v4572
    %v4574 = vpop.f32.mrb[0].mxu0
    %4575 = vmatprep.mubr.f32.mxu0 0.0
    %4576 = vmatmul.mubr.f32.gmra.mrb[0].mxu0 %v4486
    %v4577 = vpop.f32.mrb[0].mxu0
    %v4578 = vadd.f32 0.0, %v4577
    %v4579 = vpop.f32.mrb[0].mxu0
    %4580 = vmatprep.mubr.f32.mxu0 0.0
    %4581 = vmatmul.mubr.f32.gmra.mrb[0].mxu0 %v4489
    %v4582 = vpop.f32.mrb[0].mxu0
    %v4583 = vadd.f32 0.0, %v4582
    %v4584 = vpop.f32.mrb[0].mxu0
    %4585 = vmatprep.mubr.f32.mxu0 0.0
    %4586 = vmatmul.mubr.f32.gmra.mrb[0].mxu0 %v4492
    %v4587 = vpop.f32.mrb[0].mxu0
    %v4588 = vadd.f32 0.0, %v4587
    %v4589 = vpop.f32.mrb[0].mxu0
    %4590 = vmatprep.mubr.f32.mxu0 0.0
    %4591 = vmatmul.mubr.f32.gmra.mrb[0].mxu0 %v4495
    %v4592 = vpop.f32.mrb[0].mxu0
    %v4593 = vadd.f32 0.0, %v4592
    %v4594 = vpop.f32.mrb[0].mxu0
    %4595 = vmatprep.mubr.f32.mxu0 0.0
    %4596 = vmatmul.mubr.f32.gmra.mrb[0].mxu0 %v4498
    %v4597 = vpop.f32.mrb[0].mxu0
    %v4598 = vadd.f32 0.0, %v4597
    %v4599 = vpop.f32.mrb[0].mxu0
    %4600 = vmatprep.mubr.f32.mxu0 0.0
    %4601 = vmatmul.mubr.f32.gmra.mrb[0].mxu0 %v4501
    %v4602 = vpop.f32.mrb[0].mxu0
    %v4603 = vadd.f32 0.0, %v4602
    %v4604 = vpop.f32.mrb[0].mxu0
    %4605 = vmatprep.mubr.f32.mxu0 0.0
    %4606 = vmatmul.mubr.f32.gmra.mrb[0].mxu0 %v4504
    %v4607 = vpop.f32.mrb[0].mxu0
    %v4608 = vadd.f32 0.0, %v4607
    %v4609 = vpop.f32.mrb[0].mxu0
    %4610 = vdwg.mxu0
    %v4612 = vsel %vm275, %v4573, 0
    %v4615 = vsel %vm275, %v4578, 0
    %v4618 = vsel %vm275, %v4583, 0
    %v4621 = vsel %vm275, %v4588, 0
    %v4624 = vsel %vm275, %v4593, 0
    %v4627 = vsel %vm275, %v4598, 0
    %v4630 = vsel %vm275, %v4603, 0
    %v4633 = vsel %vm275, %v4608, 0
    %4635 = vmatprep.subr.mxu0 0.0
    %4636 = vmatpush1.msra.mxu0 %v2582
    %4637 = vmatprep.subr.mxu0 0.0
    %4638 = vmatpush1.msra.mxu0 0.0
    %4639 = vmatprep.subr.mxu0 0.0
    %4640 = vmatpush1.msra.mxu0 0.0
    %4641 = vmatprep.subr.mxu0 0.0
    %4642 = vmatpush1.msra.mxu0 0.0
    %4643 = vmatprep.subr.mxu0 0.0
    %4644 = vmatpush1.msra.mxu0 0.0
    %4645 = vmatprep.subr.mxu0 0.0
    %4646 = vmatpush1.msra.mxu0 0.0
    %4647 = vmatprep.subr.mxu0 0.0
    %4648 = vmatpush1.msra.mxu0 0.0
    %4649 = vmatprep.subr.mxu0 0.0
    %4650 = vmatpush1.msra.mxu0 0.0
    %4651 = vmatprep.subr.mxu0 0.0
    %4652 = vmatpush1.msra.mxu0 0.0
    %4653 = vmatprep.subr.mxu0 0.0
    %4654 = vmatpush1.msra.mxu0 0.0
    %4655 = vmatprep.subr.mxu0 0.0
    %4656 = vmatpush1.msra.mxu0 0.0
    %4657 = vmatprep.subr.mxu0 0.0
    %4658 = vmatpush1.msra.mxu0 0.0
    %4659 = vmatprep.subr.mxu0 0.0
    %4660 = vmatpush1.msra.mxu0 0.0
    %4661 = vmatprep.subr.mxu0 0.0
    %4662 = vmatpush1.msra.mxu0 0.0
    %4663 = vmatprep.subr.mxu0 0.0
    %4664 = vmatpush1.msra.mxu0 0.0
    %4665 = vmatprep.subr.mxu0 0.0
    %4666 = vmatpush1.msra.mxu0 0.0
    %4667 = vmatprep.subr.mxu0 0.0
    %4668 = vmatpush1.msra.mxu0 0.0
    %4669 = vmatprep.subr.mxu0 0.0
    %4670 = vmatpush1.msra.mxu0 0.0
    %4671 = vmatprep.subr.mxu0 0.0
    %4672 = vmatpush1.msra.mxu0 0.0
    %4673 = vmatprep.subr.mxu0 0.0
    %4674 = vmatpush1.msra.mxu0 0.0
    %4675 = vmatprep.subr.mxu0 0.0
    %4676 = vmatpush1.msra.mxu0 0.0
    %4677 = vmatprep.subr.mxu0 0.0
    %4678 = vmatpush1.msra.mxu0 0.0
    %4679 = vmatprep.subr.mxu0 0.0
    %4680 = vmatpush1.msra.mxu0 0.0
    %4681 = vmatprep.subr.mxu0 0.0
    %4682 = vmatpush1.msra.mxu0 0.0
    %4683 = vmatprep.subr.mxu0 0.0
    %4684 = vmatpush1.msra.mxu0 0.0
    %4685 = vmatprep.subr.mxu0 0.0
    %4686 = vmatpush1.msra.mxu0 0.0
    %4687 = vmatprep.subr.mxu0 0.0
    %4688 = vmatpush1.msra.mxu0 0.0
    %4689 = vmatprep.subr.mxu0 0.0
    %4690 = vmatpush1.msra.mxu0 0.0
    %4691 = vmatprep.subr.mxu0 0.0
    %4692 = vmatpush1.msra.mxu0 0.0
    %4693 = vmatprep.subr.mxu0 0.0
    %4694 = vmatpush1.msra.mxu0 0.0
    %4695 = vmatprep.subr.mxu0 0.0
    %4696 = vmatpush1.msra.mxu0 0.0
    %4697 = vmatprep.subr.mxu0 0.0
    %4698 = vmatpush1.msra.mxu0 0.0
    %4699 = vmatprep.mubr.f32.mxu0 0.0
    %4700 = vmatmul.mubr.f32.gmra.mrb[0].mxu0 %v4612
    %v4701 = vpop.f32.mrb[0].mxu0
    %v4702 = vadd.f32 0.0, %v4701
    %v4703 = vpop.f32.mrb[0].mxu0
    %4704 = vmatprep.mubr.f32.mxu0 0.0
    %4705 = vmatmul.mubr.f32.gmra.mrb[0].mxu0 %v4615
    %v4706 = vpop.f32.mrb[0].mxu0
    %v4707 = vadd.f32 0.0, %v4706
    %v4708 = vpop.f32.mrb[0].mxu0
    %4709 = vmatprep.mubr.f32.mxu0 0.0
    %4710 = vmatmul.mubr.f32.gmra.mrb[0].mxu0 %v4618
    %v4711 = vpop.f32.mrb[0].mxu0
    %v4712 = vadd.f32 0.0, %v4711
    %v4713 = vpop.f32.mrb[0].mxu0
    %4714 = vmatprep.mubr.f32.mxu0 0.0
    %4715 = vmatmul.mubr.f32.gmra.mrb[0].mxu0 %v4621
    %v4716 = vpop.f32.mrb[0].mxu0
    %v4717 = vadd.f32 0.0, %v4716
    %v4718 = vpop.f32.mrb[0].mxu0
    %4719 = vmatprep.mubr.f32.mxu0 0.0
    %4720 = vmatmul.mubr.f32.gmra.mrb[0].mxu0 %v4624
    %v4721 = vpop.f32.mrb[0].mxu0
    %v4722 = vadd.f32 0.0, %v4721
    %v4723 = vpop.f32.mrb[0].mxu0
    %4724 = vmatprep.mubr.f32.mxu0 0.0
    %4725 = vmatmul.mubr.f32.gmra.mrb[0].mxu0 %v4627
    %v4726 = vpop.f32.mrb[0].mxu0
    %v4727 = vadd.f32 0.0, %v4726
    %v4728 = vpop.f32.mrb[0].mxu0
    %4729 = vmatprep.mubr.f32.mxu0 0.0
    %4730 = vmatmul.mubr.f32.gmra.mrb[0].mxu0 %v4630
    %v4731 = vpop.f32.mrb[0].mxu0
    %v4732 = vadd.f32 0.0, %v4731
    %v4733 = vpop.f32.mrb[0].mxu0
    %4734 = vmatprep.mubr.f32.mxu0 0.0
    %4735 = vmatmul.mubr.f32.gmra.mrb[0].mxu0 %v4633
    %v4736 = vpop.f32.mrb[0].mxu0
    %v4737 = vadd.f32 0.0, %v4736
    %v4738 = vpop.f32.mrb[0].mxu0
    %4739 = vdwg.mxu0
    %v4740 = vadd.f32 %v4193, %v4702
    %v4741 = vadd.f32 %v4194, %v4707
    %v4742 = vadd.f32 %v4195, %v4712
    %v4743 = vadd.f32 %v4196, %v4717
    %v4744 = vadd.f32 %v4197, %v4722
    %v4745 = vadd.f32 %v4198, %v4727
    %v4746 = vadd.f32 %v4199, %v4732
    %v4747 = vadd.f32 %v4200, %v4737
    %v4749 = vlaneseq
    %v4750 = vshrl.u32 %v4749, 7
    %v4751 = vsub.s32 0, %v4750
    %v4752 = vrot.slane %v2583, %v4751
    %v4754 = vadd.f32 %v4740, %v4752
    %v4755 = vadd.f32 %v4741, %v4752
    %v4756 = vadd.f32 %v4742, %v4752
    %v4757 = vadd.f32 %v4743, %v4752
    %v4758 = vadd.f32 %v4744, %v4752
    %v4759 = vadd.f32 %v4745, %v4752
    %v4760 = vadd.f32 %v4746, %v4752
    %v4761 = vadd.f32 %v4747, %v4752
    %v4762 = vadd.f32 %v81, %v4754
    %v4763 = vadd.f32 %v82, %v4755
    %v4764 = vadd.f32 %v83, %v4756
    %v4765 = vadd.f32 %v84, %v4757
    %v4766 = vadd.f32 %v85, %v4758
    %v4767 = vadd.f32 %v86, %v4759
    %v4768 = vadd.f32 %v87, %v4760
    %v4769 = vadd.f32 %v88, %v4761
    %v4770 = vld [vmem:[%s23] sm:$0x1]
    %v4771 = vld [vmem:[%s24] sm:$0x1]
    %v4772 = vsel %vm108, %v4762, 0.0
    %4773 = vadd.xlane.f32.xlu0 %v4772
    %v4774 = vpop.xlane.xlu0 %4773
    %v4775 = vsel %vm108, %v4763, 0.0
    %4776 = vadd.xlane.f32.xlu0 %v4775
    %v4777 = vpop.xlane.xlu0 %4776
    %v4778 = vsel %vm108, %v4764, 0.0
    %4779 = vadd.xlane.f32.xlu0 %v4778
    %v4780 = vpop.xlane.xlu0 %4779
    %v4781 = vsel %vm108, %v4765, 0.0
    %4782 = vadd.xlane.f32.xlu0 %v4781
    %v4783 = vpop.xlane.xlu0 %4782
    %v4784 = vsel %vm108, %v4766, 0.0
    %4785 = vadd.xlane.f32.xlu0 %v4784
    %v4786 = vpop.xlane.xlu0 %4785
    %v4787 = vsel %vm108, %v4767, 0.0
    %4788 = vadd.xlane.f32.xlu0 %v4787
    %v4789 = vpop.xlane.xlu0 %4788
    %v4790 = vsel %vm108, %v4768, 0.0
    %4791 = vadd.xlane.f32.xlu0 %v4790
    %v4792 = vpop.xlane.xlu0 %4791
    %v4793 = vsel %vm108, %v4769, 0.0
    %4794 = vadd.xlane.f32.xlu0 %v4793
    %v4795 = vpop.xlane.xlu0 %4794
    %v4796 = vrcp.pop 32.0
    %v4797 = vmul.f32 %v4774, %v4796
    %v4798 = vmul.f32 %v4777, %v4796
    %v4799 = vmul.f32 %v4780, %v4796
    %v4800 = vmul.f32 %v4783, %v4796
    %v4801 = vmul.f32 %v4786, %v4796
    %v4802 = vmul.f32 %v4789, %v4796
    %v4803 = vmul.f32 %v4792, %v4796
    %v4804 = vmul.f32 %v4795, %v4796
    %v4805 = vsub.f32 %v4762, %v4797
    %v4806 = vsub.f32 %v4763, %v4798
    %v4807 = vsub.f32 %v4764, %v4799
    %v4808 = vsub.f32 %v4765, %v4800
    %v4809 = vsub.f32 %v4766, %v4801
    %v4810 = vsub.f32 %v4767, %v4802
    %v4811 = vsub.f32 %v4768, %v4803
    %v4812 = vsub.f32 %v4769, %v4804
    %v4813 = vmul.f32 %v4805, %v4805
    %v4814 = vmul.f32 %v4806, %v4806
    %v4815 = vmul.f32 %v4807, %v4807
    %v4816 = vmul.f32 %v4808, %v4808
    %v4817 = vmul.f32 %v4809, %v4809
    %v4818 = vmul.f32 %v4810, %v4810
    %v4819 = vmul.f32 %v4811, %v4811
    %v4820 = vmul.f32 %v4812, %v4812
    %v4821 = vsel %vm108, %v4813, 0.0
    %4822 = vadd.xlane.f32.xlu0 %v4821
    %v4823 = vpop.xlane.xlu0 %4822
    %v4824 = vsel %vm108, %v4814, 0.0
    %4825 = vadd.xlane.f32.xlu0 %v4824
    %v4826 = vpop.xlane.xlu0 %4825
    %v4827 = vsel %vm108, %v4815, 0.0
    %4828 = vadd.xlane.f32.xlu0 %v4827
    %v4829 = vpop.xlane.xlu0 %4828
    %v4830 = vsel %vm108, %v4816, 0.0
    %4831 = vadd.xlane.f32.xlu0 %v4830
    %v4832 = vpop.xlane.xlu0 %4831
    %v4833 = vsel %vm108, %v4817, 0.0
    %4834 = vadd.xlane.f32.xlu0 %v4833
    %v4835 = vpop.xlane.xlu0 %4834
    %v4836 = vsel %vm108, %v4818, 0.0
    %4837 = vadd.xlane.f32.xlu0 %v4836
    %v4838 = vpop.xlane.xlu0 %4837
    %v4839 = vsel %vm108, %v4819, 0.0
    %4840 = vadd.xlane.f32.xlu0 %v4839
    %v4841 = vpop.xlane.xlu0 %4840
    %v4842 = vsel %vm108, %v4820, 0.0
    %4843 = vadd.xlane.f32.xlu0 %v4842
    %v4844 = vpop.xlane.xlu0 %4843
    %v4845 = vmul.f32 %v4823, %v4796
    %v4846 = vmul.f32 %v4826, %v4796
    %v4847 = vmul.f32 %v4829, %v4796
    %v4848 = vmul.f32 %v4832, %v4796
    %v4849 = vmul.f32 %v4835, %v4796
    %v4850 = vmul.f32 %v4838, %v4796
    %v4851 = vmul.f32 %v4841, %v4796
    %v4852 = vmul.f32 %v4844, %v4796
    %v4853 = vadd.f32 %v4845, 1e-05
    %v4854 = vadd.f32 %v4846, 1e-05
    %v4855 = vadd.f32 %v4847, 1e-05
    %v4856 = vadd.f32 %v4848, 1e-05
    %v4857 = vadd.f32 %v4849, 1e-05
    %v4858 = vadd.f32 %v4850, 1e-05
    %v4859 = vadd.f32 %v4851, 1e-05
    %v4860 = vadd.f32 %v4852, 1e-05
    %v4861 = vrsqrt.pop %v4853
    %v4862 = vrsqrt.pop %v4854
    %v4863 = vrsqrt.pop %v4855
    %v4864 = vrsqrt.pop %v4856
    %v4865 = vrsqrt.pop %v4857
    %v4866 = vrsqrt.pop %v4858
    %v4867 = vrsqrt.pop %v4859
    %v4868 = vrsqrt.pop %v4860
    %v4869 = vmul.f32 %v4805, %v4861
    %v4870 = vmul.f32 %v4806, %v4862
    %v4871 = vmul.f32 %v4807, %v4863
    %v4872 = vmul.f32 %v4808, %v4864
    %v4873 = vmul.f32 %v4809, %v4865
    %v4874 = vmul.f32 %v4810, %v4866
    %v4875 = vmul.f32 %v4811, %v4867
    %v4876 = vmul.f32 %v4812, %v4868
    %v4877 = vlaneseq
    %v4878 = vshrl.u32 %v4877, 7
    %v4879 = vsub.s32 0, %v4878
    %v4880 = vrot.slane %v4770, %v4879
    %v4881 = vmul.f32 %v4869, %v4880
    %v4882 = vmul.f32 %v4870, %v4880
    %v4883 = vmul.f32 %v4871, %v4880
    %v4884 = vmul.f32 %v4872, %v4880
    %v4885 = vmul.f32 %v4873, %v4880
    %v4886 = vmul.f32 %v4874, %v4880
    %v4887 = vmul.f32 %v4875, %v4880
    %v4888 = vmul.f32 %v4876, %v4880
    %v4889 = vlaneseq
    %v4890 = vshrl.u32 %v4889, 7
    %v4891 = vsub.s32 0, %v4890
    %v4892 = vrot.slane %v4771, %v4891
    %v4893 = vadd.f32 %v4881, %v4892
    %v4894 = vadd.f32 %v4882, %v4892
    %v4895 = vadd.f32 %v4883, %v4892
    %v4896 = vadd.f32 %v4884, %v4892
    %v4897 = vadd.f32 %v4885, %v4892
    %v4898 = vadd.f32 %v4886, %v4892
    %v4899 = vadd.f32 %v4887, %v4892
    %v4900 = vadd.f32 %v4888, %v4892
    %v4901 = vld [vmem:[%s13] sm:$0xff]
    %v4902 = vld [vmem:[%s13 + $0x8] sm:$0xff]
    %v4903 = vld [vmem:[%s13 + $0x10] sm:$0xff]
    %v4904 = vld [vmem:[%s13 + $0x18] sm:$0xff]
    %v4905 = vld [vmem:[%s14] sm:$0x1]
    %v4907 = vlaneseq
    %v4908 = vshrl.u32 %v4907, 7
    %v4909 = vsub.s32 0, %v4908
    %v4910 = vrot.slane %v4905, %v4909
    %v4913 = vsel %vm108, %v4893, 0
    %v4916 = vsel %vm108, %v4894, 0
    %v4919 = vsel %vm108, %v4895, 0
    %v4922 = vsel %vm108, %v4896, 0
    %v4925 = vsel %vm108, %v4897, 0
    %v4928 = vsel %vm108, %v4898, 0
    %v4931 = vsel %vm108, %v4899, 0
    %v4934 = vsel %vm108, %v4900, 0
    %4936 = vmatprep.subr.mxu0 0.0
    %4937 = vmatpush1.msra.mxu0 %v4901
    %4938 = vmatprep.subr.mxu0 0.0
    %4939 = vmatpush1.msra.mxu0 %v4902
    %4940 = vmatprep.subr.mxu0 0.0
    %4941 = vmatpush1.msra.mxu0 %v4903
    %4942 = vmatprep.subr.mxu0 0.0
    %4943 = vmatpush1.msra.mxu0 %v4904
    %4944 = vmatprep.subr.mxu0 0.0
    %4945 = vmatpush1.msra.mxu0 0.0
    %4946 = vmatprep.subr.mxu0 0.0
    %4947 = vmatpush1.msra.mxu0 0.0
    %4948 = vmatprep.subr.mxu0 0.0
    %4949 = vmatpush1.msra.mxu0 0.0
    %4950 = vmatprep.subr.mxu0 0.0
    %4951 = vmatpush1.msra.mxu0 0.0
    %4952 = vmatprep.subr.mxu0 0.0
    %4953 = vmatpush1.msra.mxu0 0.0
    %4954 = vmatprep.subr.mxu0 0.0
    %4955 = vmatpush1.msra.mxu0 0.0
    %4956 = vmatprep.subr.mxu0 0.0
    %4957 = vmatpush1.msra.mxu0 0.0
    %4958 = vmatprep.subr.mxu0 0.0
    %4959 = vmatpush1.msra.mxu0 0.0
    %4960 = vmatprep.subr.mxu0 0.0
    %4961 = vmatpush1.msra.mxu0 0.0
    %4962 = vmatprep.subr.mxu0 0.0
    %4963 = vmatpush1.msra.mxu0 0.0
    %4964 = vmatprep.subr.mxu0 0.0
    %4965 = vmatpush1.msra.mxu0 0.0
    %4966 = vmatprep.subr.mxu0 0.0
    %4967 = vmatpush1.msra.mxu0 0.0
    %4968 = vmatprep.subr.mxu0 0.0
    %4969 = vmatpush1.msra.mxu0 0.0
    %4970 = vmatprep.subr.mxu0 0.0
    %4971 = vmatpush1.msra.mxu0 0.0
    %4972 = vmatprep.subr.mxu0 0.0
    %4973 = vmatpush1.msra.mxu0 0.0
    %4974 = vmatprep.subr.mxu0 0.0
    %4975 = vmatpush1.msra.mxu0 0.0
    %4976 = vmatprep.subr.mxu0 0.0
    %4977 = vmatpush1.msra.mxu0 0.0
    %4978 = vmatprep.subr.mxu0 0.0
    %4979 = vmatpush1.msra.mxu0 0.0
    %4980 = vmatprep.subr.mxu0 0.0
    %4981 = vmatpush1.msra.mxu0 0.0
    %4982 = vmatprep.subr.mxu0 0.0
    %4983 = vmatpush1.msra.mxu0 0.0
    %4984 = vmatprep.subr.mxu0 0.0
    %4985 = vmatpush1.msra.mxu0 0.0
    %4986 = vmatprep.subr.mxu0 0.0
    %4987 = vmatpush1.msra.mxu0 0.0
    %4988 = vmatprep.subr.mxu0 0.0
    %4989 = vmatpush1.msra.mxu0 0.0
    %4990 = vmatprep.subr.mxu0 0.0
    %4991 = vmatpush1.msra.mxu0 0.0
    %4992 = vmatprep.subr.mxu0 0.0
    %4993 = vmatpush1.msra.mxu0 0.0
    %4994 = vmatprep.subr.mxu0 0.0
    %4995 = vmatpush1.msra.mxu0 0.0
    %4996 = vmatprep.subr.mxu0 0.0
    %4997 = vmatpush1.msra.mxu0 0.0
    %4998 = vmatprep.subr.mxu0 0.0
    %4999 = vmatpush1.msra.mxu0 0.0
    %5000 = vmatprep.mubr.f32.mxu0 0.0
    %5001 = vmatmul.mubr.f32.gmra.mrb[0].mxu0 %v4913
    %v5002 = vpop.f32.mrb[0].mxu0
    %v5003 = vadd.f32 %v4910, %v5002
    %v5004 = vpop.f32.mrb[0].mxu0
    %5005 = vmatprep.mubr.f32.mxu0 0.0
    %5006 = vmatmul.mubr.f32.gmra.mrb[0].mxu0 %v4916
    %v5007 = vpop.f32.mrb[0].mxu0
    %v5008 = vadd.f32 %v4910, %v5007
    %v5009 = vpop.f32.mrb[0].mxu0
    %5010 = vmatprep.mubr.f32.mxu0 0.0
    %5011 = vmatmul.mubr.f32.gmra.mrb[0].mxu0 %v4919
    %v5012 = vpop.f32.mrb[0].mxu0
    %v5013 = vadd.f32 %v4910, %v5012
    %v5014 = vpop.f32.mrb[0].mxu0
    %5015 = vmatprep.mubr.f32.mxu0 0.0
    %5016 = vmatmul.mubr.f32.gmra.mrb[0].mxu0 %v4922
    %v5017 = vpop.f32.mrb[0].mxu0
    %v5018 = vadd.f32 %v4910, %v5017
    %v5019 = vpop.f32.mrb[0].mxu0
    %5020 = vmatprep.mubr.f32.mxu0 0.0
    %5021 = vmatmul.mubr.f32.gmra.mrb[0].mxu0 %v4925
    %v5022 = vpop.f32.mrb[0].mxu0
    %v5023 = vadd.f32 %v4910, %v5022
    %v5024 = vpop.f32.mrb[0].mxu0
    %5025 = vmatprep.mubr.f32.mxu0 0.0
    %5026 = vmatmul.mubr.f32.gmra.mrb[0].mxu0 %v4928
    %v5027 = vpop.f32.mrb[0].mxu0
    %v5028 = vadd.f32 %v4910, %v5027
    %v5029 = vpop.f32.mrb[0].mxu0
    %5030 = vmatprep.mubr.f32.mxu0 0.0
    %5031 = vmatmul.mubr.f32.gmra.mrb[0].mxu0 %v4931
    %v5032 = vpop.f32.mrb[0].mxu0
    %v5033 = vadd.f32 %v4910, %v5032
    %v5034 = vpop.f32.mrb[0].mxu0
    %5035 = vmatprep.mubr.f32.mxu0 0.0
    %5036 = vmatmul.mubr.f32.gmra.mrb[0].mxu0 %v4934
    %v5037 = vpop.f32.mrb[0].mxu0
    %v5038 = vadd.f32 %v4910, %v5037
    %v5039 = vpop.f32.mrb[0].mxu0
    %5040 = vdwg.mxu0
    %v5041 = vld [vmem:[%s15] sm:$0xff]
    %v5042 = vld [vmem:[%s15 + $0x8] sm:$0xff]
    %v5043 = vld [vmem:[%s15 + $0x10] sm:$0xff]
    %v5044 = vld [vmem:[%s15 + $0x18] sm:$0xff]
    %v5045 = vld [vmem:[%s16] sm:$0x1]
    %v5047 = vlaneseq
    %v5048 = vshrl.u32 %v5047, 7
    %v5049 = vsub.s32 0, %v5048
    %v5050 = vrot.slane %v5045, %v5049
    %v5053 = vsel %vm108, %v89, 0
    %v5056 = vsel %vm108, %v90, 0
    %v5059 = vsel %vm108, %v91, 0
    %v5062 = vsel %vm108, %v92, 0
    %v5065 = vsel %vm108, %v93, 0
    %v5068 = vsel %vm108, %v94, 0
    %v5071 = vsel %vm108, %v95, 0
    %v5074 = vsel %vm108, %v96, 0
    %5076 = vmatprep.subr.mxu0 0.0
    %5077 = vmatpush1.msra.mxu0 %v5041
    %5078 = vmatprep.subr.mxu0 0.0
    %5079 = vmatpush1.msra.mxu0 %v5042
    %5080 = vmatprep.subr.mxu0 0.0
    %5081 = vmatpush1.msra.mxu0 %v5043
    %5082 = vmatprep.subr.mxu0 0.0
    %5083 = vmatpush1.msra.mxu0 %v5044
    %5084 = vmatprep.subr.mxu0 0.0
    %5085 = vmatpush1.msra.mxu0 0.0
    %5086 = vmatprep.subr.mxu0 0.0
    %5087 = vmatpush1.msra.mxu0 0.0
    %5088 = vmatprep.subr.mxu0 0.0
    %5089 = vmatpush1.msra.mxu0 0.0
    %5090 = vmatprep.subr.mxu0 0.0
    %5091 = vmatpush1.msra.mxu0 0.0
    %5092 = vmatprep.subr.mxu0 0.0
    %5093 = vmatpush1.msra.mxu0 0.0
    %5094 = vmatprep.subr.mxu0 0.0
    %5095 = vmatpush1.msra.mxu0 0.0
    %5096 = vmatprep.subr.mxu0 0.0
    %5097 = vmatpush1.msra.mxu0 0.0
    %5098 = vmatprep.subr.mxu0 0.0
    %5099 = vmatpush1.msra.mxu0 0.0
    %5100 = vmatprep.subr.mxu0 0.0
    %5101 = vmatpush1.msra.mxu0 0.0
    %5102 = vmatprep.subr.mxu0 0.0
    %5103 = vmatpush1.msra.mxu0 0.0
    %5104 = vmatprep.subr.mxu0 0.0
    %5105 = vmatpush1.msra.mxu0 0.0
    %5106 = vmatprep.subr.mxu0 0.0
    %5107 = vmatpush1.msra.mxu0 0.0
    %5108 = vmatprep.subr.mxu0 0.0
    %5109 = vmatpush1.msra.mxu0 0.0
    %5110 = vmatprep.subr.mxu0 0.0
    %5111 = vmatpush1.msra.mxu0 0.0
    %5112 = vmatprep.subr.mxu0 0.0
    %5113 = vmatpush1.msra.mxu0 0.0
    %5114 = vmatprep.subr.mxu0 0.0
    %5115 = vmatpush1.msra.mxu0 0.0
    %5116 = vmatprep.subr.mxu0 0.0
    %5117 = vmatpush1.msra.mxu0 0.0
    %5118 = vmatprep.subr.mxu0 0.0
    %5119 = vmatpush1.msra.mxu0 0.0
    %5120 = vmatprep.subr.mxu0 0.0
    %5121 = vmatpush1.msra.mxu0 0.0
    %5122 = vmatprep.subr.mxu0 0.0
    %5123 = vmatpush1.msra.mxu0 0.0
    %5124 = vmatprep.subr.mxu0 0.0
    %5125 = vmatpush1.msra.mxu0 0.0
    %5126 = vmatprep.subr.mxu0 0.0
    %5127 = vmatpush1.msra.mxu0 0.0
    %5128 = vmatprep.subr.mxu0 0.0
    %5129 = vmatpush1.msra.mxu0 0.0
    %5130 = vmatprep.subr.mxu0 0.0
    %5131 = vmatpush1.msra.mxu0 0.0
    %5132 = vmatprep.subr.mxu0 0.0
    %5133 = vmatpush1.msra.mxu0 0.0
    %5134 = vmatprep.subr.mxu0 0.0
    %5135 = vmatpush1.msra.mxu0 0.0
    %5136 = vmatprep.subr.mxu0 0.0
    %5137 = vmatpush1.msra.mxu0 0.0
    %5138 = vmatprep.subr.mxu0 0.0
    %5139 = vmatpush1.msra.mxu0 0.0
    %5140 = vmatprep.mubr.f32.mxu0 0.0
    %5141 = vmatmul.mubr.f32.gmra.mrb[0].mxu0 %v5053
    %v5142 = vpop.f32.mrb[0].mxu0
    %v5143 = vadd.f32 %v5050, %v5142
    %v5144 = vpop.f32.mrb[0].mxu0
    %5145 = vmatprep.mubr.f32.mxu0 0.0
    %5146 = vmatmul.mubr.f32.gmra.mrb[0].mxu0 %v5056
    %v5147 = vpop.f32.mrb[0].mxu0
    %v5148 = vadd.f32 %v5050, %v5147
    %v5149 = vpop.f32.mrb[0].mxu0
    %5150 = vmatprep.mubr.f32.mxu0 0.0
    %5151 = vmatmul.mubr.f32.gmra.mrb[0].mxu0 %v5059
    %v5152 = vpop.f32.mrb[0].mxu0
    %v5153 = vadd.f32 %v5050, %v5152
    %v5154 = vpop.f32.mrb[0].mxu0
    %5155 = vmatprep.mubr.f32.mxu0 0.0
    %5156 = vmatmul.mubr.f32.gmra.mrb[0].mxu0 %v5062
    %v5157 = vpop.f32.mrb[0].mxu0
    %v5158 = vadd.f32 %v5050, %v5157
    %v5159 = vpop.f32.mrb[0].mxu0
    %5160 = vmatprep.mubr.f32.mxu0 0.0
    %5161 = vmatmul.mubr.f32.gmra.mrb[0].mxu0 %v5065
    %v5162 = vpop.f32.mrb[0].mxu0
    %v5163 = vadd.f32 %v5050, %v5162
    %v5164 = vpop.f32.mrb[0].mxu0
    %5165 = vmatprep.mubr.f32.mxu0 0.0
    %5166 = vmatmul.mubr.f32.gmra.mrb[0].mxu0 %v5068
    %v5167 = vpop.f32.mrb[0].mxu0
    %v5168 = vadd.f32 %v5050, %v5167
    %v5169 = vpop.f32.mrb[0].mxu0
    %5170 = vmatprep.mubr.f32.mxu0 0.0
    %5171 = vmatmul.mubr.f32.gmra.mrb[0].mxu0 %v5071
    %v5172 = vpop.f32.mrb[0].mxu0
    %v5173 = vadd.f32 %v5050, %v5172
    %v5174 = vpop.f32.mrb[0].mxu0
    %5175 = vmatprep.mubr.f32.mxu0 0.0
    %5176 = vmatmul.mubr.f32.gmra.mrb[0].mxu0 %v5074
    %v5177 = vpop.f32.mrb[0].mxu0
    %v5178 = vadd.f32 %v5050, %v5177
    %v5179 = vpop.f32.mrb[0].mxu0
    %5180 = vdwg.mxu0
    %v5181 = vld [vmem:[%s4] sm:$0xff]
    %v5182 = vld [vmem:[%s4 + $0x8] sm:$0xff]
    %v5183 = vld [vmem:[%s4 + $0x10] sm:$0xff]
    %v5184 = vld [vmem:[%s4 + $0x18] sm:$0xff]
    %v5185 = vld [vmem:[%s4 + $0x20] sm:$0xff]
    %v5186 = vld [vmem:[%s4 + $0x28] sm:$0xff]
    %v5187 = vld [vmem:[%s4 + $0x30] sm:$0xff]
    %v5188 = vld [vmem:[%s4 + $0x38] sm:$0xff]
    %v5189 = vld [vmem:[%s17] sm:$0xff]
    %v5190 = vld [vmem:[%s17 + $0x8] sm:$0xff]
    %v5191 = vld [vmem:[%s17 + $0x10] sm:$0xff]
    %v5192 = vld [vmem:[%s17 + $0x18] sm:$0xff]
    %v5193 = vld [vmem:[%s18] sm:$0x1]
    %v5195 = vsel %vm275, %v5003, 0
    %v5198 = vsel %vm275, %v5008, 0
    %v5201 = vsel %vm275, %v5013, 0
    %v5204 = vsel %vm275, %v5018, 0
    %v5207 = vsel %vm275, %v5023, 0
    %v5210 = vsel %vm275, %v5028, 0
    %v5213 = vsel %vm275, %v5033, 0
    %v5216 = vsel %vm275, %v5038, 0
    %v5219 = vsel %vm275, %v5143, 0
    %v5222 = vsel %vm275, %v5148, 0
    %v5225 = vsel %vm275, %v5153, 0
    %v5228 = vsel %vm275, %v5158, 0
    %v5231 = vsel %vm275, %v5163, 0
    %v5234 = vsel %vm275, %v5168, 0
    %v5237 = vsel %vm275, %v5173, 0
    %v5240 = vsel %vm275, %v5178, 0
    %5242 = vmatprep.subr.mxu0 0.0
    %5243 = vmatpush1.xpose.msra.mxu0 %v5219
    %5244 = vmatprep.subr.mxu0 0.0
    %5245 = vmatpush1.xpose.msra.mxu0 %v5222
    %5246 = vmatprep.subr.mxu0 0.0
    %5247 = vmatpush1.xpose.msra.mxu0 %v5225
    %5248 = vmatprep.subr.mxu0 0.0
    %5249 = vmatpush1.xpose.msra.mxu0 %v5228
    %5250 = vmatprep.subr.mxu0 0.0
    %5251 = vmatpush1.xpose.msra.mxu0 %v5231
    %5252 = vmatprep.subr.mxu0 0.0
    %5253 = vmatpush1.xpose.msra.mxu0 %v5234
    %5254 = vmatprep.subr.mxu0 0.0
    %5255 = vmatpush1.xpose.msra.mxu0 %v5237
    %5256 = vmatprep.subr.mxu0 0.0
    %5257 = vmatpush1.xpose.msra.mxu0 %v5240
    %5258 = vmatprep.subr.mxu0 0.0
    %5259 = vmatpush1.xpose.msra.mxu0 0.0
    %5260 = vmatprep.subr.mxu0 0.0
    %5261 = vmatpush1.xpose.msra.mxu0 0.0
    %5262 = vmatprep.subr.mxu0 0.0
    %5263 = vmatpush1.xpose.msra.mxu0 0.0
    %5264 = vmatprep.subr.mxu0 0.0
    %5265 = vmatpush1.xpose.msra.mxu0 0.0
    %5266 = vmatprep.subr.mxu0 0.0
    %5267 = vmatpush1.xpose.msra.mxu0 0.0
    %5268 = vmatprep.subr.mxu0 0.0
    %5269 = vmatpush1.xpose.msra.mxu0 0.0
    %5270 = vmatprep.subr.mxu0 0.0
    %5271 = vmatpush1.xpose.msra.mxu0 0.0
    %5272 = vmatprep.subr.mxu0 0.0
    %5273 = vmatpush1.xpose.msra.mxu0 0.0
    %5274 = vmatprep.subr.mxu0 0.0
    %5275 = vmatpush1.xpose.msra.mxu0 0.0
    %5276 = vmatprep.subr.mxu0 0.0
    %5277 = vmatpush1.xpose.msra.mxu0 0.0
    %5278 = vmatprep.subr.mxu0 0.0
    %5279 = vmatpush1.xpose.msra.mxu0 0.0
    %5280 = vmatprep.subr.mxu0 0.0
    %5281 = vmatpush1.xpose.msra.mxu0 0.0
    %5282 = vmatprep.subr.mxu0 0.0
    %5283 = vmatpush1.xpose.msra.mxu0 0.0
    %5284 = vmatprep.subr.mxu0 0.0
    %5285 = vmatpush1.xpose.msra.mxu0 0.0
    %5286 = vmatprep.subr.mxu0 0.0
    %5287 = vmatpush1.xpose.msra.mxu0 0.0
    %5288 = vmatprep.subr.mxu0 0.0
    %5289 = vmatpush1.xpose.msra.mxu0 0.0
    %5290 = vmatprep.subr.mxu0 0.0
    %5291 = vmatpush1.xpose.msra.mxu0 0.0
    %5292 = vmatprep.subr.mxu0 0.0
    %5293 = vmatpush1.xpose.msra.mxu0 0.0
    %5294 = vmatprep.subr.mxu0 0.0
    %5295 = vmatpush1.xpose.msra.mxu0 0.0
    %5296 = vmatprep.subr.mxu0 0.0
    %5297 = vmatpush1.xpose.msra.mxu0 0.0
    %5298 = vmatprep.subr.mxu0 0.0
    %5299 = vmatpush1.xpose.msra.mxu0 0.0
    %5300 = vmatprep.subr.mxu0 0.0
    %5301 = vmatpush1.xpose.msra.mxu0 0.0
    %5302 = vmatprep.subr.mxu0 0.0
    %5303 = vmatpush1.xpose.msra.mxu0 0.0
    %5304 = vmatprep.subr.mxu0 0.0
    %5305 = vmatpush1.xpose.msra.mxu0 0.0
    %5306 = vmatprep.mubr.f32.mxu0 0.0
    %5307 = vmatmul.mubr.f32.gmra.mrb[0].mxu0 %v5195
    %v5308 = vpop.f32.mrb[0].mxu0
    %v5309 = vadd.f32 %v5181, %v5308
    %v5310 = vpop.f32.mrb[0].mxu0
    %5311 = vmatprep.mubr.f32.mxu0 0.0
    %5312 = vmatmul.mubr.f32.gmra.mrb[0].mxu0 %v5198
    %v5313 = vpop.f32.mrb[0].mxu0
    %v5314 = vadd.f32 %v5182, %v5313
    %v5315 = vpop.f32.mrb[0].mxu0
    %5316 = vmatprep.mubr.f32.mxu0 0.0
    %5317 = vmatmul.mubr.f32.gmra.mrb[0].mxu0 %v5201
    %v5318 = vpop.f32.mrb[0].mxu0
    %v5319 = vadd.f32 %v5183, %v5318
    %v5320 = vpop.f32.mrb[0].mxu0
    %5321 = vmatprep.mubr.f32.mxu0 0.0
    %5322 = vmatmul.mubr.f32.gmra.mrb[0].mxu0 %v5204
    %v5323 = vpop.f32.mrb[0].mxu0
    %v5324 = vadd.f32 %v5184, %v5323
    %v5325 = vpop.f32.mrb[0].mxu0
    %5326 = vmatprep.mubr.f32.mxu0 0.0
    %5327 = vmatmul.mubr.f32.gmra.mrb[0].mxu0 %v5207
    %v5328 = vpop.f32.mrb[0].mxu0
    %v5329 = vadd.f32 %v5185, %v5328
    %v5330 = vpop.f32.mrb[0].mxu0
    %5331 = vmatprep.mubr.f32.mxu0 0.0
    %5332 = vmatmul.mubr.f32.gmra.mrb[0].mxu0 %v5210
    %v5333 = vpop.f32.mrb[0].mxu0
    %v5334 = vadd.f32 %v5186, %v5333
    %v5335 = vpop.f32.mrb[0].mxu0
    %5336 = vmatprep.mubr.f32.mxu0 0.0
    %5337 = vmatmul.mubr.f32.gmra.mrb[0].mxu0 %v5213
    %v5338 = vpop.f32.mrb[0].mxu0
    %v5339 = vadd.f32 %v5187, %v5338
    %v5340 = vpop.f32.mrb[0].mxu0
    %5341 = vmatprep.mubr.f32.mxu0 0.0
    %5342 = vmatmul.mubr.f32.gmra.mrb[0].mxu0 %v5216
    %v5343 = vpop.f32.mrb[0].mxu0
    %v5344 = vadd.f32 %v5188, %v5343
    %v5345 = vpop.f32.mrb[0].mxu0
    %5346 = vdwg.mxu0
    %v5347 = vsel %vm413, %v5309, -inf
    %5348 = vmax.xlane.f32.xlu0 %v5347
    %v5349 = vpop.xlane.xlu0 %5348
    %v5350 = vsel %vm413, %v5314, -inf
    %5351 = vmax.xlane.f32.xlu0 %v5350
    %v5352 = vpop.xlane.xlu0 %5351
    %v5353 = vsel %vm413, %v5319, -inf
    %5354 = vmax.xlane.f32.xlu0 %v5353
    %v5355 = vpop.xlane.xlu0 %5354
    %v5356 = vsel %vm413, %v5324, -inf
    %5357 = vmax.xlane.f32.xlu0 %v5356
    %v5358 = vpop.xlane.xlu0 %5357
    %v5359 = vsel %vm413, %v5329, -inf
    %5360 = vmax.xlane.f32.xlu0 %v5359
    %v5361 = vpop.xlane.xlu0 %5360
    %v5362 = vsel %vm413, %v5334, -inf
    %5363 = vmax.xlane.f32.xlu0 %v5362
    %v5364 = vpop.xlane.xlu0 %5363
    %v5365 = vsel %vm413, %v5339, -inf
    %5366 = vmax.xlane.f32.xlu0 %v5365
    %v5367 = vpop.xlane.xlu0 %5366
    %v5368 = vsel %vm413, %v5344, -inf
    %5369 = vmax.xlane.f32.xlu0 %v5368
    %v5370 = vpop.xlane.xlu0 %5369
    %v5371 = vsub.f32 %v5309, %v5349
    %v5372 = vsub.f32 %v5314, %v5352
    %v5373 = vsub.f32 %v5319, %v5355
    %v5374 = vsub.f32 %v5324, %v5358
    %v5375 = vsub.f32 %v5329, %v5361
    %v5376 = vsub.f32 %v5334, %v5364
    %v5377 = vsub.f32 %v5339, %v5367
    %v5378 = vsub.f32 %v5344, %v5370
    %v5379 = vmul.f32 %v5371, 1.442695
    %v5380 = vpow.pop %v5379
    %v5381 = vmul.f32 %v5372, 1.442695
    %v5382 = vpow.pop %v5381
    %v5383 = vmul.f32 %v5373, 1.442695
    %v5384 = vpow.pop %v5383
    %v5385 = vmul.f32 %v5374, 1.442695
    %v5386 = vpow.pop %v5385
    %v5387 = vmul.f32 %v5375, 1.442695
    %v5388 = vpow.pop %v5387
    %v5389 = vmul.f32 %v5376, 1.442695
    %v5390 = vpow.pop %v5389
    %v5391 = vmul.f32 %v5377, 1.442695
    %v5392 = vpow.pop %v5391
    %v5393 = vmul.f32 %v5378, 1.442695
    %v5394 = vpow.pop %v5393
    %v5395 = vsel %vm413, %v5380, 0.0
    %5396 = vadd.xlane.f32.xlu0 %v5395
    %v5397 = vpop.xlane.xlu0 %5396
    %v5398 = vsel %vm413, %v5382, 0.0
    %5399 = vadd.xlane.f32.xlu0 %v5398
    %v5400 = vpop.xlane.xlu0 %5399
    %v5401 = vsel %vm413, %v5384, 0.0
    %5402 = vadd.xlane.f32.xlu0 %v5401
    %v5403 = vpop.xlane.xlu0 %5402
    %v5404 = vsel %vm413, %v5386, 0.0
    %5405 = vadd.xlane.f32.xlu0 %v5404
    %v5406 = vpop.xlane.xlu0 %5405
    %v5407 = vsel %vm413, %v5388, 0.0
    %5408 = vadd.xlane.f32.xlu0 %v5407
    %v5409 = vpop.xlane.xlu0 %5408
    %v5410 = vsel %vm413, %v5390, 0.0
    %5411 = vadd.xlane.f32.xlu0 %v5410
    %v5412 = vpop.xlane.xlu0 %5411
    %v5413 = vsel %vm413, %v5392, 0.0
    %5414 = vadd.xlane.f32.xlu0 %v5413
    %v5415 = vpop.xlane.xlu0 %5414
    %v5416 = vsel %vm413, %v5394, 0.0
    %5417 = vadd.xlane.f32.xlu0 %v5416
    %v5418 = vpop.xlane.xlu0 %5417
    %v5419 = vrcp.pop %v5397
    %v5420 = vrcp.pop %v5400
    %v5421 = vrcp.pop %v5403
    %v5422 = vrcp.pop %v5406
    %v5423 = vrcp.pop %v5409
    %v5424 = vrcp.pop %v5412
    %v5425 = vrcp.pop %v5415
    %v5426 = vrcp.pop %v5418
    %v5427 = vmul.f32 %v5380, %v5419
    %v5428 = vmul.f32 %v5382, %v5420
    %v5429 = vmul.f32 %v5384, %v5421
    %v5430 = vmul.f32 %v5386, %v5422
    %v5431 = vmul.f32 %v5388, %v5423
    %v5432 = vmul.f32 %v5390, %v5424
    %v5433 = vmul.f32 %v5392, %v5425
    %v5434 = vmul.f32 %v5394, %v5426
    %5435 = vrot.lane.b32.xlu0 %v5143, 96
    %v5436 = vpop.permute.xlu0 %5435
    %5437 = vrot.lane.b32.xlu0 %v5148, 96
    %v5438 = vpop.permute.xlu0 %5437
    %5439 = vrot.lane.b32.xlu0 %v5153, 96
    %v5440 = vpop.permute.xlu0 %5439
    %5441 = vrot.lane.b32.xlu0 %v5158, 96
    %v5442 = vpop.permute.xlu0 %5441
    %5443 = vrot.lane.b32.xlu0 %v5163, 96
    %v5444 = vpop.permute.xlu0 %5443
    %5445 = vrot.lane.b32.xlu0 %v5168, 96
    %v5446 = vpop.permute.xlu0 %5445
    %5447 = vrot.lane.b32.xlu0 %v5173, 96
    %v5448 = vpop.permute.xlu0 %5447
    %5449 = vrot.lane.b32.xlu0 %v5178, 96
    %v5450 = vpop.permute.xlu0 %5449
    %v5460 = vsel %vm413, %v5427, 0
    %v5463 = vsel %vm413, %v5428, 0
    %v5466 = vsel %vm413, %v5429, 0
    %v5469 = vsel %vm413, %v5430, 0
    %v5472 = vsel %vm413, %v5431, 0
    %v5475 = vsel %vm413, %v5432, 0
    %v5478 = vsel %vm413, %v5433, 0
    %v5481 = vsel %vm413, %v5434, 0
    %5483 = vmatprep.subr.mxu0 0.0
    %5484 = vmatpush1.msra.mxu0 %v5436
    %5485 = vmatprep.subr.mxu0 0.0
    %5486 = vmatpush1.msra.mxu0 %v5438
    %5487 = vmatprep.subr.mxu0 0.0
    %5488 = vmatpush1.msra.mxu0 %v5440
    %5489 = vmatprep.subr.mxu0 0.0
    %5490 = vmatpush1.msra.mxu0 %v5442
    %5491 = vmatprep.subr.mxu0 0.0
    %5492 = vmatpush1.msra.mxu0 %v5444
    %5493 = vmatprep.subr.mxu0 0.0
    %5494 = vmatpush1.msra.mxu0 %v5446
    %5495 = vmatprep.subr.mxu0 0.0
    %5496 = vmatpush1.msra.mxu0 %v5448
    %5497 = vmatprep.subr.mxu0 0.0
    %5498 = vmatpush1.msra.mxu0 %v5450
    %5499 = vmatprep.subr.mxu0 0.0
    %5500 = vmatpush1.msra.mxu0 0.0
    %5501 = vmatprep.subr.mxu0 0.0
    %5502 = vmatpush1.msra.mxu0 0.0
    %5503 = vmatprep.subr.mxu0 0.0
    %5504 = vmatpush1.msra.mxu0 0.0
    %5505 = vmatprep.subr.mxu0 0.0
    %5506 = vmatpush1.msra.mxu0 0.0
    %5507 = vmatprep.subr.mxu0 0.0
    %5508 = vmatpush1.msra.mxu0 0.0
    %5509 = vmatprep.subr.mxu0 0.0
    %5510 = vmatpush1.msra.mxu0 0.0
    %5511 = vmatprep.subr.mxu0 0.0
    %5512 = vmatpush1.msra.mxu0 0.0
    %5513 = vmatprep.subr.mxu0 0.0
    %5514 = vmatpush1.msra.mxu0 0.0
    %5515 = vmatprep.subr.mxu0 0.0
    %5516 = vmatpush1.msra.mxu0 0.0
    %5517 = vmatprep.subr.mxu0 0.0
    %5518 = vmatpush1.msra.mxu0 0.0
    %5519 = vmatprep.subr.mxu0 0.0
    %5520 = vmatpush1.msra.mxu0 0.0
    %5521 = vmatprep.subr.mxu0 0.0
    %5522 = vmatpush1.msra.mxu0 0.0
    %5523 = vmatprep.subr.mxu0 0.0
    %5524 = vmatpush1.msra.mxu0 0.0
    %5525 = vmatprep.subr.mxu0 0.0
    %5526 = vmatpush1.msra.mxu0 0.0
    %5527 = vmatprep.subr.mxu0 0.0
    %5528 = vmatpush1.msra.mxu0 0.0
    %5529 = vmatprep.subr.mxu0 0.0
    %5530 = vmatpush1.msra.mxu0 0.0
    %5531 = vmatprep.subr.mxu0 0.0
    %5532 = vmatpush1.msra.mxu0 0.0
    %5533 = vmatprep.subr.mxu0 0.0
    %5534 = vmatpush1.msra.mxu0 0.0
    %5535 = vmatprep.subr.mxu0 0.0
    %5536 = vmatpush1.msra.mxu0 0.0
    %5537 = vmatprep.subr.mxu0 0.0
    %5538 = vmatpush1.msra.mxu0 0.0
    %5539 = vmatprep.subr.mxu0 0.0
    %5540 = vmatpush1.msra.mxu0 0.0
    %5541 = vmatprep.subr.mxu0 0.0
    %5542 = vmatpush1.msra.mxu0 0.0
    %5543 = vmatprep.subr.mxu0 0.0
    %5544 = vmatpush1.msra.mxu0 0.0
    %5545 = vmatprep.subr.mxu0 0.0
    %5546 = vmatpush1.msra.mxu0 0.0
    %5547 = vmatprep.mubr.f32.mxu0 0.0
    %5548 = vmatmul.mubr.f32.gmra.mrb[0].mxu0 %v5460
    %v5549 = vpop.f32.mrb[0].mxu0
    %v5550 = vadd.f32 0.0, %v5549
    %v5551 = vpop.f32.mrb[0].mxu0
    %5552 = vmatprep.mubr.f32.mxu0 0.0
    %5553 = vmatmul.mubr.f32.gmra.mrb[0].mxu0 %v5463
    %v5554 = vpop.f32.mrb[0].mxu0
    %v5555 = vadd.f32 0.0, %v5554
    %v5556 = vpop.f32.mrb[0].mxu0
    %5557 = vmatprep.mubr.f32.mxu0 0.0
    %5558 = vmatmul.mubr.f32.gmra.mrb[0].mxu0 %v5466
    %v5559 = vpop.f32.mrb[0].mxu0
    %v5560 = vadd.f32 0.0, %v5559
    %v5561 = vpop.f32.mrb[0].mxu0
    %5562 = vmatprep.mubr.f32.mxu0 0.0
    %5563 = vmatmul.mubr.f32.gmra.mrb[0].mxu0 %v5469
    %v5564 = vpop.f32.mrb[0].mxu0
    %v5565 = vadd.f32 0.0, %v5564
    %v5566 = vpop.f32.mrb[0].mxu0
    %5567 = vmatprep.mubr.f32.mxu0 0.0
    %5568 = vmatmul.mubr.f32.gmra.mrb[0].mxu0 %v5472
    %v5569 = vpop.f32.mrb[0].mxu0
    %v5570 = vadd.f32 0.0, %v5569
    %v5571 = vpop.f32.mrb[0].mxu0
    %5572 = vmatprep.mubr.f32.mxu0 0.0
    %5573 = vmatmul.mubr.f32.gmra.mrb[0].mxu0 %v5475
    %v5574 = vpop.f32.mrb[0].mxu0
    %v5575 = vadd.f32 0.0, %v5574
    %v5576 = vpop.f32.mrb[0].mxu0
    %5577 = vmatprep.mubr.f32.mxu0 0.0
    %5578 = vmatmul.mubr.f32.gmra.mrb[0].mxu0 %v5478
    %v5579 = vpop.f32.mrb[0].mxu0
    %v5580 = vadd.f32 0.0, %v5579
    %v5581 = vpop.f32.mrb[0].mxu0
    %5582 = vmatprep.mubr.f32.mxu0 0.0
    %5583 = vmatmul.mubr.f32.gmra.mrb[0].mxu0 %v5481
    %v5584 = vpop.f32.mrb[0].mxu0
    %v5585 = vadd.f32 0.0, %v5584
    %v5586 = vpop.f32.mrb[0].mxu0
    %5587 = vdwg.mxu0
    %5588 = vrot.lane.b32.xlu0 %v5003, 120
    %v5589 = vpop.permute.xlu0 %5588
    %5590 = vrot.lane.b32.xlu0 %v5008, 120
    %v5591 = vpop.permute.xlu0 %5590
    %5592 = vrot.lane.b32.xlu0 %v5013, 120
    %v5593 = vpop.permute.xlu0 %5592
    %5594 = vrot.lane.b32.xlu0 %v5018, 120
    %v5595 = vpop.permute.xlu0 %5594
    %5596 = vrot.lane.b32.xlu0 %v5023, 120
    %v5597 = vpop.permute.xlu0 %5596
    %5598 = vrot.lane.b32.xlu0 %v5028, 120
    %v5599 = vpop.permute.xlu0 %5598
    %5600 = vrot.lane.b32.xlu0 %v5033, 120
    %v5601 = vpop.permute.xlu0 %5600
    %5602 = vrot.lane.b32.xlu0 %v5038, 120
    %v5603 = vpop.permute.xlu0 %5602
    %5604 = vrot.lane.b32.xlu0 %v5143, 120
    %v5605 = vpop.permute.xlu0 %5604
    %5606 = vrot.lane.b32.xlu0 %v5148, 120
    %v5607 = vpop.permute.xlu0 %5606
    %5608 = vrot.lane.b32.xlu0 %v5153, 120
    %v5609 = vpop.permute.xlu0 %5608
    %5610 = vrot.lane.b32.xlu0 %v5158, 120
    %v5611 = vpop.permute.xlu0 %5610
    %5612 = vrot.lane.b32.xlu0 %v5163, 120
    %v5613 = vpop.permute.xlu0 %5612
    %5614 = vrot.lane.b32.xlu0 %v5168, 120
    %v5615 = vpop.permute.xlu0 %5614
    %5616 = vrot.lane.b32.xlu0 %v5173, 120
    %v5617 = vpop.permute.xlu0 %5616
    %5618 = vrot.lane.b32.xlu0 %v5178, 120
    %v5619 = vpop.permute.xlu0 %5618
    %v5620 = vsel %vm275, %v5589, 0
    %v5622 = vsel %vm275, %v5591, 0
    %v5624 = vsel %vm275, %v5593, 0
    %v5626 = vsel %vm275, %v5595, 0
    %v5628 = vsel %vm275, %v5597, 0
    %v5630 = vsel %vm275, %v5599, 0
    %v5632 = vsel %vm275, %v5601, 0
    %v5634 = vsel %vm275, %v5603, 0
    %v5636 = vsel %vm275, %v5605, 0
    %v5638 = vsel %vm275, %v5607, 0
    %v5640 = vsel %vm275, %v5609, 0
    %v5642 = vsel %vm275, %v5611, 0
    %v5644 = vsel %vm275, %v5613, 0
    %v5646 = vsel %vm275, %v5615, 0
    %v5648 = vsel %vm275, %v5617, 0
    %v5650 = vsel %vm275, %v5619, 0
    %5652 = vmatprep.subr.mxu0 0.0
    %5653 = vmatpush1.xpose.msra.mxu0 %v5636
    %5654 = vmatprep.subr.mxu0 0.0
    %5655 = vmatpush1.xpose.msra.mxu0 %v5638
    %5656 = vmatprep.subr.mxu0 0.0
    %5657 = vmatpush1.xpose.msra.mxu0 %v5640
    %5658 = vmatprep.subr.mxu0 0.0
    %5659 = vmatpush1.xpose.msra.mxu0 %v5642
    %5660 = vmatprep.subr.mxu0 0.0
    %5661 = vmatpush1.xpose.msra.mxu0 %v5644
    %5662 = vmatprep.subr.mxu0 0.0
    %5663 = vmatpush1.xpose.msra.mxu0 %v5646
    %5664 = vmatprep.subr.mxu0 0.0
    %5665 = vmatpush1.xpose.msra.mxu0 %v5648
    %5666 = vmatprep.subr.mxu0 0.0
    %5667 = vmatpush1.xpose.msra.mxu0 %v5650
    %5668 = vmatprep.subr.mxu0 0.0
    %5669 = vmatpush1.xpose.msra.mxu0 0.0
    %5670 = vmatprep.subr.mxu0 0.0
    %5671 = vmatpush1.xpose.msra.mxu0 0.0
    %5672 = vmatprep.subr.mxu0 0.0
    %5673 = vmatpush1.xpose.msra.mxu0 0.0
    %5674 = vmatprep.subr.mxu0 0.0
    %5675 = vmatpush1.xpose.msra.mxu0 0.0
    %5676 = vmatprep.subr.mxu0 0.0
    %5677 = vmatpush1.xpose.msra.mxu0 0.0
    %5678 = vmatprep.subr.mxu0 0.0
    %5679 = vmatpush1.xpose.msra.mxu0 0.0
    %5680 = vmatprep.subr.mxu0 0.0
    %5681 = vmatpush1.xpose.msra.mxu0 0.0
    %5682 = vmatprep.subr.mxu0 0.0
    %5683 = vmatpush1.xpose.msra.mxu0 0.0
    %5684 = vmatprep.subr.mxu0 0.0
    %5685 = vmatpush1.xpose.msra.mxu0 0.0
    %5686 = vmatprep.subr.mxu0 0.0
    %5687 = vmatpush1.xpose.msra.mxu0 0.0
    %5688 = vmatprep.subr.mxu0 0.0
    %5689 = vmatpush1.xpose.msra.mxu0 0.0
    %5690 = vmatprep.subr.mxu0 0.0
    %5691 = vmatpush1.xpose.msra.mxu0 0.0
    %5692 = vmatprep.subr.mxu0 0.0
    %5693 = vmatpush1.xpose.msra.mxu0 0.0
    %5694 = vmatprep.subr.mxu0 0.0
    %5695 = vmatpush1.xpose.msra.mxu0 0.0
    %5696 = vmatprep.subr.mxu0 0.0
    %5697 = vmatpush1.xpose.msra.mxu0 0.0
    %5698 = vmatprep.subr.mxu0 0.0
    %5699 = vmatpush1.xpose.msra.mxu0 0.0
    %5700 = vmatprep.subr.mxu0 0.0
    %5701 = vmatpush1.xpose.msra.mxu0 0.0
    %5702 = vmatprep.subr.mxu0 0.0
    %5703 = vmatpush1.xpose.msra.mxu0 0.0
    %5704 = vmatprep.subr.mxu0 0.0
    %5705 = vmatpush1.xpose.msra.mxu0 0.0
    %5706 = vmatprep.subr.mxu0 0.0
    %5707 = vmatpush1.xpose.msra.mxu0 0.0
    %5708 = vmatprep.subr.mxu0 0.0
    %5709 = vmatpush1.xpose.msra.mxu0 0.0
    %5710 = vmatprep.subr.mxu0 0.0
    %5711 = vmatpush1.xpose.msra.mxu0 0.0
    %5712 = vmatprep.subr.mxu0 0.0
    %5713 = vmatpush1.xpose.msra.mxu0 0.0
    %5714 = vmatprep.subr.mxu0 0.0
    %5715 = vmatpush1.xpose.msra.mxu0 0.0
    %5716 = vmatprep.mubr.f32.mxu0 0.0
    %5717 = vmatmul.mubr.f32.gmra.mrb[0].mxu0 %v5620
    %v5718 = vpop.f32.mrb[0].mxu0
    %v5719 = vadd.f32 %v5181, %v5718
    %v5720 = vpop.f32.mrb[0].mxu0
    %5721 = vmatprep.mubr.f32.mxu0 0.0
    %5722 = vmatmul.mubr.f32.gmra.mrb[0].mxu0 %v5622
    %v5723 = vpop.f32.mrb[0].mxu0
    %v5724 = vadd.f32 %v5182, %v5723
    %v5725 = vpop.f32.mrb[0].mxu0
    %5726 = vmatprep.mubr.f32.mxu0 0.0
    %5727 = vmatmul.mubr.f32.gmra.mrb[0].mxu0 %v5624
    %v5728 = vpop.f32.mrb[0].mxu0
    %v5729 = vadd.f32 %v5183, %v5728
    %v5730 = vpop.f32.mrb[0].mxu0
    %5731 = vmatprep.mubr.f32.mxu0 0.0
    %5732 = vmatmul.mubr.f32.gmra.mrb[0].mxu0 %v5626
    %v5733 = vpop.f32.mrb[0].mxu0
    %v5734 = vadd.f32 %v5184, %v5733
    %v5735 = vpop.f32.mrb[0].mxu0
    %5736 = vmatprep.mubr.f32.mxu0 0.0
    %5737 = vmatmul.mubr.f32.gmra.mrb[0].mxu0 %v5628
    %v5738 = vpop.f32.mrb[0].mxu0
    %v5739 = vadd.f32 %v5185, %v5738
    %v5740 = vpop.f32.mrb[0].mxu0
    %5741 = vmatprep.mubr.f32.mxu0 0.0
    %5742 = vmatmul.mubr.f32.gmra.mrb[0].mxu0 %v5630
    %v5743 = vpop.f32.mrb[0].mxu0
    %v5744 = vadd.f32 %v5186, %v5743
    %v5745 = vpop.f32.mrb[0].mxu0
    %5746 = vmatprep.mubr.f32.mxu0 0.0
    %5747 = vmatmul.mubr.f32.gmra.mrb[0].mxu0 %v5632
    %v5748 = vpop.f32.mrb[0].mxu0
    %v5749 = vadd.f32 %v5187, %v5748
    %v5750 = vpop.f32.mrb[0].mxu0
    %5751 = vmatprep.mubr.f32.mxu0 0.0
    %5752 = vmatmul.mubr.f32.gmra.mrb[0].mxu0 %v5634
    %v5753 = vpop.f32.mrb[0].mxu0
    %v5754 = vadd.f32 %v5188, %v5753
    %v5755 = vpop.f32.mrb[0].mxu0
    %5756 = vdwg.mxu0
    %v5757 = vsel %vm413, %v5719, -inf
    %5758 = vmax.xlane.f32.xlu0 %v5757
    %v5759 = vpop.xlane.xlu0 %5758
    %v5760 = vsel %vm413, %v5724, -inf
    %5761 = vmax.xlane.f32.xlu0 %v5760
    %v5762 = vpop.xlane.xlu0 %5761
    %v5763 = vsel %vm413, %v5729, -inf
    %5764 = vmax.xlane.f32.xlu0 %v5763
    %v5765 = vpop.xlane.xlu0 %5764
    %v5766 = vsel %vm413, %v5734, -inf
    %5767 = vmax.xlane.f32.xlu0 %v5766
    %v5768 = vpop.xlane.xlu0 %5767
    %v5769 = vsel %vm413, %v5739, -inf
    %5770 = vmax.xlane.f32.xlu0 %v5769
    %v5771 = vpop.xlane.xlu0 %5770
    %v5772 = vsel %vm413, %v5744, -inf
    %5773 = vmax.xlane.f32.xlu0 %v5772
    %v5774 = vpop.xlane.xlu0 %5773
    %v5775 = vsel %vm413, %v5749, -inf
    %5776 = vmax.xlane.f32.xlu0 %v5775
    %v5777 = vpop.xlane.xlu0 %5776
    %v5778 = vsel %vm413, %v5754, -inf
    %5779 = vmax.xlane.f32.xlu0 %v5778
    %v5780 = vpop.xlane.xlu0 %5779
    %v5781 = vsub.f32 %v5719, %v5759
    %v5782 = vsub.f32 %v5724, %v5762
    %v5783 = vsub.f32 %v5729, %v5765
    %v5784 = vsub.f32 %v5734, %v5768
    %v5785 = vsub.f32 %v5739, %v5771
    %v5786 = vsub.f32 %v5744, %v5774
    %v5787 = vsub.f32 %v5749, %v5777
    %v5788 = vsub.f32 %v5754, %v5780
    %v5789 = vmul.f32 %v5781, 1.442695
    %v5790 = vpow.pop %v5789
    %v5791 = vmul.f32 %v5782, 1.442695
    %v5792 = vpow.pop %v5791
    %v5793 = vmul.f32 %v5783, 1.442695
    %v5794 = vpow.pop %v5793
    %v5795 = vmul.f32 %v5784, 1.442695
    %v5796 = vpow.pop %v5795
    %v5797 = vmul.f32 %v5785, 1.442695
    %v5798 = vpow.pop %v5797
    %v5799 = vmul.f32 %v5786, 1.442695
    %v5800 = vpow.pop %v5799
    %v5801 = vmul.f32 %v5787, 1.442695
    %v5802 = vpow.pop %v5801
    %v5803 = vmul.f32 %v5788, 1.442695
    %v5804 = vpow.pop %v5803
    %v5805 = vsel %vm413, %v5790, 0.0
    %5806 = vadd.xlane.f32.xlu0 %v5805
    %v5807 = vpop.xlane.xlu0 %5806
    %v5808 = vsel %vm413, %v5792, 0.0
    %5809 = vadd.xlane.f32.xlu0 %v5808
    %v5810 = vpop.xlane.xlu0 %5809
    %v5811 = vsel %vm413, %v5794, 0.0
    %5812 = vadd.xlane.f32.xlu0 %v5811
    %v5813 = vpop.xlane.xlu0 %5812
    %v5814 = vsel %vm413, %v5796, 0.0
    %5815 = vadd.xlane.f32.xlu0 %v5814
    %v5816 = vpop.xlane.xlu0 %5815
    %v5817 = vsel %vm413, %v5798, 0.0
    %5818 = vadd.xlane.f32.xlu0 %v5817
    %v5819 = vpop.xlane.xlu0 %5818
    %v5820 = vsel %vm413, %v5800, 0.0
    %5821 = vadd.xlane.f32.xlu0 %v5820
    %v5822 = vpop.xlane.xlu0 %5821
    %v5823 = vsel %vm413, %v5802, 0.0
    %5824 = vadd.xlane.f32.xlu0 %v5823
    %v5825 = vpop.xlane.xlu0 %5824
    %v5826 = vsel %vm413, %v5804, 0.0
    %5827 = vadd.xlane.f32.xlu0 %v5826
    %v5828 = vpop.xlane.xlu0 %5827
    %v5829 = vrcp.pop %v5807
    %v5830 = vrcp.pop %v5810
    %v5831 = vrcp.pop %v5813
    %v5832 = vrcp.pop %v5816
    %v5833 = vrcp.pop %v5819
    %v5834 = vrcp.pop %v5822
    %v5835 = vrcp.pop %v5825
    %v5836 = vrcp.pop %v5828
    %v5837 = vmul.f32 %v5790, %v5829
    %v5838 = vmul.f32 %v5792, %v5830
    %v5839 = vmul.f32 %v5794, %v5831
    %v5840 = vmul.f32 %v5796, %v5832
    %v5841 = vmul.f32 %v5798, %v5833
    %v5842 = vmul.f32 %v5800, %v5834
    %v5843 = vmul.f32 %v5802, %v5835
    %v5844 = vmul.f32 %v5804, %v5836
    %5845 = vrot.lane.b32.xlu0 %v5143, 88
    %v5846 = vpop.permute.xlu0 %5845
    %5847 = vrot.lane.b32.xlu0 %v5148, 88
    %v5848 = vpop.permute.xlu0 %5847
    %5849 = vrot.lane.b32.xlu0 %v5153, 88
    %v5850 = vpop.permute.xlu0 %5849
    %5851 = vrot.lane.b32.xlu0 %v5158, 88
    %v5852 = vpop.permute.xlu0 %5851
    %5853 = vrot.lane.b32.xlu0 %v5163, 88
    %v5854 = vpop.permute.xlu0 %5853
    %5855 = vrot.lane.b32.xlu0 %v5168, 88
    %v5856 = vpop.permute.xlu0 %5855
    %5857 = vrot.lane.b32.xlu0 %v5173, 88
    %v5858 = vpop.permute.xlu0 %5857
    %5859 = vrot.lane.b32.xlu0 %v5178, 88
    %v5860 = vpop.permute.xlu0 %5859
    %v5870 = vsel %vm413, %v5837, 0
    %v5873 = vsel %vm413, %v5838, 0
    %v5876 = vsel %vm413, %v5839, 0
    %v5879 = vsel %vm413, %v5840, 0
    %v5882 = vsel %vm413, %v5841, 0
    %v5885 = vsel %vm413, %v5842, 0
    %v5888 = vsel %vm413, %v5843, 0
    %v5891 = vsel %vm413, %v5844, 0
    %5893 = vmatprep.subr.mxu0 0.0
    %5894 = vmatpush1.msra.mxu0 %v5846
    %5895 = vmatprep.subr.mxu0 0.0
    %5896 = vmatpush1.msra.mxu0 %v5848
    %5897 = vmatprep.subr.mxu0 0.0
    %5898 = vmatpush1.msra.mxu0 %v5850
    %5899 = vmatprep.subr.mxu0 0.0
    %5900 = vmatpush1.msra.mxu0 %v5852
    %5901 = vmatprep.subr.mxu0 0.0
    %5902 = vmatpush1.msra.mxu0 %v5854
    %5903 = vmatprep.subr.mxu0 0.0
    %5904 = vmatpush1.msra.mxu0 %v5856
    %5905 = vmatprep.subr.mxu0 0.0
    %5906 = vmatpush1.msra.mxu0 %v5858
    %5907 = vmatprep.subr.mxu0 0.0
    %5908 = vmatpush1.msra.mxu0 %v5860
    %5909 = vmatprep.subr.mxu0 0.0
    %5910 = vmatpush1.msra.mxu0 0.0
    %5911 = vmatprep.subr.mxu0 0.0
    %5912 = vmatpush1.msra.mxu0 0.0
    %5913 = vmatprep.subr.mxu0 0.0
    %5914 = vmatpush1.msra.mxu0 0.0
    %5915 = vmatprep.subr.mxu0 0.0
    %5916 = vmatpush1.msra.mxu0 0.0
    %5917 = vmatprep.subr.mxu0 0.0
    %5918 = vmatpush1.msra.mxu0 0.0
    %5919 = vmatprep.subr.mxu0 0.0
    %5920 = vmatpush1.msra.mxu0 0.0
    %5921 = vmatprep.subr.mxu0 0.0
    %5922 = vmatpush1.msra.mxu0 0.0
    %5923 = vmatprep.subr.mxu0 0.0
    %5924 = vmatpush1.msra.mxu0 0.0
    %5925 = vmatprep.subr.mxu0 0.0
    %5926 = vmatpush1.msra.mxu0 0.0
    %5927 = vmatprep.subr.mxu0 0.0
    %5928 = vmatpush1.msra.mxu0 0.0
    %5929 = vmatprep.subr.mxu0 0.0
    %5930 = vmatpush1.msra.mxu0 0.0
    %5931 = vmatprep.subr.mxu0 0.0
    %5932 = vmatpush1.msra.mxu0 0.0
    %5933 = vmatprep.subr.mxu0 0.0
    %5934 = vmatpush1.msra.mxu0 0.0
    %5935 = vmatprep.subr.mxu0 0.0
    %5936 = vmatpush1.msra.mxu0 0.0
    %5937 = vmatprep.subr.mxu0 0.0
    %5938 = vmatpush1.msra.mxu0 0.0
    %5939 = vmatprep.subr.mxu0 0.0
    %5940 = vmatpush1.msra.mxu0 0.0
    %5941 = vmatprep.subr.mxu0 0.0
    %5942 = vmatpush1.msra.mxu0 0.0
    %5943 = vmatprep.subr.mxu0 0.0
    %5944 = vmatpush1.msra.mxu0 0.0
    %5945 = vmatprep.subr.mxu0 0.0
    %5946 = vmatpush1.msra.mxu0 0.0
    %5947 = vmatprep.subr.mxu0 0.0
    %5948 = vmatpush1.msra.mxu0 0.0
    %5949 = vmatprep.subr.mxu0 0.0
    %5950 = vmatpush1.msra.mxu0 0.0
    %5951 = vmatprep.subr.mxu0 0.0
    %5952 = vmatpush1.msra.mxu0 0.0
    %5953 = vmatprep.subr.mxu0 0.0
    %5954 = vmatpush1.msra.mxu0 0.0
    %5955 = vmatprep.subr.mxu0 0.0
    %5956 = vmatpush1.msra.mxu0 0.0
    %5957 = vmatprep.mubr.f32.mxu0 0.0
    %5958 = vmatmul.mubr.f32.gmra.mrb[0].mxu0 %v5870
    %v5959 = vpop.f32.mrb[0].mxu0
    %v5960 = vadd.f32 0.0, %v5959
    %v5961 = vpop.f32.mrb[0].mxu0
    %5962 = vmatprep.mubr.f32.mxu0 0.0
    %5963 = vmatmul.mubr.f32.gmra.mrb[0].mxu0 %v5873
    %v5964 = vpop.f32.mrb[0].mxu0
    %v5965 = vadd.f32 0.0, %v5964
    %v5966 = vpop.f32.mrb[0].mxu0
    %5967 = vmatprep.mubr.f32.mxu0 0.0
    %5968 = vmatmul.mubr.f32.gmra.mrb[0].mxu0 %v5876
    %v5969 = vpop.f32.mrb[0].mxu0
    %v5970 = vadd.f32 0.0, %v5969
    %v5971 = vpop.f32.mrb[0].mxu0
    %5972 = vmatprep.mubr.f32.mxu0 0.0
    %5973 = vmatmul.mubr.f32.gmra.mrb[0].mxu0 %v5879
    %v5974 = vpop.f32.mrb[0].mxu0
    %v5975 = vadd.f32 0.0, %v5974
    %v5976 = vpop.f32.mrb[0].mxu0
    %5977 = vmatprep.mubr.f32.mxu0 0.0
    %5978 = vmatmul.mubr.f32.gmra.mrb[0].mxu0 %v5882
    %v5979 = vpop.f32.mrb[0].mxu0
    %v5980 = vadd.f32 0.0, %v5979
    %v5981 = vpop.f32.mrb[0].mxu0
    %5982 = vmatprep.mubr.f32.mxu0 0.0
    %5983 = vmatmul.mubr.f32.gmra.mrb[0].mxu0 %v5885
    %v5984 = vpop.f32.mrb[0].mxu0
    %v5985 = vadd.f32 0.0, %v5984
    %v5986 = vpop.f32.mrb[0].mxu0
    %5987 = vmatprep.mubr.f32.mxu0 0.0
    %5988 = vmatmul.mubr.f32.gmra.mrb[0].mxu0 %v5888
    %v5989 = vpop.f32.mrb[0].mxu0
    %v5990 = vadd.f32 0.0, %v5989
    %v5991 = vpop.f32.mrb[0].mxu0
    %5992 = vmatprep.mubr.f32.mxu0 0.0
    %5993 = vmatmul.mubr.f32.gmra.mrb[0].mxu0 %v5891
    %v5994 = vpop.f32.mrb[0].mxu0
    %v5995 = vadd.f32 0.0, %v5994
    %v5996 = vpop.f32.mrb[0].mxu0
    %5997 = vdwg.mxu0
    %v5999 = vsel %vm275, %v5960, 0
    %v6002 = vsel %vm275, %v5965, 0
    %v6005 = vsel %vm275, %v5970, 0
    %v6008 = vsel %vm275, %v5975, 0
    %v6011 = vsel %vm275, %v5980, 0
    %v6014 = vsel %vm275, %v5985, 0
    %v6017 = vsel %vm275, %v5990, 0
    %v6020 = vsel %vm275, %v5995, 0
    %6022 = vmatprep.subr.mxu0 0.0
    %6023 = vmatpush1.msra.mxu0 %v5190
    %6024 = vmatprep.subr.mxu0 0.0
    %6025 = vmatpush1.msra.mxu0 0.0
    %6026 = vmatprep.subr.mxu0 0.0
    %6027 = vmatpush1.msra.mxu0 0.0
    %6028 = vmatprep.subr.mxu0 0.0
    %6029 = vmatpush1.msra.mxu0 0.0
    %6030 = vmatprep.subr.mxu0 0.0
    %6031 = vmatpush1.msra.mxu0 0.0
    %6032 = vmatprep.subr.mxu0 0.0
    %6033 = vmatpush1.msra.mxu0 0.0
    %6034 = vmatprep.subr.mxu0 0.0
    %6035 = vmatpush1.msra.mxu0 0.0
    %6036 = vmatprep.subr.mxu0 0.0
    %6037 = vmatpush1.msra.mxu0 0.0
    %6038 = vmatprep.subr.mxu0 0.0
    %6039 = vmatpush1.msra.mxu0 0.0
    %6040 = vmatprep.subr.mxu0 0.0
    %6041 = vmatpush1.msra.mxu0 0.0
    %6042 = vmatprep.subr.mxu0 0.0
    %6043 = vmatpush1.msra.mxu0 0.0
    %6044 = vmatprep.subr.mxu0 0.0
    %6045 = vmatpush1.msra.mxu0 0.0
    %6046 = vmatprep.subr.mxu0 0.0
    %6047 = vmatpush1.msra.mxu0 0.0
    %6048 = vmatprep.subr.mxu0 0.0
    %6049 = vmatpush1.msra.mxu0 0.0
    %6050 = vmatprep.subr.mxu0 0.0
    %6051 = vmatpush1.msra.mxu0 0.0
    %6052 = vmatprep.subr.mxu0 0.0
    %6053 = vmatpush1.msra.mxu0 0.0
    %6054 = vmatprep.subr.mxu0 0.0
    %6055 = vmatpush1.msra.mxu0 0.0
    %6056 = vmatprep.subr.mxu0 0.0
    %6057 = vmatpush1.msra.mxu0 0.0
    %6058 = vmatprep.subr.mxu0 0.0
    %6059 = vmatpush1.msra.mxu0 0.0
    %6060 = vmatprep.subr.mxu0 0.0
    %6061 = vmatpush1.msra.mxu0 0.0
    %6062 = vmatprep.subr.mxu0 0.0
    %6063 = vmatpush1.msra.mxu0 0.0
    %6064 = vmatprep.subr.mxu0 0.0
    %6065 = vmatpush1.msra.mxu0 0.0
    %6066 = vmatprep.subr.mxu0 0.0
    %6067 = vmatpush1.msra.mxu0 0.0
    %6068 = vmatprep.subr.mxu0 0.0
    %6069 = vmatpush1.msra.mxu0 0.0
    %6070 = vmatprep.subr.mxu0 0.0
    %6071 = vmatpush1.msra.mxu0 0.0
    %6072 = vmatprep.subr.mxu0 0.0
    %6073 = vmatpush1.msra.mxu0 0.0
    %6074 = vmatprep.subr.mxu0 0.0
    %6075 = vmatpush1.msra.mxu0 0.0
    %6076 = vmatprep.subr.mxu0 0.0
    %6077 = vmatpush1.msra.mxu0 0.0
    %6078 = vmatprep.subr.mxu0 0.0
    %6079 = vmatpush1.msra.mxu0 0.0
    %6080 = vmatprep.subr.mxu0 0.0
    %6081 = vmatpush1.msra.mxu0 0.0
    %6082 = vmatprep.subr.mxu0 0.0
    %6083 = vmatpush1.msra.mxu0 0.0
    %6084 = vmatprep.subr.mxu0 0.0
    %6085 = vmatpush1.msra.mxu0 0.0
    %6086 = vmatprep.mubr.f32.mxu0 0.0
    %6087 = vmatmul.mubr.f32.gmra.mrb[0].mxu0 %v5999
    %v6088 = vpop.f32.mrb[0].mxu0
    %v6089 = vadd.f32 0.0, %v6088
    %v6090 = vpop.f32.mrb[0].mxu0
    %6091 = vmatprep.mubr.f32.mxu0 0.0
    %6092 = vmatmul.mubr.f32.gmra.mrb[0].mxu0 %v6002
    %v6093 = vpop.f32.mrb[0].mxu0
    %v6094 = vadd.f32 0.0, %v6093
    %v6095 = vpop.f32.mrb[0].mxu0
    %6096 = vmatprep.mubr.f32.mxu0 0.0
    %6097 = vmatmul.mubr.f32.gmra.mrb[0].mxu0 %v6005
    %v6098 = vpop.f32.mrb[0].mxu0
    %v6099 = vadd.f32 0.0, %v6098
    %v6100 = vpop.f32.mrb[0].mxu0
    %6101 = vmatprep.mubr.f32.mxu0 0.0
    %6102 = vmatmul.mubr.f32.gmra.mrb[0].mxu0 %v6008
    %v6103 = vpop.f32.mrb[0].mxu0
    %v6104 = vadd.f32 0.0, %v6103
    %v6105 = vpop.f32.mrb[0].mxu0
    %6106 = vmatprep.mubr.f32.mxu0 0.0
    %6107 = vmatmul.mubr.f32.gmra.mrb[0].mxu0 %v6011
    %v6108 = vpop.f32.mrb[0].mxu0
    %v6109 = vadd.f32 0.0, %v6108
    %v6110 = vpop.f32.mrb[0].mxu0
    %6111 = vmatprep.mubr.f32.mxu0 0.0
    %6112 = vmatmul.mubr.f32.gmra.mrb[0].mxu0 %v6014
    %v6113 = vpop.f32.mrb[0].mxu0
    %v6114 = vadd.f32 0.0, %v6113
    %v6115 = vpop.f32.mrb[0].mxu0
    %6116 = vmatprep.mubr.f32.mxu0 0.0
    %6117 = vmatmul.mubr.f32.gmra.mrb[0].mxu0 %v6017
    %v6118 = vpop.f32.mrb[0].mxu0
    %v6119 = vadd.f32 0.0, %v6118
    %v6120 = vpop.f32.mrb[0].mxu0
    %6121 = vmatprep.mubr.f32.mxu0 0.0
    %6122 = vmatmul.mubr.f32.gmra.mrb[0].mxu0 %v6020
    %v6123 = vpop.f32.mrb[0].mxu0
    %v6124 = vadd.f32 0.0, %v6123
    %v6125 = vpop.f32.mrb[0].mxu0
    %6126 = vdwg.mxu0
    %v6128 = vsel %vm275, %v5550, 0
    %v6131 = vsel %vm275, %v5555, 0
    %v6134 = vsel %vm275, %v5560, 0
    %v6137 = vsel %vm275, %v5565, 0
    %v6140 = vsel %vm275, %v5570, 0
    %v6143 = vsel %vm275, %v5575, 0
    %v6146 = vsel %vm275, %v5580, 0
    %v6149 = vsel %vm275, %v5585, 0
    %6151 = vmatprep.subr.mxu0 0.0
    %6152 = vmatpush1.msra.mxu0 %v5189
    %6153 = vmatprep.subr.mxu0 0.0
    %6154 = vmatpush1.msra.mxu0 0.0
    %6155 = vmatprep.subr.mxu0 0.0
    %6156 = vmatpush1.msra.mxu0 0.0
    %6157 = vmatprep.subr.mxu0 0.0
    %6158 = vmatpush1.msra.mxu0 0.0
    %6159 = vmatprep.subr.mxu0 0.0
    %6160 = vmatpush1.msra.mxu0 0.0
    %6161 = vmatprep.subr.mxu0 0.0
    %6162 = vmatpush1.msra.mxu0 0.0
    %6163 = vmatprep.subr.mxu0 0.0
    %6164 = vmatpush1.msra.mxu0 0.0
    %6165 = vmatprep.subr.mxu0 0.0
    %6166 = vmatpush1.msra.mxu0 0.0
    %6167 = vmatprep.subr.mxu0 0.0
    %6168 = vmatpush1.msra.mxu0 0.0
    %6169 = vmatprep.subr.mxu0 0.0
    %6170 = vmatpush1.msra.mxu0 0.0
    %6171 = vmatprep.subr.mxu0 0.0
    %6172 = vmatpush1.msra.mxu0 0.0
    %6173 = vmatprep.subr.mxu0 0.0
    %6174 = vmatpush1.msra.mxu0 0.0
    %6175 = vmatprep.subr.mxu0 0.0
    %6176 = vmatpush1.msra.mxu0 0.0
    %6177 = vmatprep.subr.mxu0 0.0
    %6178 = vmatpush1.msra.mxu0 0.0
    %6179 = vmatprep.subr.mxu0 0.0
    %6180 = vmatpush1.msra.mxu0 0.0
    %6181 = vmatprep.subr.mxu0 0.0
    %6182 = vmatpush1.msra.mxu0 0.0
    %6183 = vmatprep.subr.mxu0 0.0
    %6184 = vmatpush1.msra.mxu0 0.0
    %6185 = vmatprep.subr.mxu0 0.0
    %6186 = vmatpush1.msra.mxu0 0.0
    %6187 = vmatprep.subr.mxu0 0.0
    %6188 = vmatpush1.msra.mxu0 0.0
    %6189 = vmatprep.subr.mxu0 0.0
    %6190 = vmatpush1.msra.mxu0 0.0
    %6191 = vmatprep.subr.mxu0 0.0
    %6192 = vmatpush1.msra.mxu0 0.0
    %6193 = vmatprep.subr.mxu0 0.0
    %6194 = vmatpush1.msra.mxu0 0.0
    %6195 = vmatprep.subr.mxu0 0.0
    %6196 = vmatpush1.msra.mxu0 0.0
    %6197 = vmatprep.subr.mxu0 0.0
    %6198 = vmatpush1.msra.mxu0 0.0
    %6199 = vmatprep.subr.mxu0 0.0
    %6200 = vmatpush1.msra.mxu0 0.0
    %6201 = vmatprep.subr.mxu0 0.0
    %6202 = vmatpush1.msra.mxu0 0.0
    %6203 = vmatprep.subr.mxu0 0.0
    %6204 = vmatpush1.msra.mxu0 0.0
    %6205 = vmatprep.subr.mxu0 0.0
    %6206 = vmatpush1.msra.mxu0 0.0
    %6207 = vmatprep.subr.mxu0 0.0
    %6208 = vmatpush1.msra.mxu0 0.0
    %6209 = vmatprep.subr.mxu0 0.0
    %6210 = vmatpush1.msra.mxu0 0.0
    %6211 = vmatprep.subr.mxu0 0.0
    %6212 = vmatpush1.msra.mxu0 0.0
    %6213 = vmatprep.subr.mxu0 0.0
    %6214 = vmatpush1.msra.mxu0 0.0
    %6215 = vmatprep.mubr.f32.mxu0 0.0
    %6216 = vmatmul.mubr.f32.gmra.mrb[0].mxu0 %v6128
    %v6217 = vpop.f32.mrb[0].mxu0
    %v6218 = vadd.f32 %v6089, %v6217
    %v6219 = vpop.f32.mrb[0].mxu0
    %6220 = vmatprep.mubr.f32.mxu0 0.0
    %6221 = vmatmul.mubr.f32.gmra.mrb[0].mxu0 %v6131
    %v6222 = vpop.f32.mrb[0].mxu0
    %v6223 = vadd.f32 %v6094, %v6222
    %v6224 = vpop.f32.mrb[0].mxu0
    %6225 = vmatprep.mubr.f32.mxu0 0.0
    %6226 = vmatmul.mubr.f32.gmra.mrb[0].mxu0 %v6134
    %v6227 = vpop.f32.mrb[0].mxu0
    %v6228 = vadd.f32 %v6099, %v6227
    %v6229 = vpop.f32.mrb[0].mxu0
    %6230 = vmatprep.mubr.f32.mxu0 0.0
    %6231 = vmatmul.mubr.f32.gmra.mrb[0].mxu0 %v6137
    %v6232 = vpop.f32.mrb[0].mxu0
    %v6233 = vadd.f32 %v6104, %v6232
    %v6234 = vpop.f32.mrb[0].mxu0
    %6235 = vmatprep.mubr.f32.mxu0 0.0
    %6236 = vmatmul.mubr.f32.gmra.mrb[0].mxu0 %v6140
    %v6237 = vpop.f32.mrb[0].mxu0
    %v6238 = vadd.f32 %v6109, %v6237
    %v6239 = vpop.f32.mrb[0].mxu0
    %6240 = vmatprep.mubr.f32.mxu0 0.0
    %6241 = vmatmul.mubr.f32.gmra.mrb[0].mxu0 %v6143
    %v6242 = vpop.f32.mrb[0].mxu0
    %v6243 = vadd.f32 %v6114, %v6242
    %v6244 = vpop.f32.mrb[0].mxu0
    %6245 = vmatprep.mubr.f32.mxu0 0.0
    %6246 = vmatmul.mubr.f32.gmra.mrb[0].mxu0 %v6146
    %v6247 = vpop.f32.mrb[0].mxu0
    %v6248 = vadd.f32 %v6119, %v6247
    %v6249 = vpop.f32.mrb[0].mxu0
    %6250 = vmatprep.mubr.f32.mxu0 0.0
    %6251 = vmatmul.mubr.f32.gmra.mrb[0].mxu0 %v6149
    %v6252 = vpop.f32.mrb[0].mxu0
    %v6253 = vadd.f32 %v6124, %v6252
    %v6254 = vpop.f32.mrb[0].mxu0
    %6255 = vdwg.mxu0
    %6256 = vrot.lane.b32.xlu0 %v5003, 112
    %v6257 = vpop.permute.xlu0 %6256
    %6258 = vrot.lane.b32.xlu0 %v5008, 112
    %v6259 = vpop.permute.xlu0 %6258
    %6260 = vrot.lane.b32.xlu0 %v5013, 112
    %v6261 = vpop.permute.xlu0 %6260
    %6262 = vrot.lane.b32.xlu0 %v5018, 112
    %v6263 = vpop.permute.xlu0 %6262
    %6264 = vrot.lane.b32.xlu0 %v5023, 112
    %v6265 = vpop.permute.xlu0 %6264
    %6266 = vrot.lane.b32.xlu0 %v5028, 112
    %v6267 = vpop.permute.xlu0 %6266
    %6268 = vrot.lane.b32.xlu0 %v5033, 112
    %v6269 = vpop.permute.xlu0 %6268
    %6270 = vrot.lane.b32.xlu0 %v5038, 112
    %v6271 = vpop.permute.xlu0 %6270
    %6272 = vrot.lane.b32.xlu0 %v5143, 112
    %v6273 = vpop.permute.xlu0 %6272
    %6274 = vrot.lane.b32.xlu0 %v5148, 112
    %v6275 = vpop.permute.xlu0 %6274
    %6276 = vrot.lane.b32.xlu0 %v5153, 112
    %v6277 = vpop.permute.xlu0 %6276
    %6278 = vrot.lane.b32.xlu0 %v5158, 112
    %v6279 = vpop.permute.xlu0 %6278
    %6280 = vrot.lane.b32.xlu0 %v5163, 112
    %v6281 = vpop.permute.xlu0 %6280
    %6282 = vrot.lane.b32.xlu0 %v5168, 112
    %v6283 = vpop.permute.xlu0 %6282
    %6284 = vrot.lane.b32.xlu0 %v5173, 112
    %v6285 = vpop.permute.xlu0 %6284
    %6286 = vrot.lane.b32.xlu0 %v5178, 112
    %v6287 = vpop.permute.xlu0 %6286
    %v6288 = vsel %vm275, %v6257, 0
    %v6290 = vsel %vm275, %v6259, 0
    %v6292 = vsel %vm275, %v6261, 0
    %v6294 = vsel %vm275, %v6263, 0
    %v6296 = vsel %vm275, %v6265, 0
    %v6298 = vsel %vm275, %v6267, 0
    %v6300 = vsel %vm275, %v6269, 0
    %v6302 = vsel %vm275, %v6271, 0
    %v6304 = vsel %vm275, %v6273, 0
    %v6306 = vsel %vm275, %v6275, 0
    %v6308 = vsel %vm275, %v6277, 0
    %v6310 = vsel %vm275, %v6279, 0
    %v6312 = vsel %vm275, %v6281, 0
    %v6314 = vsel %vm275, %v6283, 0
    %v6316 = vsel %vm275, %v6285, 0
    %v6318 = vsel %vm275, %v6287, 0
    %6320 = vmatprep.subr.mxu0 0.0
    %6321 = vmatpush1.xpose.msra.mxu0 %v6304
    %6322 = vmatprep.subr.mxu0 0.0
    %6323 = vmatpush1.xpose.msra.mxu0 %v6306
    %6324 = vmatprep.subr.mxu0 0.0
    %6325 = vmatpush1.xpose.msra.mxu0 %v6308
    %6326 = vmatprep.subr.mxu0 0.0
    %6327 = vmatpush1.xpose.msra.mxu0 %v6310
    %6328 = vmatprep.subr.mxu0 0.0
    %6329 = vmatpush1.xpose.msra.mxu0 %v6312
    %6330 = vmatprep.subr.mxu0 0.0
    %6331 = vmatpush1.xpose.msra.mxu0 %v6314
    %6332 = vmatprep.subr.mxu0 0.0
    %6333 = vmatpush1.xpose.msra.mxu0 %v6316
    %6334 = vmatprep.subr.mxu0 0.0
    %6335 = vmatpush1.xpose.msra.mxu0 %v6318
    %6336 = vmatprep.subr.mxu0 0.0
    %6337 = vmatpush1.xpose.msra.mxu0 0.0
    %6338 = vmatprep.subr.mxu0 0.0
    %6339 = vmatpush1.xpose.msra.mxu0 0.0
    %6340 = vmatprep.subr.mxu0 0.0
    %6341 = vmatpush1.xpose.msra.mxu0 0.0
    %6342 = vmatprep.subr.mxu0 0.0
    %6343 = vmatpush1.xpose.msra.mxu0 0.0
    %6344 = vmatprep.subr.mxu0 0.0
    %6345 = vmatpush1.xpose.msra.mxu0 0.0
    %6346 = vmatprep.subr.mxu0 0.0
    %6347 = vmatpush1.xpose.msra.mxu0 0.0
    %6348 = vmatprep.subr.mxu0 0.0
    %6349 = vmatpush1.xpose.msra.mxu0 0.0
    %6350 = vmatprep.subr.mxu0 0.0
    %6351 = vmatpush1.xpose.msra.mxu0 0.0
    %6352 = vmatprep.subr.mxu0 0.0
    %6353 = vmatpush1.xpose.msra.mxu0 0.0
    %6354 = vmatprep.subr.mxu0 0.0
    %6355 = vmatpush1.xpose.msra.mxu0 0.0
    %6356 = vmatprep.subr.mxu0 0.0
    %6357 = vmatpush1.xpose.msra.mxu0 0.0
    %6358 = vmatprep.subr.mxu0 0.0
    %6359 = vmatpush1.xpose.msra.mxu0 0.0
    %6360 = vmatprep.subr.mxu0 0.0
    %6361 = vmatpush1.xpose.msra.mxu0 0.0
    %6362 = vmatprep.subr.mxu0 0.0
    %6363 = vmatpush1.xpose.msra.mxu0 0.0
    %6364 = vmatprep.subr.mxu0 0.0
    %6365 = vmatpush1.xpose.msra.mxu0 0.0
    %6366 = vmatprep.subr.mxu0 0.0
    %6367 = vmatpush1.xpose.msra.mxu0 0.0
    %6368 = vmatprep.subr.mxu0 0.0
    %6369 = vmatpush1.xpose.msra.mxu0 0.0
    %6370 = vmatprep.subr.mxu0 0.0
    %6371 = vmatpush1.xpose.msra.mxu0 0.0
    %6372 = vmatprep.subr.mxu0 0.0
    %6373 = vmatpush1.xpose.msra.mxu0 0.0
    %6374 = vmatprep.subr.mxu0 0.0
    %6375 = vmatpush1.xpose.msra.mxu0 0.0
    %6376 = vmatprep.subr.mxu0 0.0
    %6377 = vmatpush1.xpose.msra.mxu0 0.0
    %6378 = vmatprep.subr.mxu0 0.0
    %6379 = vmatpush1.xpose.msra.mxu0 0.0
    %6380 = vmatprep.subr.mxu0 0.0
    %6381 = vmatpush1.xpose.msra.mxu0 0.0
    %6382 = vmatprep.subr.mxu0 0.0
    %6383 = vmatpush1.xpose.msra.mxu0 0.0
    %6384 = vmatprep.mubr.f32.mxu0 0.0
    %6385 = vmatmul.mubr.f32.gmra.mrb[0].mxu0 %v6288
    %v6386 = vpop.f32.mrb[0].mxu0
    %v6387 = vadd.f32 %v5181, %v6386
    %v6388 = vpop.f32.mrb[0].mxu0
    %6389 = vmatprep.mubr.f32.mxu0 0.0
    %6390 = vmatmul.mubr.f32.gmra.mrb[0].mxu0 %v6290
    %v6391 = vpop.f32.mrb[0].mxu0
    %v6392 = vadd.f32 %v5182, %v6391
    %v6393 = vpop.f32.mrb[0].mxu0
    %6394 = vmatprep.mubr.f32.mxu0 0.0
    %6395 = vmatmul.mubr.f32.gmra.mrb[0].mxu0 %v6292
    %v6396 = vpop.f32.mrb[0].mxu0
    %v6397 = vadd.f32 %v5183, %v6396
    %v6398 = vpop.f32.mrb[0].mxu0
    %6399 = vmatprep.mubr.f32.mxu0 0.0
    %6400 = vmatmul.mubr.f32.gmra.mrb[0].mxu0 %v6294
    %v6401 = vpop.f32.mrb[0].mxu0
    %v6402 = vadd.f32 %v5184, %v6401
    %v6403 = vpop.f32.mrb[0].mxu0
    %6404 = vmatprep.mubr.f32.mxu0 0.0
    %6405 = vmatmul.mubr.f32.gmra.mrb[0].mxu0 %v6296
    %v6406 = vpop.f32.mrb[0].mxu0
    %v6407 = vadd.f32 %v5185, %v6406
    %v6408 = vpop.f32.mrb[0].mxu0
    %6409 = vmatprep.mubr.f32.mxu0 0.0
    %6410 = vmatmul.mubr.f32.gmra.mrb[0].mxu0 %v6298
    %v6411 = vpop.f32.mrb[0].mxu0
    %v6412 = vadd.f32 %v5186, %v6411
    %v6413 = vpop.f32.mrb[0].mxu0
    %6414 = vmatprep.mubr.f32.mxu0 0.0
    %6415 = vmatmul.mubr.f32.gmra.mrb[0].mxu0 %v6300
    %v6416 = vpop.f32.mrb[0].mxu0
    %v6417 = vadd.f32 %v5187, %v6416
    %v6418 = vpop.f32.mrb[0].mxu0
    %6419 = vmatprep.mubr.f32.mxu0 0.0
    %6420 = vmatmul.mubr.f32.gmra.mrb[0].mxu0 %v6302
    %v6421 = vpop.f32.mrb[0].mxu0
    %v6422 = vadd.f32 %v5188, %v6421
    %v6423 = vpop.f32.mrb[0].mxu0
    %6424 = vdwg.mxu0
    %v6425 = vsel %vm413, %v6387, -inf
    %6426 = vmax.xlane.f32.xlu0 %v6425
    %v6427 = vpop.xlane.xlu0 %6426
    %v6428 = vsel %vm413, %v6392, -inf
    %6429 = vmax.xlane.f32.xlu0 %v6428
    %v6430 = vpop.xlane.xlu0 %6429
    %v6431 = vsel %vm413, %v6397, -inf
    %6432 = vmax.xlane.f32.xlu0 %v6431
    %v6433 = vpop.xlane.xlu0 %6432
    %v6434 = vsel %vm413, %v6402, -inf
    %6435 = vmax.xlane.f32.xlu0 %v6434
    %v6436 = vpop.xlane.xlu0 %6435
    %v6437 = vsel %vm413, %v6407, -inf
    %6438 = vmax.xlane.f32.xlu0 %v6437
    %v6439 = vpop.xlane.xlu0 %6438
    %v6440 = vsel %vm413, %v6412, -inf
    %6441 = vmax.xlane.f32.xlu0 %v6440
    %v6442 = vpop.xlane.xlu0 %6441
    %v6443 = vsel %vm413, %v6417, -inf
    %6444 = vmax.xlane.f32.xlu0 %v6443
    %v6445 = vpop.xlane.xlu0 %6444
    %v6446 = vsel %vm413, %v6422, -inf
    %6447 = vmax.xlane.f32.xlu0 %v6446
    %v6448 = vpop.xlane.xlu0 %6447
    %v6449 = vsub.f32 %v6387, %v6427
    %v6450 = vsub.f32 %v6392, %v6430
    %v6451 = vsub.f32 %v6397, %v6433
    %v6452 = vsub.f32 %v6402, %v6436
    %v6453 = vsub.f32 %v6407, %v6439
    %v6454 = vsub.f32 %v6412, %v6442
    %v6455 = vsub.f32 %v6417, %v6445
    %v6456 = vsub.f32 %v6422, %v6448
    %v6457 = vmul.f32 %v6449, 1.442695
    %v6458 = vpow.pop %v6457
    %v6459 = vmul.f32 %v6450, 1.442695
    %v6460 = vpow.pop %v6459
    %v6461 = vmul.f32 %v6451, 1.442695
    %v6462 = vpow.pop %v6461
    %v6463 = vmul.f32 %v6452, 1.442695
    %v6464 = vpow.pop %v6463
    %v6465 = vmul.f32 %v6453, 1.442695
    %v6466 = vpow.pop %v6465
    %v6467 = vmul.f32 %v6454, 1.442695
    %v6468 = vpow.pop %v6467
    %v6469 = vmul.f32 %v6455, 1.442695
    %v6470 = vpow.pop %v6469
    %v6471 = vmul.f32 %v6456, 1.442695
    %v6472 = vpow.pop %v6471
    %v6473 = vsel %vm413, %v6458, 0.0
    %6474 = vadd.xlane.f32.xlu0 %v6473
    %v6475 = vpop.xlane.xlu0 %6474
    %v6476 = vsel %vm413, %v6460, 0.0
    %6477 = vadd.xlane.f32.xlu0 %v6476
    %v6478 = vpop.xlane.xlu0 %6477
    %v6479 = vsel %vm413, %v6462, 0.0
    %6480 = vadd.xlane.f32.xlu0 %v6479
    %v6481 = vpop.xlane.xlu0 %6480
    %v6482 = vsel %vm413, %v6464, 0.0
    %6483 = vadd.xlane.f32.xlu0 %v6482
    %v6484 = vpop.xlane.xlu0 %6483
    %v6485 = vsel %vm413, %v6466, 0.0
    %6486 = vadd.xlane.f32.xlu0 %v6485
    %v6487 = vpop.xlane.xlu0 %6486
    %v6488 = vsel %vm413, %v6468, 0.0
    %6489 = vadd.xlane.f32.xlu0 %v6488
    %v6490 = vpop.xlane.xlu0 %6489
    %v6491 = vsel %vm413, %v6470, 0.0
    %6492 = vadd.xlane.f32.xlu0 %v6491
    %v6493 = vpop.xlane.xlu0 %6492
    %v6494 = vsel %vm413, %v6472, 0.0
    %6495 = vadd.xlane.f32.xlu0 %v6494
    %v6496 = vpop.xlane.xlu0 %6495
    %v6497 = vrcp.pop %v6475
    %v6498 = vrcp.pop %v6478
    %v6499 = vrcp.pop %v6481
    %v6500 = vrcp.pop %v6484
    %v6501 = vrcp.pop %v6487
    %v6502 = vrcp.pop %v6490
    %v6503 = vrcp.pop %v6493
    %v6504 = vrcp.pop %v6496
    %v6505 = vmul.f32 %v6458, %v6497
    %v6506 = vmul.f32 %v6460, %v6498
    %v6507 = vmul.f32 %v6462, %v6499
    %v6508 = vmul.f32 %v6464, %v6500
    %v6509 = vmul.f32 %v6466, %v6501
    %v6510 = vmul.f32 %v6468, %v6502
    %v6511 = vmul.f32 %v6470, %v6503
    %v6512 = vmul.f32 %v6472, %v6504
    %6513 = vrot.lane.b32.xlu0 %v5143, 80
    %v6514 = vpop.permute.xlu0 %6513
    %6515 = vrot.lane.b32.xlu0 %v5148, 80
    %v6516 = vpop.permute.xlu0 %6515
    %6517 = vrot.lane.b32.xlu0 %v5153, 80
    %v6518 = vpop.permute.xlu0 %6517
    %6519 = vrot.lane.b32.xlu0 %v5158, 80
    %v6520 = vpop.permute.xlu0 %6519
    %6521 = vrot.lane.b32.xlu0 %v5163, 80
    %v6522 = vpop.permute.xlu0 %6521
    %6523 = vrot.lane.b32.xlu0 %v5168, 80
    %v6524 = vpop.permute.xlu0 %6523
    %6525 = vrot.lane.b32.xlu0 %v5173, 80
    %v6526 = vpop.permute.xlu0 %6525
    %6527 = vrot.lane.b32.xlu0 %v5178, 80
    %v6528 = vpop.permute.xlu0 %6527
    %v6538 = vsel %vm413, %v6505, 0
    %v6541 = vsel %vm413, %v6506, 0
    %v6544 = vsel %vm413, %v6507, 0
    %v6547 = vsel %vm413, %v6508, 0
    %v6550 = vsel %vm413, %v6509, 0
    %v6553 = vsel %vm413, %v6510, 0
    %v6556 = vsel %vm413, %v6511, 0
    %v6559 = vsel %vm413, %v6512, 0
    %6561 = vmatprep.subr.mxu0 0.0
    %6562 = vmatpush1.msra.mxu0 %v6514
    %6563 = vmatprep.subr.mxu0 0.0
    %6564 = vmatpush1.msra.mxu0 %v6516
    %6565 = vmatprep.subr.mxu0 0.0
    %6566 = vmatpush1.msra.mxu0 %v6518
    %6567 = vmatprep.subr.mxu0 0.0
    %6568 = vmatpush1.msra.mxu0 %v6520
    %6569 = vmatprep.subr.mxu0 0.0
    %6570 = vmatpush1.msra.mxu0 %v6522
    %6571 = vmatprep.subr.mxu0 0.0
    %6572 = vmatpush1.msra.mxu0 %v6524
    %6573 = vmatprep.subr.mxu0 0.0
    %6574 = vmatpush1.msra.mxu0 %v6526
    %6575 = vmatprep.subr.mxu0 0.0
    %6576 = vmatpush1.msra.mxu0 %v6528
    %6577 = vmatprep.subr.mxu0 0.0
    %6578 = vmatpush1.msra.mxu0 0.0
    %6579 = vmatprep.subr.mxu0 0.0
    %6580 = vmatpush1.msra.mxu0 0.0
    %6581 = vmatprep.subr.mxu0 0.0
    %6582 = vmatpush1.msra.mxu0 0.0
    %6583 = vmatprep.subr.mxu0 0.0
    %6584 = vmatpush1.msra.mxu0 0.0
    %6585 = vmatprep.subr.mxu0 0.0
    %6586 = vmatpush1.msra.mxu0 0.0
    %6587 = vmatprep.subr.mxu0 0.0
    %6588 = vmatpush1.msra.mxu0 0.0
    %6589 = vmatprep.subr.mxu0 0.0
    %6590 = vmatpush1.msra.mxu0 0.0
    %6591 = vmatprep.subr.mxu0 0.0
    %6592 = vmatpush1.msra.mxu0 0.0
    %6593 = vmatprep.subr.mxu0 0.0
    %6594 = vmatpush1.msra.mxu0 0.0
    %6595 = vmatprep.subr.mxu0 0.0
    %6596 = vmatpush1.msra.mxu0 0.0
    %6597 = vmatprep.subr.mxu0 0.0
    %6598 = vmatpush1.msra.mxu0 0.0
    %6599 = vmatprep.subr.mxu0 0.0
    %6600 = vmatpush1.msra.mxu0 0.0
    %6601 = vmatprep.subr.mxu0 0.0
    %6602 = vmatpush1.msra.mxu0 0.0
    %6603 = vmatprep.subr.mxu0 0.0
    %6604 = vmatpush1.msra.mxu0 0.0
    %6605 = vmatprep.subr.mxu0 0.0
    %6606 = vmatpush1.msra.mxu0 0.0
    %6607 = vmatprep.subr.mxu0 0.0
    %6608 = vmatpush1.msra.mxu0 0.0
    %6609 = vmatprep.subr.mxu0 0.0
    %6610 = vmatpush1.msra.mxu0 0.0
    %6611 = vmatprep.subr.mxu0 0.0
    %6612 = vmatpush1.msra.mxu0 0.0
    %6613 = vmatprep.subr.mxu0 0.0
    %6614 = vmatpush1.msra.mxu0 0.0
    %6615 = vmatprep.subr.mxu0 0.0
    %6616 = vmatpush1.msra.mxu0 0.0
    %6617 = vmatprep.subr.mxu0 0.0
    %6618 = vmatpush1.msra.mxu0 0.0
    %6619 = vmatprep.subr.mxu0 0.0
    %6620 = vmatpush1.msra.mxu0 0.0
    %6621 = vmatprep.subr.mxu0 0.0
    %6622 = vmatpush1.msra.mxu0 0.0
    %6623 = vmatprep.subr.mxu0 0.0
    %6624 = vmatpush1.msra.mxu0 0.0
    %6625 = vmatprep.mubr.f32.mxu0 0.0
    %6626 = vmatmul.mubr.f32.gmra.mrb[0].mxu0 %v6538
    %v6627 = vpop.f32.mrb[0].mxu0
    %v6628 = vadd.f32 0.0, %v6627
    %v6629 = vpop.f32.mrb[0].mxu0
    %6630 = vmatprep.mubr.f32.mxu0 0.0
    %6631 = vmatmul.mubr.f32.gmra.mrb[0].mxu0 %v6541
    %v6632 = vpop.f32.mrb[0].mxu0
    %v6633 = vadd.f32 0.0, %v6632
    %v6634 = vpop.f32.mrb[0].mxu0
    %6635 = vmatprep.mubr.f32.mxu0 0.0
    %6636 = vmatmul.mubr.f32.gmra.mrb[0].mxu0 %v6544
    %v6637 = vpop.f32.mrb[0].mxu0
    %v6638 = vadd.f32 0.0, %v6637
    %v6639 = vpop.f32.mrb[0].mxu0
    %6640 = vmatprep.mubr.f32.mxu0 0.0
    %6641 = vmatmul.mubr.f32.gmra.mrb[0].mxu0 %v6547
    %v6642 = vpop.f32.mrb[0].mxu0
    %v6643 = vadd.f32 0.0, %v6642
    %v6644 = vpop.f32.mrb[0].mxu0
    %6645 = vmatprep.mubr.f32.mxu0 0.0
    %6646 = vmatmul.mubr.f32.gmra.mrb[0].mxu0 %v6550
    %v6647 = vpop.f32.mrb[0].mxu0
    %v6648 = vadd.f32 0.0, %v6647
    %v6649 = vpop.f32.mrb[0].mxu0
    %6650 = vmatprep.mubr.f32.mxu0 0.0
    %6651 = vmatmul.mubr.f32.gmra.mrb[0].mxu0 %v6553
    %v6652 = vpop.f32.mrb[0].mxu0
    %v6653 = vadd.f32 0.0, %v6652
    %v6654 = vpop.f32.mrb[0].mxu0
    %6655 = vmatprep.mubr.f32.mxu0 0.0
    %6656 = vmatmul.mubr.f32.gmra.mrb[0].mxu0 %v6556
    %v6657 = vpop.f32.mrb[0].mxu0
    %v6658 = vadd.f32 0.0, %v6657
    %v6659 = vpop.f32.mrb[0].mxu0
    %6660 = vmatprep.mubr.f32.mxu0 0.0
    %6661 = vmatmul.mubr.f32.gmra.mrb[0].mxu0 %v6559
    %v6662 = vpop.f32.mrb[0].mxu0
    %v6663 = vadd.f32 0.0, %v6662
    %v6664 = vpop.f32.mrb[0].mxu0
    %6665 = vdwg.mxu0
    %v6667 = vsel %vm275, %v6628, 0
    %v6670 = vsel %vm275, %v6633, 0
    %v6673 = vsel %vm275, %v6638, 0
    %v6676 = vsel %vm275, %v6643, 0
    %v6679 = vsel %vm275, %v6648, 0
    %v6682 = vsel %vm275, %v6653, 0
    %v6685 = vsel %vm275, %v6658, 0
    %v6688 = vsel %vm275, %v6663, 0
    %6690 = vmatprep.subr.mxu0 0.0
    %6691 = vmatpush1.msra.mxu0 %v5191
    %6692 = vmatprep.subr.mxu0 0.0
    %6693 = vmatpush1.msra.mxu0 0.0
    %6694 = vmatprep.subr.mxu0 0.0
    %6695 = vmatpush1.msra.mxu0 0.0
    %6696 = vmatprep.subr.mxu0 0.0
    %6697 = vmatpush1.msra.mxu0 0.0
    %6698 = vmatprep.subr.mxu0 0.0
    %6699 = vmatpush1.msra.mxu0 0.0
    %6700 = vmatprep.subr.mxu0 0.0
    %6701 = vmatpush1.msra.mxu0 0.0
    %6702 = vmatprep.subr.mxu0 0.0
    %6703 = vmatpush1.msra.mxu0 0.0
    %6704 = vmatprep.subr.mxu0 0.0
    %6705 = vmatpush1.msra.mxu0 0.0
    %6706 = vmatprep.subr.mxu0 0.0
    %6707 = vmatpush1.msra.mxu0 0.0
    %6708 = vmatprep.subr.mxu0 0.0
    %6709 = vmatpush1.msra.mxu0 0.0
    %6710 = vmatprep.subr.mxu0 0.0
    %6711 = vmatpush1.msra.mxu0 0.0
    %6712 = vmatprep.subr.mxu0 0.0
    %6713 = vmatpush1.msra.mxu0 0.0
    %6714 = vmatprep.subr.mxu0 0.0
    %6715 = vmatpush1.msra.mxu0 0.0
    %6716 = vmatprep.subr.mxu0 0.0
    %6717 = vmatpush1.msra.mxu0 0.0
    %6718 = vmatprep.subr.mxu0 0.0
    %6719 = vmatpush1.msra.mxu0 0.0
    %6720 = vmatprep.subr.mxu0 0.0
    %6721 = vmatpush1.msra.mxu0 0.0
    %6722 = vmatprep.subr.mxu0 0.0
    %6723 = vmatpush1.msra.mxu0 0.0
    %6724 = vmatprep.subr.mxu0 0.0
    %6725 = vmatpush1.msra.mxu0 0.0
    %6726 = vmatprep.subr.mxu0 0.0
    %6727 = vmatpush1.msra.mxu0 0.0
    %6728 = vmatprep.subr.mxu0 0.0
    %6729 = vmatpush1.msra.mxu0 0.0
    %6730 = vmatprep.subr.mxu0 0.0
    %6731 = vmatpush1.msra.mxu0 0.0
    %6732 = vmatprep.subr.mxu0 0.0
    %6733 = vmatpush1.msra.mxu0 0.0
    %6734 = vmatprep.subr.mxu0 0.0
    %6735 = vmatpush1.msra.mxu0 0.0
    %6736 = vmatprep.subr.mxu0 0.0
    %6737 = vmatpush1.msra.mxu0 0.0
    %6738 = vmatprep.subr.mxu0 0.0
    %6739 = vmatpush1.msra.mxu0 0.0
    %6740 = vmatprep.subr.mxu0 0.0
    %6741 = vmatpush1.msra.mxu0 0.0
    %6742 = vmatprep.subr.mxu0 0.0
    %6743 = vmatpush1.msra.mxu0 0.0
    %6744 = vmatprep.subr.mxu0 0.0
    %6745 = vmatpush1.msra.mxu0 0.0
    %6746 = vmatprep.subr.mxu0 0.0
    %6747 = vmatpush1.msra.mxu0 0.0
    %6748 = vmatprep.subr.mxu0 0.0
    %6749 = vmatpush1.msra.mxu0 0.0
    %6750 = vmatprep.subr.mxu0 0.0
    %6751 = vmatpush1.msra.mxu0 0.0
    %6752 = vmatprep.subr.mxu0 0.0
    %6753 = vmatpush1.msra.mxu0 0.0
    %6754 = vmatprep.mubr.f32.mxu0 0.0
    %6755 = vmatmul.mubr.f32.gmra.mrb[0].mxu0 %v6667
    %v6756 = vpop.f32.mrb[0].mxu0
    %v6757 = vadd.f32 0.0, %v6756
    %v6758 = vpop.f32.mrb[0].mxu0
    %6759 = vmatprep.mubr.f32.mxu0 0.0
    %6760 = vmatmul.mubr.f32.gmra.mrb[0].mxu0 %v6670
    %v6761 = vpop.f32.mrb[0].mxu0
    %v6762 = vadd.f32 0.0, %v6761
    %v6763 = vpop.f32.mrb[0].mxu0
    %6764 = vmatprep.mubr.f32.mxu0 0.0
    %6765 = vmatmul.mubr.f32.gmra.mrb[0].mxu0 %v6673
    %v6766 = vpop.f32.mrb[0].mxu0
    %v6767 = vadd.f32 0.0, %v6766
    %v6768 = vpop.f32.mrb[0].mxu0
    %6769 = vmatprep.mubr.f32.mxu0 0.0
    %6770 = vmatmul.mubr.f32.gmra.mrb[0].mxu0 %v6676
    %v6771 = vpop.f32.mrb[0].mxu0
    %v6772 = vadd.f32 0.0, %v6771
    %v6773 = vpop.f32.mrb[0].mxu0
    %6774 = vmatprep.mubr.f32.mxu0 0.0
    %6775 = vmatmul.mubr.f32.gmra.mrb[0].mxu0 %v6679
    %v6776 = vpop.f32.mrb[0].mxu0
    %v6777 = vadd.f32 0.0, %v6776
    %v6778 = vpop.f32.mrb[0].mxu0
    %6779 = vmatprep.mubr.f32.mxu0 0.0
    %6780 = vmatmul.mubr.f32.gmra.mrb[0].mxu0 %v6682
    %v6781 = vpop.f32.mrb[0].mxu0
    %v6782 = vadd.f32 0.0, %v6781
    %v6783 = vpop.f32.mrb[0].mxu0
    %6784 = vmatprep.mubr.f32.mxu0 0.0
    %6785 = vmatmul.mubr.f32.gmra.mrb[0].mxu0 %v6685
    %v6786 = vpop.f32.mrb[0].mxu0
    %v6787 = vadd.f32 0.0, %v6786
    %v6788 = vpop.f32.mrb[0].mxu0
    %6789 = vmatprep.mubr.f32.mxu0 0.0
    %6790 = vmatmul.mubr.f32.gmra.mrb[0].mxu0 %v6688
    %v6791 = vpop.f32.mrb[0].mxu0
    %v6792 = vadd.f32 0.0, %v6791
    %v6793 = vpop.f32.mrb[0].mxu0
    %6794 = vdwg.mxu0
    %v6795 = vadd.f32 %v6218, %v6757
    %v6796 = vadd.f32 %v6223, %v6762
    %v6797 = vadd.f32 %v6228, %v6767
    %v6798 = vadd.f32 %v6233, %v6772
    %v6799 = vadd.f32 %v6238, %v6777
    %v6800 = vadd.f32 %v6243, %v6782
    %v6801 = vadd.f32 %v6248, %v6787
    %v6802 = vadd.f32 %v6253, %v6792
    %6803 = vrot.lane.b32.xlu0 %v5003, 104
    %v6804 = vpop.permute.xlu0 %6803
    %6805 = vrot.lane.b32.xlu0 %v5008, 104
    %v6806 = vpop.permute.xlu0 %6805
    %6807 = vrot.lane.b32.xlu0 %v5013, 104
    %v6808 = vpop.permute.xlu0 %6807
    %6809 = vrot.lane.b32.xlu0 %v5018, 104
    %v6810 = vpop.permute.xlu0 %6809
    %6811 = vrot.lane.b32.xlu0 %v5023, 104
    %v6812 = vpop.permute.xlu0 %6811
    %6813 = vrot.lane.b32.xlu0 %v5028, 104
    %v6814 = vpop.permute.xlu0 %6813
    %6815 = vrot.lane.b32.xlu0 %v5033, 104
    %v6816 = vpop.permute.xlu0 %6815
    %6817 = vrot.lane.b32.xlu0 %v5038, 104
    %v6818 = vpop.permute.xlu0 %6817
    %6819 = vrot.lane.b32.xlu0 %v5143, 104
    %v6820 = vpop.permute.xlu0 %6819
    %6821 = vrot.lane.b32.xlu0 %v5148, 104
    %v6822 = vpop.permute.xlu0 %6821
    %6823 = vrot.lane.b32.xlu0 %v5153, 104
    %v6824 = vpop.permute.xlu0 %6823
    %6825 = vrot.lane.b32.xlu0 %v5158, 104
    %v6826 = vpop.permute.xlu0 %6825
    %6827 = vrot.lane.b32.xlu0 %v5163, 104
    %v6828 = vpop.permute.xlu0 %6827
    %6829 = vrot.lane.b32.xlu0 %v5168, 104
    %v6830 = vpop.permute.xlu0 %6829
    %6831 = vrot.lane.b32.xlu0 %v5173, 104
    %v6832 = vpop.permute.xlu0 %6831
    %6833 = vrot.lane.b32.xlu0 %v5178, 104
    %v6834 = vpop.permute.xlu0 %6833
    %v6835 = vsel %vm275, %v6804, 0
    %v6837 = vsel %vm275, %v6806, 0
    %v6839 = vsel %vm275, %v6808, 0
    %v6841 = vsel %vm275, %v6810, 0
    %v6843 = vsel %vm275, %v6812, 0
    %v6845 = vsel %vm275, %v6814, 0
    %v6847 = vsel %vm275, %v6816, 0
    %v6849 = vsel %vm275, %v6818, 0
    %v6851 = vsel %vm275, %v6820, 0
    %v6853 = vsel %vm275, %v6822, 0
    %v6855 = vsel %vm275, %v6824, 0
    %v6857 = vsel %vm275, %v6826, 0
    %v6859 = vsel %vm275, %v6828, 0
    %v6861 = vsel %vm275, %v6830, 0
    %v6863 = vsel %vm275, %v6832, 0
    %v6865 = vsel %vm275, %v6834, 0
    %6867 = vmatprep.subr.mxu0 0.0
    %6868 = vmatpush1.xpose.msra.mxu0 %v6851
    %6869 = vmatprep.subr.mxu0 0.0
    %6870 = vmatpush1.xpose.msra.mxu0 %v6853
    %6871 = vmatprep.subr.mxu0 0.0
    %6872 = vmatpush1.xpose.msra.mxu0 %v6855
    %6873 = vmatprep.subr.mxu0 0.0
    %6874 = vmatpush1.xpose.msra.mxu0 %v6857
    %6875 = vmatprep.subr.mxu0 0.0
    %6876 = vmatpush1.xpose.msra.mxu0 %v6859
    %6877 = vmatprep.subr.mxu0 0.0
    %6878 = vmatpush1.xpose.msra.mxu0 %v6861
    %6879 = vmatprep.subr.mxu0 0.0
    %6880 = vmatpush1.xpose.msra.mxu0 %v6863
    %6881 = vmatprep.subr.mxu0 0.0
    %6882 = vmatpush1.xpose.msra.mxu0 %v6865
    %6883 = vmatprep.subr.mxu0 0.0
    %6884 = vmatpush1.xpose.msra.mxu0 0.0
    %6885 = vmatprep.subr.mxu0 0.0
    %6886 = vmatpush1.xpose.msra.mxu0 0.0
    %6887 = vmatprep.subr.mxu0 0.0
    %6888 = vmatpush1.xpose.msra.mxu0 0.0
    %6889 = vmatprep.subr.mxu0 0.0
    %6890 = vmatpush1.xpose.msra.mxu0 0.0
    %6891 = vmatprep.subr.mxu0 0.0
    %6892 = vmatpush1.xpose.msra.mxu0 0.0
    %6893 = vmatprep.subr.mxu0 0.0
    %6894 = vmatpush1.xpose.msra.mxu0 0.0
    %6895 = vmatprep.subr.mxu0 0.0
    %6896 = vmatpush1.xpose.msra.mxu0 0.0
    %6897 = vmatprep.subr.mxu0 0.0
    %6898 = vmatpush1.xpose.msra.mxu0 0.0
    %6899 = vmatprep.subr.mxu0 0.0
    %6900 = vmatpush1.xpose.msra.mxu0 0.0
    %6901 = vmatprep.subr.mxu0 0.0
    %6902 = vmatpush1.xpose.msra.mxu0 0.0
    %6903 = vmatprep.subr.mxu0 0.0
    %6904 = vmatpush1.xpose.msra.mxu0 0.0
    %6905 = vmatprep.subr.mxu0 0.0
    %6906 = vmatpush1.xpose.msra.mxu0 0.0
    %6907 = vmatprep.subr.mxu0 0.0
    %6908 = vmatpush1.xpose.msra.mxu0 0.0
    %6909 = vmatprep.subr.mxu0 0.0
    %6910 = vmatpush1.xpose.msra.mxu0 0.0
    %6911 = vmatprep.subr.mxu0 0.0
    %6912 = vmatpush1.xpose.msra.mxu0 0.0
    %6913 = vmatprep.subr.mxu0 0.0
    %6914 = vmatpush1.xpose.msra.mxu0 0.0
    %6915 = vmatprep.subr.mxu0 0.0
    %6916 = vmatpush1.xpose.msra.mxu0 0.0
    %6917 = vmatprep.subr.mxu0 0.0
    %6918 = vmatpush1.xpose.msra.mxu0 0.0
    %6919 = vmatprep.subr.mxu0 0.0
    %6920 = vmatpush1.xpose.msra.mxu0 0.0
    %6921 = vmatprep.subr.mxu0 0.0
    %6922 = vmatpush1.xpose.msra.mxu0 0.0
    %6923 = vmatprep.subr.mxu0 0.0
    %6924 = vmatpush1.xpose.msra.mxu0 0.0
    %6925 = vmatprep.subr.mxu0 0.0
    %6926 = vmatpush1.xpose.msra.mxu0 0.0
    %6927 = vmatprep.subr.mxu0 0.0
    %6928 = vmatpush1.xpose.msra.mxu0 0.0
    %6929 = vmatprep.subr.mxu0 0.0
    %6930 = vmatpush1.xpose.msra.mxu0 0.0
    %6931 = vmatprep.mubr.f32.mxu0 0.0
    %6932 = vmatmul.mubr.f32.gmra.mrb[0].mxu0 %v6835
    %v6933 = vpop.f32.mrb[0].mxu0
    %v6934 = vadd.f32 %v5181, %v6933
    %v6935 = vpop.f32.mrb[0].mxu0
    %6936 = vmatprep.mubr.f32.mxu0 0.0
    %6937 = vmatmul.mubr.f32.gmra.mrb[0].mxu0 %v6837
    %v6938 = vpop.f32.mrb[0].mxu0
    %v6939 = vadd.f32 %v5182, %v6938
    %v6940 = vpop.f32.mrb[0].mxu0
    %6941 = vmatprep.mubr.f32.mxu0 0.0
    %6942 = vmatmul.mubr.f32.gmra.mrb[0].mxu0 %v6839
    %v6943 = vpop.f32.mrb[0].mxu0
    %v6944 = vadd.f32 %v5183, %v6943
    %v6945 = vpop.f32.mrb[0].mxu0
    %6946 = vmatprep.mubr.f32.mxu0 0.0
    %6947 = vmatmul.mubr.f32.gmra.mrb[0].mxu0 %v6841
    %v6948 = vpop.f32.mrb[0].mxu0
    %v6949 = vadd.f32 %v5184, %v6948
    %v6950 = vpop.f32.mrb[0].mxu0
    %6951 = vmatprep.mubr.f32.mxu0 0.0
    %6952 = vmatmul.mubr.f32.gmra.mrb[0].mxu0 %v6843
    %v6953 = vpop.f32.mrb[0].mxu0
    %v6954 = vadd.f32 %v5185, %v6953
    %v6955 = vpop.f32.mrb[0].mxu0
    %6956 = vmatprep.mubr.f32.mxu0 0.0
    %6957 = vmatmul.mubr.f32.gmra.mrb[0].mxu0 %v6845
    %v6958 = vpop.f32.mrb[0].mxu0
    %v6959 = vadd.f32 %v5186, %v6958
    %v6960 = vpop.f32.mrb[0].mxu0
    %6961 = vmatprep.mubr.f32.mxu0 0.0
    %6962 = vmatmul.mubr.f32.gmra.mrb[0].mxu0 %v6847
    %v6963 = vpop.f32.mrb[0].mxu0
    %v6964 = vadd.f32 %v5187, %v6963
    %v6965 = vpop.f32.mrb[0].mxu0
    %6966 = vmatprep.mubr.f32.mxu0 0.0
    %6967 = vmatmul.mubr.f32.gmra.mrb[0].mxu0 %v6849
    %v6968 = vpop.f32.mrb[0].mxu0
    %v6969 = vadd.f32 %v5188, %v6968
    %v6970 = vpop.f32.mrb[0].mxu0
    %6971 = vdwg.mxu0
    %v6972 = vsel %vm413, %v6934, -inf
    %6973 = vmax.xlane.f32.xlu0 %v6972
    %v6974 = vpop.xlane.xlu0 %6973
    %v6975 = vsel %vm413, %v6939, -inf
    %6976 = vmax.xlane.f32.xlu0 %v6975
    %v6977 = vpop.xlane.xlu0 %6976
    %v6978 = vsel %vm413, %v6944, -inf
    %6979 = vmax.xlane.f32.xlu0 %v6978
    %v6980 = vpop.xlane.xlu0 %6979
    %v6981 = vsel %vm413, %v6949, -inf
    %6982 = vmax.xlane.f32.xlu0 %v6981
    %v6983 = vpop.xlane.xlu0 %6982
    %v6984 = vsel %vm413, %v6954, -inf
    %6985 = vmax.xlane.f32.xlu0 %v6984
    %v6986 = vpop.xlane.xlu0 %6985
    %v6987 = vsel %vm413, %v6959, -inf
    %6988 = vmax.xlane.f32.xlu0 %v6987
    %v6989 = vpop.xlane.xlu0 %6988
    %v6990 = vsel %vm413, %v6964, -inf
    %6991 = vmax.xlane.f32.xlu0 %v6990
    %v6992 = vpop.xlane.xlu0 %6991
    %v6993 = vsel %vm413, %v6969, -inf
    %6994 = vmax.xlane.f32.xlu0 %v6993
    %v6995 = vpop.xlane.xlu0 %6994
    %v6996 = vsub.f32 %v6934, %v6974
    %v6997 = vsub.f32 %v6939, %v6977
    %v6998 = vsub.f32 %v6944, %v6980
    %v6999 = vsub.f32 %v6949, %v6983
    %v7000 = vsub.f32 %v6954, %v6986
    %v7001 = vsub.f32 %v6959, %v6989
    %v7002 = vsub.f32 %v6964, %v6992
    %v7003 = vsub.f32 %v6969, %v6995
    %v7004 = vmul.f32 %v6996, 1.442695
    %v7005 = vpow.pop %v7004
    %v7006 = vmul.f32 %v6997, 1.442695
    %v7007 = vpow.pop %v7006
    %v7008 = vmul.f32 %v6998, 1.442695
    %v7009 = vpow.pop %v7008
    %v7010 = vmul.f32 %v6999, 1.442695
    %v7011 = vpow.pop %v7010
    %v7012 = vmul.f32 %v7000, 1.442695
    %v7013 = vpow.pop %v7012
    %v7014 = vmul.f32 %v7001, 1.442695
    %v7015 = vpow.pop %v7014
    %v7016 = vmul.f32 %v7002, 1.442695
    %v7017 = vpow.pop %v7016
    %v7018 = vmul.f32 %v7003, 1.442695
    %v7019 = vpow.pop %v7018
    %v7020 = vsel %vm413, %v7005, 0.0
    %7021 = vadd.xlane.f32.xlu0 %v7020
    %v7022 = vpop.xlane.xlu0 %7021
    %v7023 = vsel %vm413, %v7007, 0.0
    %7024 = vadd.xlane.f32.xlu0 %v7023
    %v7025 = vpop.xlane.xlu0 %7024
    %v7026 = vsel %vm413, %v7009, 0.0
    %7027 = vadd.xlane.f32.xlu0 %v7026
    %v7028 = vpop.xlane.xlu0 %7027
    %v7029 = vsel %vm413, %v7011, 0.0
    %7030 = vadd.xlane.f32.xlu0 %v7029
    %v7031 = vpop.xlane.xlu0 %7030
    %v7032 = vsel %vm413, %v7013, 0.0
    %7033 = vadd.xlane.f32.xlu0 %v7032
    %v7034 = vpop.xlane.xlu0 %7033
    %v7035 = vsel %vm413, %v7015, 0.0
    %7036 = vadd.xlane.f32.xlu0 %v7035
    %v7037 = vpop.xlane.xlu0 %7036
    %v7038 = vsel %vm413, %v7017, 0.0
    %7039 = vadd.xlane.f32.xlu0 %v7038
    %v7040 = vpop.xlane.xlu0 %7039
    %v7041 = vsel %vm413, %v7019, 0.0
    %7042 = vadd.xlane.f32.xlu0 %v7041
    %v7043 = vpop.xlane.xlu0 %7042
    %v7044 = vrcp.pop %v7022
    %v7045 = vrcp.pop %v7025
    %v7046 = vrcp.pop %v7028
    %v7047 = vrcp.pop %v7031
    %v7048 = vrcp.pop %v7034
    %v7049 = vrcp.pop %v7037
    %v7050 = vrcp.pop %v7040
    %v7051 = vrcp.pop %v7043
    %v7052 = vmul.f32 %v7005, %v7044
    %v7053 = vmul.f32 %v7007, %v7045
    %v7054 = vmul.f32 %v7009, %v7046
    %v7055 = vmul.f32 %v7011, %v7047
    %v7056 = vmul.f32 %v7013, %v7048
    %v7057 = vmul.f32 %v7015, %v7049
    %v7058 = vmul.f32 %v7017, %v7050
    %v7059 = vmul.f32 %v7019, %v7051
    %7060 = vrot.lane.b32.xlu0 %v5143, 72
    %v7061 = vpop.permute.xlu0 %7060
    %7062 = vrot.lane.b32.xlu0 %v5148, 72
    %v7063 = vpop.permute.xlu0 %7062
    %7064 = vrot.lane.b32.xlu0 %v5153, 72
    %v7065 = vpop.permute.xlu0 %7064
    %7066 = vrot.lane.b32.xlu0 %v5158, 72
    %v7067 = vpop.permute.xlu0 %7066
    %7068 = vrot.lane.b32.xlu0 %v5163, 72
    %v7069 = vpop.permute.xlu0 %7068
    %7070 = vrot.lane.b32.xlu0 %v5168, 72
    %v7071 = vpop.permute.xlu0 %7070
    %7072 = vrot.lane.b32.xlu0 %v5173, 72
    %v7073 = vpop.permute.xlu0 %7072
    %7074 = vrot.lane.b32.xlu0 %v5178, 72
    %v7075 = vpop.permute.xlu0 %7074
    %v7085 = vsel %vm413, %v7052, 0
    %v7088 = vsel %vm413, %v7053, 0
    %v7091 = vsel %vm413, %v7054, 0
    %v7094 = vsel %vm413, %v7055, 0
    %v7097 = vsel %vm413, %v7056, 0
    %v7100 = vsel %vm413, %v7057, 0
    %v7103 = vsel %vm413, %v7058, 0
    %v7106 = vsel %vm413, %v7059, 0
    %7108 = vmatprep.subr.mxu0 0.0
    %7109 = vmatpush1.msra.mxu0 %v7061
    %7110 = vmatprep.subr.mxu0 0.0
    %7111 = vmatpush1.msra.mxu0 %v7063
    %7112 = vmatprep.subr.mxu0 0.0
    %7113 = vmatpush1.msra.mxu0 %v7065
    %7114 = vmatprep.subr.mxu0 0.0
    %7115 = vmatpush1.msra.mxu0 %v7067
    %7116 = vmatprep.subr.mxu0 0.0
    %7117 = vmatpush1.msra.mxu0 %v7069
    %7118 = vmatprep.subr.mxu0 0.0
    %7119 = vmatpush1.msra.mxu0 %v7071
    %7120 = vmatprep.subr.mxu0 0.0
    %7121 = vmatpush1.msra.mxu0 %v7073
    %7122 = vmatprep.subr.mxu0 0.0
    %7123 = vmatpush1.msra.mxu0 %v7075
    %7124 = vmatprep.subr.mxu0 0.0
    %7125 = vmatpush1.msra.mxu0 0.0
    %7126 = vmatprep.subr.mxu0 0.0
    %7127 = vmatpush1.msra.mxu0 0.0
    %7128 = vmatprep.subr.mxu0 0.0
    %7129 = vmatpush1.msra.mxu0 0.0
    %7130 = vmatprep.subr.mxu0 0.0
    %7131 = vmatpush1.msra.mxu0 0.0
    %7132 = vmatprep.subr.mxu0 0.0
    %7133 = vmatpush1.msra.mxu0 0.0
    %7134 = vmatprep.subr.mxu0 0.0
    %7135 = vmatpush1.msra.mxu0 0.0
    %7136 = vmatprep.subr.mxu0 0.0
    %7137 = vmatpush1.msra.mxu0 0.0
    %7138 = vmatprep.subr.mxu0 0.0
    %7139 = vmatpush1.msra.mxu0 0.0
    %7140 = vmatprep.subr.mxu0 0.0
    %7141 = vmatpush1.msra.mxu0 0.0
    %7142 = vmatprep.subr.mxu0 0.0
    %7143 = vmatpush1.msra.mxu0 0.0
    %7144 = vmatprep.subr.mxu0 0.0
    %7145 = vmatpush1.msra.mxu0 0.0
    %7146 = vmatprep.subr.mxu0 0.0
    %7147 = vmatpush1.msra.mxu0 0.0
    %7148 = vmatprep.subr.mxu0 0.0
    %7149 = vmatpush1.msra.mxu0 0.0
    %7150 = vmatprep.subr.mxu0 0.0
    %7151 = vmatpush1.msra.mxu0 0.0
    %7152 = vmatprep.subr.mxu0 0.0
    %7153 = vmatpush1.msra.mxu0 0.0
    %7154 = vmatprep.subr.mxu0 0.0
    %7155 = vmatpush1.msra.mxu0 0.0
    %7156 = vmatprep.subr.mxu0 0.0
    %7157 = vmatpush1.msra.mxu0 0.0
    %7158 = vmatprep.subr.mxu0 0.0
    %7159 = vmatpush1.msra.mxu0 0.0
    %7160 = vmatprep.subr.mxu0 0.0
    %7161 = vmatpush1.msra.mxu0 0.0
    %7162 = vmatprep.subr.mxu0 0.0
    %7163 = vmatpush1.msra.mxu0 0.0
    %7164 = vmatprep.subr.mxu0 0.0
    %7165 = vmatpush1.msra.mxu0 0.0
    %7166 = vmatprep.subr.mxu0 0.0
    %7167 = vmatpush1.msra.mxu0 0.0
    %7168 = vmatprep.subr.mxu0 0.0
    %7169 = vmatpush1.msra.mxu0 0.0
    %7170 = vmatprep.subr.mxu0 0.0
    %7171 = vmatpush1.msra.mxu0 0.0
    %7172 = vmatprep.mubr.f32.mxu0 0.0
    %7173 = vmatmul.mubr.f32.gmra.mrb[0].mxu0 %v7085
    %v7174 = vpop.f32.mrb[0].mxu0
    %v7175 = vadd.f32 0.0, %v7174
    %v7176 = vpop.f32.mrb[0].mxu0
    %7177 = vmatprep.mubr.f32.mxu0 0.0
    %7178 = vmatmul.mubr.f32.gmra.mrb[0].mxu0 %v7088
    %v7179 = vpop.f32.mrb[0].mxu0
    %v7180 = vadd.f32 0.0, %v7179
    %v7181 = vpop.f32.mrb[0].mxu0
    %7182 = vmatprep.mubr.f32.mxu0 0.0
    %7183 = vmatmul.mubr.f32.gmra.mrb[0].mxu0 %v7091
    %v7184 = vpop.f32.mrb[0].mxu0
    %v7185 = vadd.f32 0.0, %v7184
    %v7186 = vpop.f32.mrb[0].mxu0
    %7187 = vmatprep.mubr.f32.mxu0 0.0
    %7188 = vmatmul.mubr.f32.gmra.mrb[0].mxu0 %v7094
    %v7189 = vpop.f32.mrb[0].mxu0
    %v7190 = vadd.f32 0.0, %v7189
    %v7191 = vpop.f32.mrb[0].mxu0
    %7192 = vmatprep.mubr.f32.mxu0 0.0
    %7193 = vmatmul.mubr.f32.gmra.mrb[0].mxu0 %v7097
    %v7194 = vpop.f32.mrb[0].mxu0
    %v7195 = vadd.f32 0.0, %v7194
    %v7196 = vpop.f32.mrb[0].mxu0
    %7197 = vmatprep.mubr.f32.mxu0 0.0
    %7198 = vmatmul.mubr.f32.gmra.mrb[0].mxu0 %v7100
    %v7199 = vpop.f32.mrb[0].mxu0
    %v7200 = vadd.f32 0.0, %v7199
    %v7201 = vpop.f32.mrb[0].mxu0
    %7202 = vmatprep.mubr.f32.mxu0 0.0
    %7203 = vmatmul.mubr.f32.gmra.mrb[0].mxu0 %v7103
    %v7204 = vpop.f32.mrb[0].mxu0
    %v7205 = vadd.f32 0.0, %v7204
    %v7206 = vpop.f32.mrb[0].mxu0
    %7207 = vmatprep.mubr.f32.mxu0 0.0
    %7208 = vmatmul.mubr.f32.gmra.mrb[0].mxu0 %v7106
    %v7209 = vpop.f32.mrb[0].mxu0
    %v7210 = vadd.f32 0.0, %v7209
    %v7211 = vpop.f32.mrb[0].mxu0
    %7212 = vdwg.mxu0
    %v7214 = vsel %vm275, %v7175, 0
    %v7217 = vsel %vm275, %v7180, 0
    %v7220 = vsel %vm275, %v7185, 0
    %v7223 = vsel %vm275, %v7190, 0
    %v7226 = vsel %vm275, %v7195, 0
    %v7229 = vsel %vm275, %v7200, 0
    %v7232 = vsel %vm275, %v7205, 0
    %v7235 = vsel %vm275, %v7210, 0
    %7237 = vmatprep.subr.mxu0 0.0
    %7238 = vmatpush1.msra.mxu0 %v5192
    %7239 = vmatprep.subr.mxu0 0.0
    %7240 = vmatpush1.msra.mxu0 0.0
    %7241 = vmatprep.subr.mxu0 0.0
    %7242 = vmatpush1.msra.mxu0 0.0
    %7243 = vmatprep.subr.mxu0 0.0
    %7244 = vmatpush1.msra.mxu0 0.0
    %7245 = vmatprep.subr.mxu0 0.0
    %7246 = vmatpush1.msra.mxu0 0.0
    %7247 = vmatprep.subr.mxu0 0.0
    %7248 = vmatpush1.msra.mxu0 0.0
    %7249 = vmatprep.subr.mxu0 0.0
    %7250 = vmatpush1.msra.mxu0 0.0
    %7251 = vmatprep.subr.mxu0 0.0
    %7252 = vmatpush1.msra.mxu0 0.0
    %7253 = vmatprep.subr.mxu0 0.0
    %7254 = vmatpush1.msra.mxu0 0.0
    %7255 = vmatprep.subr.mxu0 0.0
    %7256 = vmatpush1.msra.mxu0 0.0
    %7257 = vmatprep.subr.mxu0 0.0
    %7258 = vmatpush1.msra.mxu0 0.0
    %7259 = vmatprep.subr.mxu0 0.0
    %7260 = vmatpush1.msra.mxu0 0.0
    %7261 = vmatprep.subr.mxu0 0.0
    %7262 = vmatpush1.msra.mxu0 0.0
    %7263 = vmatprep.subr.mxu0 0.0
    %7264 = vmatpush1.msra.mxu0 0.0
    %7265 = vmatprep.subr.mxu0 0.0
    %7266 = vmatpush1.msra.mxu0 0.0
    %7267 = vmatprep.subr.mxu0 0.0
    %7268 = vmatpush1.msra.mxu0 0.0
    %7269 = vmatprep.subr.mxu0 0.0
    %7270 = vmatpush1.msra.mxu0 0.0
    %7271 = vmatprep.subr.mxu0 0.0
    %7272 = vmatpush1.msra.mxu0 0.0
    %7273 = vmatprep.subr.mxu0 0.0
    %7274 = vmatpush1.msra.mxu0 0.0
    %7275 = vmatprep.subr.mxu0 0.0
    %7276 = vmatpush1.msra.mxu0 0.0
    %7277 = vmatprep.subr.mxu0 0.0
    %7278 = vmatpush1.msra.mxu0 0.0
    %7279 = vmatprep.subr.mxu0 0.0
    %7280 = vmatpush1.msra.mxu0 0.0
    %7281 = vmatprep.subr.mxu0 0.0
    %7282 = vmatpush1.msra.mxu0 0.0
    %7283 = vmatprep.subr.mxu0 0.0
    %7284 = vmatpush1.msra.mxu0 0.0
    %7285 = vmatprep.subr.mxu0 0.0
    %7286 = vmatpush1.msra.mxu0 0.0
    %7287 = vmatprep.subr.mxu0 0.0
    %7288 = vmatpush1.msra.mxu0 0.0
    %7289 = vmatprep.subr.mxu0 0.0
    %7290 = vmatpush1.msra.mxu0 0.0
    %7291 = vmatprep.subr.mxu0 0.0
    %7292 = vmatpush1.msra.mxu0 0.0
    %7293 = vmatprep.subr.mxu0 0.0
    %7294 = vmatpush1.msra.mxu0 0.0
    %7295 = vmatprep.subr.mxu0 0.0
    %7296 = vmatpush1.msra.mxu0 0.0
    %7297 = vmatprep.subr.mxu0 0.0
    %7298 = vmatpush1.msra.mxu0 0.0
    %7299 = vmatprep.subr.mxu0 0.0
    %7300 = vmatpush1.msra.mxu0 0.0
    %7301 = vmatprep.mubr.f32.mxu0 0.0
    %7302 = vmatmul.mubr.f32.gmra.mrb[0].mxu0 %v7214
    %v7303 = vpop.f32.mrb[0].mxu0
    %v7304 = vadd.f32 0.0, %v7303
    %v7305 = vpop.f32.mrb[0].mxu0
    %7306 = vmatprep.mubr.f32.mxu0 0.0
    %7307 = vmatmul.mubr.f32.gmra.mrb[0].mxu0 %v7217
    %v7308 = vpop.f32.mrb[0].mxu0
    %v7309 = vadd.f32 0.0, %v7308
    %v7310 = vpop.f32.mrb[0].mxu0
    %7311 = vmatprep.mubr.f32.mxu0 0.0
    %7312 = vmatmul.mubr.f32.gmra.mrb[0].mxu0 %v7220
    %v7313 = vpop.f32.mrb[0].mxu0
    %v7314 = vadd.f32 0.0, %v7313
    %v7315 = vpop.f32.mrb[0].mxu0
    %7316 = vmatprep.mubr.f32.mxu0 0.0
    %7317 = vmatmul.mubr.f32.gmra.mrb[0].mxu0 %v7223
    %v7318 = vpop.f32.mrb[0].mxu0
    %v7319 = vadd.f32 0.0, %v7318
    %v7320 = vpop.f32.mrb[0].mxu0
    %7321 = vmatprep.mubr.f32.mxu0 0.0
    %7322 = vmatmul.mubr.f32.gmra.mrb[0].mxu0 %v7226
    %v7323 = vpop.f32.mrb[0].mxu0
    %v7324 = vadd.f32 0.0, %v7323
    %v7325 = vpop.f32.mrb[0].mxu0
    %7326 = vmatprep.mubr.f32.mxu0 0.0
    %7327 = vmatmul.mubr.f32.gmra.mrb[0].mxu0 %v7229
    %v7328 = vpop.f32.mrb[0].mxu0
    %v7329 = vadd.f32 0.0, %v7328
    %v7330 = vpop.f32.mrb[0].mxu0
    %7331 = vmatprep.mubr.f32.mxu0 0.0
    %7332 = vmatmul.mubr.f32.gmra.mrb[0].mxu0 %v7232
    %v7333 = vpop.f32.mrb[0].mxu0
    %v7334 = vadd.f32 0.0, %v7333
    %v7335 = vpop.f32.mrb[0].mxu0
    %7336 = vmatprep.mubr.f32.mxu0 0.0
    %7337 = vmatmul.mubr.f32.gmra.mrb[0].mxu0 %v7235
    %v7338 = vpop.f32.mrb[0].mxu0
    %v7339 = vadd.f32 0.0, %v7338
    %v7340 = vpop.f32.mrb[0].mxu0
    %7341 = vdwg.mxu0
    %v7342 = vadd.f32 %v6795, %v7304
    %v7343 = vadd.f32 %v6796, %v7309
    %v7344 = vadd.f32 %v6797, %v7314
    %v7345 = vadd.f32 %v6798, %v7319
    %v7346 = vadd.f32 %v6799, %v7324
    %v7347 = vadd.f32 %v6800, %v7329
    %v7348 = vadd.f32 %v6801, %v7334
    %v7349 = vadd.f32 %v6802, %v7339
    %v7351 = vlaneseq
    %v7352 = vshrl.u32 %v7351, 7
    %v7353 = vsub.s32 0, %v7352
    %v7354 = vrot.slane %v5193, %v7353
    %v7356 = vadd.f32 %v7342, %v7354
    %v7357 = vadd.f32 %v7343, %v7354
    %v7358 = vadd.f32 %v7344, %v7354
    %v7359 = vadd.f32 %v7345, %v7354
    %v7360 = vadd.f32 %v7346, %v7354
    %v7361 = vadd.f32 %v7347, %v7354
    %v7362 = vadd.f32 %v7348, %v7354
    %v7363 = vadd.f32 %v7349, %v7354
    %v7364 = vadd.f32 %v4893, %v7356
    %v7365 = vadd.f32 %v4894, %v7357
    %v7366 = vadd.f32 %v4895, %v7358
    %v7367 = vadd.f32 %v4896, %v7359
    %v7368 = vadd.f32 %v4897, %v7360
    %v7369 = vadd.f32 %v4898, %v7361
    %v7370 = vadd.f32 %v4899, %v7362
    %v7371 = vadd.f32 %v4900, %v7363
    %v7372 = vld [vmem:[%s23 + $0x1] sm:$0x1]
    %v7373 = vld [vmem:[%s24 + $0x1] sm:$0x1]
    %v7374 = vsel %vm108, %v7364, 0.0
    %7375 = vadd.xlane.f32.xlu0 %v7374
    %v7376 = vpop.xlane.xlu0 %7375
    %v7377 = vsel %vm108, %v7365, 0.0
    %7378 = vadd.xlane.f32.xlu0 %v7377
    %v7379 = vpop.xlane.xlu0 %7378
    %v7380 = vsel %vm108, %v7366, 0.0
    %7381 = vadd.xlane.f32.xlu0 %v7380
    %v7382 = vpop.xlane.xlu0 %7381
    %v7383 = vsel %vm108, %v7367, 0.0
    %7384 = vadd.xlane.f32.xlu0 %v7383
    %v7385 = vpop.xlane.xlu0 %7384
    %v7386 = vsel %vm108, %v7368, 0.0
    %7387 = vadd.xlane.f32.xlu0 %v7386
    %v7388 = vpop.xlane.xlu0 %7387
    %v7389 = vsel %vm108, %v7369, 0.0
    %7390 = vadd.xlane.f32.xlu0 %v7389
    %v7391 = vpop.xlane.xlu0 %7390
    %v7392 = vsel %vm108, %v7370, 0.0
    %7393 = vadd.xlane.f32.xlu0 %v7392
    %v7394 = vpop.xlane.xlu0 %7393
    %v7395 = vsel %vm108, %v7371, 0.0
    %7396 = vadd.xlane.f32.xlu0 %v7395
    %v7397 = vpop.xlane.xlu0 %7396
    %v7398 = vmul.f32 %v7376, %v4796
    %v7399 = vmul.f32 %v7379, %v4796
    %v7400 = vmul.f32 %v7382, %v4796
    %v7401 = vmul.f32 %v7385, %v4796
    %v7402 = vmul.f32 %v7388, %v4796
    %v7403 = vmul.f32 %v7391, %v4796
    %v7404 = vmul.f32 %v7394, %v4796
    %v7405 = vmul.f32 %v7397, %v4796
    %v7406 = vsub.f32 %v7364, %v7398
    %v7407 = vsub.f32 %v7365, %v7399
    %v7408 = vsub.f32 %v7366, %v7400
    %v7409 = vsub.f32 %v7367, %v7401
    %v7410 = vsub.f32 %v7368, %v7402
    %v7411 = vsub.f32 %v7369, %v7403
    %v7412 = vsub.f32 %v7370, %v7404
    %v7413 = vsub.f32 %v7371, %v7405
    %v7414 = vmul.f32 %v7406, %v7406
    %v7415 = vmul.f32 %v7407, %v7407
    %v7416 = vmul.f32 %v7408, %v7408
    %v7417 = vmul.f32 %v7409, %v7409
    %v7418 = vmul.f32 %v7410, %v7410
    %v7419 = vmul.f32 %v7411, %v7411
    %v7420 = vmul.f32 %v7412, %v7412
    %v7421 = vmul.f32 %v7413, %v7413
    %v7422 = vsel %vm108, %v7414, 0.0
    %7423 = vadd.xlane.f32.xlu0 %v7422
    %v7424 = vpop.xlane.xlu0 %7423
    %v7425 = vsel %vm108, %v7415, 0.0
    %7426 = vadd.xlane.f32.xlu0 %v7425
    %v7427 = vpop.xlane.xlu0 %7426
    %v7428 = vsel %vm108, %v7416, 0.0
    %7429 = vadd.xlane.f32.xlu0 %v7428
    %v7430 = vpop.xlane.xlu0 %7429
    %v7431 = vsel %vm108, %v7417, 0.0
    %7432 = vadd.xlane.f32.xlu0 %v7431
    %v7433 = vpop.xlane.xlu0 %7432
    %v7434 = vsel %vm108, %v7418, 0.0
    %7435 = vadd.xlane.f32.xlu0 %v7434
    %v7436 = vpop.xlane.xlu0 %7435
    %v7437 = vsel %vm108, %v7419, 0.0
    %7438 = vadd.xlane.f32.xlu0 %v7437
    %v7439 = vpop.xlane.xlu0 %7438
    %v7440 = vsel %vm108, %v7420, 0.0
    %7441 = vadd.xlane.f32.xlu0 %v7440
    %v7442 = vpop.xlane.xlu0 %7441
    %v7443 = vsel %vm108, %v7421, 0.0
    %7444 = vadd.xlane.f32.xlu0 %v7443
    %v7445 = vpop.xlane.xlu0 %7444
    %v7446 = vmul.f32 %v7424, %v4796
    %v7447 = vmul.f32 %v7427, %v4796
    %v7448 = vmul.f32 %v7430, %v4796
    %v7449 = vmul.f32 %v7433, %v4796
    %v7450 = vmul.f32 %v7436, %v4796
    %v7451 = vmul.f32 %v7439, %v4796
    %v7452 = vmul.f32 %v7442, %v4796
    %v7453 = vmul.f32 %v7445, %v4796
    %v7454 = vadd.f32 %v7446, 1e-05
    %v7455 = vadd.f32 %v7447, 1e-05
    %v7456 = vadd.f32 %v7448, 1e-05
    %v7457 = vadd.f32 %v7449, 1e-05
    %v7458 = vadd.f32 %v7450, 1e-05
    %v7459 = vadd.f32 %v7451, 1e-05
    %v7460 = vadd.f32 %v7452, 1e-05
    %v7461 = vadd.f32 %v7453, 1e-05
    %v7462 = vrsqrt.pop %v7454
    %v7463 = vrsqrt.pop %v7455
    %v7464 = vrsqrt.pop %v7456
    %v7465 = vrsqrt.pop %v7457
    %v7466 = vrsqrt.pop %v7458
    %v7467 = vrsqrt.pop %v7459
    %v7468 = vrsqrt.pop %v7460
    %v7469 = vrsqrt.pop %v7461
    %v7470 = vmul.f32 %v7406, %v7462
    %v7471 = vmul.f32 %v7407, %v7463
    %v7472 = vmul.f32 %v7408, %v7464
    %v7473 = vmul.f32 %v7409, %v7465
    %v7474 = vmul.f32 %v7410, %v7466
    %v7475 = vmul.f32 %v7411, %v7467
    %v7476 = vmul.f32 %v7412, %v7468
    %v7477 = vmul.f32 %v7413, %v7469
    %v7478 = vlaneseq
    %v7479 = vshrl.u32 %v7478, 7
    %v7480 = vsub.s32 0, %v7479
    %v7481 = vrot.slane %v7372, %v7480
    %v7482 = vmul.f32 %v7470, %v7481
    %v7483 = vmul.f32 %v7471, %v7481
    %v7484 = vmul.f32 %v7472, %v7481
    %v7485 = vmul.f32 %v7473, %v7481
    %v7486 = vmul.f32 %v7474, %v7481
    %v7487 = vmul.f32 %v7475, %v7481
    %v7488 = vmul.f32 %v7476, %v7481
    %v7489 = vmul.f32 %v7477, %v7481
    %v7490 = vlaneseq
    %v7491 = vshrl.u32 %v7490, 7
    %v7492 = vsub.s32 0, %v7491
    %v7493 = vrot.slane %v7373, %v7492
    %v7494 = vadd.f32 %v7482, %v7493
    %v7495 = vadd.f32 %v7483, %v7493
    %v7496 = vadd.f32 %v7484, %v7493
    %v7497 = vadd.f32 %v7485, %v7493
    %v7498 = vadd.f32 %v7486, %v7493
    %v7499 = vadd.f32 %v7487, %v7493
    %v7500 = vadd.f32 %v7488, %v7493
    %v7501 = vadd.f32 %v7489, %v7493
    %v7502 = vld [vmem:[%s19] sm:$0xff]
    %v7503 = vld [vmem:[%s19 + $0x8] sm:$0xff]
    %v7504 = vld [vmem:[%s19 + $0x10] sm:$0xff]
    %v7505 = vld [vmem:[%s19 + $0x18] sm:$0xff]
    %v7506 = vld [vmem:[%s20] sm:$0x1]
    %v7508 = vlaneseq
    %v7509 = vshrl.u32 %v7508, 7
    %v7510 = vsub.s32 0, %v7509
    %v7511 = vrot.slane %v7506, %v7510
    %v7514 = vsel %vm108, %v7494, 0
    %v7517 = vsel %vm108, %v7495, 0
    %v7520 = vsel %vm108, %v7496, 0
    %v7523 = vsel %vm108, %v7497, 0
    %v7526 = vsel %vm108, %v7498, 0
    %v7529 = vsel %vm108, %v7499, 0
    %v7532 = vsel %vm108, %v7500, 0
    %v7535 = vsel %vm108, %v7501, 0
    %7537 = vmatprep.subr.mxu0 0.0
    %7538 = vmatpush1.msra.mxu0 %v7502
    %7539 = vmatprep.subr.mxu0 0.0
    %7540 = vmatpush1.msra.mxu0 %v7503
    %7541 = vmatprep.subr.mxu0 0.0
    %7542 = vmatpush1.msra.mxu0 %v7504
    %7543 = vmatprep.subr.mxu0 0.0
    %7544 = vmatpush1.msra.mxu0 %v7505
    %7545 = vmatprep.subr.mxu0 0.0
    %7546 = vmatpush1.msra.mxu0 0.0
    %7547 = vmatprep.subr.mxu0 0.0
    %7548 = vmatpush1.msra.mxu0 0.0
    %7549 = vmatprep.subr.mxu0 0.0
    %7550 = vmatpush1.msra.mxu0 0.0
    %7551 = vmatprep.subr.mxu0 0.0
    %7552 = vmatpush1.msra.mxu0 0.0
    %7553 = vmatprep.subr.mxu0 0.0
    %7554 = vmatpush1.msra.mxu0 0.0
    %7555 = vmatprep.subr.mxu0 0.0
    %7556 = vmatpush1.msra.mxu0 0.0
    %7557 = vmatprep.subr.mxu0 0.0
    %7558 = vmatpush1.msra.mxu0 0.0
    %7559 = vmatprep.subr.mxu0 0.0
    %7560 = vmatpush1.msra.mxu0 0.0
    %7561 = vmatprep.subr.mxu0 0.0
    %7562 = vmatpush1.msra.mxu0 0.0
    %7563 = vmatprep.subr.mxu0 0.0
    %7564 = vmatpush1.msra.mxu0 0.0
    %7565 = vmatprep.subr.mxu0 0.0
    %7566 = vmatpush1.msra.mxu0 0.0
    %7567 = vmatprep.subr.mxu0 0.0
    %7568 = vmatpush1.msra.mxu0 0.0
    %7569 = vmatprep.subr.mxu0 0.0
    %7570 = vmatpush1.msra.mxu0 0.0
    %7571 = vmatprep.subr.mxu0 0.0
    %7572 = vmatpush1.msra.mxu0 0.0
    %7573 = vmatprep.subr.mxu0 0.0
    %7574 = vmatpush1.msra.mxu0 0.0
    %7575 = vmatprep.subr.mxu0 0.0
    %7576 = vmatpush1.msra.mxu0 0.0
    %7577 = vmatprep.subr.mxu0 0.0
    %7578 = vmatpush1.msra.mxu0 0.0
    %7579 = vmatprep.subr.mxu0 0.0
    %7580 = vmatpush1.msra.mxu0 0.0
    %7581 = vmatprep.subr.mxu0 0.0
    %7582 = vmatpush1.msra.mxu0 0.0
    %7583 = vmatprep.subr.mxu0 0.0
    %7584 = vmatpush1.msra.mxu0 0.0
    %7585 = vmatprep.subr.mxu0 0.0
    %7586 = vmatpush1.msra.mxu0 0.0
    %7587 = vmatprep.subr.mxu0 0.0
    %7588 = vmatpush1.msra.mxu0 0.0
    %7589 = vmatprep.subr.mxu0 0.0
    %7590 = vmatpush1.msra.mxu0 0.0
    %7591 = vmatprep.subr.mxu0 0.0
    %7592 = vmatpush1.msra.mxu0 0.0
    %7593 = vmatprep.subr.mxu0 0.0
    %7594 = vmatpush1.msra.mxu0 0.0
    %7595 = vmatprep.subr.mxu0 0.0
    %7596 = vmatpush1.msra.mxu0 0.0
    %7597 = vmatprep.subr.mxu0 0.0
    %7598 = vmatpush1.msra.mxu0 0.0
    %7599 = vmatprep.subr.mxu0 0.0
    %7600 = vmatpush1.msra.mxu0 0.0
    %7601 = vmatprep.mubr.f32.mxu0 0.0
    %7602 = vmatmul.mubr.f32.gmra.mrb[0].mxu0 %v7514
    %v7603 = vpop.f32.mrb[0].mxu0
    %v7604 = vadd.f32 %v7511, %v7603
    %v7605 = vpop.f32.mrb[0].mxu0
    %7606 = vmatprep.mubr.f32.mxu0 0.0
    %7607 = vmatmul.mubr.f32.gmra.mrb[0].mxu0 %v7517
    %v7608 = vpop.f32.mrb[0].mxu0
    %v7609 = vadd.f32 %v7511, %v7608
    %v7610 = vpop.f32.mrb[0].mxu0
    %7611 = vmatprep.mubr.f32.mxu0 0.0
    %7612 = vmatmul.mubr.f32.gmra.mrb[0].mxu0 %v7520
    %v7613 = vpop.f32.mrb[0].mxu0
    %v7614 = vadd.f32 %v7511, %v7613
    %v7615 = vpop.f32.mrb[0].mxu0
    %7616 = vmatprep.mubr.f32.mxu0 0.0
    %7617 = vmatmul.mubr.f32.gmra.mrb[0].mxu0 %v7523
    %v7618 = vpop.f32.mrb[0].mxu0
    %v7619 = vadd.f32 %v7511, %v7618
    %v7620 = vpop.f32.mrb[0].mxu0
    %7621 = vmatprep.mubr.f32.mxu0 0.0
    %7622 = vmatmul.mubr.f32.gmra.mrb[0].mxu0 %v7526
    %v7623 = vpop.f32.mrb[0].mxu0
    %v7624 = vadd.f32 %v7511, %v7623
    %v7625 = vpop.f32.mrb[0].mxu0
    %7626 = vmatprep.mubr.f32.mxu0 0.0
    %7627 = vmatmul.mubr.f32.gmra.mrb[0].mxu0 %v7529
    %v7628 = vpop.f32.mrb[0].mxu0
    %v7629 = vadd.f32 %v7511, %v7628
    %v7630 = vpop.f32.mrb[0].mxu0
    %7631 = vmatprep.mubr.f32.mxu0 0.0
    %7632 = vmatmul.mubr.f32.gmra.mrb[0].mxu0 %v7532
    %v7633 = vpop.f32.mrb[0].mxu0
    %v7634 = vadd.f32 %v7511, %v7633
    %v7635 = vpop.f32.mrb[0].mxu0
    %7636 = vmatprep.mubr.f32.mxu0 0.0
    %7637 = vmatmul.mubr.f32.gmra.mrb[0].mxu0 %v7535
    %v7638 = vpop.f32.mrb[0].mxu0
    %v7639 = vadd.f32 %v7511, %v7638
    %v7640 = vpop.f32.mrb[0].mxu0
    %7641 = vdwg.mxu0
    %v7642 = vmax.f32 %v7604, 0.0
    %v7643 = vmax.f32 %v7609, 0.0
    %v7644 = vmax.f32 %v7614, 0.0
    %v7645 = vmax.f32 %v7619, 0.0
    %v7646 = vmax.f32 %v7624, 0.0
    %v7647 = vmax.f32 %v7629, 0.0
    %v7648 = vmax.f32 %v7634, 0.0
    %v7649 = vmax.f32 %v7639, 0.0
    %v7650 = vld [vmem:[%s21] sm:$0xff]
    %v7651 = vld [vmem:[%s21 + $0x8] sm:$0xff]
    %v7652 = vld [vmem:[%s21 + $0x10] sm:$0xff]
    %v7653 = vld [vmem:[%s21 + $0x18] sm:$0xff]
    %v7654 = vld [vmem:[%s21 + $0x20] sm:$0xff]
    %v7655 = vld [vmem:[%s21 + $0x28] sm:$0xff]
    %v7656 = vld [vmem:[%s21 + $0x30] sm:$0xff]
    %v7657 = vld [vmem:[%s21 + $0x38] sm:$0xff]
    %v7658 = vld [vmem:[%s22] sm:$0x1]
    %v7660 = vlaneseq
    %v7661 = vshrl.u32 %v7660, 7
    %v7662 = vsub.s32 0, %v7661
    %v7663 = vrot.slane %v7658, %v7662
    %v7666 = vsel %vm413, %v7642, 0
    %v7669 = vsel %vm413, %v7643, 0
    %v7672 = vsel %vm413, %v7644, 0
    %v7675 = vsel %vm413, %v7645, 0
    %v7678 = vsel %vm413, %v7646, 0
    %v7681 = vsel %vm413, %v7647, 0
    %v7684 = vsel %vm413, %v7648, 0
    %v7687 = vsel %vm413, %v7649, 0
    %7689 = vmatprep.subr.mxu0 0.0
    %7690 = vmatpush1.msra.mxu0 %v7650
    %7691 = vmatprep.subr.mxu0 0.0
    %7692 = vmatpush1.msra.mxu0 %v7651
    %7693 = vmatprep.subr.mxu0 0.0
    %7694 = vmatpush1.msra.mxu0 %v7652
    %7695 = vmatprep.subr.mxu0 0.0
    %7696 = vmatpush1.msra.mxu0 %v7653
    %7697 = vmatprep.subr.mxu0 0.0
    %7698 = vmatpush1.msra.mxu0 %v7654
    %7699 = vmatprep.subr.mxu0 0.0
    %7700 = vmatpush1.msra.mxu0 %v7655
    %7701 = vmatprep.subr.mxu0 0.0
    %7702 = vmatpush1.msra.mxu0 %v7656
    %7703 = vmatprep.subr.mxu0 0.0
    %7704 = vmatpush1.msra.mxu0 %v7657
    %7705 = vmatprep.subr.mxu0 0.0
    %7706 = vmatpush1.msra.mxu0 0.0
    %7707 = vmatprep.subr.mxu0 0.0
    %7708 = vmatpush1.msra.mxu0 0.0
    %7709 = vmatprep.subr.mxu0 0.0
    %7710 = vmatpush1.msra.mxu0 0.0
    %7711 = vmatprep.subr.mxu0 0.0
    %7712 = vmatpush1.msra.mxu0 0.0
    %7713 = vmatprep.subr.mxu0 0.0
    %7714 = vmatpush1.msra.mxu0 0.0
    %7715 = vmatprep.subr.mxu0 0.0
    %7716 = vmatpush1.msra.mxu0 0.0
    %7717 = vmatprep.subr.mxu0 0.0
    %7718 = vmatpush1.msra.mxu0 0.0
    %7719 = vmatprep.subr.mxu0 0.0
    %7720 = vmatpush1.msra.mxu0 0.0
    %7721 = vmatprep.subr.mxu0 0.0
    %7722 = vmatpush1.msra.mxu0 0.0
    %7723 = vmatprep.subr.mxu0 0.0
    %7724 = vmatpush1.msra.mxu0 0.0
    %7725 = vmatprep.subr.mxu0 0.0
    %7726 = vmatpush1.msra.mxu0 0.0
    %7727 = vmatprep.subr.mxu0 0.0
    %7728 = vmatpush1.msra.mxu0 0.0
    %7729 = vmatprep.subr.mxu0 0.0
    %7730 = vmatpush1.msra.mxu0 0.0
    %7731 = vmatprep.subr.mxu0 0.0
    %7732 = vmatpush1.msra.mxu0 0.0
    %7733 = vmatprep.subr.mxu0 0.0
    %7734 = vmatpush1.msra.mxu0 0.0
    %7735 = vmatprep.subr.mxu0 0.0
    %7736 = vmatpush1.msra.mxu0 0.0
    %7737 = vmatprep.subr.mxu0 0.0
    %7738 = vmatpush1.msra.mxu0 0.0
    %7739 = vmatprep.subr.mxu0 0.0
    %7740 = vmatpush1.msra.mxu0 0.0
    %7741 = vmatprep.subr.mxu0 0.0
    %7742 = vmatpush1.msra.mxu0 0.0
    %7743 = vmatprep.subr.mxu0 0.0
    %7744 = vmatpush1.msra.mxu0 0.0
    %7745 = vmatprep.subr.mxu0 0.0
    %7746 = vmatpush1.msra.mxu0 0.0
    %7747 = vmatprep.subr.mxu0 0.0
    %7748 = vmatpush1.msra.mxu0 0.0
    %7749 = vmatprep.subr.mxu0 0.0
    %7750 = vmatpush1.msra.mxu0 0.0
    %7751 = vmatprep.subr.mxu0 0.0
    %7752 = vmatpush1.msra.mxu0 0.0
    %7753 = vmatprep.mubr.f32.mxu0 0.0
    %7754 = vmatmul.mubr.f32.gmra.mrb[0].mxu0 %v7666
    %v7755 = vpop.f32.mrb[0].mxu0
    %v7756 = vadd.f32 %v7663, %v7755
    %v7757 = vpop.f32.mrb[0].mxu0
    %7758 = vmatprep.mubr.f32.mxu0 0.0
    %7759 = vmatmul.mubr.f32.gmra.mrb[0].mxu0 %v7669
    %v7760 = vpop.f32.mrb[0].mxu0
    %v7761 = vadd.f32 %v7663, %v7760
    %v7762 = vpop.f32.mrb[0].mxu0
    %7763 = vmatprep.mubr.f32.mxu0 0.0
    %7764 = vmatmul.mubr.f32.gmra.mrb[0].mxu0 %v7672
    %v7765 = vpop.f32.mrb[0].mxu0
    %v7766 = vadd.f32 %v7663, %v7765
    %v7767 = vpop.f32.mrb[0].mxu0
    %7768 = vmatprep.mubr.f32.mxu0 0.0
    %7769 = vmatmul.mubr.f32.gmra.mrb[0].mxu0 %v7675
    %v7770 = vpop.f32.mrb[0].mxu0
    %v7771 = vadd.f32 %v7663, %v7770
    %v7772 = vpop.f32.mrb[0].mxu0
    %7773 = vmatprep.mubr.f32.mxu0 0.0
    %7774 = vmatmul.mubr.f32.gmra.mrb[0].mxu0 %v7678
    %v7775 = vpop.f32.mrb[0].mxu0
    %v7776 = vadd.f32 %v7663, %v7775
    %v7777 = vpop.f32.mrb[0].mxu0
    %7778 = vmatprep.mubr.f32.mxu0 0.0
    %7779 = vmatmul.mubr.f32.gmra.mrb[0].mxu0 %v7681
    %v7780 = vpop.f32.mrb[0].mxu0
    %v7781 = vadd.f32 %v7663, %v7780
    %v7782 = vpop.f32.mrb[0].mxu0
    %7783 = vmatprep.mubr.f32.mxu0 0.0
    %7784 = vmatmul.mubr.f32.gmra.mrb[0].mxu0 %v7684
    %v7785 = vpop.f32.mrb[0].mxu0
    %v7786 = vadd.f32 %v7663, %v7785
    %v7787 = vpop.f32.mrb[0].mxu0
    %7788 = vmatprep.mubr.f32.mxu0 0.0
    %7789 = vmatmul.mubr.f32.gmra.mrb[0].mxu0 %v7687
    %v7790 = vpop.f32.mrb[0].mxu0
    %v7791 = vadd.f32 %v7663, %v7790
    %v7792 = vpop.f32.mrb[0].mxu0
    %7793 = vdwg.mxu0
    %v7794 = vadd.f32 %v7494, %v7756
    %v7795 = vadd.f32 %v7495, %v7761
    %v7796 = vadd.f32 %v7496, %v7766
    %v7797 = vadd.f32 %v7497, %v7771
    %v7798 = vadd.f32 %v7498, %v7776
    %v7799 = vadd.f32 %v7499, %v7781
    %v7800 = vadd.f32 %v7500, %v7786
    %v7801 = vadd.f32 %v7501, %v7791
    %v7802 = vld [vmem:[%s23 + $0x2] sm:$0x1]
    %v7803 = vld [vmem:[%s24 + $0x2] sm:$0x1]
    %v7804 = vsel %vm108, %v7794, 0.0
    %7805 = vadd.xlane.f32.xlu0 %v7804
    %v7806 = vpop.xlane.xlu0 %7805
    %v7807 = vsel %vm108, %v7795, 0.0
    %7808 = vadd.xlane.f32.xlu0 %v7807
    %v7809 = vpop.xlane.xlu0 %7808
    %v7810 = vsel %vm108, %v7796, 0.0
    %7811 = vadd.xlane.f32.xlu0 %v7810
    %v7812 = vpop.xlane.xlu0 %7811
    %v7813 = vsel %vm108, %v7797, 0.0
    %7814 = vadd.xlane.f32.xlu0 %v7813
    %v7815 = vpop.xlane.xlu0 %7814
    %v7816 = vsel %vm108, %v7798, 0.0
    %7817 = vadd.xlane.f32.xlu0 %v7816
    %v7818 = vpop.xlane.xlu0 %7817
    %v7819 = vsel %vm108, %v7799, 0.0
    %7820 = vadd.xlane.f32.xlu0 %v7819
    %v7821 = vpop.xlane.xlu0 %7820
    %v7822 = vsel %vm108, %v7800, 0.0
    %7823 = vadd.xlane.f32.xlu0 %v7822
    %v7824 = vpop.xlane.xlu0 %7823
    %v7825 = vsel %vm108, %v7801, 0.0
    %7826 = vadd.xlane.f32.xlu0 %v7825
    %v7827 = vpop.xlane.xlu0 %7826
    %v7828 = vmul.f32 %v7806, %v4796
    %v7829 = vmul.f32 %v7809, %v4796
    %v7830 = vmul.f32 %v7812, %v4796
    %v7831 = vmul.f32 %v7815, %v4796
    %v7832 = vmul.f32 %v7818, %v4796
    %v7833 = vmul.f32 %v7821, %v4796
    %v7834 = vmul.f32 %v7824, %v4796
    %v7835 = vmul.f32 %v7827, %v4796
    %v7836 = vsub.f32 %v7794, %v7828
    %v7837 = vsub.f32 %v7795, %v7829
    %v7838 = vsub.f32 %v7796, %v7830
    %v7839 = vsub.f32 %v7797, %v7831
    %v7840 = vsub.f32 %v7798, %v7832
    %v7841 = vsub.f32 %v7799, %v7833
    %v7842 = vsub.f32 %v7800, %v7834
    %v7843 = vsub.f32 %v7801, %v7835
    %v7844 = vmul.f32 %v7836, %v7836
    %v7845 = vmul.f32 %v7837, %v7837
    %v7846 = vmul.f32 %v7838, %v7838
    %v7847 = vmul.f32 %v7839, %v7839
    %v7848 = vmul.f32 %v7840, %v7840
    %v7849 = vmul.f32 %v7841, %v7841
    %v7850 = vmul.f32 %v7842, %v7842
    %v7851 = vmul.f32 %v7843, %v7843
    %v7852 = vsel %vm108, %v7844, 0.0
    %7853 = vadd.xlane.f32.xlu0 %v7852
    %v7854 = vpop.xlane.xlu0 %7853
    %v7855 = vsel %vm108, %v7845, 0.0
    %7856 = vadd.xlane.f32.xlu0 %v7855
    %v7857 = vpop.xlane.xlu0 %7856
    %v7858 = vsel %vm108, %v7846, 0.0
    %7859 = vadd.xlane.f32.xlu0 %v7858
    %v7860 = vpop.xlane.xlu0 %7859
    %v7861 = vsel %vm108, %v7847, 0.0
    %7862 = vadd.xlane.f32.xlu0 %v7861
    %v7863 = vpop.xlane.xlu0 %7862
    %v7864 = vsel %vm108, %v7848, 0.0
    %7865 = vadd.xlane.f32.xlu0 %v7864
    %v7866 = vpop.xlane.xlu0 %7865
    %v7867 = vsel %vm108, %v7849, 0.0
    %7868 = vadd.xlane.f32.xlu0 %v7867
    %v7869 = vpop.xlane.xlu0 %7868
    %v7870 = vsel %vm108, %v7850, 0.0
    %7871 = vadd.xlane.f32.xlu0 %v7870
    %v7872 = vpop.xlane.xlu0 %7871
    %v7873 = vsel %vm108, %v7851, 0.0
    %7874 = vadd.xlane.f32.xlu0 %v7873
    %v7875 = vpop.xlane.xlu0 %7874
    %v7876 = vmul.f32 %v7854, %v4796
    %v7877 = vmul.f32 %v7857, %v4796
    %v7878 = vmul.f32 %v7860, %v4796
    %v7879 = vmul.f32 %v7863, %v4796
    %v7880 = vmul.f32 %v7866, %v4796
    %v7881 = vmul.f32 %v7869, %v4796
    %v7882 = vmul.f32 %v7872, %v4796
    %v7883 = vmul.f32 %v7875, %v4796
    %v7884 = vadd.f32 %v7876, 1e-05
    %v7885 = vadd.f32 %v7877, 1e-05
    %v7886 = vadd.f32 %v7878, 1e-05
    %v7887 = vadd.f32 %v7879, 1e-05
    %v7888 = vadd.f32 %v7880, 1e-05
    %v7889 = vadd.f32 %v7881, 1e-05
    %v7890 = vadd.f32 %v7882, 1e-05
    %v7891 = vadd.f32 %v7883, 1e-05
    %v7892 = vrsqrt.pop %v7884
    %v7893 = vrsqrt.pop %v7885
    %v7894 = vrsqrt.pop %v7886
    %v7895 = vrsqrt.pop %v7887
    %v7896 = vrsqrt.pop %v7888
    %v7897 = vrsqrt.pop %v7889
    %v7898 = vrsqrt.pop %v7890
    %v7899 = vrsqrt.pop %v7891
    %v7900 = vmul.f32 %v7836, %v7892
    %v7901 = vmul.f32 %v7837, %v7893
    %v7902 = vmul.f32 %v7838, %v7894
    %v7903 = vmul.f32 %v7839, %v7895
    %v7904 = vmul.f32 %v7840, %v7896
    %v7905 = vmul.f32 %v7841, %v7897
    %v7906 = vmul.f32 %v7842, %v7898
    %v7907 = vmul.f32 %v7843, %v7899
    %v7908 = vlaneseq
    %v7909 = vshrl.u32 %v7908, 7
    %v7910 = vsub.s32 0, %v7909
    %v7911 = vrot.slane %v7802, %v7910
    %v7912 = vmul.f32 %v7900, %v7911
    %v7913 = vmul.f32 %v7901, %v7911
    %v7914 = vmul.f32 %v7902, %v7911
    %v7915 = vmul.f32 %v7903, %v7911
    %v7916 = vmul.f32 %v7904, %v7911
    %v7917 = vmul.f32 %v7905, %v7911
    %v7918 = vmul.f32 %v7906, %v7911
    %v7919 = vmul.f32 %v7907, %v7911
    %v7920 = vlaneseq
    %v7921 = vshrl.u32 %v7920, 7
    %v7922 = vsub.s32 0, %v7921
    %v7923 = vrot.slane %v7803, %v7922
    %v7924 = vadd.f32 %v7912, %v7923
    %v7925 = vadd.f32 %v7913, %v7923
    %v7926 = vadd.f32 %v7914, %v7923
    %v7927 = vadd.f32 %v7915, %v7923
    %v7928 = vadd.f32 %v7916, %v7923
    %v7929 = vadd.f32 %v7917, %v7923
    %v7930 = vadd.f32 %v7918, %v7923
    %v7931 = vadd.f32 %v7919, %v7923
    %7932 = vst.msk [vmem:[#allocation2] sm:$0xff] %vm108, %v7924
    %7933 = vst.msk [vmem:[#allocation2 + $0x8] sm:$0xff] %vm108, %v7925
    %7934 = vst.msk [vmem:[#allocation2 + $0x10] sm:$0xff] %vm108, %v7926
    %7935 = vst.msk [vmem:[#allocation2 + $0x18] sm:$0xff] %vm108, %v7927
    %7936 = vst.msk [vmem:[#allocation2 + $0x20] sm:$0xff] %vm108, %v7928
    %7937 = vst.msk [vmem:[#allocation2 + $0x28] sm:$0xff] %vm108, %v7929
    %7938 = vst.msk [vmem:[#allocation2 + $0x30] sm:$0xff] %vm108, %v7930
    %7939 = vst.msk [vmem:[#allocation2 + $0x38] sm:$0xff] %vm108, %v7931
    // Predicated region
    $region102: #{decoder_layer.1} parent=1 // pred_check
      _
    $region103: #{decoder_layer.1} parent=1 // pred_check_branch
      %7941 = sbr.rel (0) target = $region105
    $region104: #{decoder_layer.1} parent=1 // pred_region
      %s7943 = ssub.s32 1024, 1024
      %7944 = vsyncadd [#allocation3], %s7943
      %s7945 = sshll.u32 [#allocation2], 4
      %s7946 = int_to_ptr.vmem [resolvable:$true] %s7945
      %7951 = dma.vmem_to_hbm [thread:$0]  %s7946, 1024, %s25, [#allocation3], 128, 128, 8
    $region105: #{decoder_layer.1} parent=1 // pred_fallthru
      _
    // Predicated region
    $region106: #{decoder_layer.1} parent=1 // pred_check
      _
    $region107: #{decoder_layer.1} parent=1 // pred_check_branch
      %7953 = sbr.rel (0) target = $region109
    $region108: #{decoder_layer.1} parent=1 // pred_region
      %7954 = dma.done [#allocation3], 1024
    $region109: #{decoder_layer.1} parent=1 // pred_fallthru
      _
    %7955 = vsyncpa [#allocation3], 1

</llo_original>
